<compile_context>
chip_gen: v7x
topology: tpu7x:2x2x1
jax: 0.10.0
libtpu: 0.0.40
codegen_flags: <defaults>
</compile_context>

<pallas_src>
import functools

import jax
import jax.numpy as jnp
from jax.experimental import pallas as pl
from jax.experimental.pallas import tpu as pltpu

HALF_WINDOW = 32
WINDOW_SIZE = 2 * HALF_WINDOW + 1          # 65 (sequence length)
LN_EPS = 1e-5                              # nn.LayerNorm default eps


def _layernorm(x, gamma, beta):
    mu = jnp.mean(x, axis=-1, keepdims=True)
    var = jnp.mean(jnp.square(x - mu), axis=-1, keepdims=True)
    return (x - mu) * jax.lax.rsqrt(var + LN_EPS) * gamma + beta


def _pick_batch_tile(batch, max_tile=4):
    """Largest divisor of `batch` <= max_tile that still leaves >=2 grid steps
    (so both v7x TensorCores get work) whenever batch >= 2."""
    best = 1
    for t in range(1, min(batch, max_tile) + 1):
        if batch % t == 0 and (batch // t >= 2 or batch < 2):
            best = t
    return best


# --------------------------------------------------------------------------
# Fused kernel: one grid step = one batch tile through the WHOLE network
# (embed + all encoder layers + classification head).
# --------------------------------------------------------------------------
def fused_kernel(x_ref, ln_g_ref, ln_b_ref, lin_w_ref, lin_b_ref,
                 fc_w_ref, fc_b_ref,
                 wqkv_ref, bqkv_ref, wo_ref, bo_ref,
                 g1_ref, be1_ref, w1_ref, b1_ref, w2_ref, b2_ref,
                 g2_ref, be2_ref,
                 o_ref,
                 h_ref, qkv_ref, ctx_ref,
                 *, num_heads, head_dim, seq_len, s_pad, num_layers,
                 batch_tile):
    bf16 = jnp.bfloat16
    d_model = num_heads * head_dim

    # ---- embed: LayerNorm(input_dim) + Linear(input_dim -> d_model) -------
    x = x_ref[...]                                            # (rows, Din) f32
    xn = _layernorm(x, ln_g_ref[...], ln_b_ref[...])
    h_ref[...] = (jnp.dot(xn.astype(bf16), lin_w_ref[...],
                          preferred_element_type=jnp.float32)
                  + lin_b_ref[...])

    # ---- key-padding bias: built + broadcast once per grid step ------------
    key_ids = jax.lax.broadcasted_iota(jnp.int32, (1, s_pad), 1)
    key_bias = jnp.broadcast_to(
        jnp.where(key_ids < seq_len, 0.0, -1e30).astype(jnp.float32),
        (s_pad, s_pad))                                       # stays f32

    # ---- encoder layers: static loop, weights VMEM-resident ----------------
    for l in range(num_layers):
        hb = h_ref[...].astype(bf16)                          # (rows, D)

        # fused QKV projection over the whole batch tile (M = rows), staged
        # to VMEM scratch so only one head is live in vregs at a time.
        # Q-scale (1/sqrt(head_dim)) pre-folded into wqkv/bqkv.
        qkv_ref[...] = (jnp.dot(hb, wqkv_ref[l],
                                preferred_element_type=jnp.float32)
                        + bqkv_ref[l])

        # per-sequence attention
        for b in range(batch_tile):
            r0 = b * s_pad
            qb = qkv_ref[r0:r0 + s_pad, 0:d_model].astype(bf16)       # (S, D)
            kT = (qkv_ref[r0:r0 + s_pad, d_model:2 * d_model]
                  .T.astype(bf16))                                     # (D, S)
            vb = qkv_ref[r0:r0 + s_pad, 2 * d_model:3 * d_model].astype(bf16)
            for hh in range(num_heads):
                lo = hh * head_dim
                s = (jnp.dot(qb[:, lo:lo + head_dim],
                             kT[lo:lo + head_dim, :],
                             preferred_element_type=jnp.float32)
                     + key_bias)                               # (S, S) f32
                m = jnp.max(s, axis=-1, keepdims=True)
                e = jnp.exp(s - m)
                p = e * pl.reciprocal(jnp.sum(e, axis=-1, keepdims=True),
                                      approx=True)
                ctx_ref[r0:r0 + s_pad, lo:lo + head_dim] = jnp.dot(
                    p.astype(bf16), vb[:, lo:lo + head_dim],
                    preferred_element_type=jnp.float32)

        # single K=128 output projection + residual + norm1
        attn = (jnp.dot(ctx_ref[...].astype(bf16), wo_ref[l],
                        preferred_element_type=jnp.float32) + bo_ref[l])
        h1 = _layernorm(h_ref[...] + attn, g1_ref[l], be1_ref[l])

        # feed-forward (ReLU) + residual + norm2
        ff = jnp.maximum(jnp.dot(h1.astype(bf16), w1_ref[l],
                                 preferred_element_type=jnp.float32)
                         + b1_ref[l], 0.0)
        ff2 = (jnp.dot(ff.astype(bf16), w2_ref[l],
                       preferred_element_type=jnp.float32) + b2_ref[l])
        h_ref[...] = _layernorm(h1 + ff2, g2_ref[l], be2_ref[l])

    # ---- head: center token, fc (D -> 1) as a VPU reduce, sigmoid ----------
    center = seq_len // 2
    for b in range(batch_tile):
        hc = h_ref[b * s_pad + center:b * s_pad + center + 1, :]   # (1, D)
        logit = (jnp.sum(hc * fc_w_ref[...], axis=-1, keepdims=True)
                 + fc_b_ref[...])                                  # (1, 1)
        o_ref[b:b + 1, :, :] = jnp.broadcast_to(
            jax.nn.sigmoid(logit), (1, 1, o_ref.shape[-1]))


# --------------------------------------------------------------------------
# Wrapper
# --------------------------------------------------------------------------
def transformer_classifier(x, p, *, num_heads, key_dim, num_blocks,
                           batch_tile=None):
    B, S, Din = x.shape
    D = num_heads * key_dim
    S_pad = ((S + 15) // 16) * 16            # 65 -> 80 (f32 + bf16 aligned)
    if batch_tile is None:
        batch_tile = _pick_batch_tile(B)
    assert B % batch_tile == 0
    rows = batch_tile * S_pad

    # pad the sequence, flatten (B, S_pad, Din) -> (B*S_pad, Din) so a batch
    # tile is a contiguous row block (no in-kernel reshapes).
    x_flat = jnp.pad(x, ((0, 0), (0, S_pad - S), (0, 0))).reshape(B * S_pad, Din)

    kern = functools.partial(fused_kernel,
                             num_heads=num_heads, head_dim=key_dim,
                             seq_len=S, s_pad=S_pad, num_layers=num_blocks,
                             batch_tile=batch_tile)

    def resident(a):
        # full array, constant block index -> DMA'd once, stays in VMEM.
        return pl.BlockSpec(a.shape, lambda i, _nd=a.ndim: (0,) * _nd)

    out = pl.pallas_call(
        kern,
        out_shape=jax.ShapeDtypeStruct((B, 1, 128), jnp.float32),
        grid=(B // batch_tile,),
        in_specs=[
            pl.BlockSpec((rows, Din), lambda i: (i, 0)),          # x batch tile
            resident(p["ln_g"]), resident(p["ln_b"]),
            resident(p["lin_w"]), resident(p["lin_b"]),
            resident(p["fc_w"]), resident(p["fc_b"]),
            resident(p["wqkv"]), resident(p["bqkv"]),
            resident(p["wo"]), resident(p["bo"]),
            resident(p["g1"]), resident(p["be1"]),
            resident(p["w1"]), resident(p["b1"]),
            resident(p["w2"]), resident(p["b2"]),
            resident(p["g2"]), resident(p["be2"]),
        ],
        out_specs=pl.BlockSpec((batch_tile, 1, 128), lambda i: (i, 0, 0)),
        scratch_shapes=[
            pltpu.VMEM((rows, D), jnp.float32),        # activations h
            pltpu.VMEM((rows, 3 * D), jnp.float32),    # qkv staging
            pltpu.VMEM((rows, D), jnp.float32),        # per-head ctx staging
        ],
        compiler_params=pltpu.CompilerParams(
            dimension_semantics=("parallel",)),
    )(x_flat, p["ln_g"], p["ln_b"], p["lin_w"], p["lin_b"],
      p["fc_w"], p["fc_b"],
      p["wqkv"], p["bqkv"], p["wo"], p["bo"],
      p["g1"], p["be1"], p["w1"], p["b1"],
      p["w2"], p["b2"], p["g2"], p["be2"])

    # TODO(synk): self.dropout is identity here (eval/inference mode).
    return out[:, 0, 0]                      # (B,)


# --------------------------------------------------------------------------
# Parameter init (synthetic; mirrors PyTorch shapes, linear weights in
# (in, out) layout) and packing into the fused-kernel layout.
# --------------------------------------------------------------------------
def init_params(key, input_dim, num_heads, key_dim, ff_dim, num_blocks):
    D = num_heads * key_dim
    keys = iter(jax.random.split(key, 2 + 4 * num_blocks))

    def w(shape, scale=0.02):
        return jax.random.normal(next(keys), shape, dtype=jnp.float32) * scale

    params = {
        "ln_g": jnp.ones((1, input_dim), jnp.float32),
        "ln_b": jnp.zeros((1, input_dim), jnp.float32),
        "lin_w": w((input_dim, D)),
        "lin_b": jnp.zeros((1, D), jnp.float32),
        "fc_w": w((D, 1)),
        "fc_b": jnp.zeros((1, 1), jnp.float32),
        "blocks": [],
    }
    for _ in range(num_blocks):
        blk = (
            w((D, 3 * D)),                         # 0  in_proj (q|k|v)
            jnp.zeros((1, 3 * D), jnp.float32),    # 1  in_proj bias
            w((D, D)),                             # 2  out_proj weight
            jnp.zeros((1, D), jnp.float32),        # 3  out_proj bias
            jnp.ones((1, D), jnp.float32),         # 4  norm1 gamma
            jnp.zeros((1, D), jnp.float32),        # 5  norm1 beta
            w((D, ff_dim)),                        # 6  linear1
            jnp.zeros((1, ff_dim), jnp.float32),   # 7  linear1 bias
            w((ff_dim, D)),                        # 8  linear2
            jnp.zeros((1, D), jnp.float32),        # 9  linear2 bias
            jnp.ones((1, D), jnp.float32),         # 10 norm2 gamma
            jnp.zeros((1, D), jnp.float32),        # 11 norm2 beta
        )
        params["blocks"].append(blk)
    return params


def pack_params(params, *, num_heads, key_dim):
    """Stack per-block weights along a leading layer dim, fold the attention
    scale into the Q projection, and cast matmul weights to bf16."""
    D = num_heads * key_dim
    scale = 1.0 / (float(key_dim) ** 0.5)
    blocks = params["blocks"]
    bf16 = jnp.bfloat16

    def stack(i):
        return jnp.stack([blk[i] for blk in blocks], axis=0)

    wqkv = stack(0)
    bqkv = stack(1)
    wqkv = wqkv.at[:, :, :D].multiply(scale)      # fold 1/sqrt(head_dim) into Q
    bqkv = bqkv.at[:, :, :D].multiply(scale)

    return {
        "ln_g": params["ln_g"], "ln_b": params["ln_b"],
        "lin_w": params["lin_w"].astype(bf16), "lin_b": params["lin_b"],
        "fc_w": params["fc_w"].T,                 # (1, D) row for VPU reduce
        "fc_b": params["fc_b"],                   # (1, 1)
        "wqkv": wqkv.astype(bf16), "bqkv": bqkv,
        "wo": stack(2).astype(bf16), "bo": stack(3),
        "g1": stack(4), "be1": stack(5),
        "w1": stack(6).astype(bf16), "b1": stack(7),
        "w2": stack(8).astype(bf16), "b2": stack(9),
        "g2": stack(10), "be2": stack(11),
    }


# --------------------------------------------------------------------------
# Pure-JAX f32 reference (same math, unpadded) for a sanity check.
# --------------------------------------------------------------------------
def reference_forward(x, params, *, num_heads, key_dim):
    D = num_heads * key_dim
    B, S, _ = x.shape
    scale = 1.0 / (float(key_dim) ** 0.5)

    h = _layernorm(x, params["ln_g"], params["ln_b"])
    h = h @ params["lin_w"] + params["lin_b"]

    for blk in params["blocks"]:
        (wqkv, bqkv, wo, bo, g1, be1, w1, b1, w2, b2, g2, be2) = blk
        qkv = h @ wqkv + bqkv
        q, k, v = qkv[..., :D], qkv[..., D:2 * D], qkv[..., 2 * D:]

        def split(t):
            return t.reshape(B, S, num_heads, key_dim).transpose(0, 2, 1, 3)

        qh, kh, vh = split(q), split(k), split(v)
        s = jnp.einsum('bhqd,bhkd->bhqk', qh, kh) * scale
        p = jax.nn.softmax(s, axis=-1)
        ctx = jnp.einsum('bhqk,bhkd->bhqd', p, vh)
        ctx = ctx.transpose(0, 2, 1, 3).reshape(B, S, D)
        attn = ctx @ wo + bo
        h = _layernorm(h + attn, g1, be1)
        ff = jnp.maximum(h @ w1 + b1, 0.0)
        h = _layernorm(h + (ff @ w2 + b2), g2, be2)

    hc = h[:, WINDOW_SIZE // 2, :]
    logit = hc @ params["fc_w"] + params["fc_b"]
    return jax.nn.sigmoid(logit)[:, 0]


if __name__ == "__main__":
    B = 2
    input_dim = 16
    num_heads, key_dim, ff_dim, num_blocks = 4, 32, 128, 2
    S = WINDOW_SIZE                                  # 65

    key = jax.random.PRNGKey(0)
    kx, kp = jax.random.split(key)
    x = jax.random.normal(kx, (B, S, input_dim), dtype=jnp.float32)

    params = init_params(kp, input_dim, num_heads, key_dim, ff_dim, num_blocks)
    packed = pack_params(params, num_heads=num_heads, key_dim=key_dim)

    out = transformer_classifier(x, packed, num_heads=num_heads,
                                 key_dim=key_dim, num_blocks=num_blocks)
    out = jax.block_until_ready(out)
    assert out.shape == (B,), out.shape
    assert bool(jnp.all(jnp.isfinite(out)))

    ref = reference_forward(x, params, num_heads=num_heads, key_dim=key_dim)
    max_err = float(jnp.max(jnp.abs(out - ref)))
    assert max_err < 5e-2, max_err

    print("KERNEL_OK")
</pallas_src>

<mosaic_0001>
module attributes {stable_mosaic.version = 11 : i64} {
  func.func @fused_kernel(%arg0: i32, %arg1: memref<80x16xf32, #tpu.memory_space<vmem>>, %arg2: memref<1x16xf32, #tpu.memory_space<vmem>>, %arg3: memref<1x16xf32, #tpu.memory_space<vmem>>, %arg4: memref<16x128xbf16, #tpu.memory_space<vmem>>, %arg5: memref<1x128xf32, #tpu.memory_space<vmem>>, %arg6: memref<1x128xf32, #tpu.memory_space<vmem>>, %arg7: memref<1x1xf32, #tpu.memory_space<vmem>>, %arg8: memref<2x128x384xbf16, #tpu.memory_space<vmem>>, %arg9: memref<2x1x384xf32, #tpu.memory_space<vmem>>, %arg10: memref<2x128x128xbf16, #tpu.memory_space<vmem>>, %arg11: memref<2x1x128xf32, #tpu.memory_space<vmem>>, %arg12: memref<2x1x128xf32, #tpu.memory_space<vmem>>, %arg13: memref<2x1x128xf32, #tpu.memory_space<vmem>>, %arg14: memref<2x128x128xbf16, #tpu.memory_space<vmem>>, %arg15: memref<2x1x128xf32, #tpu.memory_space<vmem>>, %arg16: memref<2x128x128xbf16, #tpu.memory_space<vmem>>, %arg17: memref<2x1x128xf32, #tpu.memory_space<vmem>>, %arg18: memref<2x1x128xf32, #tpu.memory_space<vmem>>, %arg19: memref<2x1x128xf32, #tpu.memory_space<vmem>>, %arg20: memref<1x1x128xf32, #tpu.memory_space<vmem>>, %arg21: memref<80x128xf32, #tpu.memory_space<vmem>>, %arg22: memref<80x384xf32, #tpu.memory_space<vmem>>, %arg23: memref<80x128xf32, #tpu.memory_space<vmem>>) attributes {dimension_semantics = [#tpu.dimension_semantics<parallel>], iteration_bounds = array<i64: 2>, scalar_prefetch = 0 : i64, scratch_operands = 3 : i64, tpu.core_type = #tpu.core_type<tc>, window_params = [{transform_indices = @transform_0, window_bounds = array<i64: 80, 16>}, {pipeline_mode = #tpu.pipeline_mode<synchronous>, transform_indices = @transform_1, window_bounds = array<i64: 1, 16>}, {pipeline_mode = #tpu.pipeline_mode<synchronous>, transform_indices = @transform_2, window_bounds = array<i64: 1, 16>}, {pipeline_mode = #tpu.pipeline_mode<synchronous>, transform_indices = @transform_3, window_bounds = array<i64: 16, 128>}, {pipeline_mode = #tpu.pipeline_mode<synchronous>, transform_indices = @transform_4, window_bounds = array<i64: 1, 128>}, {pipeline_mode = #tpu.pipeline_mode<synchronous>, transform_indices = @transform_5, window_bounds = array<i64: 1, 128>}, {pipeline_mode = #tpu.pipeline_mode<synchronous>, transform_indices = @transform_6, window_bounds = array<i64: 1, 1>}, {pipeline_mode = #tpu.pipeline_mode<synchronous>, transform_indices = @transform_7, window_bounds = array<i64: 2, 128, 384>}, {pipeline_mode = #tpu.pipeline_mode<synchronous>, transform_indices = @transform_8, window_bounds = array<i64: 2, 1, 384>}, {pipeline_mode = #tpu.pipeline_mode<synchronous>, transform_indices = @transform_9, window_bounds = array<i64: 2, 128, 128>}, {pipeline_mode = #tpu.pipeline_mode<synchronous>, transform_indices = @transform_10, window_bounds = array<i64: 2, 1, 128>}, {pipeline_mode = #tpu.pipeline_mode<synchronous>, transform_indices = @transform_11, window_bounds = array<i64: 2, 1, 128>}, {pipeline_mode = #tpu.pipeline_mode<synchronous>, transform_indices = @transform_12, window_bounds = array<i64: 2, 1, 128>}, {pipeline_mode = #tpu.pipeline_mode<synchronous>, transform_indices = @transform_13, window_bounds = array<i64: 2, 128, 128>}, {pipeline_mode = #tpu.pipeline_mode<synchronous>, transform_indices = @transform_14, window_bounds = array<i64: 2, 1, 128>}, {pipeline_mode = #tpu.pipeline_mode<synchronous>, transform_indices = @transform_15, window_bounds = array<i64: 2, 128, 128>}, {pipeline_mode = #tpu.pipeline_mode<synchronous>, transform_indices = @transform_16, window_bounds = array<i64: 2, 1, 128>}, {pipeline_mode = #tpu.pipeline_mode<synchronous>, transform_indices = @transform_17, window_bounds = array<i64: 2, 1, 128>}, {pipeline_mode = #tpu.pipeline_mode<synchronous>, transform_indices = @transform_18, window_bounds = array<i64: 2, 1, 128>}, {transform_indices = @transform_19, window_bounds = array<i64: 1, 1, 128>}]} {
    %c0 = arith.constant 0 : index
    %c0_0 = arith.constant 0 : index
    %0 = vector.load %arg1[%c0, %c0_0] : memref<80x16xf32, #tpu.memory_space<vmem>>, vector<80x16xf32>
    %c0_1 = arith.constant 0 : index
    %c0_2 = arith.constant 0 : index
    %1 = vector.load %arg2[%c0_1, %c0_2] : memref<1x16xf32, #tpu.memory_space<vmem>>, vector<1x16xf32>
    %c0_3 = arith.constant 0 : index
    %c0_4 = arith.constant 0 : index
    %2 = vector.load %arg3[%c0_3, %c0_4] : memref<1x16xf32, #tpu.memory_space<vmem>>, vector<1x16xf32>
    %cst = arith.constant dense<0.000000e+00> : vector<80xf32>
    %3 = vector.multi_reduction <add>, %0, %cst [1] : vector<80x16xf32> to vector<80xf32>
    %4 = vector.shape_cast %3 : vector<80xf32> to vector<80x1xf32>
    %cst_5 = arith.constant 1.600000e+01 : f32
    %5 = vector.broadcast %cst_5 : f32 to vector<80x1xf32>
    %6 = arith.divf %4, %5 : vector<80x1xf32>
    %7 = vector.broadcast %6 : vector<80x1xf32> to vector<80x16xf32>
    %8 = arith.subf %0, %7 : vector<80x16xf32>
    %9 = arith.mulf %8, %8 : vector<80x16xf32>
    %cst_6 = arith.constant dense<0.000000e+00> : vector<80xf32>
    %10 = vector.multi_reduction <add>, %9, %cst_6 [1] : vector<80x16xf32> to vector<80xf32>
    %11 = vector.shape_cast %10 : vector<80xf32> to vector<80x1xf32>
    %cst_7 = arith.constant 1.600000e+01 : f32
    %12 = vector.broadcast %cst_7 : f32 to vector<80x1xf32>
    %13 = arith.divf %11, %12 : vector<80x1xf32>
    %14 = vector.broadcast %6 : vector<80x1xf32> to vector<80x16xf32>
    %15 = arith.subf %0, %14 : vector<80x16xf32>
    %cst_8 = arith.constant 9.99999974E-6 : f32
    %16 = vector.broadcast %cst_8 : f32 to vector<80x1xf32>
    %17 = arith.addf %13, %16 : vector<80x1xf32>
    %18 = math.rsqrt %17 : vector<80x1xf32>
    %19 = vector.broadcast %18 : vector<80x1xf32> to vector<80x16xf32>
    %20 = arith.mulf %15, %19 : vector<80x16xf32>
    %21 = vector.broadcast %1 : vector<1x16xf32> to vector<80x16xf32>
    %22 = arith.mulf %20, %21 : vector<80x16xf32>
    %23 = vector.broadcast %2 : vector<1x16xf32> to vector<80x16xf32>
    %24 = arith.addf %22, %23 : vector<80x16xf32>
    %25 = arith.truncf %24 : vector<80x16xf32> to vector<80x16xbf16>
    %c0_9 = arith.constant 0 : index
    %c0_10 = arith.constant 0 : index
    %26 = vector.load %arg4[%c0_9, %c0_10] : memref<16x128xbf16, #tpu.memory_space<vmem>>, vector<16x128xbf16>
    %cst_11 = arith.constant dense<0.000000e+00> : vector<80x128xf32>
    %27 = tpu.matmul %25, %26, %cst_11 {dimension_numbers = #tpu.dot_dimension_numbers<[1], [0], [0], [1], [0, 0, 1, 1], [], []>} : vector<80x16xbf16>, vector<16x128xbf16>, vector<80x128xf32> -> vector<80x128xf32>
    %c0_12 = arith.constant 0 : index
    %c0_13 = arith.constant 0 : index
    %28 = vector.load %arg5[%c0_12, %c0_13] : memref<1x128xf32, #tpu.memory_space<vmem>>, vector<1x128xf32>
    %29 = vector.broadcast %28 : vector<1x128xf32> to vector<80x128xf32>
    %30 = arith.addf %27, %29 : vector<80x128xf32>
    %c0_14 = arith.constant 0 : index
    %c0_15 = arith.constant 0 : index
    %31 = vector.load %arg21[%c0_14, %c0_15] : memref<80x128xf32, #tpu.memory_space<vmem>>, vector<80x128xf32>
    tpu.vector_store %arg21[%c0_14, %c0_15], %30 {strides = array<i32>} : memref<80x128xf32, #tpu.memory_space<vmem>>, vector<80x128xf32>,
    %32 = tpu.iota {dimensions = array<i32: 1>} : vector<1x80xi32>
    %c65_i32 = arith.constant 65 : i32
    %33 = vector.broadcast %c65_i32 : i32 to vector<1x80xi32>
    %34 = arith.cmpi slt, %32, %33 : vector<1x80xi32>
    %cst_16 = arith.constant 0.000000e+00 : f32
    %cst_17 = arith.constant -1.000000e+30 : f32
    %35 = vector.broadcast %cst_16 : f32 to vector<1x80xf32>
    %36 = vector.broadcast %cst_17 : f32 to vector<1x80xf32>
    %37 = arith.select %34, %35, %36 : vector<1x80xi1>, vector<1x80xf32>
    %38 = vector.shape_cast %37 : vector<1x80xf32> to vector<1x80xf32>
    %39 = vector.broadcast %38 : vector<1x80xf32> to vector<80x80xf32>
    %c0_18 = arith.constant 0 : index
    %c0_19 = arith.constant 0 : index
    %40 = vector.load %arg21[%c0_18, %c0_19] : memref<80x128xf32, #tpu.memory_space<vmem>>, vector<80x128xf32>
    %41 = arith.truncf %40 : vector<80x128xf32> to vector<80x128xbf16>
    %c0_20 = arith.constant 0 : index
    %c0_21 = arith.constant 0 : index
    %c0_22 = arith.constant 0 : index
    %42 = vector.load %arg8[%c0_20, %c0_21, %c0_22] : memref<2x128x384xbf16, #tpu.memory_space<vmem>>, vector<1x128x384xbf16>
    %43 = vector.shape_cast %42 : vector<1x128x384xbf16> to vector<128x384xbf16>
    %cst_23 = arith.constant dense<0.000000e+00> : vector<80x384xf32>
    %44 = tpu.matmul %41, %43, %cst_23 {dimension_numbers = #tpu.dot_dimension_numbers<[1], [0], [0], [1], [0, 0, 1, 1], [], []>} : vector<80x128xbf16>, vector<128x384xbf16>, vector<80x384xf32> -> vector<80x384xf32>
    %c0_24 = arith.constant 0 : index
    %c0_25 = arith.constant 0 : index
    %c0_26 = arith.constant 0 : index
    %45 = vector.load %arg9[%c0_24, %c0_25, %c0_26] : memref<2x1x384xf32, #tpu.memory_space<vmem>>, vector<1x1x384xf32>
    %46 = vector.shape_cast %45 : vector<1x1x384xf32> to vector<1x384xf32>
    %47 = vector.broadcast %46 : vector<1x384xf32> to vector<80x384xf32>
    %48 = arith.addf %44, %47 : vector<80x384xf32>
    %c0_27 = arith.constant 0 : index
    %c0_28 = arith.constant 0 : index
    %49 = vector.load %arg22[%c0_27, %c0_28] : memref<80x384xf32, #tpu.memory_space<vmem>>, vector<80x384xf32>
    tpu.vector_store %arg22[%c0_27, %c0_28], %48 {strides = array<i32>} : memref<80x384xf32, #tpu.memory_space<vmem>>, vector<80x384xf32>,
    %c0_29 = arith.constant 0 : index
    %c0_30 = arith.constant 0 : index
    %50 = vector.load %arg22[%c0_29, %c0_30] : memref<80x384xf32, #tpu.memory_space<vmem>>, vector<80x128xf32>
    %51 = arith.truncf %50 : vector<80x128xf32> to vector<80x128xbf16>
    %c0_31 = arith.constant 0 : index
    %c128 = arith.constant 128 : index
    %52 = vector.load %arg22[%c0_31, %c128] : memref<80x384xf32, #tpu.memory_space<vmem>>, vector<80x128xf32>
    %53 = tpu.transpose %52, [1, 0] : vector<80x128xf32> -> vector<128x80xf32>
    %54 = arith.truncf %53 : vector<128x80xf32> to vector<128x80xbf16>
    %c0_32 = arith.constant 0 : index
    %c256 = arith.constant 256 : index
    %55 = vector.load %arg22[%c0_32, %c256] : memref<80x384xf32, #tpu.memory_space<vmem>>, vector<80x128xf32>
    %56 = arith.truncf %55 : vector<80x128xf32> to vector<80x128xbf16>
    %57 = vector.extract_strided_slice %51 {offsets = [0, 0], sizes = [80, 32], strides = [1, 1]} : vector<80x128xbf16> to vector<80x32xbf16>
    %58 = vector.extract_strided_slice %54 {offsets = [0, 0], sizes = [32, 80], strides = [1, 1]} : vector<128x80xbf16> to vector<32x80xbf16>
    %cst_33 = arith.constant dense<0.000000e+00> : vector<80x80xf32>
    %59 = tpu.matmul %57, %58, %cst_33 {dimension_numbers = #tpu.dot_dimension_numbers<[1], [0], [0], [1], [0, 0, 1, 1], [], []>} : vector<80x32xbf16>, vector<32x80xbf16>, vector<80x80xf32> -> vector<80x80xf32>
    %60 = arith.addf %59, %39 : vector<80x80xf32>
    %cst_34 = arith.constant dense<0xFF800000> : vector<80xf32>
    %61 = vector.multi_reduction <maximumf>, %60, %cst_34 [1] : vector<80x80xf32> to vector<80xf32>
    %62 = vector.shape_cast %61 : vector<80xf32> to vector<80x1xf32>
    %63 = vector.broadcast %62 : vector<80x1xf32> to vector<80x80xf32>
    %64 = arith.subf %60, %63 : vector<80x80xf32>
    %65 = math.exp %64 : vector<80x80xf32>
    %cst_35 = arith.constant dense<0.000000e+00> : vector<80xf32>
    %66 = vector.multi_reduction <add>, %65, %cst_35 [1] : vector<80x80xf32> to vector<80xf32>
    %67 = vector.shape_cast %66 : vector<80xf32> to vector<80x1xf32>
    %68 = tpu.reciprocal %67 {approx = true} : vector<80x1xf32> -> vector<80x1xf32>
    %69 = vector.broadcast %68 : vector<80x1xf32> to vector<80x80xf32>
    %70 = arith.mulf %65, %69 : vector<80x80xf32>
    %71 = arith.truncf %70 : vector<80x80xf32> to vector<80x80xbf16>
    %72 = vector.extract_strided_slice %56 {offsets = [0, 0], sizes = [80, 32], strides = [1, 1]} : vector<80x128xbf16> to vector<80x32xbf16>
    %cst_36 = arith.constant dense<0.000000e+00> : vector<80x32xf32>
    %73 = tpu.matmul %71, %72, %cst_36 {dimension_numbers = #tpu.dot_dimension_numbers<[1], [0], [0], [1], [0, 0, 1, 1], [], []>} : vector<80x80xbf16>, vector<80x32xbf16>, vector<80x32xf32> -> vector<80x32xf32>
    %c0_37 = arith.constant 0 : index
    %c0_38 = arith.constant 0 : index
    %74 = vector.load %arg23[%c0_37, %c0_38] : memref<80x128xf32, #tpu.memory_space<vmem>>, vector<80x32xf32>
    tpu.vector_store %arg23[%c0_37, %c0_38], %73 {strides = array<i32>} : memref<80x128xf32, #tpu.memory_space<vmem>>, vector<80x32xf32>,
    %75 = vector.extract_strided_slice %51 {offsets = [0, 32], sizes = [80, 32], strides = [1, 1]} : vector<80x128xbf16> to vector<80x32xbf16>
    %76 = vector.extract_strided_slice %54 {offsets = [32, 0], sizes = [32, 80], strides = [1, 1]} : vector<128x80xbf16> to vector<32x80xbf16>
    %cst_39 = arith.constant dense<0.000000e+00> : vector<80x80xf32>
    %77 = tpu.matmul %75, %76, %cst_39 {dimension_numbers = #tpu.dot_dimension_numbers<[1], [0], [0], [1], [0, 0, 1, 1], [], []>} : vector<80x32xbf16>, vector<32x80xbf16>, vector<80x80xf32> -> vector<80x80xf32>
    %78 = arith.addf %77, %39 : vector<80x80xf32>
    %cst_40 = arith.constant dense<0xFF800000> : vector<80xf32>
    %79 = vector.multi_reduction <maximumf>, %78, %cst_40 [1] : vector<80x80xf32> to vector<80xf32>
    %80 = vector.shape_cast %79 : vector<80xf32> to vector<80x1xf32>
    %81 = vector.broadcast %80 : vector<80x1xf32> to vector<80x80xf32>
    %82 = arith.subf %78, %81 : vector<80x80xf32>
    %83 = math.exp %82 : vector<80x80xf32>
    %cst_41 = arith.constant dense<0.000000e+00> : vector<80xf32>
    %84 = vector.multi_reduction <add>, %83, %cst_41 [1] : vector<80x80xf32> to vector<80xf32>
    %85 = vector.shape_cast %84 : vector<80xf32> to vector<80x1xf32>
    %86 = tpu.reciprocal %85 {approx = true} : vector<80x1xf32> -> vector<80x1xf32>
    %87 = vector.broadcast %86 : vector<80x1xf32> to vector<80x80xf32>
    %88 = arith.mulf %83, %87 : vector<80x80xf32>
    %89 = arith.truncf %88 : vector<80x80xf32> to vector<80x80xbf16>
    %90 = vector.extract_strided_slice %56 {offsets = [0, 32], sizes = [80, 32], strides = [1, 1]} : vector<80x128xbf16> to vector<80x32xbf16>
    %cst_42 = arith.constant dense<0.000000e+00> : vector<80x32xf32>
    %91 = tpu.matmul %89, %90, %cst_42 {dimension_numbers = #tpu.dot_dimension_numbers<[1], [0], [0], [1], [0, 0, 1, 1], [], []>} : vector<80x80xbf16>, vector<80x32xbf16>, vector<80x32xf32> -> vector<80x32xf32>
    %c0_43 = arith.constant 0 : index
    %c32 = arith.constant 32 : index
    %92 = vector.load %arg23[%c0_43, %c32] : memref<80x128xf32, #tpu.memory_space<vmem>>, vector<80x32xf32>
    tpu.vector_store %arg23[%c0_43, %c32], %91 {strides = array<i32>} : memref<80x128xf32, #tpu.memory_space<vmem>>, vector<80x32xf32>,
    %93 = vector.extract_strided_slice %51 {offsets = [0, 64], sizes = [80, 32], strides = [1, 1]} : vector<80x128xbf16> to vector<80x32xbf16>
    %94 = vector.extract_strided_slice %54 {offsets = [64, 0], sizes = [32, 80], strides = [1, 1]} : vector<128x80xbf16> to vector<32x80xbf16>
    %cst_44 = arith.constant dense<0.000000e+00> : vector<80x80xf32>
    %95 = tpu.matmul %93, %94, %cst_44 {dimension_numbers = #tpu.dot_dimension_numbers<[1], [0], [0], [1], [0, 0, 1, 1], [], []>} : vector<80x32xbf16>, vector<32x80xbf16>, vector<80x80xf32> -> vector<80x80xf32>
    %96 = arith.addf %95, %39 : vector<80x80xf32>
    %cst_45 = arith.constant dense<0xFF800000> : vector<80xf32>
    %97 = vector.multi_reduction <maximumf>, %96, %cst_45 [1] : vector<80x80xf32> to vector<80xf32>
    %98 = vector.shape_cast %97 : vector<80xf32> to vector<80x1xf32>
    %99 = vector.broadcast %98 : vector<80x1xf32> to vector<80x80xf32>
    %100 = arith.subf %96, %99 : vector<80x80xf32>
    %101 = math.exp %100 : vector<80x80xf32>
    %cst_46 = arith.constant dense<0.000000e+00> : vector<80xf32>
    %102 = vector.multi_reduction <add>, %101, %cst_46 [1] : vector<80x80xf32> to vector<80xf32>
    %103 = vector.shape_cast %102 : vector<80xf32> to vector<80x1xf32>
    %104 = tpu.reciprocal %103 {approx = true} : vector<80x1xf32> -> vector<80x1xf32>
    %105 = vector.broadcast %104 : vector<80x1xf32> to vector<80x80xf32>
    %106 = arith.mulf %101, %105 : vector<80x80xf32>
    %107 = arith.truncf %106 : vector<80x80xf32> to vector<80x80xbf16>
    %108 = vector.extract_strided_slice %56 {offsets = [0, 64], sizes = [80, 32], strides = [1, 1]} : vector<80x128xbf16> to vector<80x32xbf16>
    %cst_47 = arith.constant dense<0.000000e+00> : vector<80x32xf32>
    %109 = tpu.matmul %107, %108, %cst_47 {dimension_numbers = #tpu.dot_dimension_numbers<[1], [0], [0], [1], [0, 0, 1, 1], [], []>} : vector<80x80xbf16>, vector<80x32xbf16>, vector<80x32xf32> -> vector<80x32xf32>
    %c0_48 = arith.constant 0 : index
    %c64 = arith.constant 64 : index
    %110 = vector.load %arg23[%c0_48, %c64] : memref<80x128xf32, #tpu.memory_space<vmem>>, vector<80x32xf32>
    tpu.vector_store %arg23[%c0_48, %c64], %109 {strides = array<i32>} : memref<80x128xf32, #tpu.memory_space<vmem>>, vector<80x32xf32>,
    %111 = vector.extract_strided_slice %51 {offsets = [0, 96], sizes = [80, 32], strides = [1, 1]} : vector<80x128xbf16> to vector<80x32xbf16>
    %112 = vector.extract_strided_slice %54 {offsets = [96, 0], sizes = [32, 80], strides = [1, 1]} : vector<128x80xbf16> to vector<32x80xbf16>
    %cst_49 = arith.constant dense<0.000000e+00> : vector<80x80xf32>
    %113 = tpu.matmul %111, %112, %cst_49 {dimension_numbers = #tpu.dot_dimension_numbers<[1], [0], [0], [1], [0, 0, 1, 1], [], []>} : vector<80x32xbf16>, vector<32x80xbf16>, vector<80x80xf32> -> vector<80x80xf32>
    %114 = arith.addf %113, %39 : vector<80x80xf32>
    %cst_50 = arith.constant dense<0xFF800000> : vector<80xf32>
    %115 = vector.multi_reduction <maximumf>, %114, %cst_50 [1] : vector<80x80xf32> to vector<80xf32>
    %116 = vector.shape_cast %115 : vector<80xf32> to vector<80x1xf32>
    %117 = vector.broadcast %116 : vector<80x1xf32> to vector<80x80xf32>
    %118 = arith.subf %114, %117 : vector<80x80xf32>
    %119 = math.exp %118 : vector<80x80xf32>
    %cst_51 = arith.constant dense<0.000000e+00> : vector<80xf32>
    %120 = vector.multi_reduction <add>, %119, %cst_51 [1] : vector<80x80xf32> to vector<80xf32>
    %121 = vector.shape_cast %120 : vector<80xf32> to vector<80x1xf32>
    %122 = tpu.reciprocal %121 {approx = true} : vector<80x1xf32> -> vector<80x1xf32>
    %123 = vector.broadcast %122 : vector<80x1xf32> to vector<80x80xf32>
    %124 = arith.mulf %119, %123 : vector<80x80xf32>
    %125 = arith.truncf %124 : vector<80x80xf32> to vector<80x80xbf16>
    %126 = vector.extract_strided_slice %56 {offsets = [0, 96], sizes = [80, 32], strides = [1, 1]} : vector<80x128xbf16> to vector<80x32xbf16>
    %cst_52 = arith.constant dense<0.000000e+00> : vector<80x32xf32>
    %127 = tpu.matmul %125, %126, %cst_52 {dimension_numbers = #tpu.dot_dimension_numbers<[1], [0], [0], [1], [0, 0, 1, 1], [], []>} : vector<80x80xbf16>, vector<80x32xbf16>, vector<80x32xf32> -> vector<80x32xf32>
    %c0_53 = arith.constant 0 : index
    %c96 = arith.constant 96 : index
    %128 = vector.load %arg23[%c0_53, %c96] : memref<80x128xf32, #tpu.memory_space<vmem>>, vector<80x32xf32>
    tpu.vector_store %arg23[%c0_53, %c96], %127 {strides = array<i32>} : memref<80x128xf32, #tpu.memory_space<vmem>>, vector<80x32xf32>,
    %c0_54 = arith.constant 0 : index
    %c0_55 = arith.constant 0 : index
    %129 = vector.load %arg23[%c0_54, %c0_55] : memref<80x128xf32, #tpu.memory_space<vmem>>, vector<80x128xf32>
    %130 = arith.truncf %129 : vector<80x128xf32> to vector<80x128xbf16>
    %c0_56 = arith.constant 0 : index
    %c0_57 = arith.constant 0 : index
    %c0_58 = arith.constant 0 : index
    %131 = vector.load %arg10[%c0_56, %c0_57, %c0_58] : memref<2x128x128xbf16, #tpu.memory_space<vmem>>, vector<1x128x128xbf16>
    %132 = vector.shape_cast %131 : vector<1x128x128xbf16> to vector<128x128xbf16>
    %cst_59 = arith.constant dense<0.000000e+00> : vector<80x128xf32>
    %133 = tpu.matmul %130, %132, %cst_59 {dimension_numbers = #tpu.dot_dimension_numbers<[1], [0], [0], [1], [0, 0, 1, 1], [], []>} : vector<80x128xbf16>, vector<128x128xbf16>, vector<80x128xf32> -> vector<80x128xf32>
    %c0_60 = arith.constant 0 : index
    %c0_61 = arith.constant 0 : index
    %c0_62 = arith.constant 0 : index
    %134 = vector.load %arg11[%c0_60, %c0_61, %c0_62] : memref<2x1x128xf32, #tpu.memory_space<vmem>>, vector<1x1x128xf32>
    %135 = vector.shape_cast %134 : vector<1x1x128xf32> to vector<1x128xf32>
    %136 = vector.broadcast %135 : vector<1x128xf32> to vector<80x128xf32>
    %137 = arith.addf %133, %136 : vector<80x128xf32>
    %c0_63 = arith.constant 0 : index
    %c0_64 = arith.constant 0 : index
    %138 = vector.load %arg21[%c0_63, %c0_64] : memref<80x128xf32, #tpu.memory_space<vmem>>, vector<80x128xf32>
    %139 = arith.addf %138, %137 : vector<80x128xf32>
    %c0_65 = arith.constant 0 : index
    %c0_66 = arith.constant 0 : index
    %c0_67 = arith.constant 0 : index
    %140 = vector.load %arg12[%c0_65, %c0_66, %c0_67] : memref<2x1x128xf32, #tpu.memory_space<vmem>>, vector<1x1x128xf32>
    %141 = vector.shape_cast %140 : vector<1x1x128xf32> to vector<1x128xf32>
    %c0_68 = arith.constant 0 : index
    %c0_69 = arith.constant 0 : index
    %c0_70 = arith.constant 0 : index
    %142 = vector.load %arg13[%c0_68, %c0_69, %c0_70] : memref<2x1x128xf32, #tpu.memory_space<vmem>>, vector<1x1x128xf32>
    %143 = vector.shape_cast %142 : vector<1x1x128xf32> to vector<1x128xf32>
    %cst_71 = arith.constant dense<0.000000e+00> : vector<80xf32>
    %144 = vector.multi_reduction <add>, %139, %cst_71 [1] : vector<80x128xf32> to vector<80xf32>
    %145 = vector.shape_cast %144 : vector<80xf32> to vector<80x1xf32>
    %cst_72 = arith.constant 1.280000e+02 : f32
    %146 = vector.broadcast %cst_72 : f32 to vector<80x1xf32>
    %147 = arith.divf %145, %146 : vector<80x1xf32>
    %148 = vector.broadcast %147 : vector<80x1xf32> to vector<80x128xf32>
    %149 = arith.subf %139, %148 : vector<80x128xf32>
    %150 = arith.mulf %149, %149 : vector<80x128xf32>
    %cst_73 = arith.constant dense<0.000000e+00> : vector<80xf32>
    %151 = vector.multi_reduction <add>, %150, %cst_73 [1] : vector<80x128xf32> to vector<80xf32>
    %152 = vector.shape_cast %151 : vector<80xf32> to vector<80x1xf32>
    %cst_74 = arith.constant 1.280000e+02 : f32
    %153 = vector.broadcast %cst_74 : f32 to vector<80x1xf32>
    %154 = arith.divf %152, %153 : vector<80x1xf32>
    %155 = vector.broadcast %147 : vector<80x1xf32> to vector<80x128xf32>
    %156 = arith.subf %139, %155 : vector<80x128xf32>
    %cst_75 = arith.constant 9.99999974E-6 : f32
    %157 = vector.broadcast %cst_75 : f32 to vector<80x1xf32>
    %158 = arith.addf %154, %157 : vector<80x1xf32>
    %159 = math.rsqrt %158 : vector<80x1xf32>
    %160 = vector.broadcast %159 : vector<80x1xf32> to vector<80x128xf32>
    %161 = arith.mulf %156, %160 : vector<80x128xf32>
    %162 = vector.broadcast %141 : vector<1x128xf32> to vector<80x128xf32>
    %163 = arith.mulf %161, %162 : vector<80x128xf32>
    %164 = vector.broadcast %143 : vector<1x128xf32> to vector<80x128xf32>
    %165 = arith.addf %163, %164 : vector<80x128xf32>
    %166 = arith.truncf %165 : vector<80x128xf32> to vector<80x128xbf16>
    %c0_76 = arith.constant 0 : index
    %c0_77 = arith.constant 0 : index
    %c0_78 = arith.constant 0 : index
    %167 = vector.load %arg14[%c0_76, %c0_77, %c0_78] : memref<2x128x128xbf16, #tpu.memory_space<vmem>>, vector<1x128x128xbf16>
    %168 = vector.shape_cast %167 : vector<1x128x128xbf16> to vector<128x128xbf16>
    %cst_79 = arith.constant dense<0.000000e+00> : vector<80x128xf32>
    %169 = tpu.matmul %166, %168, %cst_79 {dimension_numbers = #tpu.dot_dimension_numbers<[1], [0], [0], [1], [0, 0, 1, 1], [], []>} : vector<80x128xbf16>, vector<128x128xbf16>, vector<80x128xf32> -> vector<80x128xf32>
    %c0_80 = arith.constant 0 : index
    %c0_81 = arith.constant 0 : index
    %c0_82 = arith.constant 0 : index
    %170 = vector.load %arg15[%c0_80, %c0_81, %c0_82] : memref<2x1x128xf32, #tpu.memory_space<vmem>>, vector<1x1x128xf32>
    %171 = vector.shape_cast %170 : vector<1x1x128xf32> to vector<1x128xf32>
    %172 = vector.broadcast %171 : vector<1x128xf32> to vector<80x128xf32>
    %173 = arith.addf %169, %172 : vector<80x128xf32>
    %cst_83 = arith.constant 0.000000e+00 : f32
    %174 = vector.broadcast %cst_83 : f32 to vector<80x128xf32>
    %175 = arith.maximumf %173, %174 : vector<80x128xf32>
    %176 = arith.truncf %175 : vector<80x128xf32> to vector<80x128xbf16>
    %c0_84 = arith.constant 0 : index
    %c0_85 = arith.constant 0 : index
    %c0_86 = arith.constant 0 : index
    %177 = vector.load %arg16[%c0_84, %c0_85, %c0_86] : memref<2x128x128xbf16, #tpu.memory_space<vmem>>, vector<1x128x128xbf16>
    %178 = vector.shape_cast %177 : vector<1x128x128xbf16> to vector<128x128xbf16>
    %cst_87 = arith.constant dense<0.000000e+00> : vector<80x128xf32>
    %179 = tpu.matmul %176, %178, %cst_87 {dimension_numbers = #tpu.dot_dimension_numbers<[1], [0], [0], [1], [0, 0, 1, 1], [], []>} : vector<80x128xbf16>, vector<128x128xbf16>, vector<80x128xf32> -> vector<80x128xf32>
    %c0_88 = arith.constant 0 : index
    %c0_89 = arith.constant 0 : index
    %c0_90 = arith.constant 0 : index
    %180 = vector.load %arg17[%c0_88, %c0_89, %c0_90] : memref<2x1x128xf32, #tpu.memory_space<vmem>>, vector<1x1x128xf32>
    %181 = vector.shape_cast %180 : vector<1x1x128xf32> to vector<1x128xf32>
    %182 = vector.broadcast %181 : vector<1x128xf32> to vector<80x128xf32>
    %183 = arith.addf %179, %182 : vector<80x128xf32>
    %184 = arith.addf %165, %183 : vector<80x128xf32>
    %c0_91 = arith.constant 0 : index
    %c0_92 = arith.constant 0 : index
    %c0_93 = arith.constant 0 : index
    %185 = vector.load %arg18[%c0_91, %c0_92, %c0_93] : memref<2x1x128xf32, #tpu.memory_space<vmem>>, vector<1x1x128xf32>
    %186 = vector.shape_cast %185 : vector<1x1x128xf32> to vector<1x128xf32>
    %c0_94 = arith.constant 0 : index
    %c0_95 = arith.constant 0 : index
    %c0_96 = arith.constant 0 : index
    %187 = vector.load %arg19[%c0_94, %c0_95, %c0_96] : memref<2x1x128xf32, #tpu.memory_space<vmem>>, vector<1x1x128xf32>
    %188 = vector.shape_cast %187 : vector<1x1x128xf32> to vector<1x128xf32>
    %cst_97 = arith.constant dense<0.000000e+00> : vector<80xf32>
    %189 = vector.multi_reduction <add>, %184, %cst_97 [1] : vector<80x128xf32> to vector<80xf32>
    %190 = vector.shape_cast %189 : vector<80xf32> to vector<80x1xf32>
    %cst_98 = arith.constant 1.280000e+02 : f32
    %191 = vector.broadcast %cst_98 : f32 to vector<80x1xf32>
    %192 = arith.divf %190, %191 : vector<80x1xf32>
    %193 = vector.broadcast %192 : vector<80x1xf32> to vector<80x128xf32>
    %194 = arith.subf %184, %193 : vector<80x128xf32>
    %195 = arith.mulf %194, %194 : vector<80x128xf32>
    %cst_99 = arith.constant dense<0.000000e+00> : vector<80xf32>
    %196 = vector.multi_reduction <add>, %195, %cst_99 [1] : vector<80x128xf32> to vector<80xf32>
    %197 = vector.shape_cast %196 : vector<80xf32> to vector<80x1xf32>
    %cst_100 = arith.constant 1.280000e+02 : f32
    %198 = vector.broadcast %cst_100 : f32 to vector<80x1xf32>
    %199 = arith.divf %197, %198 : vector<80x1xf32>
    %200 = vector.broadcast %192 : vector<80x1xf32> to vector<80x128xf32>
    %201 = arith.subf %184, %200 : vector<80x128xf32>
    %cst_101 = arith.constant 9.99999974E-6 : f32
    %202 = vector.broadcast %cst_101 : f32 to vector<80x1xf32>
    %203 = arith.addf %199, %202 : vector<80x1xf32>
    %204 = math.rsqrt %203 : vector<80x1xf32>
    %205 = vector.broadcast %204 : vector<80x1xf32> to vector<80x128xf32>
    %206 = arith.mulf %201, %205 : vector<80x128xf32>
    %207 = vector.broadcast %186 : vector<1x128xf32> to vector<80x128xf32>
    %208 = arith.mulf %206, %207 : vector<80x128xf32>
    %209 = vector.broadcast %188 : vector<1x128xf32> to vector<80x128xf32>
    %210 = arith.addf %208, %209 : vector<80x128xf32>
    %c0_102 = arith.constant 0 : index
    %c0_103 = arith.constant 0 : index
    %211 = vector.load %arg21[%c0_102, %c0_103] : memref<80x128xf32, #tpu.memory_space<vmem>>, vector<80x128xf32>
    tpu.vector_store %arg21[%c0_102, %c0_103], %210 {strides = array<i32>} : memref<80x128xf32, #tpu.memory_space<vmem>>, vector<80x128xf32>,
    %c0_104 = arith.constant 0 : index
    %c0_105 = arith.constant 0 : index
    %212 = vector.load %arg21[%c0_104, %c0_105] : memref<80x128xf32, #tpu.memory_space<vmem>>, vector<80x128xf32>
    %213 = arith.truncf %212 : vector<80x128xf32> to vector<80x128xbf16>
    %c1 = arith.constant 1 : index
    %c0_106 = arith.constant 0 : index
    %c0_107 = arith.constant 0 : index
    %214 = vector.load %arg8[%c1, %c0_106, %c0_107] : memref<2x128x384xbf16, #tpu.memory_space<vmem>>, vector<1x128x384xbf16>
    %215 = vector.shape_cast %214 : vector<1x128x384xbf16> to vector<128x384xbf16>
    %cst_108 = arith.constant dense<0.000000e+00> : vector<80x384xf32>
    %216 = tpu.matmul %213, %215, %cst_108 {dimension_numbers = #tpu.dot_dimension_numbers<[1], [0], [0], [1], [0, 0, 1, 1], [], []>} : vector<80x128xbf16>, vector<128x384xbf16>, vector<80x384xf32> -> vector<80x384xf32>
    %c1_109 = arith.constant 1 : index
    %c0_110 = arith.constant 0 : index
    %c0_111 = arith.constant 0 : index
    %217 = vector.load %arg9[%c1_109, %c0_110, %c0_111] : memref<2x1x384xf32, #tpu.memory_space<vmem>>, vector<1x1x384xf32>
    %218 = vector.shape_cast %217 : vector<1x1x384xf32> to vector<1x384xf32>
    %219 = vector.broadcast %218 : vector<1x384xf32> to vector<80x384xf32>
    %220 = arith.addf %216, %219 : vector<80x384xf32>
    %c0_112 = arith.constant 0 : index
    %c0_113 = arith.constant 0 : index
    %221 = vector.load %arg22[%c0_112, %c0_113] : memref<80x384xf32, #tpu.memory_space<vmem>>, vector<80x384xf32>
    tpu.vector_store %arg22[%c0_112, %c0_113], %220 {strides = array<i32>} : memref<80x384xf32, #tpu.memory_space<vmem>>, vector<80x384xf32>,
    %c0_114 = arith.constant 0 : index
    %c0_115 = arith.constant 0 : index
    %222 = vector.load %arg22[%c0_114, %c0_115] : memref<80x384xf32, #tpu.memory_space<vmem>>, vector<80x128xf32>
    %223 = arith.truncf %222 : vector<80x128xf32> to vector<80x128xbf16>
    %c0_116 = arith.constant 0 : index
    %c128_117 = arith.constant 128 : index
    %224 = vector.load %arg22[%c0_116, %c128_117] : memref<80x384xf32, #tpu.memory_space<vmem>>, vector<80x128xf32>
    %225 = tpu.transpose %224, [1, 0] : vector<80x128xf32> -> vector<128x80xf32>
    %226 = arith.truncf %225 : vector<128x80xf32> to vector<128x80xbf16>
    %c0_118 = arith.constant 0 : index
    %c256_119 = arith.constant 256 : index
    %227 = vector.load %arg22[%c0_118, %c256_119] : memref<80x384xf32, #tpu.memory_space<vmem>>, vector<80x128xf32>
    %228 = arith.truncf %227 : vector<80x128xf32> to vector<80x128xbf16>
    %229 = vector.extract_strided_slice %223 {offsets = [0, 0], sizes = [80, 32], strides = [1, 1]} : vector<80x128xbf16> to vector<80x32xbf16>
    %230 = vector.extract_strided_slice %226 {offsets = [0, 0], sizes = [32, 80], strides = [1, 1]} : vector<128x80xbf16> to vector<32x80xbf16>
    %cst_120 = arith.constant dense<0.000000e+00> : vector<80x80xf32>
    %231 = tpu.matmul %229, %230, %cst_120 {dimension_numbers = #tpu.dot_dimension_numbers<[1], [0], [0], [1], [0, 0, 1, 1], [], []>} : vector<80x32xbf16>, vector<32x80xbf16>, vector<80x80xf32> -> vector<80x80xf32>
    %232 = arith.addf %231, %39 : vector<80x80xf32>
    %cst_121 = arith.constant dense<0xFF800000> : vector<80xf32>
    %233 = vector.multi_reduction <maximumf>, %232, %cst_121 [1] : vector<80x80xf32> to vector<80xf32>
    %234 = vector.shape_cast %233 : vector<80xf32> to vector<80x1xf32>
    %235 = vector.broadcast %234 : vector<80x1xf32> to vector<80x80xf32>
    %236 = arith.subf %232, %235 : vector<80x80xf32>
    %237 = math.exp %236 : vector<80x80xf32>
    %cst_122 = arith.constant dense<0.000000e+00> : vector<80xf32>
    %238 = vector.multi_reduction <add>, %237, %cst_122 [1] : vector<80x80xf32> to vector<80xf32>
    %239 = vector.shape_cast %238 : vector<80xf32> to vector<80x1xf32>
    %240 = tpu.reciprocal %239 {approx = true} : vector<80x1xf32> -> vector<80x1xf32>
    %241 = vector.broadcast %240 : vector<80x1xf32> to vector<80x80xf32>
    %242 = arith.mulf %237, %241 : vector<80x80xf32>
    %243 = arith.truncf %242 : vector<80x80xf32> to vector<80x80xbf16>
    %244 = vector.extract_strided_slice %228 {offsets = [0, 0], sizes = [80, 32], strides = [1, 1]} : vector<80x128xbf16> to vector<80x32xbf16>
    %cst_123 = arith.constant dense<0.000000e+00> : vector<80x32xf32>
    %245 = tpu.matmul %243, %244, %cst_123 {dimension_numbers = #tpu.dot_dimension_numbers<[1], [0], [0], [1], [0, 0, 1, 1], [], []>} : vector<80x80xbf16>, vector<80x32xbf16>, vector<80x32xf32> -> vector<80x32xf32>
    %c0_124 = arith.constant 0 : index
    %c0_125 = arith.constant 0 : index
    %246 = vector.load %arg23[%c0_124, %c0_125] : memref<80x128xf32, #tpu.memory_space<vmem>>, vector<80x32xf32>
    tpu.vector_store %arg23[%c0_124, %c0_125], %245 {strides = array<i32>} : memref<80x128xf32, #tpu.memory_space<vmem>>, vector<80x32xf32>,
    %247 = vector.extract_strided_slice %223 {offsets = [0, 32], sizes = [80, 32], strides = [1, 1]} : vector<80x128xbf16> to vector<80x32xbf16>
    %248 = vector.extract_strided_slice %226 {offsets = [32, 0], sizes = [32, 80], strides = [1, 1]} : vector<128x80xbf16> to vector<32x80xbf16>
    %cst_126 = arith.constant dense<0.000000e+00> : vector<80x80xf32>
    %249 = tpu.matmul %247, %248, %cst_126 {dimension_numbers = #tpu.dot_dimension_numbers<[1], [0], [0], [1], [0, 0, 1, 1], [], []>} : vector<80x32xbf16>, vector<32x80xbf16>, vector<80x80xf32> -> vector<80x80xf32>
    %250 = arith.addf %249, %39 : vector<80x80xf32>
    %cst_127 = arith.constant dense<0xFF800000> : vector<80xf32>
    %251 = vector.multi_reduction <maximumf>, %250, %cst_127 [1] : vector<80x80xf32> to vector<80xf32>
    %252 = vector.shape_cast %251 : vector<80xf32> to vector<80x1xf32>
    %253 = vector.broadcast %252 : vector<80x1xf32> to vector<80x80xf32>
    %254 = arith.subf %250, %253 : vector<80x80xf32>
    %255 = math.exp %254 : vector<80x80xf32>
    %cst_128 = arith.constant dense<0.000000e+00> : vector<80xf32>
    %256 = vector.multi_reduction <add>, %255, %cst_128 [1] : vector<80x80xf32> to vector<80xf32>
    %257 = vector.shape_cast %256 : vector<80xf32> to vector<80x1xf32>
    %258 = tpu.reciprocal %257 {approx = true} : vector<80x1xf32> -> vector<80x1xf32>
    %259 = vector.broadcast %258 : vector<80x1xf32> to vector<80x80xf32>
    %260 = arith.mulf %255, %259 : vector<80x80xf32>
    %261 = arith.truncf %260 : vector<80x80xf32> to vector<80x80xbf16>
    %262 = vector.extract_strided_slice %228 {offsets = [0, 32], sizes = [80, 32], strides = [1, 1]} : vector<80x128xbf16> to vector<80x32xbf16>
    %cst_129 = arith.constant dense<0.000000e+00> : vector<80x32xf32>
    %263 = tpu.matmul %261, %262, %cst_129 {dimension_numbers = #tpu.dot_dimension_numbers<[1], [0], [0], [1], [0, 0, 1, 1], [], []>} : vector<80x80xbf16>, vector<80x32xbf16>, vector<80x32xf32> -> vector<80x32xf32>
    %c0_130 = arith.constant 0 : index
    %c32_131 = arith.constant 32 : index
    %264 = vector.load %arg23[%c0_130, %c32_131] : memref<80x128xf32, #tpu.memory_space<vmem>>, vector<80x32xf32>
    tpu.vector_store %arg23[%c0_130, %c32_131], %263 {strides = array<i32>} : memref<80x128xf32, #tpu.memory_space<vmem>>, vector<80x32xf32>,
    %265 = vector.extract_strided_slice %223 {offsets = [0, 64], sizes = [80, 32], strides = [1, 1]} : vector<80x128xbf16> to vector<80x32xbf16>
    %266 = vector.extract_strided_slice %226 {offsets = [64, 0], sizes = [32, 80], strides = [1, 1]} : vector<128x80xbf16> to vector<32x80xbf16>
    %cst_132 = arith.constant dense<0.000000e+00> : vector<80x80xf32>
    %267 = tpu.matmul %265, %266, %cst_132 {dimension_numbers = #tpu.dot_dimension_numbers<[1], [0], [0], [1], [0, 0, 1, 1], [], []>} : vector<80x32xbf16>, vector<32x80xbf16>, vector<80x80xf32> -> vector<80x80xf32>
    %268 = arith.addf %267, %39 : vector<80x80xf32>
    %cst_133 = arith.constant dense<0xFF800000> : vector<80xf32>
    %269 = vector.multi_reduction <maximumf>, %268, %cst_133 [1] : vector<80x80xf32> to vector<80xf32>
    %270 = vector.shape_cast %269 : vector<80xf32> to vector<80x1xf32>
    %271 = vector.broadcast %270 : vector<80x1xf32> to vector<80x80xf32>
    %272 = arith.subf %268, %271 : vector<80x80xf32>
    %273 = math.exp %272 : vector<80x80xf32>
    %cst_134 = arith.constant dense<0.000000e+00> : vector<80xf32>
    %274 = vector.multi_reduction <add>, %273, %cst_134 [1] : vector<80x80xf32> to vector<80xf32>
    %275 = vector.shape_cast %274 : vector<80xf32> to vector<80x1xf32>
    %276 = tpu.reciprocal %275 {approx = true} : vector<80x1xf32> -> vector<80x1xf32>
    %277 = vector.broadcast %276 : vector<80x1xf32> to vector<80x80xf32>
    %278 = arith.mulf %273, %277 : vector<80x80xf32>
    %279 = arith.truncf %278 : vector<80x80xf32> to vector<80x80xbf16>
    %280 = vector.extract_strided_slice %228 {offsets = [0, 64], sizes = [80, 32], strides = [1, 1]} : vector<80x128xbf16> to vector<80x32xbf16>
    %cst_135 = arith.constant dense<0.000000e+00> : vector<80x32xf32>
    %281 = tpu.matmul %279, %280, %cst_135 {dimension_numbers = #tpu.dot_dimension_numbers<[1], [0], [0], [1], [0, 0, 1, 1], [], []>} : vector<80x80xbf16>, vector<80x32xbf16>, vector<80x32xf32> -> vector<80x32xf32>
    %c0_136 = arith.constant 0 : index
    %c64_137 = arith.constant 64 : index
    %282 = vector.load %arg23[%c0_136, %c64_137] : memref<80x128xf32, #tpu.memory_space<vmem>>, vector<80x32xf32>
    tpu.vector_store %arg23[%c0_136, %c64_137], %281 {strides = array<i32>} : memref<80x128xf32, #tpu.memory_space<vmem>>, vector<80x32xf32>,
    %283 = vector.extract_strided_slice %223 {offsets = [0, 96], sizes = [80, 32], strides = [1, 1]} : vector<80x128xbf16> to vector<80x32xbf16>
    %284 = vector.extract_strided_slice %226 {offsets = [96, 0], sizes = [32, 80], strides = [1, 1]} : vector<128x80xbf16> to vector<32x80xbf16>
    %cst_138 = arith.constant dense<0.000000e+00> : vector<80x80xf32>
    %285 = tpu.matmul %283, %284, %cst_138 {dimension_numbers = #tpu.dot_dimension_numbers<[1], [0], [0], [1], [0, 0, 1, 1], [], []>} : vector<80x32xbf16>, vector<32x80xbf16>, vector<80x80xf32> -> vector<80x80xf32>
    %286 = arith.addf %285, %39 : vector<80x80xf32>
    %cst_139 = arith.constant dense<0xFF800000> : vector<80xf32>
    %287 = vector.multi_reduction <maximumf>, %286, %cst_139 [1] : vector<80x80xf32> to vector<80xf32>
    %288 = vector.shape_cast %287 : vector<80xf32> to vector<80x1xf32>
    %289 = vector.broadcast %288 : vector<80x1xf32> to vector<80x80xf32>
    %290 = arith.subf %286, %289 : vector<80x80xf32>
    %291 = math.exp %290 : vector<80x80xf32>
    %cst_140 = arith.constant dense<0.000000e+00> : vector<80xf32>
    %292 = vector.multi_reduction <add>, %291, %cst_140 [1] : vector<80x80xf32> to vector<80xf32>
    %293 = vector.shape_cast %292 : vector<80xf32> to vector<80x1xf32>
    %294 = tpu.reciprocal %293 {approx = true} : vector<80x1xf32> -> vector<80x1xf32>
    %295 = vector.broadcast %294 : vector<80x1xf32> to vector<80x80xf32>
    %296 = arith.mulf %291, %295 : vector<80x80xf32>
    %297 = arith.truncf %296 : vector<80x80xf32> to vector<80x80xbf16>
    %298 = vector.extract_strided_slice %228 {offsets = [0, 96], sizes = [80, 32], strides = [1, 1]} : vector<80x128xbf16> to vector<80x32xbf16>
    %cst_141 = arith.constant dense<0.000000e+00> : vector<80x32xf32>
    %299 = tpu.matmul %297, %298, %cst_141 {dimension_numbers = #tpu.dot_dimension_numbers<[1], [0], [0], [1], [0, 0, 1, 1], [], []>} : vector<80x80xbf16>, vector<80x32xbf16>, vector<80x32xf32> -> vector<80x32xf32>
    %c0_142 = arith.constant 0 : index
    %c96_143 = arith.constant 96 : index
    %300 = vector.load %arg23[%c0_142, %c96_143] : memref<80x128xf32, #tpu.memory_space<vmem>>, vector<80x32xf32>
    tpu.vector_store %arg23[%c0_142, %c96_143], %299 {strides = array<i32>} : memref<80x128xf32, #tpu.memory_space<vmem>>, vector<80x32xf32>,
    %c0_144 = arith.constant 0 : index
    %c0_145 = arith.constant 0 : index
    %301 = vector.load %arg23[%c0_144, %c0_145] : memref<80x128xf32, #tpu.memory_space<vmem>>, vector<80x128xf32>
    %302 = arith.truncf %301 : vector<80x128xf32> to vector<80x128xbf16>
    %c1_146 = arith.constant 1 : index
    %c0_147 = arith.constant 0 : index
    %c0_148 = arith.constant 0 : index
    %303 = vector.load %arg10[%c1_146, %c0_147, %c0_148] : memref<2x128x128xbf16, #tpu.memory_space<vmem>>, vector<1x128x128xbf16>
    %304 = vector.shape_cast %303 : vector<1x128x128xbf16> to vector<128x128xbf16>
    %cst_149 = arith.constant dense<0.000000e+00> : vector<80x128xf32>
    %305 = tpu.matmul %302, %304, %cst_149 {dimension_numbers = #tpu.dot_dimension_numbers<[1], [0], [0], [1], [0, 0, 1, 1], [], []>} : vector<80x128xbf16>, vector<128x128xbf16>, vector<80x128xf32> -> vector<80x128xf32>
    %c1_150 = arith.constant 1 : index
    %c0_151 = arith.constant 0 : index
    %c0_152 = arith.constant 0 : index
    %306 = vector.load %arg11[%c1_150, %c0_151, %c0_152] : memref<2x1x128xf32, #tpu.memory_space<vmem>>, vector<1x1x128xf32>
    %307 = vector.shape_cast %306 : vector<1x1x128xf32> to vector<1x128xf32>
    %308 = vector.broadcast %307 : vector<1x128xf32> to vector<80x128xf32>
    %309 = arith.addf %305, %308 : vector<80x128xf32>
    %c0_153 = arith.constant 0 : index
    %c0_154 = arith.constant 0 : index
    %310 = vector.load %arg21[%c0_153, %c0_154] : memref<80x128xf32, #tpu.memory_space<vmem>>, vector<80x128xf32>
    %311 = arith.addf %310, %309 : vector<80x128xf32>
    %c1_155 = arith.constant 1 : index
    %c0_156 = arith.constant 0 : index
    %c0_157 = arith.constant 0 : index
    %312 = vector.load %arg12[%c1_155, %c0_156, %c0_157] : memref<2x1x128xf32, #tpu.memory_space<vmem>>, vector<1x1x128xf32>
    %313 = vector.shape_cast %312 : vector<1x1x128xf32> to vector<1x128xf32>
    %c1_158 = arith.constant 1 : index
    %c0_159 = arith.constant 0 : index
    %c0_160 = arith.constant 0 : index
    %314 = vector.load %arg13[%c1_158, %c0_159, %c0_160] : memref<2x1x128xf32, #tpu.memory_space<vmem>>, vector<1x1x128xf32>
    %315 = vector.shape_cast %314 : vector<1x1x128xf32> to vector<1x128xf32>
    %cst_161 = arith.constant dense<0.000000e+00> : vector<80xf32>
    %316 = vector.multi_reduction <add>, %311, %cst_161 [1] : vector<80x128xf32> to vector<80xf32>
    %317 = vector.shape_cast %316 : vector<80xf32> to vector<80x1xf32>
    %cst_162 = arith.constant 1.280000e+02 : f32
    %318 = vector.broadcast %cst_162 : f32 to vector<80x1xf32>
    %319 = arith.divf %317, %318 : vector<80x1xf32>
    %320 = vector.broadcast %319 : vector<80x1xf32> to vector<80x128xf32>
    %321 = arith.subf %311, %320 : vector<80x128xf32>
    %322 = arith.mulf %321, %321 : vector<80x128xf32>
    %cst_163 = arith.constant dense<0.000000e+00> : vector<80xf32>
    %323 = vector.multi_reduction <add>, %322, %cst_163 [1] : vector<80x128xf32> to vector<80xf32>
    %324 = vector.shape_cast %323 : vector<80xf32> to vector<80x1xf32>
    %cst_164 = arith.constant 1.280000e+02 : f32
    %325 = vector.broadcast %cst_164 : f32 to vector<80x1xf32>
    %326 = arith.divf %324, %325 : vector<80x1xf32>
    %327 = vector.broadcast %319 : vector<80x1xf32> to vector<80x128xf32>
    %328 = arith.subf %311, %327 : vector<80x128xf32>
    %cst_165 = arith.constant 9.99999974E-6 : f32
    %329 = vector.broadcast %cst_165 : f32 to vector<80x1xf32>
    %330 = arith.addf %326, %329 : vector<80x1xf32>
    %331 = math.rsqrt %330 : vector<80x1xf32>
    %332 = vector.broadcast %331 : vector<80x1xf32> to vector<80x128xf32>
    %333 = arith.mulf %328, %332 : vector<80x128xf32>
    %334 = vector.broadcast %313 : vector<1x128xf32> to vector<80x128xf32>
    %335 = arith.mulf %333, %334 : vector<80x128xf32>
    %336 = vector.broadcast %315 : vector<1x128xf32> to vector<80x128xf32>
    %337 = arith.addf %335, %336 : vector<80x128xf32>
    %338 = arith.truncf %337 : vector<80x128xf32> to vector<80x128xbf16>
    %c1_166 = arith.constant 1 : index
    %c0_167 = arith.constant 0 : index
    %c0_168 = arith.constant 0 : index
    %339 = vector.load %arg14[%c1_166, %c0_167, %c0_168] : memref<2x128x128xbf16, #tpu.memory_space<vmem>>, vector<1x128x128xbf16>
    %340 = vector.shape_cast %339 : vector<1x128x128xbf16> to vector<128x128xbf16>
    %cst_169 = arith.constant dense<0.000000e+00> : vector<80x128xf32>
    %341 = tpu.matmul %338, %340, %cst_169 {dimension_numbers = #tpu.dot_dimension_numbers<[1], [0], [0], [1], [0, 0, 1, 1], [], []>} : vector<80x128xbf16>, vector<128x128xbf16>, vector<80x128xf32> -> vector<80x128xf32>
    %c1_170 = arith.constant 1 : index
    %c0_171 = arith.constant 0 : index
    %c0_172 = arith.constant 0 : index
    %342 = vector.load %arg15[%c1_170, %c0_171, %c0_172] : memref<2x1x128xf32, #tpu.memory_space<vmem>>, vector<1x1x128xf32>
    %343 = vector.shape_cast %342 : vector<1x1x128xf32> to vector<1x128xf32>
    %344 = vector.broadcast %343 : vector<1x128xf32> to vector<80x128xf32>
    %345 = arith.addf %341, %344 : vector<80x128xf32>
    %cst_173 = arith.constant 0.000000e+00 : f32
    %346 = vector.broadcast %cst_173 : f32 to vector<80x128xf32>
    %347 = arith.maximumf %345, %346 : vector<80x128xf32>
    %348 = arith.truncf %347 : vector<80x128xf32> to vector<80x128xbf16>
    %c1_174 = arith.constant 1 : index
    %c0_175 = arith.constant 0 : index
    %c0_176 = arith.constant 0 : index
    %349 = vector.load %arg16[%c1_174, %c0_175, %c0_176] : memref<2x128x128xbf16, #tpu.memory_space<vmem>>, vector<1x128x128xbf16>
    %350 = vector.shape_cast %349 : vector<1x128x128xbf16> to vector<128x128xbf16>
    %cst_177 = arith.constant dense<0.000000e+00> : vector<80x128xf32>
    %351 = tpu.matmul %348, %350, %cst_177 {dimension_numbers = #tpu.dot_dimension_numbers<[1], [0], [0], [1], [0, 0, 1, 1], [], []>} : vector<80x128xbf16>, vector<128x128xbf16>, vector<80x128xf32> -> vector<80x128xf32>
    %c1_178 = arith.constant 1 : index
    %c0_179 = arith.constant 0 : index
    %c0_180 = arith.constant 0 : index
    %352 = vector.load %arg17[%c1_178, %c0_179, %c0_180] : memref<2x1x128xf32, #tpu.memory_space<vmem>>, vector<1x1x128xf32>
    %353 = vector.shape_cast %352 : vector<1x1x128xf32> to vector<1x128xf32>
    %354 = vector.broadcast %353 : vector<1x128xf32> to vector<80x128xf32>
    %355 = arith.addf %351, %354 : vector<80x128xf32>
    %356 = arith.addf %337, %355 : vector<80x128xf32>
    %c1_181 = arith.constant 1 : index
    %c0_182 = arith.constant 0 : index
    %c0_183 = arith.constant 0 : index
    %357 = vector.load %arg18[%c1_181, %c0_182, %c0_183] : memref<2x1x128xf32, #tpu.memory_space<vmem>>, vector<1x1x128xf32>
    %358 = vector.shape_cast %357 : vector<1x1x128xf32> to vector<1x128xf32>
    %c1_184 = arith.constant 1 : index
    %c0_185 = arith.constant 0 : index
    %c0_186 = arith.constant 0 : index
    %359 = vector.load %arg19[%c1_184, %c0_185, %c0_186] : memref<2x1x128xf32, #tpu.memory_space<vmem>>, vector<1x1x128xf32>
    %360 = vector.shape_cast %359 : vector<1x1x128xf32> to vector<1x128xf32>
    %cst_187 = arith.constant dense<0.000000e+00> : vector<80xf32>
    %361 = vector.multi_reduction <add>, %356, %cst_187 [1] : vector<80x128xf32> to vector<80xf32>
    %362 = vector.shape_cast %361 : vector<80xf32> to vector<80x1xf32>
    %cst_188 = arith.constant 1.280000e+02 : f32
    %363 = vector.broadcast %cst_188 : f32 to vector<80x1xf32>
    %364 = arith.divf %362, %363 : vector<80x1xf32>
    %365 = vector.broadcast %364 : vector<80x1xf32> to vector<80x128xf32>
    %366 = arith.subf %356, %365 : vector<80x128xf32>
    %367 = arith.mulf %366, %366 : vector<80x128xf32>
    %cst_189 = arith.constant dense<0.000000e+00> : vector<80xf32>
    %368 = vector.multi_reduction <add>, %367, %cst_189 [1] : vector<80x128xf32> to vector<80xf32>
    %369 = vector.shape_cast %368 : vector<80xf32> to vector<80x1xf32>
    %cst_190 = arith.constant 1.280000e+02 : f32
    %370 = vector.broadcast %cst_190 : f32 to vector<80x1xf32>
    %371 = arith.divf %369, %370 : vector<80x1xf32>
    %372 = vector.broadcast %364 : vector<80x1xf32> to vector<80x128xf32>
    %373 = arith.subf %356, %372 : vector<80x128xf32>
    %cst_191 = arith.constant 9.99999974E-6 : f32
    %374 = vector.broadcast %cst_191 : f32 to vector<80x1xf32>
    %375 = arith.addf %371, %374 : vector<80x1xf32>
    %376 = math.rsqrt %375 : vector<80x1xf32>
    %377 = vector.broadcast %376 : vector<80x1xf32> to vector<80x128xf32>
    %378 = arith.mulf %373, %377 : vector<80x128xf32>
    %379 = vector.broadcast %358 : vector<1x128xf32> to vector<80x128xf32>
    %380 = arith.mulf %378, %379 : vector<80x128xf32>
    %381 = vector.broadcast %360 : vector<1x128xf32> to vector<80x128xf32>
    %382 = arith.addf %380, %381 : vector<80x128xf32>
    %c0_192 = arith.constant 0 : index
    %c0_193 = arith.constant 0 : index
    %383 = vector.load %arg21[%c0_192, %c0_193] : memref<80x128xf32, #tpu.memory_space<vmem>>, vector<80x128xf32>
    tpu.vector_store %arg21[%c0_192, %c0_193], %382 {strides = array<i32>} : memref<80x128xf32, #tpu.memory_space<vmem>>, vector<80x128xf32>,
    %c32_194 = arith.constant 32 : index
    %c0_195 = arith.constant 0 : index
    %384 = vector.load %arg21[%c32_194, %c0_195] : memref<80x128xf32, #tpu.memory_space<vmem>>, vector<1x128xf32>
    %c0_196 = arith.constant 0 : index
    %c0_197 = arith.constant 0 : index
    %385 = vector.load %arg6[%c0_196, %c0_197] : memref<1x128xf32, #tpu.memory_space<vmem>>, vector<1x128xf32>
    %386 = arith.mulf %384, %385 : vector<1x128xf32>
    %cst_198 = arith.constant dense<0.000000e+00> : vector<1xf32>
    %387 = vector.multi_reduction <add>, %386, %cst_198 [1] : vector<1x128xf32> to vector<1xf32>
    %388 = vector.shape_cast %387 : vector<1xf32> to vector<1x1xf32>
    %c0_199 = arith.constant 0 : index
    %c0_200 = arith.constant 0 : index
    %389 = vector.load %arg7[%c0_199, %c0_200] : memref<1x1xf32, #tpu.memory_space<vmem>>, vector<1x1xf32>
    %390 = arith.addf %388, %389 : vector<1x1xf32>
    %391 = arith.negf %390 : vector<1x1xf32>
    %392 = math.exp %391 : vector<1x1xf32>
    %cst_201 = arith.constant 1.000000e+00 : f32
    %393 = vector.broadcast %cst_201 : f32 to vector<1x1xf32>
    %394 = arith.addf %393, %392 : vector<1x1xf32>
    %395 = arith.divf %393, %394 : vector<1x1xf32>
    %396 = vector.shape_cast %395 : vector<1x1xf32> to vector<1x1x1xf32>
    %397 = vector.broadcast %396 : vector<1x1x1xf32> to vector<1x1x128xf32>
    %c0_202 = arith.constant 0 : index
    %c0_203 = arith.constant 0 : index
    %c0_204 = arith.constant 0 : index
    %398 = vector.load %arg20[%c0_202, %c0_203, %c0_204] : memref<1x1x128xf32, #tpu.memory_space<vmem>>, vector<1x1x128xf32>
    tpu.vector_store %arg20[%c0_202, %c0_203, %c0_204], %397 {strides = array<i32>} : memref<1x1x128xf32, #tpu.memory_space<vmem>>, vector<1x1x128xf32>,
    return
  }
  func.func @transform_0(%arg0: i32) -> (i32, i32) {
    %c0_i32 = arith.constant 0 : i32
    %c0_i32_0 = arith.constant 0 : i32
    return %arg0, %c0_i32 : i32, i32
  }
  func.func @transform_1(%arg0: i32) -> (i32, i32) {
    %c0_i32 = arith.constant 0 : i32
    %c0_i32_0 = arith.constant 0 : i32
    %c0_i32_1 = arith.constant 0 : i32
    return %c0_i32, %c0_i32_0 : i32, i32
  }
  func.func @transform_2(%arg0: i32) -> (i32, i32) {
    %c0_i32 = arith.constant 0 : i32
    %c0_i32_0 = arith.constant 0 : i32
    %c0_i32_1 = arith.constant 0 : i32
    return %c0_i32, %c0_i32_0 : i32, i32
  }
  func.func @transform_3(%arg0: i32) -> (i32, i32) {
    %c0_i32 = arith.constant 0 : i32
    %c0_i32_0 = arith.constant 0 : i32
    %c0_i32_1 = arith.constant 0 : i32
    return %c0_i32, %c0_i32_0 : i32, i32
  }
  func.func @transform_4(%arg0: i32) -> (i32, i32) {
    %c0_i32 = arith.constant 0 : i32
    %c0_i32_0 = arith.constant 0 : i32
    %c0_i32_1 = arith.constant 0 : i32
    return %c0_i32, %c0_i32_0 : i32, i32
  }
  func.func @transform_5(%arg0: i32) -> (i32, i32) {
    %c0_i32 = arith.constant 0 : i32
    %c0_i32_0 = arith.constant 0 : i32
    %c0_i32_1 = arith.constant 0 : i32
    return %c0_i32, %c0_i32_0 : i32, i32
  }
  func.func @transform_6(%arg0: i32) -> (i32, i32) {
    %c0_i32 = arith.constant 0 : i32
    %c0_i32_0 = arith.constant 0 : i32
    %c0_i32_1 = arith.constant 0 : i32
    return %c0_i32, %c0_i32_0 : i32, i32
  }
  func.func @transform_7(%arg0: i32) -> (i32, i32, i32) {
    %c0_i32 = arith.constant 0 : i32
    %c0_i32_0 = arith.constant 0 : i32
    %c0_i32_1 = arith.constant 0 : i32
    %c0_i32_2 = arith.constant 0 : i32
    return %c0_i32, %c0_i32_0, %c0_i32_1 : i32, i32, i32
  }
  func.func @transform_8(%arg0: i32) -> (i32, i32, i32) {
    %c0_i32 = arith.constant 0 : i32
    %c0_i32_0 = arith.constant 0 : i32
    %c0_i32_1 = arith.constant 0 : i32
    %c0_i32_2 = arith.constant 0 : i32
    return %c0_i32, %c0_i32_0, %c0_i32_1 : i32, i32, i32
  }
  func.func @transform_9(%arg0: i32) -> (i32, i32, i32) {
    %c0_i32 = arith.constant 0 : i32
    %c0_i32_0 = arith.constant 0 : i32
    %c0_i32_1 = arith.constant 0 : i32
    %c0_i32_2 = arith.constant 0 : i32
    return %c0_i32, %c0_i32_0, %c0_i32_1 : i32, i32, i32
  }
  func.func @transform_10(%arg0: i32) -> (i32, i32, i32) {
    %c0_i32 = arith.constant 0 : i32
    %c0_i32_0 = arith.constant 0 : i32
    %c0_i32_1 = arith.constant 0 : i32
    %c0_i32_2 = arith.constant 0 : i32
    return %c0_i32, %c0_i32_0, %c0_i32_1 : i32, i32, i32
  }
  func.func @transform_11(%arg0: i32) -> (i32, i32, i32) {
    %c0_i32 = arith.constant 0 : i32
    %c0_i32_0 = arith.constant 0 : i32
    %c0_i32_1 = arith.constant 0 : i32
    %c0_i32_2 = arith.constant 0 : i32
    return %c0_i32, %c0_i32_0, %c0_i32_1 : i32, i32, i32
  }
  func.func @transform_12(%arg0: i32) -> (i32, i32, i32) {
    %c0_i32 = arith.constant 0 : i32
    %c0_i32_0 = arith.constant 0 : i32
    %c0_i32_1 = arith.constant 0 : i32
    %c0_i32_2 = arith.constant 0 : i32
    return %c0_i32, %c0_i32_0, %c0_i32_1 : i32, i32, i32
  }
  func.func @transform_13(%arg0: i32) -> (i32, i32, i32) {
    %c0_i32 = arith.constant 0 : i32
    %c0_i32_0 = arith.constant 0 : i32
    %c0_i32_1 = arith.constant 0 : i32
    %c0_i32_2 = arith.constant 0 : i32
    return %c0_i32, %c0_i32_0, %c0_i32_1 : i32, i32, i32
  }
  func.func @transform_14(%arg0: i32) -> (i32, i32, i32) {
    %c0_i32 = arith.constant 0 : i32
    %c0_i32_0 = arith.constant 0 : i32
    %c0_i32_1 = arith.constant 0 : i32
    %c0_i32_2 = arith.constant 0 : i32
    return %c0_i32, %c0_i32_0, %c0_i32_1 : i32, i32, i32
  }
  func.func @transform_15(%arg0: i32) -> (i32, i32, i32) {
    %c0_i32 = arith.constant 0 : i32
    %c0_i32_0 = arith.constant 0 : i32
    %c0_i32_1 = arith.constant 0 : i32
    %c0_i32_2 = arith.constant 0 : i32
    return %c0_i32, %c0_i32_0, %c0_i32_1 : i32, i32, i32
  }
  func.func @transform_16(%arg0: i32) -> (i32, i32, i32) {
    %c0_i32 = arith.constant 0 : i32
    %c0_i32_0 = arith.constant 0 : i32
    %c0_i32_1 = arith.constant 0 : i32
    %c0_i32_2 = arith.constant 0 : i32
    return %c0_i32, %c0_i32_0, %c0_i32_1 : i32, i32, i32
  }
  func.func @transform_17(%arg0: i32) -> (i32, i32, i32) {
    %c0_i32 = arith.constant 0 : i32
    %c0_i32_0 = arith.constant 0 : i32
    %c0_i32_1 = arith.constant 0 : i32
    %c0_i32_2 = arith.constant 0 : i32
    return %c0_i32, %c0_i32_0, %c0_i32_1 : i32, i32, i32
  }
  func.func @transform_18(%arg0: i32) -> (i32, i32, i32) {
    %c0_i32 = arith.constant 0 : i32
    %c0_i32_0 = arith.constant 0 : i32
    %c0_i32_1 = arith.constant 0 : i32
    %c0_i32_2 = arith.constant 0 : i32
    return %c0_i32, %c0_i32_0, %c0_i32_1 : i32, i32, i32
  }
  func.func @transform_19(%arg0: i32) -> (i32, i32, i32) {
    %c0_i32 = arith.constant 0 : i32
    %c0_i32_0 = arith.constant 0 : i32
    %c0_i32_1 = arith.constant 0 : i32
    return %arg0, %c0_i32, %c0_i32_0 : i32, i32, i32
  }
}

</mosaic_0001>

<llo_original>
// kernel: tpu_custom_call.1
$region0: #{tpu_custom_call.1}
  #allocation0 [shape = 'u32[]', space=smem, size = 0x4, offset = 0x4, fixed_abs, tag = 'smem constant byte address 0x4 - core index']
  #allocation1 [shape = 'u32[144,128]{1,0:T(1,128)}', space=vmem, size = 0x12000, scoped, tag = 'internal scratch']
  #allocation2 [shape = 'f32[80,128]{1,0:T(8,128)}', space=vmem, size = 0xa000, scoped, tag = 'scratch operand']
  #allocation3 [shape = 'f32[80,384]{1,0:T(8,128)}', space=vmem, size = 0x1e000, scoped, tag = 'scratch operand']
  #allocation4 [shape = 'f32[80,128]{1,0:T(8,128)}', space=vmem, size = 0xa000, scoped, tag = 'scratch operand']
  #allocation5 [shape = 'f32[1,1]{1,0:T(1,128)S(1)}', space=vmem, size = 0x200, scoped, tag = 'scoped memory for tpu_custom_call.1']
  %s0 = inlined_call_operand.vmem [shape: f32[160,16], index: 0, kind: input, shape index: {}]
  %s1 = inlined_call_operand.vmem [shape: f32[1,16], index: 1, kind: input, shape index: {}]
  %s2 = inlined_call_operand.vmem [shape: f32[1,16], index: 2, kind: input, shape index: {}]
  %s3 = inlined_call_operand.vmem [shape: bf16[16,128], index: 3, kind: input, shape index: {}]
  %s4 = inlined_call_operand.vmem [shape: f32[1,128], index: 4, kind: input, shape index: {}]
  %s5 = inlined_call_operand.vmem [shape: f32[1,128], index: 5, kind: input, shape index: {}]
  %s6 = inlined_call_operand.<no memory space> [shape: f32[1,1], index: 6, kind: input, shape index: {}]
  %s7 = inlined_call_operand.hbm [shape: bf16[2,128,384], index: 7, kind: input, shape index: {}]
  %s8 = inlined_call_operand.vmem [shape: f32[2,1,384], index: 8, kind: input, shape index: {}]
  %s9 = inlined_call_operand.vmem [shape: bf16[2,128,128], index: 9, kind: input, shape index: {}]
  %s10 = inlined_call_operand.vmem [shape: f32[2,1,128], index: 10, kind: input, shape index: {}]
  %s11 = inlined_call_operand.vmem [shape: f32[2,1,128], index: 11, kind: input, shape index: {}]
  %s12 = inlined_call_operand.vmem [shape: f32[2,1,128], index: 12, kind: input, shape index: {}]
  %s13 = inlined_call_operand.hbm [shape: bf16[2,128,128], index: 13, kind: input, shape index: {}]
  %s14 = inlined_call_operand.vmem [shape: f32[2,1,128], index: 14, kind: input, shape index: {}]
  %s15 = inlined_call_operand.hbm [shape: bf16[2,128,128], index: 15, kind: input, shape index: {}]
  %s16 = inlined_call_operand.vmem [shape: f32[2,1,128], index: 16, kind: input, shape index: {}]
  %s17 = inlined_call_operand.vmem [shape: f32[2,1,128], index: 17, kind: input, shape index: {}]
  %s18 = inlined_call_operand.vmem [shape: f32[2,1,128], index: 18, kind: input, shape index: {}]
  %s19 = inlined_call_operand.hbm [shape: f32[2,1,128], index: 19, kind: output, shape index: {}]
  %s20 = sld [smem:[#allocation0]]
  $region121: #{tpu_custom_call.1} parent=0
    _
  %s22 = ssub.s32 1, %s20
  %s23 = scalar_select 0, %s22, %s20
  %v24 = vstv %s6
  %25 = vst [vmem:[#allocation5] sm:$0x1] %v24
  $region1: #{tpu_custom_call.1} parent=0
    #allocation6 [shape = 'u8[196608]{0}', space=vmem, size = 0x30000, scoped, tag = 'input window, operand 7, single buffered']
    #allocation7 [shape = 's32[2]{0}', space=sflag, size = 0x8, scoped, tag = 'scoped memory for tpu_custom_call.1']
    #allocation8 [shape = 's32[2]{0}', space=sflag, size = 0x8, scoped, tag = 'scoped memory for tpu_custom_call.1']
    #allocation9 [shape = 'u8[65536]{0}', space=vmem, size = 0x10000, scoped, tag = 'input window, operand 13, single buffered']
    #allocation10 [shape = 's32[1]{0}', space=sflag, size = 0x4, scoped, tag = 'scoped memory for tpu_custom_call.1']
    #allocation11 [shape = 'u8[65536]{0}', space=vmem, size = 0x10000, scoped, tag = 'input window, operand 15, single buffered']
    #allocation12 [shape = 'u8[1024]{0}', space=vmem, size = 0x400, scoped, tag = 'output window, operand 0']
    %26 = vsyncpa [#allocation7], 0
    %27 = vsyncpa [#allocation10], 0
    %28 = vsyncpa [#allocation8], 0
    %s29 = scalar_lea.sflag [#allocation8], 1
    %30 = vsyncpa %s29, 0
    loop: start=0, step=1, limit=4
    $region2: #{tpu_custom_call.1} parent=1 // loop_pre_header
      _
    $region3: #{tpu_custom_call.1} parent=1 // loop_header
      %s32 = sphi 0, %s36
      %p33 = scmp.ge.s32.totalorder %s32, 4
      %s42 = sphi 0, %s44
      %s45 = sphi 0, %s42
      %s46 = sphi 0, %s45
      %s62 = sphi 0, %s46
      %s66 = sphi 0, %s66
      %s68 = sphi 0, %s66
      %s69 = sphi 0, %s68
      %s83 = sphi 0, %s69
      %s87 = sphi 0, %s87
      %s89 = sphi 0, %s87
      %s90 = sphi 0, %s89
      %s104 = sphi 0, %s90
      %s108 = sphi 0, %s108
      %s110 = sphi 0, %s108
      %s111 = sphi 0, %s110
      %s125 = sphi 0, %s111
      %s129 = sphi 0, %s129
      %s131 = sphi 0, %s129
      %s132 = sphi 0, %s131
      %s146 = sphi 0, %s132
      %s150 = sphi 0, %s150
      %s152 = sphi 0, %s150
      %s153 = sphi 0, %s152
      %s167 = sphi 0, %s153
      %s171 = sphi 0, %s171
      %s173 = sphi 0, %s171
      %s174 = sphi 0, %s173
      %s188 = sphi 0, %s174
      %s192 = sphi 0, %s192
      %s194 = sphi 0, %s192
      %s195 = sphi 0, %s194
      %s209 = sphi 0, %s195
      %s213 = sphi 0, %s213
      %s215 = sphi 0, %s213
      %s216 = sphi 0, %s215
      %s230 = sphi 0, %s216
      %s234 = sphi 0, %s234
      %s236 = sphi 0, %s234
      %s237 = sphi 0, %s236
      %s251 = sphi 0, %s237
      %s255 = sphi 0, %s255
      %s257 = sphi 0, %s255
      %s258 = sphi 0, %s257
      %s272 = sphi 0, %s258
      %s276 = sphi 0, %s276
      %s278 = sphi 0, %s276
      %s279 = sphi 0, %s278
      %s293 = sphi 0, %s279
      %s297 = sphi 0, %s297
      %s299 = sphi 0, %s297
      %s300 = sphi 0, %s299
      %s314 = sphi 0, %s300
      %s318 = sphi 0, %s318
      %s320 = sphi 0, %s318
      %s321 = sphi 0, %s320
      %s335 = sphi 0, %s321
      %s339 = sphi 0, %s339
      %s341 = sphi 0, %s339
      %s342 = sphi 0, %s341
      %s356 = sphi 0, %s342
      %s360 = sphi 0, %s360
      %s362 = sphi 0, %s360
      %s363 = sphi 0, %s362
      %s377 = sphi 0, %s363
      %s381 = sphi 0, %s381
      %s383 = sphi 0, %s381
      %s384 = sphi 0, %s383
      %s398 = sphi 0, %s384
      %s402 = sphi 0, %s402
      %s404 = sphi 0, %s402
      %s405 = sphi 0, %s404
      %s419 = sphi 0, %s405
      %s423 = sphi 0, %s423
      %s425 = sphi 0, %s423
      %s426 = sphi 0, %s425
      %s440 = sphi 0, %s426
      %s446 = sphi 0, %s448
      %s449 = sphi 0, %s446
      %s450 = sphi 0, %s449
      %s466 = sphi 0, %s450
    $region4: #{tpu_custom_call.1} parent=1 // loop_header_branch
      %35 = sbr.rel (%p33) target = $region8
    $region5: #{tpu_custom_call.1} parent=1 // loop_body
      %s37 = ssub.s32 %s32, 1
      %s38 = ssub.s32 %s32, 2
      %s39 = sadd.s32 %s32, 1
      %s40 = ssub.s32 %s32, %s39
      %p41 = scmp.eq.s32.totalorder %s40, 0
      %s43 = sadd.s32 %s42, 1
      %s44 = scalar_select %p41, %s42, %s43
      %p47 = pneg %p41
      %p48 = scmp.eq.s32.totalorder %s32, 1
      %p49 = por %p47, %p48
      %p50 = scmp.ne.s32.totalorder %s42, %s45
      %p51 = scmp.eq.s32.totalorder %s32, 0
      %p52 = por %p50, %p51
      %p53 = scmp.ne.s32.totalorder %s42, %s45
      %p54 = scmp.eq.s32.totalorder %s37, 1
      %p55 = por %p53, %p54
      %p56 = scmp.ne.s32.totalorder %s45, %s46
      %p57 = scmp.eq.s32.totalorder %s37, 0
      %p58 = por %p56, %p57
      %p59 = scmp.ne.s32.totalorder %s45, %s46
      %p60 = scmp.eq.s32.totalorder %s38, 1
      %p61 = por %p59, %p60
      %p63 = scmp.ne.s32.totalorder %s46, %s62
      %p64 = scmp.eq.s32.totalorder %s38, 0
      %p65 = por %p63, %p64
      %s67 = sadd.s32 %s66, 1
      %p70 = scmp.eq.s32.totalorder %s32, 1
      %p71 = scmp.ne.s32.totalorder %s66, %s68
      %p72 = scmp.eq.s32.totalorder %s32, 0
      %p73 = por %p71, %p72
      %p74 = scmp.ne.s32.totalorder %s66, %s68
      %p75 = scmp.eq.s32.totalorder %s37, 1
      %p76 = por %p74, %p75
      %p77 = scmp.ne.s32.totalorder %s68, %s69
      %p78 = scmp.eq.s32.totalorder %s37, 0
      %p79 = por %p77, %p78
      %p80 = scmp.ne.s32.totalorder %s68, %s69
      %p81 = scmp.eq.s32.totalorder %s38, 1
      %p82 = por %p80, %p81
      %p84 = scmp.ne.s32.totalorder %s69, %s83
      %p85 = scmp.eq.s32.totalorder %s38, 0
      %p86 = por %p84, %p85
      %s88 = sadd.s32 %s87, 1
      %p91 = scmp.eq.s32.totalorder %s32, 1
      %p92 = scmp.ne.s32.totalorder %s87, %s89
      %p93 = scmp.eq.s32.totalorder %s32, 0
      %p94 = por %p92, %p93
      %p95 = scmp.ne.s32.totalorder %s87, %s89
      %p96 = scmp.eq.s32.totalorder %s37, 1
      %p97 = por %p95, %p96
      %p98 = scmp.ne.s32.totalorder %s89, %s90
      %p99 = scmp.eq.s32.totalorder %s37, 0
      %p100 = por %p98, %p99
      %p101 = scmp.ne.s32.totalorder %s89, %s90
      %p102 = scmp.eq.s32.totalorder %s38, 1
      %p103 = por %p101, %p102
      %p105 = scmp.ne.s32.totalorder %s90, %s104
      %p106 = scmp.eq.s32.totalorder %s38, 0
      %p107 = por %p105, %p106
      %s109 = sadd.s32 %s108, 1
      %p112 = scmp.eq.s32.totalorder %s32, 1
      %p113 = scmp.ne.s32.totalorder %s108, %s110
      %p114 = scmp.eq.s32.totalorder %s32, 0
      %p115 = por %p113, %p114
      %p116 = scmp.ne.s32.totalorder %s108, %s110
      %p117 = scmp.eq.s32.totalorder %s37, 1
      %p118 = por %p116, %p117
      %p119 = scmp.ne.s32.totalorder %s110, %s111
      %p120 = scmp.eq.s32.totalorder %s37, 0
      %p121 = por %p119, %p120
      %p122 = scmp.ne.s32.totalorder %s110, %s111
      %p123 = scmp.eq.s32.totalorder %s38, 1
      %p124 = por %p122, %p123
      %p126 = scmp.ne.s32.totalorder %s111, %s125
      %p127 = scmp.eq.s32.totalorder %s38, 0
      %p128 = por %p126, %p127
      %s130 = sadd.s32 %s129, 1
      %p133 = scmp.eq.s32.totalorder %s32, 1
      %p134 = scmp.ne.s32.totalorder %s129, %s131
      %p135 = scmp.eq.s32.totalorder %s32, 0
      %p136 = por %p134, %p135
      %p137 = scmp.ne.s32.totalorder %s129, %s131
      %p138 = scmp.eq.s32.totalorder %s37, 1
      %p139 = por %p137, %p138
      %p140 = scmp.ne.s32.totalorder %s131, %s132
      %p141 = scmp.eq.s32.totalorder %s37, 0
      %p142 = por %p140, %p141
      %p143 = scmp.ne.s32.totalorder %s131, %s132
      %p144 = scmp.eq.s32.totalorder %s38, 1
      %p145 = por %p143, %p144
      %p147 = scmp.ne.s32.totalorder %s132, %s146
      %p148 = scmp.eq.s32.totalorder %s38, 0
      %p149 = por %p147, %p148
      %s151 = sadd.s32 %s150, 1
      %p154 = scmp.eq.s32.totalorder %s32, 1
      %p155 = scmp.ne.s32.totalorder %s150, %s152
      %p156 = scmp.eq.s32.totalorder %s32, 0
      %p157 = por %p155, %p156
      %p158 = scmp.ne.s32.totalorder %s150, %s152
      %p159 = scmp.eq.s32.totalorder %s37, 1
      %p160 = por %p158, %p159
      %p161 = scmp.ne.s32.totalorder %s152, %s153
      %p162 = scmp.eq.s32.totalorder %s37, 0
      %p163 = por %p161, %p162
      %p164 = scmp.ne.s32.totalorder %s152, %s153
      %p165 = scmp.eq.s32.totalorder %s38, 1
      %p166 = por %p164, %p165
      %p168 = scmp.ne.s32.totalorder %s153, %s167
      %p169 = scmp.eq.s32.totalorder %s38, 0
      %p170 = por %p168, %p169
      %s172 = sadd.s32 %s171, 1
      %p175 = scmp.eq.s32.totalorder %s32, 1
      %p176 = scmp.ne.s32.totalorder %s171, %s173
      %p177 = scmp.eq.s32.totalorder %s32, 0
      %p178 = por %p176, %p177
      %p179 = scmp.ne.s32.totalorder %s171, %s173
      %p180 = scmp.eq.s32.totalorder %s37, 1
      %p181 = por %p179, %p180
      %p182 = scmp.ne.s32.totalorder %s173, %s174
      %p183 = scmp.eq.s32.totalorder %s37, 0
      %p184 = por %p182, %p183
      %p185 = scmp.ne.s32.totalorder %s173, %s174
      %p186 = scmp.eq.s32.totalorder %s38, 1
      %p187 = por %p185, %p186
      %p189 = scmp.ne.s32.totalorder %s174, %s188
      %p190 = scmp.eq.s32.totalorder %s38, 0
      %p191 = por %p189, %p190
      %s193 = sadd.s32 %s192, 1
      %p196 = scmp.eq.s32.totalorder %s32, 1
      %p197 = scmp.ne.s32.totalorder %s192, %s194
      %p198 = scmp.eq.s32.totalorder %s32, 0
      %p199 = por %p197, %p198
      %p200 = scmp.ne.s32.totalorder %s192, %s194
      %p201 = scmp.eq.s32.totalorder %s37, 1
      %p202 = por %p200, %p201
      %p203 = scmp.ne.s32.totalorder %s194, %s195
      %p204 = scmp.eq.s32.totalorder %s37, 0
      %p205 = por %p203, %p204
      %p206 = scmp.ne.s32.totalorder %s194, %s195
      %p207 = scmp.eq.s32.totalorder %s38, 1
      %p208 = por %p206, %p207
      %p210 = scmp.ne.s32.totalorder %s195, %s209
      %p211 = scmp.eq.s32.totalorder %s38, 0
      %p212 = por %p210, %p211
      %s214 = sadd.s32 %s213, 1
      %p217 = scmp.eq.s32.totalorder %s32, 1
      %p218 = scmp.ne.s32.totalorder %s213, %s215
      %p219 = scmp.eq.s32.totalorder %s32, 0
      %p220 = por %p218, %p219
      %p221 = scmp.ne.s32.totalorder %s213, %s215
      %p222 = scmp.eq.s32.totalorder %s37, 1
      %p223 = por %p221, %p222
      %p224 = scmp.ne.s32.totalorder %s215, %s216
      %p225 = scmp.eq.s32.totalorder %s37, 0
      %p226 = por %p224, %p225
      %p227 = scmp.ne.s32.totalorder %s215, %s216
      %p228 = scmp.eq.s32.totalorder %s38, 1
      %p229 = por %p227, %p228
      %p231 = scmp.ne.s32.totalorder %s216, %s230
      %p232 = scmp.eq.s32.totalorder %s38, 0
      %p233 = por %p231, %p232
      %s235 = sadd.s32 %s234, 1
      %p238 = scmp.eq.s32.totalorder %s32, 1
      %p239 = scmp.ne.s32.totalorder %s234, %s236
      %p240 = scmp.eq.s32.totalorder %s32, 0
      %p241 = por %p239, %p240
      %p242 = scmp.ne.s32.totalorder %s234, %s236
      %p243 = scmp.eq.s32.totalorder %s37, 1
      %p244 = por %p242, %p243
      %p245 = scmp.ne.s32.totalorder %s236, %s237
      %p246 = scmp.eq.s32.totalorder %s37, 0
      %p247 = por %p245, %p246
      %p248 = scmp.ne.s32.totalorder %s236, %s237
      %p249 = scmp.eq.s32.totalorder %s38, 1
      %p250 = por %p248, %p249
      %p252 = scmp.ne.s32.totalorder %s237, %s251
      %p253 = scmp.eq.s32.totalorder %s38, 0
      %p254 = por %p252, %p253
      %s256 = sadd.s32 %s255, 1
      %p259 = scmp.eq.s32.totalorder %s32, 1
      %p260 = scmp.ne.s32.totalorder %s255, %s257
      %p261 = scmp.eq.s32.totalorder %s32, 0
      %p262 = por %p260, %p261
      %p263 = scmp.ne.s32.totalorder %s255, %s257
      %p264 = scmp.eq.s32.totalorder %s37, 1
      %p265 = por %p263, %p264
      %p266 = scmp.ne.s32.totalorder %s257, %s258
      %p267 = scmp.eq.s32.totalorder %s37, 0
      %p268 = por %p266, %p267
      %p269 = scmp.ne.s32.totalorder %s257, %s258
      %p270 = scmp.eq.s32.totalorder %s38, 1
      %p271 = por %p269, %p270
      %p273 = scmp.ne.s32.totalorder %s258, %s272
      %p274 = scmp.eq.s32.totalorder %s38, 0
      %p275 = por %p273, %p274
      %s277 = sadd.s32 %s276, 1
      %p280 = scmp.eq.s32.totalorder %s32, 1
      %p281 = scmp.ne.s32.totalorder %s276, %s278
      %p282 = scmp.eq.s32.totalorder %s32, 0
      %p283 = por %p281, %p282
      %p284 = scmp.ne.s32.totalorder %s276, %s278
      %p285 = scmp.eq.s32.totalorder %s37, 1
      %p286 = por %p284, %p285
      %p287 = scmp.ne.s32.totalorder %s278, %s279
      %p288 = scmp.eq.s32.totalorder %s37, 0
      %p289 = por %p287, %p288
      %p290 = scmp.ne.s32.totalorder %s278, %s279
      %p291 = scmp.eq.s32.totalorder %s38, 1
      %p292 = por %p290, %p291
      %p294 = scmp.ne.s32.totalorder %s279, %s293
      %p295 = scmp.eq.s32.totalorder %s38, 0
      %p296 = por %p294, %p295
      %s298 = sadd.s32 %s297, 1
      %p301 = scmp.eq.s32.totalorder %s32, 1
      %p302 = scmp.ne.s32.totalorder %s297, %s299
      %p303 = scmp.eq.s32.totalorder %s32, 0
      %p304 = por %p302, %p303
      %p305 = scmp.ne.s32.totalorder %s297, %s299
      %p306 = scmp.eq.s32.totalorder %s37, 1
      %p307 = por %p305, %p306
      %p308 = scmp.ne.s32.totalorder %s299, %s300
      %p309 = scmp.eq.s32.totalorder %s37, 0
      %p310 = por %p308, %p309
      %p311 = scmp.ne.s32.totalorder %s299, %s300
      %p312 = scmp.eq.s32.totalorder %s38, 1
      %p313 = por %p311, %p312
      %p315 = scmp.ne.s32.totalorder %s300, %s314
      %p316 = scmp.eq.s32.totalorder %s38, 0
      %p317 = por %p315, %p316
      %s319 = sadd.s32 %s318, 1
      %p322 = scmp.eq.s32.totalorder %s32, 1
      %p323 = scmp.ne.s32.totalorder %s318, %s320
      %p324 = scmp.eq.s32.totalorder %s32, 0
      %p325 = por %p323, %p324
      %p326 = scmp.ne.s32.totalorder %s318, %s320
      %p327 = scmp.eq.s32.totalorder %s37, 1
      %p328 = por %p326, %p327
      %p329 = scmp.ne.s32.totalorder %s320, %s321
      %p330 = scmp.eq.s32.totalorder %s37, 0
      %p331 = por %p329, %p330
      %p332 = scmp.ne.s32.totalorder %s320, %s321
      %p333 = scmp.eq.s32.totalorder %s38, 1
      %p334 = por %p332, %p333
      %p336 = scmp.ne.s32.totalorder %s321, %s335
      %p337 = scmp.eq.s32.totalorder %s38, 0
      %p338 = por %p336, %p337
      %s340 = sadd.s32 %s339, 1
      %p343 = scmp.eq.s32.totalorder %s32, 1
      %p344 = scmp.ne.s32.totalorder %s339, %s341
      %p345 = scmp.eq.s32.totalorder %s32, 0
      %p346 = por %p344, %p345
      %p347 = scmp.ne.s32.totalorder %s339, %s341
      %p348 = scmp.eq.s32.totalorder %s37, 1
      %p349 = por %p347, %p348
      %p350 = scmp.ne.s32.totalorder %s341, %s342
      %p351 = scmp.eq.s32.totalorder %s37, 0
      %p352 = por %p350, %p351
      %p353 = scmp.ne.s32.totalorder %s341, %s342
      %p354 = scmp.eq.s32.totalorder %s38, 1
      %p355 = por %p353, %p354
      %p357 = scmp.ne.s32.totalorder %s342, %s356
      %p358 = scmp.eq.s32.totalorder %s38, 0
      %p359 = por %p357, %p358
      %s361 = sadd.s32 %s360, 1
      %p364 = scmp.eq.s32.totalorder %s32, 1
      %p365 = scmp.ne.s32.totalorder %s360, %s362
      %p366 = scmp.eq.s32.totalorder %s32, 0
      %p367 = por %p365, %p366
      %p368 = scmp.ne.s32.totalorder %s360, %s362
      %p369 = scmp.eq.s32.totalorder %s37, 1
      %p370 = por %p368, %p369
      %p371 = scmp.ne.s32.totalorder %s362, %s363
      %p372 = scmp.eq.s32.totalorder %s37, 0
      %p373 = por %p371, %p372
      %p374 = scmp.ne.s32.totalorder %s362, %s363
      %p375 = scmp.eq.s32.totalorder %s38, 1
      %p376 = por %p374, %p375
      %p378 = scmp.ne.s32.totalorder %s363, %s377
      %p379 = scmp.eq.s32.totalorder %s38, 0
      %p380 = por %p378, %p379
      %s382 = sadd.s32 %s381, 1
      %p385 = scmp.eq.s32.totalorder %s32, 1
      %p386 = scmp.ne.s32.totalorder %s381, %s383
      %p387 = scmp.eq.s32.totalorder %s32, 0
      %p388 = por %p386, %p387
      %p389 = scmp.ne.s32.totalorder %s381, %s383
      %p390 = scmp.eq.s32.totalorder %s37, 1
      %p391 = por %p389, %p390
      %p392 = scmp.ne.s32.totalorder %s383, %s384
      %p393 = scmp.eq.s32.totalorder %s37, 0
      %p394 = por %p392, %p393
      %p395 = scmp.ne.s32.totalorder %s383, %s384
      %p396 = scmp.eq.s32.totalorder %s38, 1
      %p397 = por %p395, %p396
      %p399 = scmp.ne.s32.totalorder %s384, %s398
      %p400 = scmp.eq.s32.totalorder %s38, 0
      %p401 = por %p399, %p400
      %s403 = sadd.s32 %s402, 1
      %p406 = scmp.eq.s32.totalorder %s32, 1
      %p407 = scmp.ne.s32.totalorder %s402, %s404
      %p408 = scmp.eq.s32.totalorder %s32, 0
      %p409 = por %p407, %p408
      %p410 = scmp.ne.s32.totalorder %s402, %s404
      %p411 = scmp.eq.s32.totalorder %s37, 1
      %p412 = por %p410, %p411
      %p413 = scmp.ne.s32.totalorder %s404, %s405
      %p414 = scmp.eq.s32.totalorder %s37, 0
      %p415 = por %p413, %p414
      %p416 = scmp.ne.s32.totalorder %s404, %s405
      %p417 = scmp.eq.s32.totalorder %s38, 1
      %p418 = por %p416, %p417
      %p420 = scmp.ne.s32.totalorder %s405, %s419
      %p421 = scmp.eq.s32.totalorder %s38, 0
      %p422 = por %p420, %p421
      %s424 = sadd.s32 %s423, 1
      %p427 = scmp.eq.s32.totalorder %s32, 1
      %p428 = scmp.ne.s32.totalorder %s423, %s425
      %p429 = scmp.eq.s32.totalorder %s32, 0
      %p430 = por %p428, %p429
      %p431 = scmp.ne.s32.totalorder %s423, %s425
      %p432 = scmp.eq.s32.totalorder %s37, 1
      %p433 = por %p431, %p432
      %p434 = scmp.ne.s32.totalorder %s425, %s426
      %p435 = scmp.eq.s32.totalorder %s37, 0
      %p436 = por %p434, %p435
      %p437 = scmp.ne.s32.totalorder %s425, %s426
      %p438 = scmp.eq.s32.totalorder %s38, 1
      %p439 = por %p437, %p438
      %p441 = scmp.ne.s32.totalorder %s426, %s440
      %p442 = scmp.eq.s32.totalorder %s38, 0
      %p443 = por %p441, %p442
      %s444 = ssub.s32 %s32, %s39
      %p445 = scmp.eq.s32.totalorder %s444, 0
      %s447 = sadd.s32 %s446, 1
      %s448 = scalar_select %p445, %s446, %s447
      %p451 = pneg %p445
      %p452 = scmp.eq.s32.totalorder %s32, 1
      %p453 = por %p451, %p452
      %p454 = scmp.ne.s32.totalorder %s446, %s449
      %p455 = scmp.eq.s32.totalorder %s32, 0
      %p456 = por %p454, %p455
      %p457 = scmp.ne.s32.totalorder %s446, %s449
      %p458 = scmp.eq.s32.totalorder %s37, 1
      %p459 = por %p457, %p458
      %p460 = scmp.ne.s32.totalorder %s449, %s450
      %p461 = scmp.eq.s32.totalorder %s37, 0
      %p462 = por %p460, %p461
      %p463 = scmp.ne.s32.totalorder %s449, %s450
      %p464 = scmp.eq.s32.totalorder %s38, 1
      %p465 = por %p463, %p464
      %p467 = scmp.ne.s32.totalorder %s450, %s466
      %p468 = scmp.eq.s32.totalorder %s38, 0
      %p469 = por %p467, %p468
      %p470 = scmp.le.s32.totalorder 1, %s32
      %p471 = scmp.lt.s32.totalorder %s32, 3
      %p472 = pnand %p470, %p471
      %p473 = pneg %p472
      // Predicated region
      $region9: #{tpu_custom_call.1} parent=5 // pred_check
        _
      $region10: #{tpu_custom_call.1} parent=5 // pred_check_branch
        %475 = sbr.rel (%p472) target = $region12
      $region11: #{tpu_custom_call.1} parent=5 // pred_region
        %s476 = ssub.s32 %s32, 1
        // Predicated region
        $region13: #{tpu_custom_call.1} parent=11 // pred_check
          %p477 = pneg %p79
        $region14: #{tpu_custom_call.1} parent=11 // pred_check_branch
          %479 = sbr.rel (%p477) target = $region16
        $region15: #{tpu_custom_call.1} parent=11 // pred_region
          _
        $region16: #{tpu_custom_call.1} parent=11 // pred_fallthru
          _
        // Predicated region
        $region17: #{tpu_custom_call.1} parent=11 // pred_check
          %p480 = pneg %p100
        $region18: #{tpu_custom_call.1} parent=11 // pred_check_branch
          %482 = sbr.rel (%p480) target = $region20
        $region19: #{tpu_custom_call.1} parent=11 // pred_region
          _
        $region20: #{tpu_custom_call.1} parent=11 // pred_fallthru
          _
        // Predicated region
        $region21: #{tpu_custom_call.1} parent=11 // pred_check
          %p483 = pneg %p121
        $region22: #{tpu_custom_call.1} parent=11 // pred_check_branch
          %485 = sbr.rel (%p483) target = $region24
        $region23: #{tpu_custom_call.1} parent=11 // pred_region
          _
        $region24: #{tpu_custom_call.1} parent=11 // pred_fallthru
          _
        // Predicated region
        $region25: #{tpu_custom_call.1} parent=11 // pred_check
          %p486 = pneg %p142
        $region26: #{tpu_custom_call.1} parent=11 // pred_check_branch
          %488 = sbr.rel (%p486) target = $region28
        $region27: #{tpu_custom_call.1} parent=11 // pred_region
          _
        $region28: #{tpu_custom_call.1} parent=11 // pred_fallthru
          _
        // Predicated region
        $region29: #{tpu_custom_call.1} parent=11 // pred_check
          %p489 = pneg %p163
        $region30: #{tpu_custom_call.1} parent=11 // pred_check_branch
          %491 = sbr.rel (%p489) target = $region32
        $region31: #{tpu_custom_call.1} parent=11 // pred_region
          _
        $region32: #{tpu_custom_call.1} parent=11 // pred_fallthru
          _
        // Predicated region
        $region33: #{tpu_custom_call.1} parent=11 // pred_check
          %p492 = pneg %p184
        $region34: #{tpu_custom_call.1} parent=11 // pred_check_branch
          %494 = sbr.rel (%p492) target = $region36
        $region35: #{tpu_custom_call.1} parent=11 // pred_region
          _
        $region36: #{tpu_custom_call.1} parent=11 // pred_fallthru
          _
        // Predicated region
        $region37: #{tpu_custom_call.1} parent=11 // pred_check
          %p495 = pneg %p205
        $region38: #{tpu_custom_call.1} parent=11 // pred_check_branch
          %497 = sbr.rel (%p495) target = $region40
        $region39: #{tpu_custom_call.1} parent=11 // pred_region
          %s499 = ssub.s32 6144, 6144
          %500 = vsyncadd [#allocation7], %s499
          %s501 = sshll.u32 [#allocation6], 4
          %s502 = int_to_ptr.vmem [resolvable:$true] %s501
          %507 = dma.hbm_to_vmem [thread:$0]  %s7, 6144, %s502, [#allocation7], 192, 192, 12
        $region40: #{tpu_custom_call.1} parent=11 // pred_fallthru
          _
        // Predicated region
        $region41: #{tpu_custom_call.1} parent=11 // pred_check
          %p508 = pneg %p226
        $region42: #{tpu_custom_call.1} parent=11 // pred_check_branch
          %510 = sbr.rel (%p508) target = $region44
        $region43: #{tpu_custom_call.1} parent=11 // pred_region
          _
        $region44: #{tpu_custom_call.1} parent=11 // pred_fallthru
          _
        // Predicated region
        $region45: #{tpu_custom_call.1} parent=11 // pred_check
          %p511 = pneg %p247
        $region46: #{tpu_custom_call.1} parent=11 // pred_check_branch
          %513 = sbr.rel (%p511) target = $region48
        $region47: #{tpu_custom_call.1} parent=11 // pred_region
          _
        $region48: #{tpu_custom_call.1} parent=11 // pred_fallthru
          _
        // Predicated region
        $region49: #{tpu_custom_call.1} parent=11 // pred_check
          %p514 = pneg %p268
        $region50: #{tpu_custom_call.1} parent=11 // pred_check_branch
          %516 = sbr.rel (%p514) target = $region52
        $region51: #{tpu_custom_call.1} parent=11 // pred_region
          _
        $region52: #{tpu_custom_call.1} parent=11 // pred_fallthru
          _
        // Predicated region
        $region53: #{tpu_custom_call.1} parent=11 // pred_check
          %p517 = pneg %p289
        $region54: #{tpu_custom_call.1} parent=11 // pred_check_branch
          %519 = sbr.rel (%p517) target = $region56
        $region55: #{tpu_custom_call.1} parent=11 // pred_region
          _
        $region56: #{tpu_custom_call.1} parent=11 // pred_fallthru
          _
        // Predicated region
        $region57: #{tpu_custom_call.1} parent=11 // pred_check
          %p520 = pneg %p310
        $region58: #{tpu_custom_call.1} parent=11 // pred_check_branch
          %522 = sbr.rel (%p520) target = $region60
        $region59: #{tpu_custom_call.1} parent=11 // pred_region
          _
        $region60: #{tpu_custom_call.1} parent=11 // pred_fallthru
          _
        // Predicated region
        $region61: #{tpu_custom_call.1} parent=11 // pred_check
          %p523 = pneg %p331
        $region62: #{tpu_custom_call.1} parent=11 // pred_check_branch
          %525 = sbr.rel (%p523) target = $region64
        $region63: #{tpu_custom_call.1} parent=11 // pred_region
          %s527 = ssub.s32 2048, 2048
          %528 = vsyncadd [#allocation10], %s527
          %s529 = sshll.u32 [#allocation9], 4
          %s530 = int_to_ptr.vmem [resolvable:$true] %s529
          %535 = dma.hbm_to_vmem [thread:$0]  %s13, 2048, %s530, [#allocation10], 64, 64, 4
        $region64: #{tpu_custom_call.1} parent=11 // pred_fallthru
          _
        // Predicated region
        $region65: #{tpu_custom_call.1} parent=11 // pred_check
          %p536 = pneg %p352
        $region66: #{tpu_custom_call.1} parent=11 // pred_check_branch
          %538 = sbr.rel (%p536) target = $region68
        $region67: #{tpu_custom_call.1} parent=11 // pred_region
          _
        $region68: #{tpu_custom_call.1} parent=11 // pred_fallthru
          _
        // Predicated region
        $region69: #{tpu_custom_call.1} parent=11 // pred_check
          %p539 = pneg %p373
        $region70: #{tpu_custom_call.1} parent=11 // pred_check_branch
          %541 = sbr.rel (%p539) target = $region72
        $region71: #{tpu_custom_call.1} parent=11 // pred_region
          %s543 = ssub.s32 2048, 2048
          %544 = vsyncadd [#allocation10], %s543
          %s545 = sshll.u32 [#allocation11], 4
          %s546 = int_to_ptr.vmem [resolvable:$true] %s545
          %551 = dma.hbm_to_vmem [thread:$0]  %s15, 2048, %s546, [#allocation10], 64, 64, 4
        $region72: #{tpu_custom_call.1} parent=11 // pred_fallthru
          _
        // Predicated region
        $region73: #{tpu_custom_call.1} parent=11 // pred_check
          %p552 = pneg %p394
        $region74: #{tpu_custom_call.1} parent=11 // pred_check_branch
          %554 = sbr.rel (%p552) target = $region76
        $region75: #{tpu_custom_call.1} parent=11 // pred_region
          _
        $region76: #{tpu_custom_call.1} parent=11 // pred_fallthru
          _
        // Predicated region
        $region77: #{tpu_custom_call.1} parent=11 // pred_check
          %p555 = pneg %p415
        $region78: #{tpu_custom_call.1} parent=11 // pred_check_branch
          %557 = sbr.rel (%p555) target = $region80
        $region79: #{tpu_custom_call.1} parent=11 // pred_region
          _
        $region80: #{tpu_custom_call.1} parent=11 // pred_fallthru
          _
        // Predicated region
        $region81: #{tpu_custom_call.1} parent=11 // pred_check
          %p558 = pneg %p436
        $region82: #{tpu_custom_call.1} parent=11 // pred_check_branch
          %560 = sbr.rel (%p558) target = $region84
        $region83: #{tpu_custom_call.1} parent=11 // pred_region
          _
        $region84: #{tpu_custom_call.1} parent=11 // pred_fallthru
          _
      $region12: #{tpu_custom_call.1} parent=5 // pred_fallthru
        _
      %p561 = scmp.lt.s32.totalorder %s32, 2
      // Predicated region
      $region85: #{tpu_custom_call.1} parent=5 // pred_check
        %p562 = pneg %p561
      $region86: #{tpu_custom_call.1} parent=5 // pred_check_branch
        %564 = sbr.rel (%p562) target = $region88
      $region87: #{tpu_custom_call.1} parent=5 // pred_region
        // Predicated region
        $region89: #{tpu_custom_call.1} parent=87 // pred_check
          %p565 = pneg %p52
        $region90: #{tpu_custom_call.1} parent=87 // pred_check_branch
          %567 = sbr.rel (%p565) target = $region92
        $region91: #{tpu_custom_call.1} parent=87 // pred_region
          %s568 = smul.u32 10, %s32
          %p569 = scmp.lt.s32.totalorder %s568, 19
          %s570 = scalar_select %p569, %s568, 19
          %s571 = smul.addr %s570, 8
          %s572 = scalar_lea.vmem %s0, %s571
          %s573 = smul.u32 10, %s32
        $region92: #{tpu_custom_call.1} parent=87 // pred_fallthru
          _
      $region88: #{tpu_custom_call.1} parent=5 // pred_fallthru
        _
      %p574 = scmp.le.s32.totalorder 1, %s32
      %p575 = scmp.lt.s32.totalorder %s32, 3
      %p576 = pnand %p574, %p575
      %p577 = pneg %p576
      // Predicated region
      $region93: #{tpu_custom_call.1} parent=5 // pred_check
        _
      $region94: #{tpu_custom_call.1} parent=5 // pred_check_branch
        %579 = sbr.rel (%p576) target = $region96
      $region95: #{tpu_custom_call.1} parent=5 // pred_region
        %s580 = ssub.s32 %s32, 1
        // Predicated region
        $region97: #{tpu_custom_call.1} parent=95 // pred_check
          %p581 = pneg %p205
        $region98: #{tpu_custom_call.1} parent=95 // pred_check_branch
          %583 = sbr.rel (%p581) target = $region100
        $region99: #{tpu_custom_call.1} parent=95 // pred_region
          %584 = dma.done [#allocation7], 6144
        $region100: #{tpu_custom_call.1} parent=95 // pred_fallthru
          _
        // Predicated region
        $region101: #{tpu_custom_call.1} parent=95 // pred_check
          %p585 = pneg %p331
        $region102: #{tpu_custom_call.1} parent=95 // pred_check_branch
          %587 = sbr.rel (%p585) target = $region104
        $region103: #{tpu_custom_call.1} parent=95 // pred_region
          %588 = dma.done [#allocation10], 2048
        $region104: #{tpu_custom_call.1} parent=95 // pred_fallthru
          _
        // Predicated region
        $region105: #{tpu_custom_call.1} parent=95 // pred_check
          %p589 = pneg %p373
        $region106: #{tpu_custom_call.1} parent=95 // pred_check_branch
          %591 = sbr.rel (%p589) target = $region108
        $region107: #{tpu_custom_call.1} parent=95 // pred_region
          %592 = dma.done [#allocation10], 2048
        $region108: #{tpu_custom_call.1} parent=95 // pred_fallthru
          _
        %s593 = smul.u32 10, %s37
        %p594 = scmp.lt.s32.totalorder %s593, 19
        %s595 = scalar_select %p594, %s593, 19
        %s596 = smul.addr %s595, 8
        %s597 = scalar_lea.vmem %s0, %s596
        %p598 = pneg %p58
        %p599 = pneg %p55
        %p600 = pneg %p79
        %p601 = pneg %p76
        %p602 = pneg %p100
        %p603 = pneg %p97
        %p604 = pneg %p121
        %p605 = pneg %p118
        %p606 = pneg %p142
        %p607 = pneg %p139
        %p608 = pneg %p163
        %p609 = pneg %p160
        %p610 = pneg %p184
        %p611 = pneg %p181
        %p612 = pneg %p205
        %p613 = pneg %p202
        %p614 = pneg %p226
        %p615 = pneg %p223
        %p616 = pneg %p247
        %p617 = pneg %p244
        %p618 = pneg %p268
        %p619 = pneg %p265
        %p620 = pneg %p289
        %p621 = pneg %p286
        %p622 = pneg %p310
        %p623 = pneg %p307
        %p624 = pneg %p331
        %p625 = pneg %p328
        %p626 = pneg %p352
        %p627 = pneg %p349
        %p628 = pneg %p373
        %p629 = pneg %p370
        %p630 = pneg %p394
        %p631 = pneg %p391
        %p632 = pneg %p415
        %p633 = pneg %p412
        %p634 = pneg %p436
        %p635 = pneg %p433
        %p636 = pneg %p462
        %p637 = pneg %p459
        %s638 = sand.u32 %s449, 1
        %s639 = scalar_lea.sflag [#allocation8], %s638
        %s640 = sand.u32 %s449, 1
        %s641 = scalar_lea.vmem [#allocation12], %s640
        %s642 = smul.u32 10, %s37
        %p643 = scmp.lt.s32.totalorder %s642, 19
        %s644 = scalar_select %p643, %s642, 19
        %s645 = smul.addr %s644, 8
        %s646 = scalar_lea.vmem %s0, %s645
        %s647 = smul.u32 10, %s37
        %v649 = vld [vmem:[%s646] sm:$0xff]
        %v650 = vld [vmem:[%s646 + $0x8] sm:$0xff]
        %v651 = vld [vmem:[%s646 + $0x10] sm:$0xff]
        %v652 = vld [vmem:[%s646 + $0x18] sm:$0xff]
        %v653 = vld [vmem:[%s646 + $0x20] sm:$0xff]
        %v654 = vld [vmem:[%s646 + $0x28] sm:$0xff]
        %v655 = vld [vmem:[%s646 + $0x30] sm:$0xff]
        %v656 = vld [vmem:[%s646 + $0x38] sm:$0xff]
        %v657 = vld [vmem:[%s646 + $0x40] sm:$0xff]
        %v658 = vld [vmem:[%s646 + $0x48] sm:$0xff]
        %v659 = vld [vmem:[%s1] sm:$0x1]
        %v660 = vld [vmem:[%s2] sm:$0x1]
        %vm661 = vcmask 130048
        %v662 = vsel %vm661, %v649, 0.0
        %663 = vadd.xlane.f32.xlu0 %v662
        %v664 = vpop.xlane.xlu0 %663
        %v665 = vsel %vm661, %v650, 0.0
        %666 = vadd.xlane.f32.xlu0 %v665
        %v667 = vpop.xlane.xlu0 %666
        %v668 = vsel %vm661, %v651, 0.0
        %669 = vadd.xlane.f32.xlu0 %v668
        %v670 = vpop.xlane.xlu0 %669
        %v671 = vsel %vm661, %v652, 0.0
        %672 = vadd.xlane.f32.xlu0 %v671
        %v673 = vpop.xlane.xlu0 %672
        %v674 = vsel %vm661, %v653, 0.0
        %675 = vadd.xlane.f32.xlu0 %v674
        %v676 = vpop.xlane.xlu0 %675
        %v677 = vsel %vm661, %v654, 0.0
        %678 = vadd.xlane.f32.xlu0 %v677
        %v679 = vpop.xlane.xlu0 %678
        %v680 = vsel %vm661, %v655, 0.0
        %681 = vadd.xlane.f32.xlu0 %v680
        %v682 = vpop.xlane.xlu0 %681
        %v683 = vsel %vm661, %v656, 0.0
        %684 = vadd.xlane.f32.xlu0 %v683
        %v685 = vpop.xlane.xlu0 %684
        %v686 = vsel %vm661, %v657, 0.0
        %687 = vadd.xlane.f32.xlu0 %v686
        %v688 = vpop.xlane.xlu0 %687
        %v689 = vsel %vm661, %v658, 0.0
        %690 = vadd.xlane.f32.xlu0 %v689
        %v691 = vpop.xlane.xlu0 %690
        %v692 = vrcp.pop 16.0
        %v693 = vmul.f32 %v664, %v692
        %v694 = vmul.f32 %v667, %v692
        %v695 = vmul.f32 %v670, %v692
        %v696 = vmul.f32 %v673, %v692
        %v697 = vmul.f32 %v676, %v692
        %v698 = vmul.f32 %v679, %v692
        %v699 = vmul.f32 %v682, %v692
        %v700 = vmul.f32 %v685, %v692
        %v701 = vmul.f32 %v688, %v692
        %v702 = vmul.f32 %v691, %v692
        %v703 = vsub.f32 %v649, %v693
        %v704 = vsub.f32 %v650, %v694
        %v705 = vsub.f32 %v651, %v695
        %v706 = vsub.f32 %v652, %v696
        %v707 = vsub.f32 %v653, %v697
        %v708 = vsub.f32 %v654, %v698
        %v709 = vsub.f32 %v655, %v699
        %v710 = vsub.f32 %v656, %v700
        %v711 = vsub.f32 %v657, %v701
        %v712 = vsub.f32 %v658, %v702
        %v713 = vmul.f32 %v703, %v703
        %v714 = vmul.f32 %v704, %v704
        %v715 = vmul.f32 %v705, %v705
        %v716 = vmul.f32 %v706, %v706
        %v717 = vmul.f32 %v707, %v707
        %v718 = vmul.f32 %v708, %v708
        %v719 = vmul.f32 %v709, %v709
        %v720 = vmul.f32 %v710, %v710
        %v721 = vmul.f32 %v711, %v711
        %v722 = vmul.f32 %v712, %v712
        %v723 = vsel %vm661, %v713, 0.0
        %724 = vadd.xlane.f32.xlu0 %v723
        %v725 = vpop.xlane.xlu0 %724
        %v726 = vsel %vm661, %v714, 0.0
        %727 = vadd.xlane.f32.xlu0 %v726
        %v728 = vpop.xlane.xlu0 %727
        %v729 = vsel %vm661, %v715, 0.0
        %730 = vadd.xlane.f32.xlu0 %v729
        %v731 = vpop.xlane.xlu0 %730
        %v732 = vsel %vm661, %v716, 0.0
        %733 = vadd.xlane.f32.xlu0 %v732
        %v734 = vpop.xlane.xlu0 %733
        %v735 = vsel %vm661, %v717, 0.0
        %736 = vadd.xlane.f32.xlu0 %v735
        %v737 = vpop.xlane.xlu0 %736
        %v738 = vsel %vm661, %v718, 0.0
        %739 = vadd.xlane.f32.xlu0 %v738
        %v740 = vpop.xlane.xlu0 %739
        %v741 = vsel %vm661, %v719, 0.0
        %742 = vadd.xlane.f32.xlu0 %v741
        %v743 = vpop.xlane.xlu0 %742
        %v744 = vsel %vm661, %v720, 0.0
        %745 = vadd.xlane.f32.xlu0 %v744
        %v746 = vpop.xlane.xlu0 %745
        %v747 = vsel %vm661, %v721, 0.0
        %748 = vadd.xlane.f32.xlu0 %v747
        %v749 = vpop.xlane.xlu0 %748
        %v750 = vsel %vm661, %v722, 0.0
        %751 = vadd.xlane.f32.xlu0 %v750
        %v752 = vpop.xlane.xlu0 %751
        %v753 = vmul.f32 %v725, %v692
        %v754 = vmul.f32 %v728, %v692
        %v755 = vmul.f32 %v731, %v692
        %v756 = vmul.f32 %v734, %v692
        %v757 = vmul.f32 %v737, %v692
        %v758 = vmul.f32 %v740, %v692
        %v759 = vmul.f32 %v743, %v692
        %v760 = vmul.f32 %v746, %v692
        %v761 = vmul.f32 %v749, %v692
        %v762 = vmul.f32 %v752, %v692
        %v763 = vadd.f32 %v753, 1e-05
        %v764 = vadd.f32 %v754, 1e-05
        %v765 = vadd.f32 %v755, 1e-05
        %v766 = vadd.f32 %v756, 1e-05
        %v767 = vadd.f32 %v757, 1e-05
        %v768 = vadd.f32 %v758, 1e-05
        %v769 = vadd.f32 %v759, 1e-05
        %v770 = vadd.f32 %v760, 1e-05
        %v771 = vadd.f32 %v761, 1e-05
        %v772 = vadd.f32 %v762, 1e-05
        %v773 = vrsqrt.pop %v763
        %v774 = vrsqrt.pop %v764
        %v775 = vrsqrt.pop %v765
        %v776 = vrsqrt.pop %v766
        %v777 = vrsqrt.pop %v767
        %v778 = vrsqrt.pop %v768
        %v779 = vrsqrt.pop %v769
        %v780 = vrsqrt.pop %v770
        %v781 = vrsqrt.pop %v771
        %v782 = vrsqrt.pop %v772
        %v783 = vmul.f32 %v703, %v773
        %v784 = vmul.f32 %v704, %v774
        %v785 = vmul.f32 %v705, %v775
        %v786 = vmul.f32 %v706, %v776
        %v787 = vmul.f32 %v707, %v777
        %v788 = vmul.f32 %v708, %v778
        %v789 = vmul.f32 %v709, %v779
        %v790 = vmul.f32 %v710, %v780
        %v791 = vmul.f32 %v711, %v781
        %v792 = vmul.f32 %v712, %v782
        %v794 = vlaneseq
        %v795 = vshrl.u32 %v794, 7
        %v796 = vsub.s32 0, %v795
        %v797 = vrot.slane %v659, %v796
        %v799 = vmul.f32 %v783, %v797
        %v800 = vmul.f32 %v784, %v797
        %v801 = vmul.f32 %v785, %v797
        %v802 = vmul.f32 %v786, %v797
        %v803 = vmul.f32 %v787, %v797
        %v804 = vmul.f32 %v788, %v797
        %v805 = vmul.f32 %v789, %v797
        %v806 = vmul.f32 %v790, %v797
        %v807 = vmul.f32 %v791, %v797
        %v808 = vmul.f32 %v792, %v797
        %v810 = vlaneseq
        %v811 = vshrl.u32 %v810, 7
        %v812 = vsub.s32 0, %v811
        %v813 = vrot.slane %v660, %v812
        %v815 = vadd.f32 %v799, %v813
        %v816 = vadd.f32 %v800, %v813
        %v817 = vadd.f32 %v801, %v813
        %v818 = vadd.f32 %v802, %v813
        %v819 = vadd.f32 %v803, %v813
        %v820 = vadd.f32 %v804, %v813
        %v821 = vadd.f32 %v805, %v813
        %v822 = vadd.f32 %v806, %v813
        %v823 = vadd.f32 %v807, %v813
        %v824 = vadd.f32 %v808, %v813
        %v825 = vpack.c.bf16 %v816, %v815
        %v826 = vpack.c.bf16 %v818, %v817
        %v827 = vpack.c.bf16 %v820, %v819
        %v828 = vpack.c.bf16 %v822, %v821
        %v829 = vpack.c.bf16 %v824, %v823
        %v830 = vld [vmem:[%s3] sm:$0xf]
        %v831 = vld [vmem:[%s3 + $0x4] sm:$0xf]
        %v832 = vld [vmem:[%s4] sm:$0x1]
        %v834 = vlaneseq
        %v835 = vshrl.u32 %v834, 7
        %v836 = vsub.s32 0, %v835
        %v837 = vrot.slane %v832, %v836
        %v841 = vunpack.c.l.b16 %v830
        %v842 = vunpack.c.l.b16 %v831
        %v843 = vpack.c.b16 %v842, %v841
        %v846 = vsel %vm661, %v825, 0
        %v849 = vsel %vm661, %v826, 0
        %v852 = vsel %vm661, %v827, 0
        %v855 = vsel %vm661, %v828, 0
        %v858 = vsel %vm661, %v829, 0
        %860 = vmatprep.subr.bf16.mxu0 0
        %861 = vmatpush1.bf16.msra.mxu0 %v843
        %862 = vmatprep.subr.bf16.mxu0 0
        %863 = vmatpush1.bf16.msra.mxu0 0
        %864 = vmatprep.subr.bf16.mxu0 0
        %865 = vmatpush1.bf16.msra.mxu0 0
        %866 = vmatprep.subr.bf16.mxu0 0
        %867 = vmatpush1.bf16.msra.mxu0 0
        %868 = vmatprep.subr.bf16.mxu0 0
        %869 = vmatpush1.bf16.msra.mxu0 0
        %870 = vmatprep.subr.bf16.mxu0 0
        %871 = vmatpush1.bf16.msra.mxu0 0
        %872 = vmatprep.subr.bf16.mxu0 0
        %873 = vmatpush1.bf16.msra.mxu0 0
        %874 = vmatprep.subr.bf16.mxu0 0
        %875 = vmatpush1.bf16.msra.mxu0 0
        %876 = vmatprep.subr.bf16.mxu0 0
        %877 = vmatpush1.bf16.msra.mxu0 0
        %878 = vmatprep.subr.bf16.mxu0 0
        %879 = vmatpush1.bf16.msra.mxu0 0
        %880 = vmatprep.subr.bf16.mxu0 0
        %881 = vmatpush1.bf16.msra.mxu0 0
        %882 = vmatprep.subr.bf16.mxu0 0
        %883 = vmatpush1.bf16.msra.mxu0 0
        %884 = vmatprep.subr.bf16.mxu0 0
        %885 = vmatpush1.bf16.msra.mxu0 0
        %886 = vmatprep.subr.bf16.mxu0 0
        %887 = vmatpush1.bf16.msra.mxu0 0
        %888 = vmatprep.subr.bf16.mxu0 0
        %889 = vmatpush1.bf16.msra.mxu0 0
        %890 = vmatprep.subr.bf16.mxu0 0
        %891 = vmatpush1.bf16.msra.mxu0 0
        %892 = vmatprep.mubr.bf16.mxu0 0
        %893 = vmatmul.mubr.bf16.gmra.mrb[0].mxu0 %v846
        %v894 = vpop.f32.mrb[0].mxu0
        %v895 = vadd.f32 %v837, %v894
        %v896 = vpop.f32.mrb[0].mxu0
        %v897 = vpop.f32.mrb[0].mxu0
        %v898 = vadd.f32 %v837, %v897
        %v899 = vpop.f32.mrb[0].mxu0
        %900 = vmatprep.mubr.bf16.mxu0 0
        %901 = vmatmul.mubr.bf16.gmra.mrb[0].mxu0 %v849
        %v902 = vpop.f32.mrb[0].mxu0
        %v903 = vadd.f32 %v837, %v902
        %v904 = vpop.f32.mrb[0].mxu0
        %v905 = vpop.f32.mrb[0].mxu0
        %v906 = vadd.f32 %v837, %v905
        %v907 = vpop.f32.mrb[0].mxu0
        %908 = vmatprep.mubr.bf16.mxu0 0
        %909 = vmatmul.mubr.bf16.gmra.mrb[0].mxu0 %v852
        %v910 = vpop.f32.mrb[0].mxu0
        %v911 = vadd.f32 %v837, %v910
        %v912 = vpop.f32.mrb[0].mxu0
        %v913 = vpop.f32.mrb[0].mxu0
        %v914 = vadd.f32 %v837, %v913
        %v915 = vpop.f32.mrb[0].mxu0
        %916 = vmatprep.mubr.bf16.mxu0 0
        %917 = vmatmul.mubr.bf16.gmra.mrb[0].mxu0 %v855
        %v918 = vpop.f32.mrb[0].mxu0
        %v919 = vadd.f32 %v837, %v918
        %v920 = vpop.f32.mrb[0].mxu0
        %v921 = vpop.f32.mrb[0].mxu0
        %v922 = vadd.f32 %v837, %v921
        %v923 = vpop.f32.mrb[0].mxu0
        %924 = vmatprep.mubr.bf16.mxu0 0
        %925 = vmatmul.mubr.bf16.gmra.mrb[0].mxu0 %v858
        %v926 = vpop.f32.mrb[0].mxu0
        %v927 = vadd.f32 %v837, %v926
        %v928 = vpop.f32.mrb[0].mxu0
        %v929 = vpop.f32.mrb[0].mxu0
        %v930 = vadd.f32 %v837, %v929
        %v931 = vpop.f32.mrb[0].mxu0
        %932 = vdwg.mxu0
        %933 = vst [vmem:[#allocation2] sm:$0xff] %v895
        %934 = vst [vmem:[#allocation2 + $0x8] sm:$0xff] %v898
        %935 = vst [vmem:[#allocation2 + $0x10] sm:$0xff] %v903
        %936 = vst [vmem:[#allocation2 + $0x18] sm:$0xff] %v906
        %937 = vst [vmem:[#allocation2 + $0x20] sm:$0xff] %v911
        %938 = vst [vmem:[#allocation2 + $0x28] sm:$0xff] %v914
        %939 = vst [vmem:[#allocation2 + $0x30] sm:$0xff] %v919
        %940 = vst [vmem:[#allocation2 + $0x38] sm:$0xff] %v922
        %941 = vst [vmem:[#allocation2 + $0x40] sm:$0xff] %v927
        %942 = vst [vmem:[#allocation2 + $0x48] sm:$0xff] %v930
        %v943 = vlaneseq
        %v944 = vand.u32 %v943, 127
        %vm945 = vcmp.lt.s32.totalorder %v944, 65
        %v946 = vsel %vm945, 0.0, -1e+30
        %v947 = vld [vmem:[#allocation2] sm:$0xff]
        %v948 = vld [vmem:[#allocation2 + $0x8] sm:$0xff]
        %v949 = vld [vmem:[#allocation2 + $0x10] sm:$0xff]
        %v950 = vld [vmem:[#allocation2 + $0x18] sm:$0xff]
        %v951 = vld [vmem:[#allocation2 + $0x20] sm:$0xff]
        %v952 = vld [vmem:[#allocation2 + $0x28] sm:$0xff]
        %v953 = vld [vmem:[#allocation2 + $0x30] sm:$0xff]
        %v954 = vld [vmem:[#allocation2 + $0x38] sm:$0xff]
        %v955 = vld [vmem:[#allocation2 + $0x40] sm:$0xff]
        %v956 = vld [vmem:[#allocation2 + $0x48] sm:$0xff]
        %v957 = vpack.c.bf16 %v948, %v947
        %v958 = vpack.c.bf16 %v950, %v949
        %v959 = vpack.c.bf16 %v952, %v951
        %v960 = vpack.c.bf16 %v954, %v953
        %v961 = vpack.c.bf16 %v956, %v955
        %v962 = vld [vmem:[#allocation6] sm:$0xff]
        %v963 = vld [vmem:[#allocation6 + $0x8] sm:$0xf]
        %v964 = vld [vmem:[#allocation6 + $0xc] sm:$0xff]
        %v965 = vld [vmem:[#allocation6 + $0x14] sm:$0xf]
        %v966 = vld [vmem:[#allocation6 + $0x18] sm:$0xff]
        %v967 = vld [vmem:[#allocation6 + $0x20] sm:$0xf]
        %v968 = vld [vmem:[#allocation6 + $0x24] sm:$0xff]
        %v969 = vld [vmem:[#allocation6 + $0x2c] sm:$0xf]
        %v970 = vld [vmem:[#allocation6 + $0x30] sm:$0xff]
        %v971 = vld [vmem:[#allocation6 + $0x38] sm:$0xf]
        %v972 = vld [vmem:[#allocation6 + $0x3c] sm:$0xff]
        %v973 = vld [vmem:[#allocation6 + $0x44] sm:$0xf]
        %v974 = vld [vmem:[#allocation6 + $0x48] sm:$0xff]
        %v975 = vld [vmem:[#allocation6 + $0x50] sm:$0xf]
        %v976 = vld [vmem:[#allocation6 + $0x54] sm:$0xff]
        %v977 = vld [vmem:[#allocation6 + $0x5c] sm:$0xf]
        %v978 = vld [vmem:[#allocation6 + $0x60] sm:$0xff]
        %v979 = vld [vmem:[#allocation6 + $0x68] sm:$0xf]
        %v980 = vld [vmem:[#allocation6 + $0x6c] sm:$0xff]
        %v981 = vld [vmem:[#allocation6 + $0x74] sm:$0xf]
        %v982 = vld [vmem:[#allocation6 + $0x78] sm:$0xff]
        %v983 = vld [vmem:[#allocation6 + $0x80] sm:$0xf]
        %v984 = vld [vmem:[#allocation6 + $0x84] sm:$0xff]
        %v985 = vld [vmem:[#allocation6 + $0x8c] sm:$0xf]
        %v986 = vld [vmem:[#allocation6 + $0x90] sm:$0xff]
        %v987 = vld [vmem:[#allocation6 + $0x98] sm:$0xf]
        %v988 = vld [vmem:[#allocation6 + $0x9c] sm:$0xff]
        %v989 = vld [vmem:[#allocation6 + $0xa4] sm:$0xf]
        %v990 = vld [vmem:[#allocation6 + $0xa8] sm:$0xff]
        %v991 = vld [vmem:[#allocation6 + $0xb0] sm:$0xf]
        %v992 = vld [vmem:[#allocation6 + $0xb4] sm:$0xff]
        %v993 = vld [vmem:[#allocation6 + $0xbc] sm:$0xf]
        %v994 = vld [vmem:[%s8] sm:$0x7]
        %v996 = vlaneseq
        %v997 = vshrl.u32 %v996, 7
        %v998 = vsub.s32 0, %v997
        %v999 = vrot.slane %v994, %v998
        %v1000 = vlaneseq
        %v1001 = vshrl.u32 %v1000, 7
        %v1002 = vsub.s32 1, %v1001
        %v1003 = vrot.slane %v994, %v1002
        %v1004 = vlaneseq
        %v1005 = vshrl.u32 %v1004, 7
        %v1006 = vsub.s32 2, %v1005
        %v1007 = vrot.slane %v994, %v1006
        %v1043 = vunpack.c.l.b16 %v962
        %v1044 = vunpack.c.h.b16 %v962
        %v1045 = vunpack.c.l.b16 %v963
        %v1046 = vunpack.c.l.b16 %v964
        %v1047 = vunpack.c.h.b16 %v964
        %v1048 = vunpack.c.l.b16 %v965
        %v1049 = vunpack.c.l.b16 %v966
        %v1050 = vunpack.c.h.b16 %v966
        %v1051 = vunpack.c.l.b16 %v967
        %v1052 = vunpack.c.l.b16 %v968
        %v1053 = vunpack.c.h.b16 %v968
        %v1054 = vunpack.c.l.b16 %v969
        %v1055 = vunpack.c.l.b16 %v970
        %v1056 = vunpack.c.h.b16 %v970
        %v1057 = vunpack.c.l.b16 %v971
        %v1058 = vunpack.c.l.b16 %v972
        %v1059 = vunpack.c.h.b16 %v972
        %v1060 = vunpack.c.l.b16 %v973
        %v1061 = vunpack.c.l.b16 %v974
        %v1062 = vunpack.c.h.b16 %v974
        %v1063 = vunpack.c.l.b16 %v975
        %v1064 = vunpack.c.l.b16 %v976
        %v1065 = vunpack.c.h.b16 %v976
        %v1066 = vunpack.c.l.b16 %v977
        %v1067 = vunpack.c.l.b16 %v978
        %v1068 = vunpack.c.h.b16 %v978
        %v1069 = vunpack.c.l.b16 %v979
        %v1070 = vunpack.c.l.b16 %v980
        %v1071 = vunpack.c.h.b16 %v980
        %v1072 = vunpack.c.l.b16 %v981
        %v1073 = vunpack.c.l.b16 %v982
        %v1074 = vunpack.c.h.b16 %v982
        %v1075 = vunpack.c.l.b16 %v983
        %v1076 = vunpack.c.l.b16 %v984
        %v1077 = vunpack.c.h.b16 %v984
        %v1078 = vunpack.c.l.b16 %v985
        %v1079 = vunpack.c.l.b16 %v986
        %v1080 = vunpack.c.h.b16 %v986
        %v1081 = vunpack.c.l.b16 %v987
        %v1082 = vunpack.c.l.b16 %v988
        %v1083 = vunpack.c.h.b16 %v988
        %v1084 = vunpack.c.l.b16 %v989
        %v1085 = vunpack.c.l.b16 %v990
        %v1086 = vunpack.c.h.b16 %v990
        %v1087 = vunpack.c.l.b16 %v991
        %v1088 = vunpack.c.l.b16 %v992
        %v1089 = vunpack.c.h.b16 %v992
        %v1090 = vunpack.c.l.b16 %v993
        %v1091 = vpack.c.b16 %v1046, %v1043
        %v1092 = vpack.c.b16 %v1047, %v1044
        %v1093 = vpack.c.b16 %v1048, %v1045
        %v1094 = vpack.c.b16 %v1052, %v1049
        %v1095 = vpack.c.b16 %v1053, %v1050
        %v1096 = vpack.c.b16 %v1054, %v1051
        %v1097 = vpack.c.b16 %v1058, %v1055
        %v1098 = vpack.c.b16 %v1059, %v1056
        %v1099 = vpack.c.b16 %v1060, %v1057
        %v1100 = vpack.c.b16 %v1064, %v1061
        %v1101 = vpack.c.b16 %v1065, %v1062
        %v1102 = vpack.c.b16 %v1066, %v1063
        %v1103 = vpack.c.b16 %v1070, %v1067
        %v1104 = vpack.c.b16 %v1071, %v1068
        %v1105 = vpack.c.b16 %v1072, %v1069
        %v1106 = vpack.c.b16 %v1076, %v1073
        %v1107 = vpack.c.b16 %v1077, %v1074
        %v1108 = vpack.c.b16 %v1078, %v1075
        %v1109 = vpack.c.b16 %v1082, %v1079
        %v1110 = vpack.c.b16 %v1083, %v1080
        %v1111 = vpack.c.b16 %v1084, %v1081
        %v1112 = vpack.c.b16 %v1088, %v1085
        %v1113 = vpack.c.b16 %v1089, %v1086
        %v1114 = vpack.c.b16 %v1090, %v1087
        %1139 = vmatprep.subr.bf16.mxu0 %v1092
        %1140 = vmatpush1.bf16.msra.mxu0 %v1091
        %1141 = vmatprep.subr.bf16.mxu0 %v1095
        %1142 = vmatpush1.bf16.msra.mxu0 %v1094
        %1143 = vmatprep.subr.bf16.mxu0 %v1098
        %1144 = vmatpush1.bf16.msra.mxu0 %v1097
        %1145 = vmatprep.subr.bf16.mxu0 %v1101
        %1146 = vmatpush1.bf16.msra.mxu0 %v1100
        %1147 = vmatprep.subr.bf16.mxu0 %v1104
        %1148 = vmatpush1.bf16.msra.mxu0 %v1103
        %1149 = vmatprep.subr.bf16.mxu0 %v1107
        %1150 = vmatpush1.bf16.msra.mxu0 %v1106
        %1151 = vmatprep.subr.bf16.mxu0 %v1110
        %1152 = vmatpush1.bf16.msra.mxu0 %v1109
        %1153 = vmatprep.subr.bf16.mxu0 %v1113
        %1154 = vmatpush1.bf16.msra.mxu0 %v1112
        %1155 = vmatprep.subr.bf16.mxu0 0
        %1156 = vmatpush1.bf16.msra.mxu0 0
        %1157 = vmatprep.subr.bf16.mxu0 0
        %1158 = vmatpush1.bf16.msra.mxu0 0
        %1159 = vmatprep.subr.bf16.mxu0 0
        %1160 = vmatpush1.bf16.msra.mxu0 0
        %1161 = vmatprep.subr.bf16.mxu0 0
        %1162 = vmatpush1.bf16.msra.mxu0 0
        %1163 = vmatprep.subr.bf16.mxu0 0
        %1164 = vmatpush1.bf16.msra.mxu0 0
        %1165 = vmatprep.subr.bf16.mxu0 0
        %1166 = vmatpush1.bf16.msra.mxu0 0
        %1167 = vmatprep.subr.bf16.mxu0 0
        %1168 = vmatpush1.bf16.msra.mxu0 0
        %1169 = vmatprep.subr.bf16.mxu0 0
        %1170 = vmatpush1.bf16.msra.mxu0 0
        %1171 = vmatprep.mubr.bf16.mxu0 0
        %1172 = vmatmul.mubr.bf16.gmra.mrb[0].mxu0 %v957
        %v1173 = vpop.f32.mrb[0].mxu0
        %v1174 = vadd.f32 %v999, %v1173
        %v1175 = vpop.f32.mrb[0].mxu0
        %v1176 = vadd.f32 %v1003, %v1175
        %v1177 = vpop.f32.mrb[0].mxu0
        %v1178 = vadd.f32 %v999, %v1177
        %v1179 = vpop.f32.mrb[0].mxu0
        %v1180 = vadd.f32 %v1003, %v1179
        %1181 = vmatprep.mubr.bf16.mxu0 0
        %1182 = vmatmul.mubr.bf16.gmra.mrb[0].mxu0 %v958
        %v1183 = vpop.f32.mrb[0].mxu0
        %v1184 = vadd.f32 %v999, %v1183
        %v1185 = vpop.f32.mrb[0].mxu0
        %v1186 = vadd.f32 %v1003, %v1185
        %v1187 = vpop.f32.mrb[0].mxu0
        %v1188 = vadd.f32 %v999, %v1187
        %v1189 = vpop.f32.mrb[0].mxu0
        %v1190 = vadd.f32 %v1003, %v1189
        %1191 = vmatprep.mubr.bf16.mxu0 0
        %1192 = vmatmul.mubr.bf16.gmra.mrb[0].mxu0 %v959
        %v1193 = vpop.f32.mrb[0].mxu0
        %v1194 = vadd.f32 %v999, %v1193
        %v1195 = vpop.f32.mrb[0].mxu0
        %v1196 = vadd.f32 %v1003, %v1195
        %v1197 = vpop.f32.mrb[0].mxu0
        %v1198 = vadd.f32 %v999, %v1197
        %v1199 = vpop.f32.mrb[0].mxu0
        %v1200 = vadd.f32 %v1003, %v1199
        %1201 = vmatprep.mubr.bf16.mxu0 0
        %1202 = vmatmul.mubr.bf16.gmra.mrb[0].mxu0 %v960
        %v1203 = vpop.f32.mrb[0].mxu0
        %v1204 = vadd.f32 %v999, %v1203
        %v1205 = vpop.f32.mrb[0].mxu0
        %v1206 = vadd.f32 %v1003, %v1205
        %v1207 = vpop.f32.mrb[0].mxu0
        %v1208 = vadd.f32 %v999, %v1207
        %v1209 = vpop.f32.mrb[0].mxu0
        %v1210 = vadd.f32 %v1003, %v1209
        %1211 = vmatprep.mubr.bf16.mxu0 0
        %1212 = vmatmul.mubr.bf16.gmra.mrb[0].mxu0 %v961
        %v1213 = vpop.f32.mrb[0].mxu0
        %v1214 = vadd.f32 %v999, %v1213
        %v1215 = vpop.f32.mrb[0].mxu0
        %v1216 = vadd.f32 %v1003, %v1215
        %v1217 = vpop.f32.mrb[0].mxu0
        %v1218 = vadd.f32 %v999, %v1217
        %v1219 = vpop.f32.mrb[0].mxu0
        %v1220 = vadd.f32 %v1003, %v1219
        %1221 = vdwg.mxu0
        %1222 = vmatprep.subr.bf16.mxu0 0
        %1223 = vmatpush1.bf16.msra.mxu0 %v1093
        %1224 = vmatprep.subr.bf16.mxu0 0
        %1225 = vmatpush1.bf16.msra.mxu0 %v1096
        %1226 = vmatprep.subr.bf16.mxu0 0
        %1227 = vmatpush1.bf16.msra.mxu0 %v1099
        %1228 = vmatprep.subr.bf16.mxu0 0
        %1229 = vmatpush1.bf16.msra.mxu0 %v1102
        %1230 = vmatprep.subr.bf16.mxu0 0
        %1231 = vmatpush1.bf16.msra.mxu0 %v1105
        %1232 = vmatprep.subr.bf16.mxu0 0
        %1233 = vmatpush1.bf16.msra.mxu0 %v1108
        %1234 = vmatprep.subr.bf16.mxu0 0
        %1235 = vmatpush1.bf16.msra.mxu0 %v1111
        %1236 = vmatprep.subr.bf16.mxu0 0
        %1237 = vmatpush1.bf16.msra.mxu0 %v1114
        %1238 = vmatprep.subr.bf16.mxu0 0
        %1239 = vmatpush1.bf16.msra.mxu0 0
        %1240 = vmatprep.subr.bf16.mxu0 0
        %1241 = vmatpush1.bf16.msra.mxu0 0
        %1242 = vmatprep.subr.bf16.mxu0 0
        %1243 = vmatpush1.bf16.msra.mxu0 0
        %1244 = vmatprep.subr.bf16.mxu0 0
        %1245 = vmatpush1.bf16.msra.mxu0 0
        %1246 = vmatprep.subr.bf16.mxu0 0
        %1247 = vmatpush1.bf16.msra.mxu0 0
        %1248 = vmatprep.subr.bf16.mxu0 0
        %1249 = vmatpush1.bf16.msra.mxu0 0
        %1250 = vmatprep.subr.bf16.mxu0 0
        %1251 = vmatpush1.bf16.msra.mxu0 0
        %1252 = vmatprep.subr.bf16.mxu0 0
        %1253 = vmatpush1.bf16.msra.mxu0 0
        %1254 = vmatprep.mubr.bf16.mxu0 0
        %1255 = vmatmul.mubr.bf16.gmra.mrb[0].mxu0 %v957
        %v1256 = vpop.f32.mrb[0].mxu0
        %v1257 = vadd.f32 %v1007, %v1256
        %v1258 = vpop.f32.mrb[0].mxu0
        %v1259 = vpop.f32.mrb[0].mxu0
        %v1260 = vadd.f32 %v1007, %v1259
        %v1261 = vpop.f32.mrb[0].mxu0
        %1262 = vmatprep.mubr.bf16.mxu0 0
        %1263 = vmatmul.mubr.bf16.gmra.mrb[0].mxu0 %v958
        %v1264 = vpop.f32.mrb[0].mxu0
        %v1265 = vadd.f32 %v1007, %v1264
        %v1266 = vpop.f32.mrb[0].mxu0
        %v1267 = vpop.f32.mrb[0].mxu0
        %v1268 = vadd.f32 %v1007, %v1267
        %v1269 = vpop.f32.mrb[0].mxu0
        %1270 = vmatprep.mubr.bf16.mxu0 0
        %1271 = vmatmul.mubr.bf16.gmra.mrb[0].mxu0 %v959
        %v1272 = vpop.f32.mrb[0].mxu0
        %v1273 = vadd.f32 %v1007, %v1272
        %v1274 = vpop.f32.mrb[0].mxu0
        %v1275 = vpop.f32.mrb[0].mxu0
        %v1276 = vadd.f32 %v1007, %v1275
        %v1277 = vpop.f32.mrb[0].mxu0
        %1278 = vmatprep.mubr.bf16.mxu0 0
        %1279 = vmatmul.mubr.bf16.gmra.mrb[0].mxu0 %v960
        %v1280 = vpop.f32.mrb[0].mxu0
        %v1281 = vadd.f32 %v1007, %v1280
        %v1282 = vpop.f32.mrb[0].mxu0
        %v1283 = vpop.f32.mrb[0].mxu0
        %v1284 = vadd.f32 %v1007, %v1283
        %v1285 = vpop.f32.mrb[0].mxu0
        %1286 = vmatprep.mubr.bf16.mxu0 0
        %1287 = vmatmul.mubr.bf16.gmra.mrb[0].mxu0 %v961
        %v1288 = vpop.f32.mrb[0].mxu0
        %v1289 = vadd.f32 %v1007, %v1288
        %v1290 = vpop.f32.mrb[0].mxu0
        %v1291 = vpop.f32.mrb[0].mxu0
        %v1292 = vadd.f32 %v1007, %v1291
        %v1293 = vpop.f32.mrb[0].mxu0
        %1294 = vdwg.mxu0
        %1295 = vst [vmem:[#allocation3] sm:$0xff] %v1174
        %1296 = vst [vmem:[#allocation3 + $0x8] sm:$0xff] %v1176
        %1297 = vst [vmem:[#allocation3 + $0x10] sm:$0xff] %v1257
        %1298 = vst [vmem:[#allocation3 + $0x18] sm:$0xff] %v1178
        %1299 = vst [vmem:[#allocation3 + $0x20] sm:$0xff] %v1180
        %1300 = vst [vmem:[#allocation3 + $0x28] sm:$0xff] %v1260
        %1301 = vst [vmem:[#allocation3 + $0x30] sm:$0xff] %v1184
        %1302 = vst [vmem:[#allocation3 + $0x38] sm:$0xff] %v1186
        %1303 = vst [vmem:[#allocation3 + $0x40] sm:$0xff] %v1265
        %1304 = vst [vmem:[#allocation3 + $0x48] sm:$0xff] %v1188
        %1305 = vst [vmem:[#allocation3 + $0x50] sm:$0xff] %v1190
        %1306 = vst [vmem:[#allocation3 + $0x58] sm:$0xff] %v1268
        %1307 = vst [vmem:[#allocation3 + $0x60] sm:$0xff] %v1194
        %1308 = vst [vmem:[#allocation3 + $0x68] sm:$0xff] %v1196
        %1309 = vst [vmem:[#allocation3 + $0x70] sm:$0xff] %v1273
        %1310 = vst [vmem:[#allocation3 + $0x78] sm:$0xff] %v1198
        %1311 = vst [vmem:[#allocation3 + $0x80] sm:$0xff] %v1200
        %1312 = vst [vmem:[#allocation3 + $0x88] sm:$0xff] %v1276
        %1313 = vst [vmem:[#allocation3 + $0x90] sm:$0xff] %v1204
        %1314 = vst [vmem:[#allocation3 + $0x98] sm:$0xff] %v1206
        %1315 = vst [vmem:[#allocation3 + $0xa0] sm:$0xff] %v1281
        %1316 = vst [vmem:[#allocation3 + $0xa8] sm:$0xff] %v1208
        %1317 = vst [vmem:[#allocation3 + $0xb0] sm:$0xff] %v1210
        %1318 = vst [vmem:[#allocation3 + $0xb8] sm:$0xff] %v1284
        %1319 = vst [vmem:[#allocation3 + $0xc0] sm:$0xff] %v1214
        %1320 = vst [vmem:[#allocation3 + $0xc8] sm:$0xff] %v1216
        %1321 = vst [vmem:[#allocation3 + $0xd0] sm:$0xff] %v1289
        %1322 = vst [vmem:[#allocation3 + $0xd8] sm:$0xff] %v1218
        %1323 = vst [vmem:[#allocation3 + $0xe0] sm:$0xff] %v1220
        %1324 = vst [vmem:[#allocation3 + $0xe8] sm:$0xff] %v1292
        %v1325 = vld [vmem:[#allocation3] sm:$0xff]
        %v1326 = vld [vmem:[#allocation3 + $0x18] sm:$0xff]
        %v1327 = vld [vmem:[#allocation3 + $0x30] sm:$0xff]
        %v1328 = vld [vmem:[#allocation3 + $0x48] sm:$0xff]
        %v1329 = vld [vmem:[#allocation3 + $0x60] sm:$0xff]
        %v1330 = vld [vmem:[#allocation3 + $0x78] sm:$0xff]
        %v1331 = vld [vmem:[#allocation3 + $0x90] sm:$0xff]
        %v1332 = vld [vmem:[#allocation3 + $0xa8] sm:$0xff]
        %v1333 = vld [vmem:[#allocation3 + $0xc0] sm:$0xff]
        %v1334 = vld [vmem:[#allocation3 + $0xd8] sm:$0xff]
        %v1335 = vpack.c.bf16 %v1326, %v1325
        %v1336 = vpack.c.bf16 %v1328, %v1327
        %v1337 = vpack.c.bf16 %v1330, %v1329
        %v1338 = vpack.c.bf16 %v1332, %v1331
        %v1339 = vpack.c.bf16 %v1334, %v1333
        %v1340 = vld [vmem:[#allocation3 + $0x8] sm:$0xff]
        %v1341 = vld [vmem:[#allocation3 + $0x20] sm:$0xff]
        %v1342 = vld [vmem:[#allocation3 + $0x38] sm:$0xff]
        %v1343 = vld [vmem:[#allocation3 + $0x50] sm:$0xff]
        %v1344 = vld [vmem:[#allocation3 + $0x68] sm:$0xff]
        %v1345 = vld [vmem:[#allocation3 + $0x80] sm:$0xff]
        %v1346 = vld [vmem:[#allocation3 + $0x98] sm:$0xff]
        %v1347 = vld [vmem:[#allocation3 + $0xb0] sm:$0xff]
        %v1348 = vld [vmem:[#allocation3 + $0xc8] sm:$0xff]
        %v1349 = vld [vmem:[#allocation3 + $0xe0] sm:$0xff]
        %1350 = vxpose.xlu0.b32.start [1/16] %v1340, 128
        %1351 = vxpose.xlu0.b32.cont [2/16] %v1341, 128
        %1352 = vxpose.xlu0.b32.cont [3/16] %v1342, 128
        %1353 = vxpose.xlu0.b32.cont [4/16] %v1343, 128
        %1354 = vxpose.xlu0.b32.cont [5/16] %v1344, 128
        %1355 = vxpose.xlu0.b32.cont [6/16] %v1345, 128
        %1356 = vxpose.xlu0.b32.cont [7/16] %v1346, 128
        %1357 = vxpose.xlu0.b32.cont [8/16] %v1347, 128
        %1358 = vxpose.xlu0.b32.cont [9/16] %v1348, 128
        %1359 = vxpose.xlu0.b32.cont [10/16] %v1349, 128
        %1360 = vxpose.xlu0.b32.cont [11/16] 0.0, 128
        %1361 = vxpose.xlu0.b32.cont [12/16] 0.0, 128
        %1362 = vxpose.xlu0.b32.cont [13/16] 0.0, 128
        %1363 = vxpose.xlu0.b32.cont [14/16] 0.0, 128
        %1364 = vxpose.xlu0.b32.cont [15/16] 0.0, 128
        %1365 = vxpose.xlu0.b32.end [16/16] 0.0, 128
        %v1366 = vpop.trf.xlu0
        %v1367 = vpop.trf.xlu0
        %v1368 = vpop.trf.xlu0
        %v1369 = vpop.trf.xlu0
        %v1370 = vpop.trf.xlu0
        %v1371 = vpop.trf.xlu0
        %v1372 = vpop.trf.xlu0
        %v1373 = vpop.trf.xlu0
        %v1374 = vpop.trf.xlu0
        %v1375 = vpop.trf.xlu0
        %v1376 = vpop.trf.xlu0
        %v1377 = vpop.trf.xlu0
        %v1378 = vpop.trf.xlu0
        %v1379 = vpop.trf.xlu0
        %v1380 = vpop.trf.xlu0
        %v1381 = vpop.trf.xlu0
        %v1382 = vpack.c.bf16 %v1367, %v1366
        %v1383 = vpack.c.bf16 %v1369, %v1368
        %v1384 = vpack.c.bf16 %v1371, %v1370
        %v1385 = vpack.c.bf16 %v1373, %v1372
        %v1386 = vpack.c.bf16 %v1375, %v1374
        %v1387 = vpack.c.bf16 %v1377, %v1376
        %v1388 = vpack.c.bf16 %v1379, %v1378
        %v1389 = vpack.c.bf16 %v1381, %v1380
        %v1390 = vld [vmem:[#allocation3 + $0x10] sm:$0xff]
        %v1391 = vld [vmem:[#allocation3 + $0x28] sm:$0xff]
        %v1392 = vld [vmem:[#allocation3 + $0x40] sm:$0xff]
        %v1393 = vld [vmem:[#allocation3 + $0x58] sm:$0xff]
        %v1394 = vld [vmem:[#allocation3 + $0x70] sm:$0xff]
        %v1395 = vld [vmem:[#allocation3 + $0x88] sm:$0xff]
        %v1396 = vld [vmem:[#allocation3 + $0xa0] sm:$0xff]
        %v1397 = vld [vmem:[#allocation3 + $0xb8] sm:$0xff]
        %v1398 = vld [vmem:[#allocation3 + $0xd0] sm:$0xff]
        %v1399 = vld [vmem:[#allocation3 + $0xe8] sm:$0xff]
        %v1400 = vpack.c.bf16 %v1391, %v1390
        %v1401 = vpack.c.bf16 %v1393, %v1392
        %v1402 = vpack.c.bf16 %v1395, %v1394
        %v1403 = vpack.c.bf16 %v1397, %v1396
        %v1404 = vpack.c.bf16 %v1399, %v1398
        %vm1405 = vcmask 261120
        %v1407 = vsel %vm1405, %v1335, 0
        %v1410 = vsel %vm1405, %v1336, 0
        %v1413 = vsel %vm1405, %v1337, 0
        %v1416 = vsel %vm1405, %v1338, 0
        %v1419 = vsel %vm1405, %v1339, 0
        %1421 = vmatprep.subr.bf16.mxu0 0
        %1422 = vmatpush1.bf16.msra.mxu0 %v1382
        %1423 = vmatprep.subr.bf16.mxu0 0
        %1424 = vmatpush1.bf16.msra.mxu0 %v1383
        %1425 = vmatprep.subr.bf16.mxu0 0
        %1426 = vmatpush1.bf16.msra.mxu0 0
        %1427 = vmatprep.subr.bf16.mxu0 0
        %1428 = vmatpush1.bf16.msra.mxu0 0
        %1429 = vmatprep.subr.bf16.mxu0 0
        %1430 = vmatpush1.bf16.msra.mxu0 0
        %1431 = vmatprep.subr.bf16.mxu0 0
        %1432 = vmatpush1.bf16.msra.mxu0 0
        %1433 = vmatprep.subr.bf16.mxu0 0
        %1434 = vmatpush1.bf16.msra.mxu0 0
        %1435 = vmatprep.subr.bf16.mxu0 0
        %1436 = vmatpush1.bf16.msra.mxu0 0
        %1437 = vmatprep.subr.bf16.mxu0 0
        %1438 = vmatpush1.bf16.msra.mxu0 0
        %1439 = vmatprep.subr.bf16.mxu0 0
        %1440 = vmatpush1.bf16.msra.mxu0 0
        %1441 = vmatprep.subr.bf16.mxu0 0
        %1442 = vmatpush1.bf16.msra.mxu0 0
        %1443 = vmatprep.subr.bf16.mxu0 0
        %1444 = vmatpush1.bf16.msra.mxu0 0
        %1445 = vmatprep.subr.bf16.mxu0 0
        %1446 = vmatpush1.bf16.msra.mxu0 0
        %1447 = vmatprep.subr.bf16.mxu0 0
        %1448 = vmatpush1.bf16.msra.mxu0 0
        %1449 = vmatprep.subr.bf16.mxu0 0
        %1450 = vmatpush1.bf16.msra.mxu0 0
        %1451 = vmatprep.subr.bf16.mxu0 0
        %1452 = vmatpush1.bf16.msra.mxu0 0
        %1453 = vmatprep.mubr.bf16.mxu0 0
        %1454 = vmatmul.mubr.bf16.gmra.mrb[0].mxu0 %v1407
        %v1455 = vpop.f32.mrb[0].mxu0
        %v1456 = vadd.f32 %v946, %v1455
        %v1457 = vpop.f32.mrb[0].mxu0
        %v1458 = vpop.f32.mrb[0].mxu0
        %v1459 = vadd.f32 %v946, %v1458
        %v1460 = vpop.f32.mrb[0].mxu0
        %1461 = vmatprep.mubr.bf16.mxu0 0
        %1462 = vmatmul.mubr.bf16.gmra.mrb[0].mxu0 %v1410
        %v1463 = vpop.f32.mrb[0].mxu0
        %v1464 = vadd.f32 %v946, %v1463
        %v1465 = vpop.f32.mrb[0].mxu0
        %v1466 = vpop.f32.mrb[0].mxu0
        %v1467 = vadd.f32 %v946, %v1466
        %v1468 = vpop.f32.mrb[0].mxu0
        %1469 = vmatprep.mubr.bf16.mxu0 0
        %1470 = vmatmul.mubr.bf16.gmra.mrb[0].mxu0 %v1413
        %v1471 = vpop.f32.mrb[0].mxu0
        %v1472 = vadd.f32 %v946, %v1471
        %v1473 = vpop.f32.mrb[0].mxu0
        %v1474 = vpop.f32.mrb[0].mxu0
        %v1475 = vadd.f32 %v946, %v1474
        %v1476 = vpop.f32.mrb[0].mxu0
        %1477 = vmatprep.mubr.bf16.mxu0 0
        %1478 = vmatmul.mubr.bf16.gmra.mrb[0].mxu0 %v1416
        %v1479 = vpop.f32.mrb[0].mxu0
        %v1480 = vadd.f32 %v946, %v1479
        %v1481 = vpop.f32.mrb[0].mxu0
        %v1482 = vpop.f32.mrb[0].mxu0
        %v1483 = vadd.f32 %v946, %v1482
        %v1484 = vpop.f32.mrb[0].mxu0
        %1485 = vmatprep.mubr.bf16.mxu0 0
        %1486 = vmatmul.mubr.bf16.gmra.mrb[0].mxu0 %v1419
        %v1487 = vpop.f32.mrb[0].mxu0
        %v1488 = vadd.f32 %v946, %v1487
        %v1489 = vpop.f32.mrb[0].mxu0
        %v1490 = vpop.f32.mrb[0].mxu0
        %v1491 = vadd.f32 %v946, %v1490
        %v1492 = vpop.f32.mrb[0].mxu0
        %1493 = vdwg.mxu0
        %vm1494 = vcmask 654336
        %v1495 = vsel %vm1494, %v1456, -inf
        %1496 = vmax.xlane.f32.xlu0 %v1495
        %v1497 = vpop.xlane.xlu0 %1496
        %v1498 = vsel %vm1494, %v1459, -inf
        %1499 = vmax.xlane.f32.xlu0 %v1498
        %v1500 = vpop.xlane.xlu0 %1499
        %v1501 = vsel %vm1494, %v1464, -inf
        %1502 = vmax.xlane.f32.xlu0 %v1501
        %v1503 = vpop.xlane.xlu0 %1502
        %v1504 = vsel %vm1494, %v1467, -inf
        %1505 = vmax.xlane.f32.xlu0 %v1504
        %v1506 = vpop.xlane.xlu0 %1505
        %v1507 = vsel %vm1494, %v1472, -inf
        %1508 = vmax.xlane.f32.xlu0 %v1507
        %v1509 = vpop.xlane.xlu0 %1508
        %v1510 = vsel %vm1494, %v1475, -inf
        %1511 = vmax.xlane.f32.xlu0 %v1510
        %v1512 = vpop.xlane.xlu0 %1511
        %v1513 = vsel %vm1494, %v1480, -inf
        %1514 = vmax.xlane.f32.xlu0 %v1513
        %v1515 = vpop.xlane.xlu0 %1514
        %v1516 = vsel %vm1494, %v1483, -inf
        %1517 = vmax.xlane.f32.xlu0 %v1516
        %v1518 = vpop.xlane.xlu0 %1517
        %v1519 = vsel %vm1494, %v1488, -inf
        %1520 = vmax.xlane.f32.xlu0 %v1519
        %v1521 = vpop.xlane.xlu0 %1520
        %v1522 = vsel %vm1494, %v1491, -inf
        %1523 = vmax.xlane.f32.xlu0 %v1522
        %v1524 = vpop.xlane.xlu0 %1523
        %v1525 = vsub.f32 %v1456, %v1497
        %v1526 = vsub.f32 %v1459, %v1500
        %v1527 = vsub.f32 %v1464, %v1503
        %v1528 = vsub.f32 %v1467, %v1506
        %v1529 = vsub.f32 %v1472, %v1509
        %v1530 = vsub.f32 %v1475, %v1512
        %v1531 = vsub.f32 %v1480, %v1515
        %v1532 = vsub.f32 %v1483, %v1518
        %v1533 = vsub.f32 %v1488, %v1521
        %v1534 = vsub.f32 %v1491, %v1524
        %v1535 = vmul.f32 %v1525, 1.442695
        %v1536 = vpow.pop %v1535
        %v1537 = vmul.f32 %v1526, 1.442695
        %v1538 = vpow.pop %v1537
        %v1539 = vmul.f32 %v1527, 1.442695
        %v1540 = vpow.pop %v1539
        %v1541 = vmul.f32 %v1528, 1.442695
        %v1542 = vpow.pop %v1541
        %v1543 = vmul.f32 %v1529, 1.442695
        %v1544 = vpow.pop %v1543
        %v1545 = vmul.f32 %v1530, 1.442695
        %v1546 = vpow.pop %v1545
        %v1547 = vmul.f32 %v1531, 1.442695
        %v1548 = vpow.pop %v1547
        %v1549 = vmul.f32 %v1532, 1.442695
        %v1550 = vpow.pop %v1549
        %v1551 = vmul.f32 %v1533, 1.442695
        %v1552 = vpow.pop %v1551
        %v1553 = vmul.f32 %v1534, 1.442695
        %v1554 = vpow.pop %v1553
        %v1555 = vsel %vm1494, %v1536, 0.0
        %1556 = vadd.xlane.f32.xlu0 %v1555
        %v1557 = vpop.xlane.xlu0 %1556
        %v1558 = vsel %vm1494, %v1538, 0.0
        %1559 = vadd.xlane.f32.xlu0 %v1558
        %v1560 = vpop.xlane.xlu0 %1559
        %v1561 = vsel %vm1494, %v1540, 0.0
        %1562 = vadd.xlane.f32.xlu0 %v1561
        %v1563 = vpop.xlane.xlu0 %1562
        %v1564 = vsel %vm1494, %v1542, 0.0
        %1565 = vadd.xlane.f32.xlu0 %v1564
        %v1566 = vpop.xlane.xlu0 %1565
        %v1567 = vsel %vm1494, %v1544, 0.0
        %1568 = vadd.xlane.f32.xlu0 %v1567
        %v1569 = vpop.xlane.xlu0 %1568
        %v1570 = vsel %vm1494, %v1546, 0.0
        %1571 = vadd.xlane.f32.xlu0 %v1570
        %v1572 = vpop.xlane.xlu0 %1571
        %v1573 = vsel %vm1494, %v1548, 0.0
        %1574 = vadd.xlane.f32.xlu0 %v1573
        %v1575 = vpop.xlane.xlu0 %1574
        %v1576 = vsel %vm1494, %v1550, 0.0
        %1577 = vadd.xlane.f32.xlu0 %v1576
        %v1578 = vpop.xlane.xlu0 %1577
        %v1579 = vsel %vm1494, %v1552, 0.0
        %1580 = vadd.xlane.f32.xlu0 %v1579
        %v1581 = vpop.xlane.xlu0 %1580
        %v1582 = vsel %vm1494, %v1554, 0.0
        %1583 = vadd.xlane.f32.xlu0 %v1582
        %v1584 = vpop.xlane.xlu0 %1583
        %v1585 = vrcp.pop %v1557
        %v1586 = vrcp.pop %v1560
        %v1587 = vrcp.pop %v1563
        %v1588 = vrcp.pop %v1566
        %v1589 = vrcp.pop %v1569
        %v1590 = vrcp.pop %v1572
        %v1591 = vrcp.pop %v1575
        %v1592 = vrcp.pop %v1578
        %v1593 = vrcp.pop %v1581
        %v1594 = vrcp.pop %v1584
        %v1595 = vmul.f32 %v1536, %v1585
        %v1596 = vmul.f32 %v1538, %v1586
        %v1597 = vmul.f32 %v1540, %v1587
        %v1598 = vmul.f32 %v1542, %v1588
        %v1599 = vmul.f32 %v1544, %v1589
        %v1600 = vmul.f32 %v1546, %v1590
        %v1601 = vmul.f32 %v1548, %v1591
        %v1602 = vmul.f32 %v1550, %v1592
        %v1603 = vmul.f32 %v1552, %v1593
        %v1604 = vmul.f32 %v1554, %v1594
        %v1605 = vpack.c.bf16 %v1596, %v1595
        %v1606 = vpack.c.bf16 %v1598, %v1597
        %v1607 = vpack.c.bf16 %v1600, %v1599
        %v1608 = vpack.c.bf16 %v1602, %v1601
        %v1609 = vpack.c.bf16 %v1604, %v1603
        %v1611 = vsel %vm1494, %v1605, 0
        %v1614 = vsel %vm1494, %v1606, 0
        %v1617 = vsel %vm1494, %v1607, 0
        %v1620 = vsel %vm1494, %v1608, 0
        %v1623 = vsel %vm1494, %v1609, 0
        %1625 = vmatprep.subr.bf16.mxu0 0
        %1626 = vmatpush1.bf16.msra.mxu0 %v1400
        %1627 = vmatprep.subr.bf16.mxu0 0
        %1628 = vmatpush1.bf16.msra.mxu0 %v1401
        %1629 = vmatprep.subr.bf16.mxu0 0
        %1630 = vmatpush1.bf16.msra.mxu0 %v1402
        %1631 = vmatprep.subr.bf16.mxu0 0
        %1632 = vmatpush1.bf16.msra.mxu0 %v1403
        %1633 = vmatprep.subr.bf16.mxu0 0
        %1634 = vmatpush1.bf16.msra.mxu0 %v1404
        %1635 = vmatprep.subr.bf16.mxu0 0
        %1636 = vmatpush1.bf16.msra.mxu0 0
        %1637 = vmatprep.subr.bf16.mxu0 0
        %1638 = vmatpush1.bf16.msra.mxu0 0
        %1639 = vmatprep.subr.bf16.mxu0 0
        %1640 = vmatpush1.bf16.msra.mxu0 0
        %1641 = vmatprep.subr.bf16.mxu0 0
        %1642 = vmatpush1.bf16.msra.mxu0 0
        %1643 = vmatprep.subr.bf16.mxu0 0
        %1644 = vmatpush1.bf16.msra.mxu0 0
        %1645 = vmatprep.subr.bf16.mxu0 0
        %1646 = vmatpush1.bf16.msra.mxu0 0
        %1647 = vmatprep.subr.bf16.mxu0 0
        %1648 = vmatpush1.bf16.msra.mxu0 0
        %1649 = vmatprep.subr.bf16.mxu0 0
        %1650 = vmatpush1.bf16.msra.mxu0 0
        %1651 = vmatprep.subr.bf16.mxu0 0
        %1652 = vmatpush1.bf16.msra.mxu0 0
        %1653 = vmatprep.subr.bf16.mxu0 0
        %1654 = vmatpush1.bf16.msra.mxu0 0
        %1655 = vmatprep.subr.bf16.mxu0 0
        %1656 = vmatpush1.bf16.msra.mxu0 0
        %1657 = vmatprep.mubr.bf16.mxu0 0
        %1658 = vmatmul.mubr.bf16.gmra.mrb[0].mxu0 %v1611
        %v1659 = vpop.f32.mrb[0].mxu0
        %v1660 = vadd.f32 0.0, %v1659
        %v1661 = vpop.f32.mrb[0].mxu0
        %v1662 = vpop.f32.mrb[0].mxu0
        %v1663 = vadd.f32 0.0, %v1662
        %v1664 = vpop.f32.mrb[0].mxu0
        %1665 = vmatprep.mubr.bf16.mxu0 0
        %1666 = vmatmul.mubr.bf16.gmra.mrb[0].mxu0 %v1614
        %v1667 = vpop.f32.mrb[0].mxu0
        %v1668 = vadd.f32 0.0, %v1667
        %v1669 = vpop.f32.mrb[0].mxu0
        %v1670 = vpop.f32.mrb[0].mxu0
        %v1671 = vadd.f32 0.0, %v1670
        %v1672 = vpop.f32.mrb[0].mxu0
        %1673 = vmatprep.mubr.bf16.mxu0 0
        %1674 = vmatmul.mubr.bf16.gmra.mrb[0].mxu0 %v1617
        %v1675 = vpop.f32.mrb[0].mxu0
        %v1676 = vadd.f32 0.0, %v1675
        %v1677 = vpop.f32.mrb[0].mxu0
        %v1678 = vpop.f32.mrb[0].mxu0
        %v1679 = vadd.f32 0.0, %v1678
        %v1680 = vpop.f32.mrb[0].mxu0
        %1681 = vmatprep.mubr.bf16.mxu0 0
        %1682 = vmatmul.mubr.bf16.gmra.mrb[0].mxu0 %v1620
        %v1683 = vpop.f32.mrb[0].mxu0
        %v1684 = vadd.f32 0.0, %v1683
        %v1685 = vpop.f32.mrb[0].mxu0
        %v1686 = vpop.f32.mrb[0].mxu0
        %v1687 = vadd.f32 0.0, %v1686
        %v1688 = vpop.f32.mrb[0].mxu0
        %1689 = vmatprep.mubr.bf16.mxu0 0
        %1690 = vmatmul.mubr.bf16.gmra.mrb[0].mxu0 %v1623
        %v1691 = vpop.f32.mrb[0].mxu0
        %v1692 = vadd.f32 0.0, %v1691
        %v1693 = vpop.f32.mrb[0].mxu0
        %v1694 = vpop.f32.mrb[0].mxu0
        %v1695 = vadd.f32 0.0, %v1694
        %v1696 = vpop.f32.mrb[0].mxu0
        %1697 = vdwg.mxu0
        %1698 = vst.msk [vmem:[#allocation4] sm:$0xff] %vm1405, %v1660
        %1699 = vst.msk [vmem:[#allocation4 + $0x8] sm:$0xff] %vm1405, %v1663
        %1700 = vst.msk [vmem:[#allocation4 + $0x10] sm:$0xff] %vm1405, %v1668
        %1701 = vst.msk [vmem:[#allocation4 + $0x18] sm:$0xff] %vm1405, %v1671
        %1702 = vst.msk [vmem:[#allocation4 + $0x20] sm:$0xff] %vm1405, %v1676
        %1703 = vst.msk [vmem:[#allocation4 + $0x28] sm:$0xff] %vm1405, %v1679
        %1704 = vst.msk [vmem:[#allocation4 + $0x30] sm:$0xff] %vm1405, %v1684
        %1705 = vst.msk [vmem:[#allocation4 + $0x38] sm:$0xff] %vm1405, %v1687
        %1706 = vst.msk [vmem:[#allocation4 + $0x40] sm:$0xff] %vm1405, %v1692
        %1707 = vst.msk [vmem:[#allocation4 + $0x48] sm:$0xff] %vm1405, %v1695
        %1713 = vrot.lane.b32.xlu0 %v1335, 96
        %v1714 = vpop.permute.xlu0 %1713
        %1715 = vrot.lane.b32.xlu0 %v1336, 96
        %v1716 = vpop.permute.xlu0 %1715
        %1717 = vrot.lane.b32.xlu0 %v1337, 96
        %v1718 = vpop.permute.xlu0 %1717
        %1719 = vrot.lane.b32.xlu0 %v1338, 96
        %v1720 = vpop.permute.xlu0 %1719
        %1721 = vrot.lane.b32.xlu0 %v1339, 96
        %v1722 = vpop.permute.xlu0 %1721
        %v1724 = vsel %vm1405, %v1714, 0
        %v1727 = vsel %vm1405, %v1716, 0
        %v1730 = vsel %vm1405, %v1718, 0
        %v1733 = vsel %vm1405, %v1720, 0
        %v1736 = vsel %vm1405, %v1722, 0
        %1738 = vmatprep.subr.bf16.mxu0 0
        %1739 = vmatpush1.bf16.msra.mxu0 %v1384
        %1740 = vmatprep.subr.bf16.mxu0 0
        %1741 = vmatpush1.bf16.msra.mxu0 %v1385
        %1742 = vmatprep.subr.bf16.mxu0 0
        %1743 = vmatpush1.bf16.msra.mxu0 0
        %1744 = vmatprep.subr.bf16.mxu0 0
        %1745 = vmatpush1.bf16.msra.mxu0 0
        %1746 = vmatprep.subr.bf16.mxu0 0
        %1747 = vmatpush1.bf16.msra.mxu0 0
        %1748 = vmatprep.subr.bf16.mxu0 0
        %1749 = vmatpush1.bf16.msra.mxu0 0
        %1750 = vmatprep.subr.bf16.mxu0 0
        %1751 = vmatpush1.bf16.msra.mxu0 0
        %1752 = vmatprep.subr.bf16.mxu0 0
        %1753 = vmatpush1.bf16.msra.mxu0 0
        %1754 = vmatprep.subr.bf16.mxu0 0
        %1755 = vmatpush1.bf16.msra.mxu0 0
        %1756 = vmatprep.subr.bf16.mxu0 0
        %1757 = vmatpush1.bf16.msra.mxu0 0
        %1758 = vmatprep.subr.bf16.mxu0 0
        %1759 = vmatpush1.bf16.msra.mxu0 0
        %1760 = vmatprep.subr.bf16.mxu0 0
        %1761 = vmatpush1.bf16.msra.mxu0 0
        %1762 = vmatprep.subr.bf16.mxu0 0
        %1763 = vmatpush1.bf16.msra.mxu0 0
        %1764 = vmatprep.subr.bf16.mxu0 0
        %1765 = vmatpush1.bf16.msra.mxu0 0
        %1766 = vmatprep.subr.bf16.mxu0 0
        %1767 = vmatpush1.bf16.msra.mxu0 0
        %1768 = vmatprep.subr.bf16.mxu0 0
        %1769 = vmatpush1.bf16.msra.mxu0 0
        %1770 = vmatprep.mubr.bf16.mxu0 0
        %1771 = vmatmul.mubr.bf16.gmra.mrb[0].mxu0 %v1724
        %v1772 = vpop.f32.mrb[0].mxu0
        %v1773 = vadd.f32 %v946, %v1772
        %v1774 = vpop.f32.mrb[0].mxu0
        %v1775 = vpop.f32.mrb[0].mxu0
        %v1776 = vadd.f32 %v946, %v1775
        %v1777 = vpop.f32.mrb[0].mxu0
        %1778 = vmatprep.mubr.bf16.mxu0 0
        %1779 = vmatmul.mubr.bf16.gmra.mrb[0].mxu0 %v1727
        %v1780 = vpop.f32.mrb[0].mxu0
        %v1781 = vadd.f32 %v946, %v1780
        %v1782 = vpop.f32.mrb[0].mxu0
        %v1783 = vpop.f32.mrb[0].mxu0
        %v1784 = vadd.f32 %v946, %v1783
        %v1785 = vpop.f32.mrb[0].mxu0
        %1786 = vmatprep.mubr.bf16.mxu0 0
        %1787 = vmatmul.mubr.bf16.gmra.mrb[0].mxu0 %v1730
        %v1788 = vpop.f32.mrb[0].mxu0
        %v1789 = vadd.f32 %v946, %v1788
        %v1790 = vpop.f32.mrb[0].mxu0
        %v1791 = vpop.f32.mrb[0].mxu0
        %v1792 = vadd.f32 %v946, %v1791
        %v1793 = vpop.f32.mrb[0].mxu0
        %1794 = vmatprep.mubr.bf16.mxu0 0
        %1795 = vmatmul.mubr.bf16.gmra.mrb[0].mxu0 %v1733
        %v1796 = vpop.f32.mrb[0].mxu0
        %v1797 = vadd.f32 %v946, %v1796
        %v1798 = vpop.f32.mrb[0].mxu0
        %v1799 = vpop.f32.mrb[0].mxu0
        %v1800 = vadd.f32 %v946, %v1799
        %v1801 = vpop.f32.mrb[0].mxu0
        %1802 = vmatprep.mubr.bf16.mxu0 0
        %1803 = vmatmul.mubr.bf16.gmra.mrb[0].mxu0 %v1736
        %v1804 = vpop.f32.mrb[0].mxu0
        %v1805 = vadd.f32 %v946, %v1804
        %v1806 = vpop.f32.mrb[0].mxu0
        %v1807 = vpop.f32.mrb[0].mxu0
        %v1808 = vadd.f32 %v946, %v1807
        %v1809 = vpop.f32.mrb[0].mxu0
        %1810 = vdwg.mxu0
        %v1811 = vsel %vm1494, %v1773, -inf
        %1812 = vmax.xlane.f32.xlu0 %v1811
        %v1813 = vpop.xlane.xlu0 %1812
        %v1814 = vsel %vm1494, %v1776, -inf
        %1815 = vmax.xlane.f32.xlu0 %v1814
        %v1816 = vpop.xlane.xlu0 %1815
        %v1817 = vsel %vm1494, %v1781, -inf
        %1818 = vmax.xlane.f32.xlu0 %v1817
        %v1819 = vpop.xlane.xlu0 %1818
        %v1820 = vsel %vm1494, %v1784, -inf
        %1821 = vmax.xlane.f32.xlu0 %v1820
        %v1822 = vpop.xlane.xlu0 %1821
        %v1823 = vsel %vm1494, %v1789, -inf
        %1824 = vmax.xlane.f32.xlu0 %v1823
        %v1825 = vpop.xlane.xlu0 %1824
        %v1826 = vsel %vm1494, %v1792, -inf
        %1827 = vmax.xlane.f32.xlu0 %v1826
        %v1828 = vpop.xlane.xlu0 %1827
        %v1829 = vsel %vm1494, %v1797, -inf
        %1830 = vmax.xlane.f32.xlu0 %v1829
        %v1831 = vpop.xlane.xlu0 %1830
        %v1832 = vsel %vm1494, %v1800, -inf
        %1833 = vmax.xlane.f32.xlu0 %v1832
        %v1834 = vpop.xlane.xlu0 %1833
        %v1835 = vsel %vm1494, %v1805, -inf
        %1836 = vmax.xlane.f32.xlu0 %v1835
        %v1837 = vpop.xlane.xlu0 %1836
        %v1838 = vsel %vm1494, %v1808, -inf
        %1839 = vmax.xlane.f32.xlu0 %v1838
        %v1840 = vpop.xlane.xlu0 %1839
        %v1841 = vsub.f32 %v1773, %v1813
        %v1842 = vsub.f32 %v1776, %v1816
        %v1843 = vsub.f32 %v1781, %v1819
        %v1844 = vsub.f32 %v1784, %v1822
        %v1845 = vsub.f32 %v1789, %v1825
        %v1846 = vsub.f32 %v1792, %v1828
        %v1847 = vsub.f32 %v1797, %v1831
        %v1848 = vsub.f32 %v1800, %v1834
        %v1849 = vsub.f32 %v1805, %v1837
        %v1850 = vsub.f32 %v1808, %v1840
        %v1851 = vmul.f32 %v1841, 1.442695
        %v1852 = vpow.pop %v1851
        %v1853 = vmul.f32 %v1842, 1.442695
        %v1854 = vpow.pop %v1853
        %v1855 = vmul.f32 %v1843, 1.442695
        %v1856 = vpow.pop %v1855
        %v1857 = vmul.f32 %v1844, 1.442695
        %v1858 = vpow.pop %v1857
        %v1859 = vmul.f32 %v1845, 1.442695
        %v1860 = vpow.pop %v1859
        %v1861 = vmul.f32 %v1846, 1.442695
        %v1862 = vpow.pop %v1861
        %v1863 = vmul.f32 %v1847, 1.442695
        %v1864 = vpow.pop %v1863
        %v1865 = vmul.f32 %v1848, 1.442695
        %v1866 = vpow.pop %v1865
        %v1867 = vmul.f32 %v1849, 1.442695
        %v1868 = vpow.pop %v1867
        %v1869 = vmul.f32 %v1850, 1.442695
        %v1870 = vpow.pop %v1869
        %v1871 = vsel %vm1494, %v1852, 0.0
        %1872 = vadd.xlane.f32.xlu0 %v1871
        %v1873 = vpop.xlane.xlu0 %1872
        %v1874 = vsel %vm1494, %v1854, 0.0
        %1875 = vadd.xlane.f32.xlu0 %v1874
        %v1876 = vpop.xlane.xlu0 %1875
        %v1877 = vsel %vm1494, %v1856, 0.0
        %1878 = vadd.xlane.f32.xlu0 %v1877
        %v1879 = vpop.xlane.xlu0 %1878
        %v1880 = vsel %vm1494, %v1858, 0.0
        %1881 = vadd.xlane.f32.xlu0 %v1880
        %v1882 = vpop.xlane.xlu0 %1881
        %v1883 = vsel %vm1494, %v1860, 0.0
        %1884 = vadd.xlane.f32.xlu0 %v1883
        %v1885 = vpop.xlane.xlu0 %1884
        %v1886 = vsel %vm1494, %v1862, 0.0
        %1887 = vadd.xlane.f32.xlu0 %v1886
        %v1888 = vpop.xlane.xlu0 %1887
        %v1889 = vsel %vm1494, %v1864, 0.0
        %1890 = vadd.xlane.f32.xlu0 %v1889
        %v1891 = vpop.xlane.xlu0 %1890
        %v1892 = vsel %vm1494, %v1866, 0.0
        %1893 = vadd.xlane.f32.xlu0 %v1892
        %v1894 = vpop.xlane.xlu0 %1893
        %v1895 = vsel %vm1494, %v1868, 0.0
        %1896 = vadd.xlane.f32.xlu0 %v1895
        %v1897 = vpop.xlane.xlu0 %1896
        %v1898 = vsel %vm1494, %v1870, 0.0
        %1899 = vadd.xlane.f32.xlu0 %v1898
        %v1900 = vpop.xlane.xlu0 %1899
        %v1901 = vrcp.pop %v1873
        %v1902 = vrcp.pop %v1876
        %v1903 = vrcp.pop %v1879
        %v1904 = vrcp.pop %v1882
        %v1905 = vrcp.pop %v1885
        %v1906 = vrcp.pop %v1888
        %v1907 = vrcp.pop %v1891
        %v1908 = vrcp.pop %v1894
        %v1909 = vrcp.pop %v1897
        %v1910 = vrcp.pop %v1900
        %v1911 = vmul.f32 %v1852, %v1901
        %v1912 = vmul.f32 %v1854, %v1902
        %v1913 = vmul.f32 %v1856, %v1903
        %v1914 = vmul.f32 %v1858, %v1904
        %v1915 = vmul.f32 %v1860, %v1905
        %v1916 = vmul.f32 %v1862, %v1906
        %v1917 = vmul.f32 %v1864, %v1907
        %v1918 = vmul.f32 %v1866, %v1908
        %v1919 = vmul.f32 %v1868, %v1909
        %v1920 = vmul.f32 %v1870, %v1910
        %v1921 = vpack.c.bf16 %v1912, %v1911
        %v1922 = vpack.c.bf16 %v1914, %v1913
        %v1923 = vpack.c.bf16 %v1916, %v1915
        %v1924 = vpack.c.bf16 %v1918, %v1917
        %v1925 = vpack.c.bf16 %v1920, %v1919
        %1931 = vrot.lane.b32.xlu0 %v1400, 96
        %v1932 = vpop.permute.xlu0 %1931
        %1933 = vrot.lane.b32.xlu0 %v1401, 96
        %v1934 = vpop.permute.xlu0 %1933
        %1935 = vrot.lane.b32.xlu0 %v1402, 96
        %v1936 = vpop.permute.xlu0 %1935
        %1937 = vrot.lane.b32.xlu0 %v1403, 96
        %v1938 = vpop.permute.xlu0 %1937
        %1939 = vrot.lane.b32.xlu0 %v1404, 96
        %v1940 = vpop.permute.xlu0 %1939
        %v1947 = vsel %vm1494, %v1921, 0
        %v1950 = vsel %vm1494, %v1922, 0
        %v1953 = vsel %vm1494, %v1923, 0
        %v1956 = vsel %vm1494, %v1924, 0
        %v1959 = vsel %vm1494, %v1925, 0
        %1961 = vmatprep.subr.bf16.mxu0 0
        %1962 = vmatpush1.bf16.msra.mxu0 %v1932
        %1963 = vmatprep.subr.bf16.mxu0 0
        %1964 = vmatpush1.bf16.msra.mxu0 %v1934
        %1965 = vmatprep.subr.bf16.mxu0 0
        %1966 = vmatpush1.bf16.msra.mxu0 %v1936
        %1967 = vmatprep.subr.bf16.mxu0 0
        %1968 = vmatpush1.bf16.msra.mxu0 %v1938
        %1969 = vmatprep.subr.bf16.mxu0 0
        %1970 = vmatpush1.bf16.msra.mxu0 %v1940
        %1971 = vmatprep.subr.bf16.mxu0 0
        %1972 = vmatpush1.bf16.msra.mxu0 0
        %1973 = vmatprep.subr.bf16.mxu0 0
        %1974 = vmatpush1.bf16.msra.mxu0 0
        %1975 = vmatprep.subr.bf16.mxu0 0
        %1976 = vmatpush1.bf16.msra.mxu0 0
        %1977 = vmatprep.subr.bf16.mxu0 0
        %1978 = vmatpush1.bf16.msra.mxu0 0
        %1979 = vmatprep.subr.bf16.mxu0 0
        %1980 = vmatpush1.bf16.msra.mxu0 0
        %1981 = vmatprep.subr.bf16.mxu0 0
        %1982 = vmatpush1.bf16.msra.mxu0 0
        %1983 = vmatprep.subr.bf16.mxu0 0
        %1984 = vmatpush1.bf16.msra.mxu0 0
        %1985 = vmatprep.subr.bf16.mxu0 0
        %1986 = vmatpush1.bf16.msra.mxu0 0
        %1987 = vmatprep.subr.bf16.mxu0 0
        %1988 = vmatpush1.bf16.msra.mxu0 0
        %1989 = vmatprep.subr.bf16.mxu0 0
        %1990 = vmatpush1.bf16.msra.mxu0 0
        %1991 = vmatprep.subr.bf16.mxu0 0
        %1992 = vmatpush1.bf16.msra.mxu0 0
        %1993 = vmatprep.mubr.bf16.mxu0 0
        %1994 = vmatmul.mubr.bf16.gmra.mrb[0].mxu0 %v1947
        %v1995 = vpop.f32.mrb[0].mxu0
        %v1996 = vadd.f32 0.0, %v1995
        %v1997 = vpop.f32.mrb[0].mxu0
        %v1998 = vpop.f32.mrb[0].mxu0
        %v1999 = vadd.f32 0.0, %v1998
        %v2000 = vpop.f32.mrb[0].mxu0
        %2001 = vmatprep.mubr.bf16.mxu0 0
        %2002 = vmatmul.mubr.bf16.gmra.mrb[0].mxu0 %v1950
        %v2003 = vpop.f32.mrb[0].mxu0
        %v2004 = vadd.f32 0.0, %v2003
        %v2005 = vpop.f32.mrb[0].mxu0
        %v2006 = vpop.f32.mrb[0].mxu0
        %v2007 = vadd.f32 0.0, %v2006
        %v2008 = vpop.f32.mrb[0].mxu0
        %2009 = vmatprep.mubr.bf16.mxu0 0
        %2010 = vmatmul.mubr.bf16.gmra.mrb[0].mxu0 %v1953
        %v2011 = vpop.f32.mrb[0].mxu0
        %v2012 = vadd.f32 0.0, %v2011
        %v2013 = vpop.f32.mrb[0].mxu0
        %v2014 = vpop.f32.mrb[0].mxu0
        %v2015 = vadd.f32 0.0, %v2014
        %v2016 = vpop.f32.mrb[0].mxu0
        %2017 = vmatprep.mubr.bf16.mxu0 0
        %2018 = vmatmul.mubr.bf16.gmra.mrb[0].mxu0 %v1956
        %v2019 = vpop.f32.mrb[0].mxu0
        %v2020 = vadd.f32 0.0, %v2019
        %v2021 = vpop.f32.mrb[0].mxu0
        %v2022 = vpop.f32.mrb[0].mxu0
        %v2023 = vadd.f32 0.0, %v2022
        %v2024 = vpop.f32.mrb[0].mxu0
        %2025 = vmatprep.mubr.bf16.mxu0 0
        %2026 = vmatmul.mubr.bf16.gmra.mrb[0].mxu0 %v1959
        %v2027 = vpop.f32.mrb[0].mxu0
        %v2028 = vadd.f32 0.0, %v2027
        %v2029 = vpop.f32.mrb[0].mxu0
        %v2030 = vpop.f32.mrb[0].mxu0
        %v2031 = vadd.f32 0.0, %v2030
        %v2032 = vpop.f32.mrb[0].mxu0
        %2033 = vdwg.mxu0
        %2044 = vrot.lane.b32.xlu0 %v1996, 32
        %v2045 = vpop.permute.xlu0 %2044
        %2046 = vrot.lane.b32.xlu0 %v1999, 32
        %v2047 = vpop.permute.xlu0 %2046
        %2048 = vrot.lane.b32.xlu0 %v2004, 32
        %v2049 = vpop.permute.xlu0 %2048
        %2050 = vrot.lane.b32.xlu0 %v2007, 32
        %v2051 = vpop.permute.xlu0 %2050
        %2052 = vrot.lane.b32.xlu0 %v2012, 32
        %v2053 = vpop.permute.xlu0 %2052
        %2054 = vrot.lane.b32.xlu0 %v2015, 32
        %v2055 = vpop.permute.xlu0 %2054
        %2056 = vrot.lane.b32.xlu0 %v2020, 32
        %v2057 = vpop.permute.xlu0 %2056
        %2058 = vrot.lane.b32.xlu0 %v2023, 32
        %v2059 = vpop.permute.xlu0 %2058
        %2060 = vrot.lane.b32.xlu0 %v2028, 32
        %v2061 = vpop.permute.xlu0 %2060
        %2062 = vrot.lane.b32.xlu0 %v2031, 32
        %v2063 = vpop.permute.xlu0 %2062
        %vm2074 = vcmask 523520
        %2075 = vst.msk [vmem:[#allocation4] sm:$0xff] %vm2074, %v2045
        %2076 = vst.msk [vmem:[#allocation4 + $0x8] sm:$0xff] %vm2074, %v2047
        %2077 = vst.msk [vmem:[#allocation4 + $0x10] sm:$0xff] %vm2074, %v2049
        %2078 = vst.msk [vmem:[#allocation4 + $0x18] sm:$0xff] %vm2074, %v2051
        %2079 = vst.msk [vmem:[#allocation4 + $0x20] sm:$0xff] %vm2074, %v2053
        %2080 = vst.msk [vmem:[#allocation4 + $0x28] sm:$0xff] %vm2074, %v2055
        %2081 = vst.msk [vmem:[#allocation4 + $0x30] sm:$0xff] %vm2074, %v2057
        %2082 = vst.msk [vmem:[#allocation4 + $0x38] sm:$0xff] %vm2074, %v2059
        %2083 = vst.msk [vmem:[#allocation4 + $0x40] sm:$0xff] %vm2074, %v2061
        %2084 = vst.msk [vmem:[#allocation4 + $0x48] sm:$0xff] %vm2074, %v2063
        %2085 = vrot.lane.b32.xlu0 %v1335, 64
        %v2086 = vpop.permute.xlu0 %2085
        %2087 = vrot.lane.b32.xlu0 %v1336, 64
        %v2088 = vpop.permute.xlu0 %2087
        %2089 = vrot.lane.b32.xlu0 %v1337, 64
        %v2090 = vpop.permute.xlu0 %2089
        %2091 = vrot.lane.b32.xlu0 %v1338, 64
        %v2092 = vpop.permute.xlu0 %2091
        %2093 = vrot.lane.b32.xlu0 %v1339, 64
        %v2094 = vpop.permute.xlu0 %2093
        %v2096 = vsel %vm1405, %v2086, 0
        %v2099 = vsel %vm1405, %v2088, 0
        %v2102 = vsel %vm1405, %v2090, 0
        %v2105 = vsel %vm1405, %v2092, 0
        %v2108 = vsel %vm1405, %v2094, 0
        %2110 = vmatprep.subr.bf16.mxu0 0
        %2111 = vmatpush1.bf16.msra.mxu0 %v1386
        %2112 = vmatprep.subr.bf16.mxu0 0
        %2113 = vmatpush1.bf16.msra.mxu0 %v1387
        %2114 = vmatprep.subr.bf16.mxu0 0
        %2115 = vmatpush1.bf16.msra.mxu0 0
        %2116 = vmatprep.subr.bf16.mxu0 0
        %2117 = vmatpush1.bf16.msra.mxu0 0
        %2118 = vmatprep.subr.bf16.mxu0 0
        %2119 = vmatpush1.bf16.msra.mxu0 0
        %2120 = vmatprep.subr.bf16.mxu0 0
        %2121 = vmatpush1.bf16.msra.mxu0 0
        %2122 = vmatprep.subr.bf16.mxu0 0
        %2123 = vmatpush1.bf16.msra.mxu0 0
        %2124 = vmatprep.subr.bf16.mxu0 0
        %2125 = vmatpush1.bf16.msra.mxu0 0
        %2126 = vmatprep.subr.bf16.mxu0 0
        %2127 = vmatpush1.bf16.msra.mxu0 0
        %2128 = vmatprep.subr.bf16.mxu0 0
        %2129 = vmatpush1.bf16.msra.mxu0 0
        %2130 = vmatprep.subr.bf16.mxu0 0
        %2131 = vmatpush1.bf16.msra.mxu0 0
        %2132 = vmatprep.subr.bf16.mxu0 0
        %2133 = vmatpush1.bf16.msra.mxu0 0
        %2134 = vmatprep.subr.bf16.mxu0 0
        %2135 = vmatpush1.bf16.msra.mxu0 0
        %2136 = vmatprep.subr.bf16.mxu0 0
        %2137 = vmatpush1.bf16.msra.mxu0 0
        %2138 = vmatprep.subr.bf16.mxu0 0
        %2139 = vmatpush1.bf16.msra.mxu0 0
        %2140 = vmatprep.subr.bf16.mxu0 0
        %2141 = vmatpush1.bf16.msra.mxu0 0
        %2142 = vmatprep.mubr.bf16.mxu0 0
        %2143 = vmatmul.mubr.bf16.gmra.mrb[0].mxu0 %v2096
        %v2144 = vpop.f32.mrb[0].mxu0
        %v2145 = vadd.f32 %v946, %v2144
        %v2146 = vpop.f32.mrb[0].mxu0
        %v2147 = vpop.f32.mrb[0].mxu0
        %v2148 = vadd.f32 %v946, %v2147
        %v2149 = vpop.f32.mrb[0].mxu0
        %2150 = vmatprep.mubr.bf16.mxu0 0
        %2151 = vmatmul.mubr.bf16.gmra.mrb[0].mxu0 %v2099
        %v2152 = vpop.f32.mrb[0].mxu0
        %v2153 = vadd.f32 %v946, %v2152
        %v2154 = vpop.f32.mrb[0].mxu0
        %v2155 = vpop.f32.mrb[0].mxu0
        %v2156 = vadd.f32 %v946, %v2155
        %v2157 = vpop.f32.mrb[0].mxu0
        %2158 = vmatprep.mubr.bf16.mxu0 0
        %2159 = vmatmul.mubr.bf16.gmra.mrb[0].mxu0 %v2102
        %v2160 = vpop.f32.mrb[0].mxu0
        %v2161 = vadd.f32 %v946, %v2160
        %v2162 = vpop.f32.mrb[0].mxu0
        %v2163 = vpop.f32.mrb[0].mxu0
        %v2164 = vadd.f32 %v946, %v2163
        %v2165 = vpop.f32.mrb[0].mxu0
        %2166 = vmatprep.mubr.bf16.mxu0 0
        %2167 = vmatmul.mubr.bf16.gmra.mrb[0].mxu0 %v2105
        %v2168 = vpop.f32.mrb[0].mxu0
        %v2169 = vadd.f32 %v946, %v2168
        %v2170 = vpop.f32.mrb[0].mxu0
        %v2171 = vpop.f32.mrb[0].mxu0
        %v2172 = vadd.f32 %v946, %v2171
        %v2173 = vpop.f32.mrb[0].mxu0
        %2174 = vmatprep.mubr.bf16.mxu0 0
        %2175 = vmatmul.mubr.bf16.gmra.mrb[0].mxu0 %v2108
        %v2176 = vpop.f32.mrb[0].mxu0
        %v2177 = vadd.f32 %v946, %v2176
        %v2178 = vpop.f32.mrb[0].mxu0
        %v2179 = vpop.f32.mrb[0].mxu0
        %v2180 = vadd.f32 %v946, %v2179
        %v2181 = vpop.f32.mrb[0].mxu0
        %2182 = vdwg.mxu0
        %v2183 = vsel %vm1494, %v2145, -inf
        %2184 = vmax.xlane.f32.xlu0 %v2183
        %v2185 = vpop.xlane.xlu0 %2184
        %v2186 = vsel %vm1494, %v2148, -inf
        %2187 = vmax.xlane.f32.xlu0 %v2186
        %v2188 = vpop.xlane.xlu0 %2187
        %v2189 = vsel %vm1494, %v2153, -inf
        %2190 = vmax.xlane.f32.xlu0 %v2189
        %v2191 = vpop.xlane.xlu0 %2190
        %v2192 = vsel %vm1494, %v2156, -inf
        %2193 = vmax.xlane.f32.xlu0 %v2192
        %v2194 = vpop.xlane.xlu0 %2193
        %v2195 = vsel %vm1494, %v2161, -inf
        %2196 = vmax.xlane.f32.xlu0 %v2195
        %v2197 = vpop.xlane.xlu0 %2196
        %v2198 = vsel %vm1494, %v2164, -inf
        %2199 = vmax.xlane.f32.xlu0 %v2198
        %v2200 = vpop.xlane.xlu0 %2199
        %v2201 = vsel %vm1494, %v2169, -inf
        %2202 = vmax.xlane.f32.xlu0 %v2201
        %v2203 = vpop.xlane.xlu0 %2202
        %v2204 = vsel %vm1494, %v2172, -inf
        %2205 = vmax.xlane.f32.xlu0 %v2204
        %v2206 = vpop.xlane.xlu0 %2205
        %v2207 = vsel %vm1494, %v2177, -inf
        %2208 = vmax.xlane.f32.xlu0 %v2207
        %v2209 = vpop.xlane.xlu0 %2208
        %v2210 = vsel %vm1494, %v2180, -inf
        %2211 = vmax.xlane.f32.xlu0 %v2210
        %v2212 = vpop.xlane.xlu0 %2211
        %v2213 = vsub.f32 %v2145, %v2185
        %v2214 = vsub.f32 %v2148, %v2188
        %v2215 = vsub.f32 %v2153, %v2191
        %v2216 = vsub.f32 %v2156, %v2194
        %v2217 = vsub.f32 %v2161, %v2197
        %v2218 = vsub.f32 %v2164, %v2200
        %v2219 = vsub.f32 %v2169, %v2203
        %v2220 = vsub.f32 %v2172, %v2206
        %v2221 = vsub.f32 %v2177, %v2209
        %v2222 = vsub.f32 %v2180, %v2212
        %v2223 = vmul.f32 %v2213, 1.442695
        %v2224 = vpow.pop %v2223
        %v2225 = vmul.f32 %v2214, 1.442695
        %v2226 = vpow.pop %v2225
        %v2227 = vmul.f32 %v2215, 1.442695
        %v2228 = vpow.pop %v2227
        %v2229 = vmul.f32 %v2216, 1.442695
        %v2230 = vpow.pop %v2229
        %v2231 = vmul.f32 %v2217, 1.442695
        %v2232 = vpow.pop %v2231
        %v2233 = vmul.f32 %v2218, 1.442695
        %v2234 = vpow.pop %v2233
        %v2235 = vmul.f32 %v2219, 1.442695
        %v2236 = vpow.pop %v2235
        %v2237 = vmul.f32 %v2220, 1.442695
        %v2238 = vpow.pop %v2237
        %v2239 = vmul.f32 %v2221, 1.442695
        %v2240 = vpow.pop %v2239
        %v2241 = vmul.f32 %v2222, 1.442695
        %v2242 = vpow.pop %v2241
        %v2243 = vsel %vm1494, %v2224, 0.0
        %2244 = vadd.xlane.f32.xlu0 %v2243
        %v2245 = vpop.xlane.xlu0 %2244
        %v2246 = vsel %vm1494, %v2226, 0.0
        %2247 = vadd.xlane.f32.xlu0 %v2246
        %v2248 = vpop.xlane.xlu0 %2247
        %v2249 = vsel %vm1494, %v2228, 0.0
        %2250 = vadd.xlane.f32.xlu0 %v2249
        %v2251 = vpop.xlane.xlu0 %2250
        %v2252 = vsel %vm1494, %v2230, 0.0
        %2253 = vadd.xlane.f32.xlu0 %v2252
        %v2254 = vpop.xlane.xlu0 %2253
        %v2255 = vsel %vm1494, %v2232, 0.0
        %2256 = vadd.xlane.f32.xlu0 %v2255
        %v2257 = vpop.xlane.xlu0 %2256
        %v2258 = vsel %vm1494, %v2234, 0.0
        %2259 = vadd.xlane.f32.xlu0 %v2258
        %v2260 = vpop.xlane.xlu0 %2259
        %v2261 = vsel %vm1494, %v2236, 0.0
        %2262 = vadd.xlane.f32.xlu0 %v2261
        %v2263 = vpop.xlane.xlu0 %2262
        %v2264 = vsel %vm1494, %v2238, 0.0
        %2265 = vadd.xlane.f32.xlu0 %v2264
        %v2266 = vpop.xlane.xlu0 %2265
        %v2267 = vsel %vm1494, %v2240, 0.0
        %2268 = vadd.xlane.f32.xlu0 %v2267
        %v2269 = vpop.xlane.xlu0 %2268
        %v2270 = vsel %vm1494, %v2242, 0.0
        %2271 = vadd.xlane.f32.xlu0 %v2270
        %v2272 = vpop.xlane.xlu0 %2271
        %v2273 = vrcp.pop %v2245
        %v2274 = vrcp.pop %v2248
        %v2275 = vrcp.pop %v2251
        %v2276 = vrcp.pop %v2254
        %v2277 = vrcp.pop %v2257
        %v2278 = vrcp.pop %v2260
        %v2279 = vrcp.pop %v2263
        %v2280 = vrcp.pop %v2266
        %v2281 = vrcp.pop %v2269
        %v2282 = vrcp.pop %v2272
        %v2283 = vmul.f32 %v2224, %v2273
        %v2284 = vmul.f32 %v2226, %v2274
        %v2285 = vmul.f32 %v2228, %v2275
        %v2286 = vmul.f32 %v2230, %v2276
        %v2287 = vmul.f32 %v2232, %v2277
        %v2288 = vmul.f32 %v2234, %v2278
        %v2289 = vmul.f32 %v2236, %v2279
        %v2290 = vmul.f32 %v2238, %v2280
        %v2291 = vmul.f32 %v2240, %v2281
        %v2292 = vmul.f32 %v2242, %v2282
        %v2293 = vpack.c.bf16 %v2284, %v2283
        %v2294 = vpack.c.bf16 %v2286, %v2285
        %v2295 = vpack.c.bf16 %v2288, %v2287
        %v2296 = vpack.c.bf16 %v2290, %v2289
        %v2297 = vpack.c.bf16 %v2292, %v2291
        %2298 = vrot.lane.b32.xlu0 %v1400, 64
        %v2299 = vpop.permute.xlu0 %2298
        %2300 = vrot.lane.b32.xlu0 %v1401, 64
        %v2301 = vpop.permute.xlu0 %2300
        %2302 = vrot.lane.b32.xlu0 %v1402, 64
        %v2303 = vpop.permute.xlu0 %2302
        %2304 = vrot.lane.b32.xlu0 %v1403, 64
        %v2305 = vpop.permute.xlu0 %2304
        %2306 = vrot.lane.b32.xlu0 %v1404, 64
        %v2307 = vpop.permute.xlu0 %2306
        %v2314 = vsel %vm1494, %v2293, 0
        %v2317 = vsel %vm1494, %v2294, 0
        %v2320 = vsel %vm1494, %v2295, 0
        %v2323 = vsel %vm1494, %v2296, 0
        %v2326 = vsel %vm1494, %v2297, 0
        %2328 = vmatprep.subr.bf16.mxu0 0
        %2329 = vmatpush1.bf16.msra.mxu0 %v2299
        %2330 = vmatprep.subr.bf16.mxu0 0
        %2331 = vmatpush1.bf16.msra.mxu0 %v2301
        %2332 = vmatprep.subr.bf16.mxu0 0
        %2333 = vmatpush1.bf16.msra.mxu0 %v2303
        %2334 = vmatprep.subr.bf16.mxu0 0
        %2335 = vmatpush1.bf16.msra.mxu0 %v2305
        %2336 = vmatprep.subr.bf16.mxu0 0
        %2337 = vmatpush1.bf16.msra.mxu0 %v2307
        %2338 = vmatprep.subr.bf16.mxu0 0
        %2339 = vmatpush1.bf16.msra.mxu0 0
        %2340 = vmatprep.subr.bf16.mxu0 0
        %2341 = vmatpush1.bf16.msra.mxu0 0
        %2342 = vmatprep.subr.bf16.mxu0 0
        %2343 = vmatpush1.bf16.msra.mxu0 0
        %2344 = vmatprep.subr.bf16.mxu0 0
        %2345 = vmatpush1.bf16.msra.mxu0 0
        %2346 = vmatprep.subr.bf16.mxu0 0
        %2347 = vmatpush1.bf16.msra.mxu0 0
        %2348 = vmatprep.subr.bf16.mxu0 0
        %2349 = vmatpush1.bf16.msra.mxu0 0
        %2350 = vmatprep.subr.bf16.mxu0 0
        %2351 = vmatpush1.bf16.msra.mxu0 0
        %2352 = vmatprep.subr.bf16.mxu0 0
        %2353 = vmatpush1.bf16.msra.mxu0 0
        %2354 = vmatprep.subr.bf16.mxu0 0
        %2355 = vmatpush1.bf16.msra.mxu0 0
        %2356 = vmatprep.subr.bf16.mxu0 0
        %2357 = vmatpush1.bf16.msra.mxu0 0
        %2358 = vmatprep.subr.bf16.mxu0 0
        %2359 = vmatpush1.bf16.msra.mxu0 0
        %2360 = vmatprep.mubr.bf16.mxu0 0
        %2361 = vmatmul.mubr.bf16.gmra.mrb[0].mxu0 %v2314
        %v2362 = vpop.f32.mrb[0].mxu0
        %v2363 = vadd.f32 0.0, %v2362
        %v2364 = vpop.f32.mrb[0].mxu0
        %v2365 = vpop.f32.mrb[0].mxu0
        %v2366 = vadd.f32 0.0, %v2365
        %v2367 = vpop.f32.mrb[0].mxu0
        %2368 = vmatprep.mubr.bf16.mxu0 0
        %2369 = vmatmul.mubr.bf16.gmra.mrb[0].mxu0 %v2317
        %v2370 = vpop.f32.mrb[0].mxu0
        %v2371 = vadd.f32 0.0, %v2370
        %v2372 = vpop.f32.mrb[0].mxu0
        %v2373 = vpop.f32.mrb[0].mxu0
        %v2374 = vadd.f32 0.0, %v2373
        %v2375 = vpop.f32.mrb[0].mxu0
        %2376 = vmatprep.mubr.bf16.mxu0 0
        %2377 = vmatmul.mubr.bf16.gmra.mrb[0].mxu0 %v2320
        %v2378 = vpop.f32.mrb[0].mxu0
        %v2379 = vadd.f32 0.0, %v2378
        %v2380 = vpop.f32.mrb[0].mxu0
        %v2381 = vpop.f32.mrb[0].mxu0
        %v2382 = vadd.f32 0.0, %v2381
        %v2383 = vpop.f32.mrb[0].mxu0
        %2384 = vmatprep.mubr.bf16.mxu0 0
        %2385 = vmatmul.mubr.bf16.gmra.mrb[0].mxu0 %v2323
        %v2386 = vpop.f32.mrb[0].mxu0
        %v2387 = vadd.f32 0.0, %v2386
        %v2388 = vpop.f32.mrb[0].mxu0
        %v2389 = vpop.f32.mrb[0].mxu0
        %v2390 = vadd.f32 0.0, %v2389
        %v2391 = vpop.f32.mrb[0].mxu0
        %2392 = vmatprep.mubr.bf16.mxu0 0
        %2393 = vmatmul.mubr.bf16.gmra.mrb[0].mxu0 %v2326
        %v2394 = vpop.f32.mrb[0].mxu0
        %v2395 = vadd.f32 0.0, %v2394
        %v2396 = vpop.f32.mrb[0].mxu0
        %v2397 = vpop.f32.mrb[0].mxu0
        %v2398 = vadd.f32 0.0, %v2397
        %v2399 = vpop.f32.mrb[0].mxu0
        %2400 = vdwg.mxu0
        %2411 = vrot.lane.b32.xlu0 %v2363, 64
        %v2412 = vpop.permute.xlu0 %2411
        %2413 = vrot.lane.b32.xlu0 %v2366, 64
        %v2414 = vpop.permute.xlu0 %2413
        %2415 = vrot.lane.b32.xlu0 %v2371, 64
        %v2416 = vpop.permute.xlu0 %2415
        %2417 = vrot.lane.b32.xlu0 %v2374, 64
        %v2418 = vpop.permute.xlu0 %2417
        %2419 = vrot.lane.b32.xlu0 %v2379, 64
        %v2420 = vpop.permute.xlu0 %2419
        %2421 = vrot.lane.b32.xlu0 %v2382, 64
        %v2422 = vpop.permute.xlu0 %2421
        %2423 = vrot.lane.b32.xlu0 %v2387, 64
        %v2424 = vpop.permute.xlu0 %2423
        %2425 = vrot.lane.b32.xlu0 %v2390, 64
        %v2426 = vpop.permute.xlu0 %2425
        %2427 = vrot.lane.b32.xlu0 %v2395, 64
        %v2428 = vpop.permute.xlu0 %2427
        %2429 = vrot.lane.b32.xlu0 %v2398, 64
        %v2430 = vpop.permute.xlu0 %2429
        %vm2441 = vcmask 785920
        %2442 = vst.msk [vmem:[#allocation4] sm:$0xff] %vm2441, %v2412
        %2443 = vst.msk [vmem:[#allocation4 + $0x8] sm:$0xff] %vm2441, %v2414
        %2444 = vst.msk [vmem:[#allocation4 + $0x10] sm:$0xff] %vm2441, %v2416
        %2445 = vst.msk [vmem:[#allocation4 + $0x18] sm:$0xff] %vm2441, %v2418
        %2446 = vst.msk [vmem:[#allocation4 + $0x20] sm:$0xff] %vm2441, %v2420
        %2447 = vst.msk [vmem:[#allocation4 + $0x28] sm:$0xff] %vm2441, %v2422
        %2448 = vst.msk [vmem:[#allocation4 + $0x30] sm:$0xff] %vm2441, %v2424
        %2449 = vst.msk [vmem:[#allocation4 + $0x38] sm:$0xff] %vm2441, %v2426
        %2450 = vst.msk [vmem:[#allocation4 + $0x40] sm:$0xff] %vm2441, %v2428
        %2451 = vst.msk [vmem:[#allocation4 + $0x48] sm:$0xff] %vm2441, %v2430
        %2452 = vrot.lane.b32.xlu0 %v1335, 32
        %v2453 = vpop.permute.xlu0 %2452
        %2454 = vrot.lane.b32.xlu0 %v1336, 32
        %v2455 = vpop.permute.xlu0 %2454
        %2456 = vrot.lane.b32.xlu0 %v1337, 32
        %v2457 = vpop.permute.xlu0 %2456
        %2458 = vrot.lane.b32.xlu0 %v1338, 32
        %v2459 = vpop.permute.xlu0 %2458
        %2460 = vrot.lane.b32.xlu0 %v1339, 32
        %v2461 = vpop.permute.xlu0 %2460
        %v2463 = vsel %vm1405, %v2453, 0
        %v2466 = vsel %vm1405, %v2455, 0
        %v2469 = vsel %vm1405, %v2457, 0
        %v2472 = vsel %vm1405, %v2459, 0
        %v2475 = vsel %vm1405, %v2461, 0
        %2477 = vmatprep.subr.bf16.mxu0 0
        %2478 = vmatpush1.bf16.msra.mxu0 %v1388
        %2479 = vmatprep.subr.bf16.mxu0 0
        %2480 = vmatpush1.bf16.msra.mxu0 %v1389
        %2481 = vmatprep.subr.bf16.mxu0 0
        %2482 = vmatpush1.bf16.msra.mxu0 0
        %2483 = vmatprep.subr.bf16.mxu0 0
        %2484 = vmatpush1.bf16.msra.mxu0 0
        %2485 = vmatprep.subr.bf16.mxu0 0
        %2486 = vmatpush1.bf16.msra.mxu0 0
        %2487 = vmatprep.subr.bf16.mxu0 0
        %2488 = vmatpush1.bf16.msra.mxu0 0
        %2489 = vmatprep.subr.bf16.mxu0 0
        %2490 = vmatpush1.bf16.msra.mxu0 0
        %2491 = vmatprep.subr.bf16.mxu0 0
        %2492 = vmatpush1.bf16.msra.mxu0 0
        %2493 = vmatprep.subr.bf16.mxu0 0
        %2494 = vmatpush1.bf16.msra.mxu0 0
        %2495 = vmatprep.subr.bf16.mxu0 0
        %2496 = vmatpush1.bf16.msra.mxu0 0
        %2497 = vmatprep.subr.bf16.mxu0 0
        %2498 = vmatpush1.bf16.msra.mxu0 0
        %2499 = vmatprep.subr.bf16.mxu0 0
        %2500 = vmatpush1.bf16.msra.mxu0 0
        %2501 = vmatprep.subr.bf16.mxu0 0
        %2502 = vmatpush1.bf16.msra.mxu0 0
        %2503 = vmatprep.subr.bf16.mxu0 0
        %2504 = vmatpush1.bf16.msra.mxu0 0
        %2505 = vmatprep.subr.bf16.mxu0 0
        %2506 = vmatpush1.bf16.msra.mxu0 0
        %2507 = vmatprep.subr.bf16.mxu0 0
        %2508 = vmatpush1.bf16.msra.mxu0 0
        %2509 = vmatprep.mubr.bf16.mxu0 0
        %2510 = vmatmul.mubr.bf16.gmra.mrb[0].mxu0 %v2463
        %v2511 = vpop.f32.mrb[0].mxu0
        %v2512 = vadd.f32 %v946, %v2511
        %v2513 = vpop.f32.mrb[0].mxu0
        %v2514 = vpop.f32.mrb[0].mxu0
        %v2515 = vadd.f32 %v946, %v2514
        %v2516 = vpop.f32.mrb[0].mxu0
        %2517 = vmatprep.mubr.bf16.mxu0 0
        %2518 = vmatmul.mubr.bf16.gmra.mrb[0].mxu0 %v2466
        %v2519 = vpop.f32.mrb[0].mxu0
        %v2520 = vadd.f32 %v946, %v2519
        %v2521 = vpop.f32.mrb[0].mxu0
        %v2522 = vpop.f32.mrb[0].mxu0
        %v2523 = vadd.f32 %v946, %v2522
        %v2524 = vpop.f32.mrb[0].mxu0
        %2525 = vmatprep.mubr.bf16.mxu0 0
        %2526 = vmatmul.mubr.bf16.gmra.mrb[0].mxu0 %v2469
        %v2527 = vpop.f32.mrb[0].mxu0
        %v2528 = vadd.f32 %v946, %v2527
        %v2529 = vpop.f32.mrb[0].mxu0
        %v2530 = vpop.f32.mrb[0].mxu0
        %v2531 = vadd.f32 %v946, %v2530
        %v2532 = vpop.f32.mrb[0].mxu0
        %2533 = vmatprep.mubr.bf16.mxu0 0
        %2534 = vmatmul.mubr.bf16.gmra.mrb[0].mxu0 %v2472
        %v2535 = vpop.f32.mrb[0].mxu0
        %v2536 = vadd.f32 %v946, %v2535
        %v2537 = vpop.f32.mrb[0].mxu0
        %v2538 = vpop.f32.mrb[0].mxu0
        %v2539 = vadd.f32 %v946, %v2538
        %v2540 = vpop.f32.mrb[0].mxu0
        %2541 = vmatprep.mubr.bf16.mxu0 0
        %2542 = vmatmul.mubr.bf16.gmra.mrb[0].mxu0 %v2475
        %v2543 = vpop.f32.mrb[0].mxu0
        %v2544 = vadd.f32 %v946, %v2543
        %v2545 = vpop.f32.mrb[0].mxu0
        %v2546 = vpop.f32.mrb[0].mxu0
        %v2547 = vadd.f32 %v946, %v2546
        %v2548 = vpop.f32.mrb[0].mxu0
        %2549 = vdwg.mxu0
        %v2550 = vsel %vm1494, %v2512, -inf
        %2551 = vmax.xlane.f32.xlu0 %v2550
        %v2552 = vpop.xlane.xlu0 %2551
        %v2553 = vsel %vm1494, %v2515, -inf
        %2554 = vmax.xlane.f32.xlu0 %v2553
        %v2555 = vpop.xlane.xlu0 %2554
        %v2556 = vsel %vm1494, %v2520, -inf
        %2557 = vmax.xlane.f32.xlu0 %v2556
        %v2558 = vpop.xlane.xlu0 %2557
        %v2559 = vsel %vm1494, %v2523, -inf
        %2560 = vmax.xlane.f32.xlu0 %v2559
        %v2561 = vpop.xlane.xlu0 %2560
        %v2562 = vsel %vm1494, %v2528, -inf
        %2563 = vmax.xlane.f32.xlu0 %v2562
        %v2564 = vpop.xlane.xlu0 %2563
        %v2565 = vsel %vm1494, %v2531, -inf
        %2566 = vmax.xlane.f32.xlu0 %v2565
        %v2567 = vpop.xlane.xlu0 %2566
        %v2568 = vsel %vm1494, %v2536, -inf
        %2569 = vmax.xlane.f32.xlu0 %v2568
        %v2570 = vpop.xlane.xlu0 %2569
        %v2571 = vsel %vm1494, %v2539, -inf
        %2572 = vmax.xlane.f32.xlu0 %v2571
        %v2573 = vpop.xlane.xlu0 %2572
        %v2574 = vsel %vm1494, %v2544, -inf
        %2575 = vmax.xlane.f32.xlu0 %v2574
        %v2576 = vpop.xlane.xlu0 %2575
        %v2577 = vsel %vm1494, %v2547, -inf
        %2578 = vmax.xlane.f32.xlu0 %v2577
        %v2579 = vpop.xlane.xlu0 %2578
        %v2580 = vsub.f32 %v2512, %v2552
        %v2581 = vsub.f32 %v2515, %v2555
        %v2582 = vsub.f32 %v2520, %v2558
        %v2583 = vsub.f32 %v2523, %v2561
        %v2584 = vsub.f32 %v2528, %v2564
        %v2585 = vsub.f32 %v2531, %v2567
        %v2586 = vsub.f32 %v2536, %v2570
        %v2587 = vsub.f32 %v2539, %v2573
        %v2588 = vsub.f32 %v2544, %v2576
        %v2589 = vsub.f32 %v2547, %v2579
        %v2590 = vmul.f32 %v2580, 1.442695
        %v2591 = vpow.pop %v2590
        %v2592 = vmul.f32 %v2581, 1.442695
        %v2593 = vpow.pop %v2592
        %v2594 = vmul.f32 %v2582, 1.442695
        %v2595 = vpow.pop %v2594
        %v2596 = vmul.f32 %v2583, 1.442695
        %v2597 = vpow.pop %v2596
        %v2598 = vmul.f32 %v2584, 1.442695
        %v2599 = vpow.pop %v2598
        %v2600 = vmul.f32 %v2585, 1.442695
        %v2601 = vpow.pop %v2600
        %v2602 = vmul.f32 %v2586, 1.442695
        %v2603 = vpow.pop %v2602
        %v2604 = vmul.f32 %v2587, 1.442695
        %v2605 = vpow.pop %v2604
        %v2606 = vmul.f32 %v2588, 1.442695
        %v2607 = vpow.pop %v2606
        %v2608 = vmul.f32 %v2589, 1.442695
        %v2609 = vpow.pop %v2608
        %v2610 = vsel %vm1494, %v2591, 0.0
        %2611 = vadd.xlane.f32.xlu0 %v2610
        %v2612 = vpop.xlane.xlu0 %2611
        %v2613 = vsel %vm1494, %v2593, 0.0
        %2614 = vadd.xlane.f32.xlu0 %v2613
        %v2615 = vpop.xlane.xlu0 %2614
        %v2616 = vsel %vm1494, %v2595, 0.0
        %2617 = vadd.xlane.f32.xlu0 %v2616
        %v2618 = vpop.xlane.xlu0 %2617
        %v2619 = vsel %vm1494, %v2597, 0.0
        %2620 = vadd.xlane.f32.xlu0 %v2619
        %v2621 = vpop.xlane.xlu0 %2620
        %v2622 = vsel %vm1494, %v2599, 0.0
        %2623 = vadd.xlane.f32.xlu0 %v2622
        %v2624 = vpop.xlane.xlu0 %2623
        %v2625 = vsel %vm1494, %v2601, 0.0
        %2626 = vadd.xlane.f32.xlu0 %v2625
        %v2627 = vpop.xlane.xlu0 %2626
        %v2628 = vsel %vm1494, %v2603, 0.0
        %2629 = vadd.xlane.f32.xlu0 %v2628
        %v2630 = vpop.xlane.xlu0 %2629
        %v2631 = vsel %vm1494, %v2605, 0.0
        %2632 = vadd.xlane.f32.xlu0 %v2631
        %v2633 = vpop.xlane.xlu0 %2632
        %v2634 = vsel %vm1494, %v2607, 0.0
        %2635 = vadd.xlane.f32.xlu0 %v2634
        %v2636 = vpop.xlane.xlu0 %2635
        %v2637 = vsel %vm1494, %v2609, 0.0
        %2638 = vadd.xlane.f32.xlu0 %v2637
        %v2639 = vpop.xlane.xlu0 %2638
        %v2640 = vrcp.pop %v2612
        %v2641 = vrcp.pop %v2615
        %v2642 = vrcp.pop %v2618
        %v2643 = vrcp.pop %v2621
        %v2644 = vrcp.pop %v2624
        %v2645 = vrcp.pop %v2627
        %v2646 = vrcp.pop %v2630
        %v2647 = vrcp.pop %v2633
        %v2648 = vrcp.pop %v2636
        %v2649 = vrcp.pop %v2639
        %v2650 = vmul.f32 %v2591, %v2640
        %v2651 = vmul.f32 %v2593, %v2641
        %v2652 = vmul.f32 %v2595, %v2642
        %v2653 = vmul.f32 %v2597, %v2643
        %v2654 = vmul.f32 %v2599, %v2644
        %v2655 = vmul.f32 %v2601, %v2645
        %v2656 = vmul.f32 %v2603, %v2646
        %v2657 = vmul.f32 %v2605, %v2647
        %v2658 = vmul.f32 %v2607, %v2648
        %v2659 = vmul.f32 %v2609, %v2649
        %v2660 = vpack.c.bf16 %v2651, %v2650
        %v2661 = vpack.c.bf16 %v2653, %v2652
        %v2662 = vpack.c.bf16 %v2655, %v2654
        %v2663 = vpack.c.bf16 %v2657, %v2656
        %v2664 = vpack.c.bf16 %v2659, %v2658
        %2665 = vrot.lane.b32.xlu0 %v1400, 32
        %v2666 = vpop.permute.xlu0 %2665
        %2667 = vrot.lane.b32.xlu0 %v1401, 32
        %v2668 = vpop.permute.xlu0 %2667
        %2669 = vrot.lane.b32.xlu0 %v1402, 32
        %v2670 = vpop.permute.xlu0 %2669
        %2671 = vrot.lane.b32.xlu0 %v1403, 32
        %v2672 = vpop.permute.xlu0 %2671
        %2673 = vrot.lane.b32.xlu0 %v1404, 32
        %v2674 = vpop.permute.xlu0 %2673
        %v2681 = vsel %vm1494, %v2660, 0
        %v2684 = vsel %vm1494, %v2661, 0
        %v2687 = vsel %vm1494, %v2662, 0
        %v2690 = vsel %vm1494, %v2663, 0
        %v2693 = vsel %vm1494, %v2664, 0
        %2695 = vmatprep.subr.bf16.mxu0 0
        %2696 = vmatpush1.bf16.msra.mxu0 %v2666
        %2697 = vmatprep.subr.bf16.mxu0 0
        %2698 = vmatpush1.bf16.msra.mxu0 %v2668
        %2699 = vmatprep.subr.bf16.mxu0 0
        %2700 = vmatpush1.bf16.msra.mxu0 %v2670
        %2701 = vmatprep.subr.bf16.mxu0 0
        %2702 = vmatpush1.bf16.msra.mxu0 %v2672
        %2703 = vmatprep.subr.bf16.mxu0 0
        %2704 = vmatpush1.bf16.msra.mxu0 %v2674
        %2705 = vmatprep.subr.bf16.mxu0 0
        %2706 = vmatpush1.bf16.msra.mxu0 0
        %2707 = vmatprep.subr.bf16.mxu0 0
        %2708 = vmatpush1.bf16.msra.mxu0 0
        %2709 = vmatprep.subr.bf16.mxu0 0
        %2710 = vmatpush1.bf16.msra.mxu0 0
        %2711 = vmatprep.subr.bf16.mxu0 0
        %2712 = vmatpush1.bf16.msra.mxu0 0
        %2713 = vmatprep.subr.bf16.mxu0 0
        %2714 = vmatpush1.bf16.msra.mxu0 0
        %2715 = vmatprep.subr.bf16.mxu0 0
        %2716 = vmatpush1.bf16.msra.mxu0 0
        %2717 = vmatprep.subr.bf16.mxu0 0
        %2718 = vmatpush1.bf16.msra.mxu0 0
        %2719 = vmatprep.subr.bf16.mxu0 0
        %2720 = vmatpush1.bf16.msra.mxu0 0
        %2721 = vmatprep.subr.bf16.mxu0 0
        %2722 = vmatpush1.bf16.msra.mxu0 0
        %2723 = vmatprep.subr.bf16.mxu0 0
        %2724 = vmatpush1.bf16.msra.mxu0 0
        %2725 = vmatprep.subr.bf16.mxu0 0
        %2726 = vmatpush1.bf16.msra.mxu0 0
        %2727 = vmatprep.mubr.bf16.mxu0 0
        %2728 = vmatmul.mubr.bf16.gmra.mrb[0].mxu0 %v2681
        %v2729 = vpop.f32.mrb[0].mxu0
        %v2730 = vadd.f32 0.0, %v2729
        %v2731 = vpop.f32.mrb[0].mxu0
        %v2732 = vpop.f32.mrb[0].mxu0
        %v2733 = vadd.f32 0.0, %v2732
        %v2734 = vpop.f32.mrb[0].mxu0
        %2735 = vmatprep.mubr.bf16.mxu0 0
        %2736 = vmatmul.mubr.bf16.gmra.mrb[0].mxu0 %v2684
        %v2737 = vpop.f32.mrb[0].mxu0
        %v2738 = vadd.f32 0.0, %v2737
        %v2739 = vpop.f32.mrb[0].mxu0
        %v2740 = vpop.f32.mrb[0].mxu0
        %v2741 = vadd.f32 0.0, %v2740
        %v2742 = vpop.f32.mrb[0].mxu0
        %2743 = vmatprep.mubr.bf16.mxu0 0
        %2744 = vmatmul.mubr.bf16.gmra.mrb[0].mxu0 %v2687
        %v2745 = vpop.f32.mrb[0].mxu0
        %v2746 = vadd.f32 0.0, %v2745
        %v2747 = vpop.f32.mrb[0].mxu0
        %v2748 = vpop.f32.mrb[0].mxu0
        %v2749 = vadd.f32 0.0, %v2748
        %v2750 = vpop.f32.mrb[0].mxu0
        %2751 = vmatprep.mubr.bf16.mxu0 0
        %2752 = vmatmul.mubr.bf16.gmra.mrb[0].mxu0 %v2690
        %v2753 = vpop.f32.mrb[0].mxu0
        %v2754 = vadd.f32 0.0, %v2753
        %v2755 = vpop.f32.mrb[0].mxu0
        %v2756 = vpop.f32.mrb[0].mxu0
        %v2757 = vadd.f32 0.0, %v2756
        %v2758 = vpop.f32.mrb[0].mxu0
        %2759 = vmatprep.mubr.bf16.mxu0 0
        %2760 = vmatmul.mubr.bf16.gmra.mrb[0].mxu0 %v2693
        %v2761 = vpop.f32.mrb[0].mxu0
        %v2762 = vadd.f32 0.0, %v2761
        %v2763 = vpop.f32.mrb[0].mxu0
        %v2764 = vpop.f32.mrb[0].mxu0
        %v2765 = vadd.f32 0.0, %v2764
        %v2766 = vpop.f32.mrb[0].mxu0
        %2767 = vdwg.mxu0
        %2778 = vrot.lane.b32.xlu0 %v2730, 96
        %v2779 = vpop.permute.xlu0 %2778
        %2780 = vrot.lane.b32.xlu0 %v2733, 96
        %v2781 = vpop.permute.xlu0 %2780
        %2782 = vrot.lane.b32.xlu0 %v2738, 96
        %v2783 = vpop.permute.xlu0 %2782
        %2784 = vrot.lane.b32.xlu0 %v2741, 96
        %v2785 = vpop.permute.xlu0 %2784
        %2786 = vrot.lane.b32.xlu0 %v2746, 96
        %v2787 = vpop.permute.xlu0 %2786
        %2788 = vrot.lane.b32.xlu0 %v2749, 96
        %v2789 = vpop.permute.xlu0 %2788
        %2790 = vrot.lane.b32.xlu0 %v2754, 96
        %v2791 = vpop.permute.xlu0 %2790
        %2792 = vrot.lane.b32.xlu0 %v2757, 96
        %v2793 = vpop.permute.xlu0 %2792
        %2794 = vrot.lane.b32.xlu0 %v2762, 96
        %v2795 = vpop.permute.xlu0 %2794
        %2796 = vrot.lane.b32.xlu0 %v2765, 96
        %v2797 = vpop.permute.xlu0 %2796
        %vm2808 = vcmask 1048320
        %2809 = vst.msk [vmem:[#allocation4] sm:$0xff] %vm2808, %v2779
        %2810 = vst.msk [vmem:[#allocation4 + $0x8] sm:$0xff] %vm2808, %v2781
        %2811 = vst.msk [vmem:[#allocation4 + $0x10] sm:$0xff] %vm2808, %v2783
        %2812 = vst.msk [vmem:[#allocation4 + $0x18] sm:$0xff] %vm2808, %v2785
        %2813 = vst.msk [vmem:[#allocation4 + $0x20] sm:$0xff] %vm2808, %v2787
        %2814 = vst.msk [vmem:[#allocation4 + $0x28] sm:$0xff] %vm2808, %v2789
        %2815 = vst.msk [vmem:[#allocation4 + $0x30] sm:$0xff] %vm2808, %v2791
        %2816 = vst.msk [vmem:[#allocation4 + $0x38] sm:$0xff] %vm2808, %v2793
        %2817 = vst.msk [vmem:[#allocation4 + $0x40] sm:$0xff] %vm2808, %v2795
        %2818 = vst.msk [vmem:[#allocation4 + $0x48] sm:$0xff] %vm2808, %v2797
        %v2819 = vld [vmem:[#allocation4] sm:$0xff]
        %v2820 = vld [vmem:[#allocation4 + $0x8] sm:$0xff]
        %v2821 = vld [vmem:[#allocation4 + $0x10] sm:$0xff]
        %v2822 = vld [vmem:[#allocation4 + $0x18] sm:$0xff]
        %v2823 = vld [vmem:[#allocation4 + $0x20] sm:$0xff]
        %v2824 = vld [vmem:[#allocation4 + $0x28] sm:$0xff]
        %v2825 = vld [vmem:[#allocation4 + $0x30] sm:$0xff]
        %v2826 = vld [vmem:[#allocation4 + $0x38] sm:$0xff]
        %v2827 = vld [vmem:[#allocation4 + $0x40] sm:$0xff]
        %v2828 = vld [vmem:[#allocation4 + $0x48] sm:$0xff]
        %v2829 = vpack.c.bf16 %v2820, %v2819
        %v2830 = vpack.c.bf16 %v2822, %v2821
        %v2831 = vpack.c.bf16 %v2824, %v2823
        %v2832 = vpack.c.bf16 %v2826, %v2825
        %v2833 = vpack.c.bf16 %v2828, %v2827
        %v2834 = vld [vmem:[%s9] sm:$0xf]
        %v2835 = vld [vmem:[%s9 + $0x4] sm:$0xf]
        %v2836 = vld [vmem:[%s9 + $0x8] sm:$0xf]
        %v2837 = vld [vmem:[%s9 + $0xc] sm:$0xf]
        %v2838 = vld [vmem:[%s9 + $0x10] sm:$0xf]
        %v2839 = vld [vmem:[%s9 + $0x14] sm:$0xf]
        %v2840 = vld [vmem:[%s9 + $0x18] sm:$0xf]
        %v2841 = vld [vmem:[%s9 + $0x1c] sm:$0xf]
        %v2842 = vld [vmem:[%s9 + $0x20] sm:$0xf]
        %v2843 = vld [vmem:[%s9 + $0x24] sm:$0xf]
        %v2844 = vld [vmem:[%s9 + $0x28] sm:$0xf]
        %v2845 = vld [vmem:[%s9 + $0x2c] sm:$0xf]
        %v2846 = vld [vmem:[%s9 + $0x30] sm:$0xf]
        %v2847 = vld [vmem:[%s9 + $0x34] sm:$0xf]
        %v2848 = vld [vmem:[%s9 + $0x38] sm:$0xf]
        %v2849 = vld [vmem:[%s9 + $0x3c] sm:$0xf]
        %v2850 = vld [vmem:[%s10] sm:$0x1]
        %v2852 = vlaneseq
        %v2853 = vshrl.u32 %v2852, 7
        %v2854 = vsub.s32 0, %v2853
        %v2855 = vrot.slane %v2850, %v2854
        %v2873 = vunpack.c.l.b16 %v2834
        %v2874 = vunpack.c.l.b16 %v2835
        %v2875 = vunpack.c.l.b16 %v2836
        %v2876 = vunpack.c.l.b16 %v2837
        %v2877 = vunpack.c.l.b16 %v2838
        %v2878 = vunpack.c.l.b16 %v2839
        %v2879 = vunpack.c.l.b16 %v2840
        %v2880 = vunpack.c.l.b16 %v2841
        %v2881 = vunpack.c.l.b16 %v2842
        %v2882 = vunpack.c.l.b16 %v2843
        %v2883 = vunpack.c.l.b16 %v2844
        %v2884 = vunpack.c.l.b16 %v2845
        %v2885 = vunpack.c.l.b16 %v2846
        %v2886 = vunpack.c.l.b16 %v2847
        %v2887 = vunpack.c.l.b16 %v2848
        %v2888 = vunpack.c.l.b16 %v2849
        %v2889 = vpack.c.b16 %v2874, %v2873
        %v2890 = vpack.c.b16 %v2876, %v2875
        %v2891 = vpack.c.b16 %v2878, %v2877
        %v2892 = vpack.c.b16 %v2880, %v2879
        %v2893 = vpack.c.b16 %v2882, %v2881
        %v2894 = vpack.c.b16 %v2884, %v2883
        %v2895 = vpack.c.b16 %v2886, %v2885
        %v2896 = vpack.c.b16 %v2888, %v2887
        %2905 = vmatprep.subr.bf16.mxu0 0
        %2906 = vmatpush1.bf16.msra.mxu0 %v2889
        %2907 = vmatprep.subr.bf16.mxu0 0
        %2908 = vmatpush1.bf16.msra.mxu0 %v2890
        %2909 = vmatprep.subr.bf16.mxu0 0
        %2910 = vmatpush1.bf16.msra.mxu0 %v2891
        %2911 = vmatprep.subr.bf16.mxu0 0
        %2912 = vmatpush1.bf16.msra.mxu0 %v2892
        %2913 = vmatprep.subr.bf16.mxu0 0
        %2914 = vmatpush1.bf16.msra.mxu0 %v2893
        %2915 = vmatprep.subr.bf16.mxu0 0
        %2916 = vmatpush1.bf16.msra.mxu0 %v2894
        %2917 = vmatprep.subr.bf16.mxu0 0
        %2918 = vmatpush1.bf16.msra.mxu0 %v2895
        %2919 = vmatprep.subr.bf16.mxu0 0
        %2920 = vmatpush1.bf16.msra.mxu0 %v2896
        %2921 = vmatprep.subr.bf16.mxu0 0
        %2922 = vmatpush1.bf16.msra.mxu0 0
        %2923 = vmatprep.subr.bf16.mxu0 0
        %2924 = vmatpush1.bf16.msra.mxu0 0
        %2925 = vmatprep.subr.bf16.mxu0 0
        %2926 = vmatpush1.bf16.msra.mxu0 0
        %2927 = vmatprep.subr.bf16.mxu0 0
        %2928 = vmatpush1.bf16.msra.mxu0 0
        %2929 = vmatprep.subr.bf16.mxu0 0
        %2930 = vmatpush1.bf16.msra.mxu0 0
        %2931 = vmatprep.subr.bf16.mxu0 0
        %2932 = vmatpush1.bf16.msra.mxu0 0
        %2933 = vmatprep.subr.bf16.mxu0 0
        %2934 = vmatpush1.bf16.msra.mxu0 0
        %2935 = vmatprep.subr.bf16.mxu0 0
        %2936 = vmatpush1.bf16.msra.mxu0 0
        %2937 = vmatprep.mubr.bf16.mxu0 0
        %2938 = vmatmul.mubr.bf16.gmra.mrb[0].mxu0 %v2829
        %v2939 = vpop.f32.mrb[0].mxu0
        %v2940 = vadd.f32 %v2855, %v2939
        %v2941 = vpop.f32.mrb[0].mxu0
        %v2942 = vpop.f32.mrb[0].mxu0
        %v2943 = vadd.f32 %v2855, %v2942
        %v2944 = vpop.f32.mrb[0].mxu0
        %2945 = vmatprep.mubr.bf16.mxu0 0
        %2946 = vmatmul.mubr.bf16.gmra.mrb[0].mxu0 %v2830
        %v2947 = vpop.f32.mrb[0].mxu0
        %v2948 = vadd.f32 %v2855, %v2947
        %v2949 = vpop.f32.mrb[0].mxu0
        %v2950 = vpop.f32.mrb[0].mxu0
        %v2951 = vadd.f32 %v2855, %v2950
        %v2952 = vpop.f32.mrb[0].mxu0
        %2953 = vmatprep.mubr.bf16.mxu0 0
        %2954 = vmatmul.mubr.bf16.gmra.mrb[0].mxu0 %v2831
        %v2955 = vpop.f32.mrb[0].mxu0
        %v2956 = vadd.f32 %v2855, %v2955
        %v2957 = vpop.f32.mrb[0].mxu0
        %v2958 = vpop.f32.mrb[0].mxu0
        %v2959 = vadd.f32 %v2855, %v2958
        %v2960 = vpop.f32.mrb[0].mxu0
        %2961 = vmatprep.mubr.bf16.mxu0 0
        %2962 = vmatmul.mubr.bf16.gmra.mrb[0].mxu0 %v2832
        %v2963 = vpop.f32.mrb[0].mxu0
        %v2964 = vadd.f32 %v2855, %v2963
        %v2965 = vpop.f32.mrb[0].mxu0
        %v2966 = vpop.f32.mrb[0].mxu0
        %v2967 = vadd.f32 %v2855, %v2966
        %v2968 = vpop.f32.mrb[0].mxu0
        %2969 = vmatprep.mubr.bf16.mxu0 0
        %2970 = vmatmul.mubr.bf16.gmra.mrb[0].mxu0 %v2833
        %v2971 = vpop.f32.mrb[0].mxu0
        %v2972 = vadd.f32 %v2855, %v2971
        %v2973 = vpop.f32.mrb[0].mxu0
        %v2974 = vpop.f32.mrb[0].mxu0
        %v2975 = vadd.f32 %v2855, %v2974
        %v2976 = vpop.f32.mrb[0].mxu0
        %2977 = vdwg.mxu0
        %v2978 = vld [vmem:[#allocation2] sm:$0xff]
        %v2979 = vld [vmem:[#allocation2 + $0x8] sm:$0xff]
        %v2980 = vld [vmem:[#allocation2 + $0x10] sm:$0xff]
        %v2981 = vld [vmem:[#allocation2 + $0x18] sm:$0xff]
        %v2982 = vld [vmem:[#allocation2 + $0x20] sm:$0xff]
        %v2983 = vld [vmem:[#allocation2 + $0x28] sm:$0xff]
        %v2984 = vld [vmem:[#allocation2 + $0x30] sm:$0xff]
        %v2985 = vld [vmem:[#allocation2 + $0x38] sm:$0xff]
        %v2986 = vld [vmem:[#allocation2 + $0x40] sm:$0xff]
        %v2987 = vld [vmem:[#allocation2 + $0x48] sm:$0xff]
        %v2988 = vadd.f32 %v2978, %v2940
        %v2989 = vadd.f32 %v2979, %v2943
        %v2990 = vadd.f32 %v2980, %v2948
        %v2991 = vadd.f32 %v2981, %v2951
        %v2992 = vadd.f32 %v2982, %v2956
        %v2993 = vadd.f32 %v2983, %v2959
        %v2994 = vadd.f32 %v2984, %v2964
        %v2995 = vadd.f32 %v2985, %v2967
        %v2996 = vadd.f32 %v2986, %v2972
        %v2997 = vadd.f32 %v2987, %v2975
        %v2998 = vld [vmem:[%s11] sm:$0x1]
        %v2999 = vld [vmem:[%s12] sm:$0x1]
        %3000 = vadd.xlane.f32.xlu0 %v2988
        %v3001 = vpop.xlane.xlu0 %3000
        %3002 = vadd.xlane.f32.xlu0 %v2989
        %v3003 = vpop.xlane.xlu0 %3002
        %3004 = vadd.xlane.f32.xlu0 %v2990
        %v3005 = vpop.xlane.xlu0 %3004
        %3006 = vadd.xlane.f32.xlu0 %v2991
        %v3007 = vpop.xlane.xlu0 %3006
        %3008 = vadd.xlane.f32.xlu0 %v2992
        %v3009 = vpop.xlane.xlu0 %3008
        %3010 = vadd.xlane.f32.xlu0 %v2993
        %v3011 = vpop.xlane.xlu0 %3010
        %3012 = vadd.xlane.f32.xlu0 %v2994
        %v3013 = vpop.xlane.xlu0 %3012
        %3014 = vadd.xlane.f32.xlu0 %v2995
        %v3015 = vpop.xlane.xlu0 %3014
        %3016 = vadd.xlane.f32.xlu0 %v2996
        %v3017 = vpop.xlane.xlu0 %3016
        %3018 = vadd.xlane.f32.xlu0 %v2997
        %v3019 = vpop.xlane.xlu0 %3018
        %v3020 = vrcp.pop 128.0
        %v3021 = vmul.f32 %v3001, %v3020
        %v3022 = vmul.f32 %v3003, %v3020
        %v3023 = vmul.f32 %v3005, %v3020
        %v3024 = vmul.f32 %v3007, %v3020
        %v3025 = vmul.f32 %v3009, %v3020
        %v3026 = vmul.f32 %v3011, %v3020
        %v3027 = vmul.f32 %v3013, %v3020
        %v3028 = vmul.f32 %v3015, %v3020
        %v3029 = vmul.f32 %v3017, %v3020
        %v3030 = vmul.f32 %v3019, %v3020
        %v3031 = vsub.f32 %v2988, %v3021
        %v3032 = vsub.f32 %v2989, %v3022
        %v3033 = vsub.f32 %v2990, %v3023
        %v3034 = vsub.f32 %v2991, %v3024
        %v3035 = vsub.f32 %v2992, %v3025
        %v3036 = vsub.f32 %v2993, %v3026
        %v3037 = vsub.f32 %v2994, %v3027
        %v3038 = vsub.f32 %v2995, %v3028
        %v3039 = vsub.f32 %v2996, %v3029
        %v3040 = vsub.f32 %v2997, %v3030
        %v3041 = vmul.f32 %v3031, %v3031
        %v3042 = vmul.f32 %v3032, %v3032
        %v3043 = vmul.f32 %v3033, %v3033
        %v3044 = vmul.f32 %v3034, %v3034
        %v3045 = vmul.f32 %v3035, %v3035
        %v3046 = vmul.f32 %v3036, %v3036
        %v3047 = vmul.f32 %v3037, %v3037
        %v3048 = vmul.f32 %v3038, %v3038
        %v3049 = vmul.f32 %v3039, %v3039
        %v3050 = vmul.f32 %v3040, %v3040
        %3051 = vadd.xlane.f32.xlu0 %v3041
        %v3052 = vpop.xlane.xlu0 %3051
        %3053 = vadd.xlane.f32.xlu0 %v3042
        %v3054 = vpop.xlane.xlu0 %3053
        %3055 = vadd.xlane.f32.xlu0 %v3043
        %v3056 = vpop.xlane.xlu0 %3055
        %3057 = vadd.xlane.f32.xlu0 %v3044
        %v3058 = vpop.xlane.xlu0 %3057
        %3059 = vadd.xlane.f32.xlu0 %v3045
        %v3060 = vpop.xlane.xlu0 %3059
        %3061 = vadd.xlane.f32.xlu0 %v3046
        %v3062 = vpop.xlane.xlu0 %3061
        %3063 = vadd.xlane.f32.xlu0 %v3047
        %v3064 = vpop.xlane.xlu0 %3063
        %3065 = vadd.xlane.f32.xlu0 %v3048
        %v3066 = vpop.xlane.xlu0 %3065
        %3067 = vadd.xlane.f32.xlu0 %v3049
        %v3068 = vpop.xlane.xlu0 %3067
        %3069 = vadd.xlane.f32.xlu0 %v3050
        %v3070 = vpop.xlane.xlu0 %3069
        %v3071 = vmul.f32 %v3052, %v3020
        %v3072 = vmul.f32 %v3054, %v3020
        %v3073 = vmul.f32 %v3056, %v3020
        %v3074 = vmul.f32 %v3058, %v3020
        %v3075 = vmul.f32 %v3060, %v3020
        %v3076 = vmul.f32 %v3062, %v3020
        %v3077 = vmul.f32 %v3064, %v3020
        %v3078 = vmul.f32 %v3066, %v3020
        %v3079 = vmul.f32 %v3068, %v3020
        %v3080 = vmul.f32 %v3070, %v3020
        %v3081 = vadd.f32 %v3071, 1e-05
        %v3082 = vadd.f32 %v3072, 1e-05
        %v3083 = vadd.f32 %v3073, 1e-05
        %v3084 = vadd.f32 %v3074, 1e-05
        %v3085 = vadd.f32 %v3075, 1e-05
        %v3086 = vadd.f32 %v3076, 1e-05
        %v3087 = vadd.f32 %v3077, 1e-05
        %v3088 = vadd.f32 %v3078, 1e-05
        %v3089 = vadd.f32 %v3079, 1e-05
        %v3090 = vadd.f32 %v3080, 1e-05
        %v3091 = vrsqrt.pop %v3081
        %v3092 = vrsqrt.pop %v3082
        %v3093 = vrsqrt.pop %v3083
        %v3094 = vrsqrt.pop %v3084
        %v3095 = vrsqrt.pop %v3085
        %v3096 = vrsqrt.pop %v3086
        %v3097 = vrsqrt.pop %v3087
        %v3098 = vrsqrt.pop %v3088
        %v3099 = vrsqrt.pop %v3089
        %v3100 = vrsqrt.pop %v3090
        %v3101 = vmul.f32 %v3031, %v3091
        %v3102 = vmul.f32 %v3032, %v3092
        %v3103 = vmul.f32 %v3033, %v3093
        %v3104 = vmul.f32 %v3034, %v3094
        %v3105 = vmul.f32 %v3035, %v3095
        %v3106 = vmul.f32 %v3036, %v3096
        %v3107 = vmul.f32 %v3037, %v3097
        %v3108 = vmul.f32 %v3038, %v3098
        %v3109 = vmul.f32 %v3039, %v3099
        %v3110 = vmul.f32 %v3040, %v3100
        %v3112 = vlaneseq
        %v3113 = vshrl.u32 %v3112, 7
        %v3114 = vsub.s32 0, %v3113
        %v3115 = vrot.slane %v2998, %v3114
        %v3117 = vmul.f32 %v3101, %v3115
        %v3118 = vmul.f32 %v3102, %v3115
        %v3119 = vmul.f32 %v3103, %v3115
        %v3120 = vmul.f32 %v3104, %v3115
        %v3121 = vmul.f32 %v3105, %v3115
        %v3122 = vmul.f32 %v3106, %v3115
        %v3123 = vmul.f32 %v3107, %v3115
        %v3124 = vmul.f32 %v3108, %v3115
        %v3125 = vmul.f32 %v3109, %v3115
        %v3126 = vmul.f32 %v3110, %v3115
        %v3128 = vlaneseq
        %v3129 = vshrl.u32 %v3128, 7
        %v3130 = vsub.s32 0, %v3129
        %v3131 = vrot.slane %v2999, %v3130
        %v3133 = vadd.f32 %v3117, %v3131
        %v3134 = vadd.f32 %v3118, %v3131
        %v3135 = vadd.f32 %v3119, %v3131
        %v3136 = vadd.f32 %v3120, %v3131
        %v3137 = vadd.f32 %v3121, %v3131
        %v3138 = vadd.f32 %v3122, %v3131
        %v3139 = vadd.f32 %v3123, %v3131
        %v3140 = vadd.f32 %v3124, %v3131
        %v3141 = vadd.f32 %v3125, %v3131
        %v3142 = vadd.f32 %v3126, %v3131
        %v3143 = vpack.c.bf16 %v3134, %v3133
        %v3144 = vpack.c.bf16 %v3136, %v3135
        %v3145 = vpack.c.bf16 %v3138, %v3137
        %v3146 = vpack.c.bf16 %v3140, %v3139
        %v3147 = vpack.c.bf16 %v3142, %v3141
        %v3148 = vld [vmem:[#allocation9] sm:$0xf]
        %v3149 = vld [vmem:[#allocation9 + $0x4] sm:$0xf]
        %v3150 = vld [vmem:[#allocation9 + $0x8] sm:$0xf]
        %v3151 = vld [vmem:[#allocation9 + $0xc] sm:$0xf]
        %v3152 = vld [vmem:[#allocation9 + $0x10] sm:$0xf]
        %v3153 = vld [vmem:[#allocation9 + $0x14] sm:$0xf]
        %v3154 = vld [vmem:[#allocation9 + $0x18] sm:$0xf]
        %v3155 = vld [vmem:[#allocation9 + $0x1c] sm:$0xf]
        %v3156 = vld [vmem:[#allocation9 + $0x20] sm:$0xf]
        %v3157 = vld [vmem:[#allocation9 + $0x24] sm:$0xf]
        %v3158 = vld [vmem:[#allocation9 + $0x28] sm:$0xf]
        %v3159 = vld [vmem:[#allocation9 + $0x2c] sm:$0xf]
        %v3160 = vld [vmem:[#allocation9 + $0x30] sm:$0xf]
        %v3161 = vld [vmem:[#allocation9 + $0x34] sm:$0xf]
        %v3162 = vld [vmem:[#allocation9 + $0x38] sm:$0xf]
        %v3163 = vld [vmem:[#allocation9 + $0x3c] sm:$0xf]
        %v3164 = vld [vmem:[%s14] sm:$0x1]
        %v3166 = vlaneseq
        %v3167 = vshrl.u32 %v3166, 7
        %v3168 = vsub.s32 0, %v3167
        %v3169 = vrot.slane %v3164, %v3168
        %v3187 = vunpack.c.l.b16 %v3148
        %v3188 = vunpack.c.l.b16 %v3149
        %v3189 = vunpack.c.l.b16 %v3150
        %v3190 = vunpack.c.l.b16 %v3151
        %v3191 = vunpack.c.l.b16 %v3152
        %v3192 = vunpack.c.l.b16 %v3153
        %v3193 = vunpack.c.l.b16 %v3154
        %v3194 = vunpack.c.l.b16 %v3155
        %v3195 = vunpack.c.l.b16 %v3156
        %v3196 = vunpack.c.l.b16 %v3157
        %v3197 = vunpack.c.l.b16 %v3158
        %v3198 = vunpack.c.l.b16 %v3159
        %v3199 = vunpack.c.l.b16 %v3160
        %v3200 = vunpack.c.l.b16 %v3161
        %v3201 = vunpack.c.l.b16 %v3162
        %v3202 = vunpack.c.l.b16 %v3163
        %v3203 = vpack.c.b16 %v3188, %v3187
        %v3204 = vpack.c.b16 %v3190, %v3189
        %v3205 = vpack.c.b16 %v3192, %v3191
        %v3206 = vpack.c.b16 %v3194, %v3193
        %v3207 = vpack.c.b16 %v3196, %v3195
        %v3208 = vpack.c.b16 %v3198, %v3197
        %v3209 = vpack.c.b16 %v3200, %v3199
        %v3210 = vpack.c.b16 %v3202, %v3201
        %3219 = vmatprep.subr.bf16.mxu0 0
        %3220 = vmatpush1.bf16.msra.mxu0 %v3203
        %3221 = vmatprep.subr.bf16.mxu0 0
        %3222 = vmatpush1.bf16.msra.mxu0 %v3204
        %3223 = vmatprep.subr.bf16.mxu0 0
        %3224 = vmatpush1.bf16.msra.mxu0 %v3205
        %3225 = vmatprep.subr.bf16.mxu0 0
        %3226 = vmatpush1.bf16.msra.mxu0 %v3206
        %3227 = vmatprep.subr.bf16.mxu0 0
        %3228 = vmatpush1.bf16.msra.mxu0 %v3207
        %3229 = vmatprep.subr.bf16.mxu0 0
        %3230 = vmatpush1.bf16.msra.mxu0 %v3208
        %3231 = vmatprep.subr.bf16.mxu0 0
        %3232 = vmatpush1.bf16.msra.mxu0 %v3209
        %3233 = vmatprep.subr.bf16.mxu0 0
        %3234 = vmatpush1.bf16.msra.mxu0 %v3210
        %3235 = vmatprep.subr.bf16.mxu0 0
        %3236 = vmatpush1.bf16.msra.mxu0 0
        %3237 = vmatprep.subr.bf16.mxu0 0
        %3238 = vmatpush1.bf16.msra.mxu0 0
        %3239 = vmatprep.subr.bf16.mxu0 0
        %3240 = vmatpush1.bf16.msra.mxu0 0
        %3241 = vmatprep.subr.bf16.mxu0 0
        %3242 = vmatpush1.bf16.msra.mxu0 0
        %3243 = vmatprep.subr.bf16.mxu0 0
        %3244 = vmatpush1.bf16.msra.mxu0 0
        %3245 = vmatprep.subr.bf16.mxu0 0
        %3246 = vmatpush1.bf16.msra.mxu0 0
        %3247 = vmatprep.subr.bf16.mxu0 0
        %3248 = vmatpush1.bf16.msra.mxu0 0
        %3249 = vmatprep.subr.bf16.mxu0 0
        %3250 = vmatpush1.bf16.msra.mxu0 0
        %3251 = vmatprep.mubr.bf16.mxu0 0
        %3252 = vmatmul.mubr.bf16.gmra.mrb[0].mxu0 %v3143
        %v3253 = vpop.f32.mrb[0].mxu0
        %v3254 = vadd.f32 %v3169, %v3253
        %v3255 = vpop.f32.mrb[0].mxu0
        %v3256 = vpop.f32.mrb[0].mxu0
        %v3257 = vadd.f32 %v3169, %v3256
        %v3258 = vpop.f32.mrb[0].mxu0
        %3259 = vmatprep.mubr.bf16.mxu0 0
        %3260 = vmatmul.mubr.bf16.gmra.mrb[0].mxu0 %v3144
        %v3261 = vpop.f32.mrb[0].mxu0
        %v3262 = vadd.f32 %v3169, %v3261
        %v3263 = vpop.f32.mrb[0].mxu0
        %v3264 = vpop.f32.mrb[0].mxu0
        %v3265 = vadd.f32 %v3169, %v3264
        %v3266 = vpop.f32.mrb[0].mxu0
        %3267 = vmatprep.mubr.bf16.mxu0 0
        %3268 = vmatmul.mubr.bf16.gmra.mrb[0].mxu0 %v3145
        %v3269 = vpop.f32.mrb[0].mxu0
        %v3270 = vadd.f32 %v3169, %v3269
        %v3271 = vpop.f32.mrb[0].mxu0
        %v3272 = vpop.f32.mrb[0].mxu0
        %v3273 = vadd.f32 %v3169, %v3272
        %v3274 = vpop.f32.mrb[0].mxu0
        %3275 = vmatprep.mubr.bf16.mxu0 0
        %3276 = vmatmul.mubr.bf16.gmra.mrb[0].mxu0 %v3146
        %v3277 = vpop.f32.mrb[0].mxu0
        %v3278 = vadd.f32 %v3169, %v3277
        %v3279 = vpop.f32.mrb[0].mxu0
        %v3280 = vpop.f32.mrb[0].mxu0
        %v3281 = vadd.f32 %v3169, %v3280
        %v3282 = vpop.f32.mrb[0].mxu0
        %3283 = vmatprep.mubr.bf16.mxu0 0
        %3284 = vmatmul.mubr.bf16.gmra.mrb[0].mxu0 %v3147
        %v3285 = vpop.f32.mrb[0].mxu0
        %v3286 = vadd.f32 %v3169, %v3285
        %v3287 = vpop.f32.mrb[0].mxu0
        %v3288 = vpop.f32.mrb[0].mxu0
        %v3289 = vadd.f32 %v3169, %v3288
        %v3290 = vpop.f32.mrb[0].mxu0
        %3291 = vdwg.mxu0
        %v3292 = vmax.f32 %v3254, 0.0
        %v3293 = vmax.f32 %v3257, 0.0
        %v3294 = vmax.f32 %v3262, 0.0
        %v3295 = vmax.f32 %v3265, 0.0
        %v3296 = vmax.f32 %v3270, 0.0
        %v3297 = vmax.f32 %v3273, 0.0
        %v3298 = vmax.f32 %v3278, 0.0
        %v3299 = vmax.f32 %v3281, 0.0
        %v3300 = vmax.f32 %v3286, 0.0
        %v3301 = vmax.f32 %v3289, 0.0
        %v3302 = vpack.c.bf16 %v3293, %v3292
        %v3303 = vpack.c.bf16 %v3295, %v3294
        %v3304 = vpack.c.bf16 %v3297, %v3296
        %v3305 = vpack.c.bf16 %v3299, %v3298
        %v3306 = vpack.c.bf16 %v3301, %v3300
        %v3307 = vld [vmem:[#allocation11] sm:$0xf]
        %v3308 = vld [vmem:[#allocation11 + $0x4] sm:$0xf]
        %v3309 = vld [vmem:[#allocation11 + $0x8] sm:$0xf]
        %v3310 = vld [vmem:[#allocation11 + $0xc] sm:$0xf]
        %v3311 = vld [vmem:[#allocation11 + $0x10] sm:$0xf]
        %v3312 = vld [vmem:[#allocation11 + $0x14] sm:$0xf]
        %v3313 = vld [vmem:[#allocation11 + $0x18] sm:$0xf]
        %v3314 = vld [vmem:[#allocation11 + $0x1c] sm:$0xf]
        %v3315 = vld [vmem:[#allocation11 + $0x20] sm:$0xf]
        %v3316 = vld [vmem:[#allocation11 + $0x24] sm:$0xf]
        %v3317 = vld [vmem:[#allocation11 + $0x28] sm:$0xf]
        %v3318 = vld [vmem:[#allocation11 + $0x2c] sm:$0xf]
        %v3319 = vld [vmem:[#allocation11 + $0x30] sm:$0xf]
        %v3320 = vld [vmem:[#allocation11 + $0x34] sm:$0xf]
        %v3321 = vld [vmem:[#allocation11 + $0x38] sm:$0xf]
        %v3322 = vld [vmem:[#allocation11 + $0x3c] sm:$0xf]
        %v3323 = vld [vmem:[%s16] sm:$0x1]
        %v3325 = vlaneseq
        %v3326 = vshrl.u32 %v3325, 7
        %v3327 = vsub.s32 0, %v3326
        %v3328 = vrot.slane %v3323, %v3327
        %v3346 = vunpack.c.l.b16 %v3307
        %v3347 = vunpack.c.l.b16 %v3308
        %v3348 = vunpack.c.l.b16 %v3309
        %v3349 = vunpack.c.l.b16 %v3310
        %v3350 = vunpack.c.l.b16 %v3311
        %v3351 = vunpack.c.l.b16 %v3312
        %v3352 = vunpack.c.l.b16 %v3313
        %v3353 = vunpack.c.l.b16 %v3314
        %v3354 = vunpack.c.l.b16 %v3315
        %v3355 = vunpack.c.l.b16 %v3316
        %v3356 = vunpack.c.l.b16 %v3317
        %v3357 = vunpack.c.l.b16 %v3318
        %v3358 = vunpack.c.l.b16 %v3319
        %v3359 = vunpack.c.l.b16 %v3320
        %v3360 = vunpack.c.l.b16 %v3321
        %v3361 = vunpack.c.l.b16 %v3322
        %v3362 = vpack.c.b16 %v3347, %v3346
        %v3363 = vpack.c.b16 %v3349, %v3348
        %v3364 = vpack.c.b16 %v3351, %v3350
        %v3365 = vpack.c.b16 %v3353, %v3352
        %v3366 = vpack.c.b16 %v3355, %v3354
        %v3367 = vpack.c.b16 %v3357, %v3356
        %v3368 = vpack.c.b16 %v3359, %v3358
        %v3369 = vpack.c.b16 %v3361, %v3360
        %3378 = vmatprep.subr.bf16.mxu0 0
        %3379 = vmatpush1.bf16.msra.mxu0 %v3362
        %3380 = vmatprep.subr.bf16.mxu0 0
        %3381 = vmatpush1.bf16.msra.mxu0 %v3363
        %3382 = vmatprep.subr.bf16.mxu0 0
        %3383 = vmatpush1.bf16.msra.mxu0 %v3364
        %3384 = vmatprep.subr.bf16.mxu0 0
        %3385 = vmatpush1.bf16.msra.mxu0 %v3365
        %3386 = vmatprep.subr.bf16.mxu0 0
        %3387 = vmatpush1.bf16.msra.mxu0 %v3366
        %3388 = vmatprep.subr.bf16.mxu0 0
        %3389 = vmatpush1.bf16.msra.mxu0 %v3367
        %3390 = vmatprep.subr.bf16.mxu0 0
        %3391 = vmatpush1.bf16.msra.mxu0 %v3368
        %3392 = vmatprep.subr.bf16.mxu0 0
        %3393 = vmatpush1.bf16.msra.mxu0 %v3369
        %3394 = vmatprep.subr.bf16.mxu0 0
        %3395 = vmatpush1.bf16.msra.mxu0 0
        %3396 = vmatprep.subr.bf16.mxu0 0
        %3397 = vmatpush1.bf16.msra.mxu0 0
        %3398 = vmatprep.subr.bf16.mxu0 0
        %3399 = vmatpush1.bf16.msra.mxu0 0
        %3400 = vmatprep.subr.bf16.mxu0 0
        %3401 = vmatpush1.bf16.msra.mxu0 0
        %3402 = vmatprep.subr.bf16.mxu0 0
        %3403 = vmatpush1.bf16.msra.mxu0 0
        %3404 = vmatprep.subr.bf16.mxu0 0
        %3405 = vmatpush1.bf16.msra.mxu0 0
        %3406 = vmatprep.subr.bf16.mxu0 0
        %3407 = vmatpush1.bf16.msra.mxu0 0
        %3408 = vmatprep.subr.bf16.mxu0 0
        %3409 = vmatpush1.bf16.msra.mxu0 0
        %3410 = vmatprep.mubr.bf16.mxu0 0
        %3411 = vmatmul.mubr.bf16.gmra.mrb[0].mxu0 %v3302
        %v3412 = vpop.f32.mrb[0].mxu0
        %v3413 = vadd.f32 %v3328, %v3412
        %v3414 = vpop.f32.mrb[0].mxu0
        %v3415 = vpop.f32.mrb[0].mxu0
        %v3416 = vadd.f32 %v3328, %v3415
        %v3417 = vpop.f32.mrb[0].mxu0
        %3418 = vmatprep.mubr.bf16.mxu0 0
        %3419 = vmatmul.mubr.bf16.gmra.mrb[0].mxu0 %v3303
        %v3420 = vpop.f32.mrb[0].mxu0
        %v3421 = vadd.f32 %v3328, %v3420
        %v3422 = vpop.f32.mrb[0].mxu0
        %v3423 = vpop.f32.mrb[0].mxu0
        %v3424 = vadd.f32 %v3328, %v3423
        %v3425 = vpop.f32.mrb[0].mxu0
        %3426 = vmatprep.mubr.bf16.mxu0 0
        %3427 = vmatmul.mubr.bf16.gmra.mrb[0].mxu0 %v3304
        %v3428 = vpop.f32.mrb[0].mxu0
        %v3429 = vadd.f32 %v3328, %v3428
        %v3430 = vpop.f32.mrb[0].mxu0
        %v3431 = vpop.f32.mrb[0].mxu0
        %v3432 = vadd.f32 %v3328, %v3431
        %v3433 = vpop.f32.mrb[0].mxu0
        %3434 = vmatprep.mubr.bf16.mxu0 0
        %3435 = vmatmul.mubr.bf16.gmra.mrb[0].mxu0 %v3305
        %v3436 = vpop.f32.mrb[0].mxu0
        %v3437 = vadd.f32 %v3328, %v3436
        %v3438 = vpop.f32.mrb[0].mxu0
        %v3439 = vpop.f32.mrb[0].mxu0
        %v3440 = vadd.f32 %v3328, %v3439
        %v3441 = vpop.f32.mrb[0].mxu0
        %3442 = vmatprep.mubr.bf16.mxu0 0
        %3443 = vmatmul.mubr.bf16.gmra.mrb[0].mxu0 %v3306
        %v3444 = vpop.f32.mrb[0].mxu0
        %v3445 = vadd.f32 %v3328, %v3444
        %v3446 = vpop.f32.mrb[0].mxu0
        %v3447 = vpop.f32.mrb[0].mxu0
        %v3448 = vadd.f32 %v3328, %v3447
        %v3449 = vpop.f32.mrb[0].mxu0
        %3450 = vdwg.mxu0
        %v3451 = vadd.f32 %v3133, %v3413
        %v3452 = vadd.f32 %v3134, %v3416
        %v3453 = vadd.f32 %v3135, %v3421
        %v3454 = vadd.f32 %v3136, %v3424
        %v3455 = vadd.f32 %v3137, %v3429
        %v3456 = vadd.f32 %v3138, %v3432
        %v3457 = vadd.f32 %v3139, %v3437
        %v3458 = vadd.f32 %v3140, %v3440
        %v3459 = vadd.f32 %v3141, %v3445
        %v3460 = vadd.f32 %v3142, %v3448
        %v3461 = vld [vmem:[%s17] sm:$0x1]
        %v3462 = vld [vmem:[%s18] sm:$0x1]
        %3463 = vadd.xlane.f32.xlu0 %v3451
        %v3464 = vpop.xlane.xlu0 %3463
        %3465 = vadd.xlane.f32.xlu0 %v3452
        %v3466 = vpop.xlane.xlu0 %3465
        %3467 = vadd.xlane.f32.xlu0 %v3453
        %v3468 = vpop.xlane.xlu0 %3467
        %3469 = vadd.xlane.f32.xlu0 %v3454
        %v3470 = vpop.xlane.xlu0 %3469
        %3471 = vadd.xlane.f32.xlu0 %v3455
        %v3472 = vpop.xlane.xlu0 %3471
        %3473 = vadd.xlane.f32.xlu0 %v3456
        %v3474 = vpop.xlane.xlu0 %3473
        %3475 = vadd.xlane.f32.xlu0 %v3457
        %v3476 = vpop.xlane.xlu0 %3475
        %3477 = vadd.xlane.f32.xlu0 %v3458
        %v3478 = vpop.xlane.xlu0 %3477
        %3479 = vadd.xlane.f32.xlu0 %v3459
        %v3480 = vpop.xlane.xlu0 %3479
        %3481 = vadd.xlane.f32.xlu0 %v3460
        %v3482 = vpop.xlane.xlu0 %3481
        %v3483 = vmul.f32 %v3464, %v3020
        %v3484 = vmul.f32 %v3466, %v3020
        %v3485 = vmul.f32 %v3468, %v3020
        %v3486 = vmul.f32 %v3470, %v3020
        %v3487 = vmul.f32 %v3472, %v3020
        %v3488 = vmul.f32 %v3474, %v3020
        %v3489 = vmul.f32 %v3476, %v3020
        %v3490 = vmul.f32 %v3478, %v3020
        %v3491 = vmul.f32 %v3480, %v3020
        %v3492 = vmul.f32 %v3482, %v3020
        %v3493 = vsub.f32 %v3451, %v3483
        %v3494 = vsub.f32 %v3452, %v3484
        %v3495 = vsub.f32 %v3453, %v3485
        %v3496 = vsub.f32 %v3454, %v3486
        %v3497 = vsub.f32 %v3455, %v3487
        %v3498 = vsub.f32 %v3456, %v3488
        %v3499 = vsub.f32 %v3457, %v3489
        %v3500 = vsub.f32 %v3458, %v3490
        %v3501 = vsub.f32 %v3459, %v3491
        %v3502 = vsub.f32 %v3460, %v3492
        %v3503 = vmul.f32 %v3493, %v3493
        %v3504 = vmul.f32 %v3494, %v3494
        %v3505 = vmul.f32 %v3495, %v3495
        %v3506 = vmul.f32 %v3496, %v3496
        %v3507 = vmul.f32 %v3497, %v3497
        %v3508 = vmul.f32 %v3498, %v3498
        %v3509 = vmul.f32 %v3499, %v3499
        %v3510 = vmul.f32 %v3500, %v3500
        %v3511 = vmul.f32 %v3501, %v3501
        %v3512 = vmul.f32 %v3502, %v3502
        %3513 = vadd.xlane.f32.xlu0 %v3503
        %v3514 = vpop.xlane.xlu0 %3513
        %3515 = vadd.xlane.f32.xlu0 %v3504
        %v3516 = vpop.xlane.xlu0 %3515
        %3517 = vadd.xlane.f32.xlu0 %v3505
        %v3518 = vpop.xlane.xlu0 %3517
        %3519 = vadd.xlane.f32.xlu0 %v3506
        %v3520 = vpop.xlane.xlu0 %3519
        %3521 = vadd.xlane.f32.xlu0 %v3507
        %v3522 = vpop.xlane.xlu0 %3521
        %3523 = vadd.xlane.f32.xlu0 %v3508
        %v3524 = vpop.xlane.xlu0 %3523
        %3525 = vadd.xlane.f32.xlu0 %v3509
        %v3526 = vpop.xlane.xlu0 %3525
        %3527 = vadd.xlane.f32.xlu0 %v3510
        %v3528 = vpop.xlane.xlu0 %3527
        %3529 = vadd.xlane.f32.xlu0 %v3511
        %v3530 = vpop.xlane.xlu0 %3529
        %3531 = vadd.xlane.f32.xlu0 %v3512
        %v3532 = vpop.xlane.xlu0 %3531
        %v3533 = vmul.f32 %v3514, %v3020
        %v3534 = vmul.f32 %v3516, %v3020
        %v3535 = vmul.f32 %v3518, %v3020
        %v3536 = vmul.f32 %v3520, %v3020
        %v3537 = vmul.f32 %v3522, %v3020
        %v3538 = vmul.f32 %v3524, %v3020
        %v3539 = vmul.f32 %v3526, %v3020
        %v3540 = vmul.f32 %v3528, %v3020
        %v3541 = vmul.f32 %v3530, %v3020
        %v3542 = vmul.f32 %v3532, %v3020
        %v3543 = vadd.f32 %v3533, 1e-05
        %v3544 = vadd.f32 %v3534, 1e-05
        %v3545 = vadd.f32 %v3535, 1e-05
        %v3546 = vadd.f32 %v3536, 1e-05
        %v3547 = vadd.f32 %v3537, 1e-05
        %v3548 = vadd.f32 %v3538, 1e-05
        %v3549 = vadd.f32 %v3539, 1e-05
        %v3550 = vadd.f32 %v3540, 1e-05
        %v3551 = vadd.f32 %v3541, 1e-05
        %v3552 = vadd.f32 %v3542, 1e-05
        %v3553 = vrsqrt.pop %v3543
        %v3554 = vrsqrt.pop %v3544
        %v3555 = vrsqrt.pop %v3545
        %v3556 = vrsqrt.pop %v3546
        %v3557 = vrsqrt.pop %v3547
        %v3558 = vrsqrt.pop %v3548
        %v3559 = vrsqrt.pop %v3549
        %v3560 = vrsqrt.pop %v3550
        %v3561 = vrsqrt.pop %v3551
        %v3562 = vrsqrt.pop %v3552
        %v3563 = vmul.f32 %v3493, %v3553
        %v3564 = vmul.f32 %v3494, %v3554
        %v3565 = vmul.f32 %v3495, %v3555
        %v3566 = vmul.f32 %v3496, %v3556
        %v3567 = vmul.f32 %v3497, %v3557
        %v3568 = vmul.f32 %v3498, %v3558
        %v3569 = vmul.f32 %v3499, %v3559
        %v3570 = vmul.f32 %v3500, %v3560
        %v3571 = vmul.f32 %v3501, %v3561
        %v3572 = vmul.f32 %v3502, %v3562
        %v3574 = vlaneseq
        %v3575 = vshrl.u32 %v3574, 7
        %v3576 = vsub.s32 0, %v3575
        %v3577 = vrot.slane %v3461, %v3576
        %v3579 = vmul.f32 %v3563, %v3577
        %v3580 = vmul.f32 %v3564, %v3577
        %v3581 = vmul.f32 %v3565, %v3577
        %v3582 = vmul.f32 %v3566, %v3577
        %v3583 = vmul.f32 %v3567, %v3577
        %v3584 = vmul.f32 %v3568, %v3577
        %v3585 = vmul.f32 %v3569, %v3577
        %v3586 = vmul.f32 %v3570, %v3577
        %v3587 = vmul.f32 %v3571, %v3577
        %v3588 = vmul.f32 %v3572, %v3577
        %v3590 = vlaneseq
        %v3591 = vshrl.u32 %v3590, 7
        %v3592 = vsub.s32 0, %v3591
        %v3593 = vrot.slane %v3462, %v3592
        %v3595 = vadd.f32 %v3579, %v3593
        %v3596 = vadd.f32 %v3580, %v3593
        %v3597 = vadd.f32 %v3581, %v3593
        %v3598 = vadd.f32 %v3582, %v3593
        %v3599 = vadd.f32 %v3583, %v3593
        %v3600 = vadd.f32 %v3584, %v3593
        %v3601 = vadd.f32 %v3585, %v3593
        %v3602 = vadd.f32 %v3586, %v3593
        %v3603 = vadd.f32 %v3587, %v3593
        %v3604 = vadd.f32 %v3588, %v3593
        %3605 = vst [vmem:[#allocation2] sm:$0xff] %v3595
        %3606 = vst [vmem:[#allocation2 + $0x8] sm:$0xff] %v3596
        %3607 = vst [vmem:[#allocation2 + $0x10] sm:$0xff] %v3597
        %3608 = vst [vmem:[#allocation2 + $0x18] sm:$0xff] %v3598
        %3609 = vst [vmem:[#allocation2 + $0x20] sm:$0xff] %v3599
        %3610 = vst [vmem:[#allocation2 + $0x28] sm:$0xff] %v3600
        %3611 = vst [vmem:[#allocation2 + $0x30] sm:$0xff] %v3601
        %3612 = vst [vmem:[#allocation2 + $0x38] sm:$0xff] %v3602
        %3613 = vst [vmem:[#allocation2 + $0x40] sm:$0xff] %v3603
        %3614 = vst [vmem:[#allocation2 + $0x48] sm:$0xff] %v3604
        %v3615 = vld [vmem:[#allocation2] sm:$0xff]
        %v3616 = vld [vmem:[#allocation2 + $0x8] sm:$0xff]
        %v3617 = vld [vmem:[#allocation2 + $0x10] sm:$0xff]
        %v3618 = vld [vmem:[#allocation2 + $0x18] sm:$0xff]
        %v3619 = vld [vmem:[#allocation2 + $0x20] sm:$0xff]
        %v3620 = vld [vmem:[#allocation2 + $0x28] sm:$0xff]
        %v3621 = vld [vmem:[#allocation2 + $0x30] sm:$0xff]
        %v3622 = vld [vmem:[#allocation2 + $0x38] sm:$0xff]
        %v3623 = vld [vmem:[#allocation2 + $0x40] sm:$0xff]
        %v3624 = vld [vmem:[#allocation2 + $0x48] sm:$0xff]
        %v3625 = vpack.c.bf16 %v3616, %v3615
        %v3626 = vpack.c.bf16 %v3618, %v3617
        %v3627 = vpack.c.bf16 %v3620, %v3619
        %v3628 = vpack.c.bf16 %v3622, %v3621
        %v3629 = vpack.c.bf16 %v3624, %v3623
        %s3630 = scalar_lea.vmem [#allocation6], 192
        %v3631 = vld [vmem:[%s3630] sm:$0xff]
        %v3632 = vld [vmem:[%s3630 + $0x8] sm:$0xf]
        %v3633 = vld [vmem:[%s3630 + $0xc] sm:$0xff]
        %v3634 = vld [vmem:[%s3630 + $0x14] sm:$0xf]
        %v3635 = vld [vmem:[%s3630 + $0x18] sm:$0xff]
        %v3636 = vld [vmem:[%s3630 + $0x20] sm:$0xf]
        %v3637 = vld [vmem:[%s3630 + $0x24] sm:$0xff]
        %v3638 = vld [vmem:[%s3630 + $0x2c] sm:$0xf]
        %v3639 = vld [vmem:[%s3630 + $0x30] sm:$0xff]
        %v3640 = vld [vmem:[%s3630 + $0x38] sm:$0xf]
        %v3641 = vld [vmem:[%s3630 + $0x3c] sm:$0xff]
        %v3642 = vld [vmem:[%s3630 + $0x44] sm:$0xf]
        %v3643 = vld [vmem:[%s3630 + $0x48] sm:$0xff]
        %v3644 = vld [vmem:[%s3630 + $0x50] sm:$0xf]
        %v3645 = vld [vmem:[%s3630 + $0x54] sm:$0xff]
        %v3646 = vld [vmem:[%s3630 + $0x5c] sm:$0xf]
        %v3647 = vld [vmem:[%s3630 + $0x60] sm:$0xff]
        %v3648 = vld [vmem:[%s3630 + $0x68] sm:$0xf]
        %v3649 = vld [vmem:[%s3630 + $0x6c] sm:$0xff]
        %v3650 = vld [vmem:[%s3630 + $0x74] sm:$0xf]
        %v3651 = vld [vmem:[%s3630 + $0x78] sm:$0xff]
        %v3652 = vld [vmem:[%s3630 + $0x80] sm:$0xf]
        %v3653 = vld [vmem:[%s3630 + $0x84] sm:$0xff]
        %v3654 = vld [vmem:[%s3630 + $0x8c] sm:$0xf]
        %v3655 = vld [vmem:[%s3630 + $0x90] sm:$0xff]
        %v3656 = vld [vmem:[%s3630 + $0x98] sm:$0xf]
        %v3657 = vld [vmem:[%s3630 + $0x9c] sm:$0xff]
        %v3658 = vld [vmem:[%s3630 + $0xa4] sm:$0xf]
        %v3659 = vld [vmem:[%s3630 + $0xa8] sm:$0xff]
        %v3660 = vld [vmem:[%s3630 + $0xb0] sm:$0xf]
        %v3661 = vld [vmem:[%s3630 + $0xb4] sm:$0xff]
        %v3662 = vld [vmem:[%s3630 + $0xbc] sm:$0xf]
        %s3663 = scalar_lea.vmem %s8, 3
        %v3664 = vld [vmem:[%s3663] sm:$0x7]
        %v3666 = vlaneseq
        %v3667 = vshrl.u32 %v3666, 7
        %v3668 = vsub.s32 0, %v3667
        %v3669 = vrot.slane %v3664, %v3668
        %v3670 = vlaneseq
        %v3671 = vshrl.u32 %v3670, 7
        %v3672 = vsub.s32 1, %v3671
        %v3673 = vrot.slane %v3664, %v3672
        %v3674 = vlaneseq
        %v3675 = vshrl.u32 %v3674, 7
        %v3676 = vsub.s32 2, %v3675
        %v3677 = vrot.slane %v3664, %v3676
        %v3713 = vunpack.c.l.b16 %v3631
        %v3714 = vunpack.c.h.b16 %v3631
        %v3715 = vunpack.c.l.b16 %v3632
        %v3716 = vunpack.c.l.b16 %v3633
        %v3717 = vunpack.c.h.b16 %v3633
        %v3718 = vunpack.c.l.b16 %v3634
        %v3719 = vunpack.c.l.b16 %v3635
        %v3720 = vunpack.c.h.b16 %v3635
        %v3721 = vunpack.c.l.b16 %v3636
        %v3722 = vunpack.c.l.b16 %v3637
        %v3723 = vunpack.c.h.b16 %v3637
        %v3724 = vunpack.c.l.b16 %v3638
        %v3725 = vunpack.c.l.b16 %v3639
        %v3726 = vunpack.c.h.b16 %v3639
        %v3727 = vunpack.c.l.b16 %v3640
        %v3728 = vunpack.c.l.b16 %v3641
        %v3729 = vunpack.c.h.b16 %v3641
        %v3730 = vunpack.c.l.b16 %v3642
        %v3731 = vunpack.c.l.b16 %v3643
        %v3732 = vunpack.c.h.b16 %v3643
        %v3733 = vunpack.c.l.b16 %v3644
        %v3734 = vunpack.c.l.b16 %v3645
        %v3735 = vunpack.c.h.b16 %v3645
        %v3736 = vunpack.c.l.b16 %v3646
        %v3737 = vunpack.c.l.b16 %v3647
        %v3738 = vunpack.c.h.b16 %v3647
        %v3739 = vunpack.c.l.b16 %v3648
        %v3740 = vunpack.c.l.b16 %v3649
        %v3741 = vunpack.c.h.b16 %v3649
        %v3742 = vunpack.c.l.b16 %v3650
        %v3743 = vunpack.c.l.b16 %v3651
        %v3744 = vunpack.c.h.b16 %v3651
        %v3745 = vunpack.c.l.b16 %v3652
        %v3746 = vunpack.c.l.b16 %v3653
        %v3747 = vunpack.c.h.b16 %v3653
        %v3748 = vunpack.c.l.b16 %v3654
        %v3749 = vunpack.c.l.b16 %v3655
        %v3750 = vunpack.c.h.b16 %v3655
        %v3751 = vunpack.c.l.b16 %v3656
        %v3752 = vunpack.c.l.b16 %v3657
        %v3753 = vunpack.c.h.b16 %v3657
        %v3754 = vunpack.c.l.b16 %v3658
        %v3755 = vunpack.c.l.b16 %v3659
        %v3756 = vunpack.c.h.b16 %v3659
        %v3757 = vunpack.c.l.b16 %v3660
        %v3758 = vunpack.c.l.b16 %v3661
        %v3759 = vunpack.c.h.b16 %v3661
        %v3760 = vunpack.c.l.b16 %v3662
        %v3761 = vpack.c.b16 %v3716, %v3713
        %v3762 = vpack.c.b16 %v3717, %v3714
        %v3763 = vpack.c.b16 %v3718, %v3715
        %v3764 = vpack.c.b16 %v3722, %v3719
        %v3765 = vpack.c.b16 %v3723, %v3720
        %v3766 = vpack.c.b16 %v3724, %v3721
        %v3767 = vpack.c.b16 %v3728, %v3725
        %v3768 = vpack.c.b16 %v3729, %v3726
        %v3769 = vpack.c.b16 %v3730, %v3727
        %v3770 = vpack.c.b16 %v3734, %v3731
        %v3771 = vpack.c.b16 %v3735, %v3732
        %v3772 = vpack.c.b16 %v3736, %v3733
        %v3773 = vpack.c.b16 %v3740, %v3737
        %v3774 = vpack.c.b16 %v3741, %v3738
        %v3775 = vpack.c.b16 %v3742, %v3739
        %v3776 = vpack.c.b16 %v3746, %v3743
        %v3777 = vpack.c.b16 %v3747, %v3744
        %v3778 = vpack.c.b16 %v3748, %v3745
        %v3779 = vpack.c.b16 %v3752, %v3749
        %v3780 = vpack.c.b16 %v3753, %v3750
        %v3781 = vpack.c.b16 %v3754, %v3751
        %v3782 = vpack.c.b16 %v3758, %v3755
        %v3783 = vpack.c.b16 %v3759, %v3756
        %v3784 = vpack.c.b16 %v3760, %v3757
        %3809 = vmatprep.subr.bf16.mxu0 %v3762
        %3810 = vmatpush1.bf16.msra.mxu0 %v3761
        %3811 = vmatprep.subr.bf16.mxu0 %v3765
        %3812 = vmatpush1.bf16.msra.mxu0 %v3764
        %3813 = vmatprep.subr.bf16.mxu0 %v3768
        %3814 = vmatpush1.bf16.msra.mxu0 %v3767
        %3815 = vmatprep.subr.bf16.mxu0 %v3771
        %3816 = vmatpush1.bf16.msra.mxu0 %v3770
        %3817 = vmatprep.subr.bf16.mxu0 %v3774
        %3818 = vmatpush1.bf16.msra.mxu0 %v3773
        %3819 = vmatprep.subr.bf16.mxu0 %v3777
        %3820 = vmatpush1.bf16.msra.mxu0 %v3776
        %3821 = vmatprep.subr.bf16.mxu0 %v3780
        %3822 = vmatpush1.bf16.msra.mxu0 %v3779
        %3823 = vmatprep.subr.bf16.mxu0 %v3783
        %3824 = vmatpush1.bf16.msra.mxu0 %v3782
        %3825 = vmatprep.subr.bf16.mxu0 0
        %3826 = vmatpush1.bf16.msra.mxu0 0
        %3827 = vmatprep.subr.bf16.mxu0 0
        %3828 = vmatpush1.bf16.msra.mxu0 0
        %3829 = vmatprep.subr.bf16.mxu0 0
        %3830 = vmatpush1.bf16.msra.mxu0 0
        %3831 = vmatprep.subr.bf16.mxu0 0
        %3832 = vmatpush1.bf16.msra.mxu0 0
        %3833 = vmatprep.subr.bf16.mxu0 0
        %3834 = vmatpush1.bf16.msra.mxu0 0
        %3835 = vmatprep.subr.bf16.mxu0 0
        %3836 = vmatpush1.bf16.msra.mxu0 0
        %3837 = vmatprep.subr.bf16.mxu0 0
        %3838 = vmatpush1.bf16.msra.mxu0 0
        %3839 = vmatprep.subr.bf16.mxu0 0
        %3840 = vmatpush1.bf16.msra.mxu0 0
        %3841 = vmatprep.mubr.bf16.mxu0 0
        %3842 = vmatmul.mubr.bf16.gmra.mrb[0].mxu0 %v3625
        %v3843 = vpop.f32.mrb[0].mxu0
        %v3844 = vadd.f32 %v3669, %v3843
        %v3845 = vpop.f32.mrb[0].mxu0
        %v3846 = vadd.f32 %v3673, %v3845
        %v3847 = vpop.f32.mrb[0].mxu0
        %v3848 = vadd.f32 %v3669, %v3847
        %v3849 = vpop.f32.mrb[0].mxu0
        %v3850 = vadd.f32 %v3673, %v3849
        %3851 = vmatprep.mubr.bf16.mxu0 0
        %3852 = vmatmul.mubr.bf16.gmra.mrb[0].mxu0 %v3626
        %v3853 = vpop.f32.mrb[0].mxu0
        %v3854 = vadd.f32 %v3669, %v3853
        %v3855 = vpop.f32.mrb[0].mxu0
        %v3856 = vadd.f32 %v3673, %v3855
        %v3857 = vpop.f32.mrb[0].mxu0
        %v3858 = vadd.f32 %v3669, %v3857
        %v3859 = vpop.f32.mrb[0].mxu0
        %v3860 = vadd.f32 %v3673, %v3859
        %3861 = vmatprep.mubr.bf16.mxu0 0
        %3862 = vmatmul.mubr.bf16.gmra.mrb[0].mxu0 %v3627
        %v3863 = vpop.f32.mrb[0].mxu0
        %v3864 = vadd.f32 %v3669, %v3863
        %v3865 = vpop.f32.mrb[0].mxu0
        %v3866 = vadd.f32 %v3673, %v3865
        %v3867 = vpop.f32.mrb[0].mxu0
        %v3868 = vadd.f32 %v3669, %v3867
        %v3869 = vpop.f32.mrb[0].mxu0
        %v3870 = vadd.f32 %v3673, %v3869
        %3871 = vmatprep.mubr.bf16.mxu0 0
        %3872 = vmatmul.mubr.bf16.gmra.mrb[0].mxu0 %v3628
        %v3873 = vpop.f32.mrb[0].mxu0
        %v3874 = vadd.f32 %v3669, %v3873
        %v3875 = vpop.f32.mrb[0].mxu0
        %v3876 = vadd.f32 %v3673, %v3875
        %v3877 = vpop.f32.mrb[0].mxu0
        %v3878 = vadd.f32 %v3669, %v3877
        %v3879 = vpop.f32.mrb[0].mxu0
        %v3880 = vadd.f32 %v3673, %v3879
        %3881 = vmatprep.mubr.bf16.mxu0 0
        %3882 = vmatmul.mubr.bf16.gmra.mrb[0].mxu0 %v3629
        %v3883 = vpop.f32.mrb[0].mxu0
        %v3884 = vadd.f32 %v3669, %v3883
        %v3885 = vpop.f32.mrb[0].mxu0
        %v3886 = vadd.f32 %v3673, %v3885
        %v3887 = vpop.f32.mrb[0].mxu0
        %v3888 = vadd.f32 %v3669, %v3887
        %v3889 = vpop.f32.mrb[0].mxu0
        %v3890 = vadd.f32 %v3673, %v3889
        %3891 = vdwg.mxu0
        %3892 = vmatprep.subr.bf16.mxu0 0
        %3893 = vmatpush1.bf16.msra.mxu0 %v3763
        %3894 = vmatprep.subr.bf16.mxu0 0
        %3895 = vmatpush1.bf16.msra.mxu0 %v3766
        %3896 = vmatprep.subr.bf16.mxu0 0
        %3897 = vmatpush1.bf16.msra.mxu0 %v3769
        %3898 = vmatprep.subr.bf16.mxu0 0
        %3899 = vmatpush1.bf16.msra.mxu0 %v3772
        %3900 = vmatprep.subr.bf16.mxu0 0
        %3901 = vmatpush1.bf16.msra.mxu0 %v3775
        %3902 = vmatprep.subr.bf16.mxu0 0
        %3903 = vmatpush1.bf16.msra.mxu0 %v3778
        %3904 = vmatprep.subr.bf16.mxu0 0
        %3905 = vmatpush1.bf16.msra.mxu0 %v3781
        %3906 = vmatprep.subr.bf16.mxu0 0
        %3907 = vmatpush1.bf16.msra.mxu0 %v3784
        %3908 = vmatprep.subr.bf16.mxu0 0
        %3909 = vmatpush1.bf16.msra.mxu0 0
        %3910 = vmatprep.subr.bf16.mxu0 0
        %3911 = vmatpush1.bf16.msra.mxu0 0
        %3912 = vmatprep.subr.bf16.mxu0 0
        %3913 = vmatpush1.bf16.msra.mxu0 0
        %3914 = vmatprep.subr.bf16.mxu0 0
        %3915 = vmatpush1.bf16.msra.mxu0 0
        %3916 = vmatprep.subr.bf16.mxu0 0
        %3917 = vmatpush1.bf16.msra.mxu0 0
        %3918 = vmatprep.subr.bf16.mxu0 0
        %3919 = vmatpush1.bf16.msra.mxu0 0
        %3920 = vmatprep.subr.bf16.mxu0 0
        %3921 = vmatpush1.bf16.msra.mxu0 0
        %3922 = vmatprep.subr.bf16.mxu0 0
        %3923 = vmatpush1.bf16.msra.mxu0 0
        %3924 = vmatprep.mubr.bf16.mxu0 0
        %3925 = vmatmul.mubr.bf16.gmra.mrb[0].mxu0 %v3625
        %v3926 = vpop.f32.mrb[0].mxu0
        %v3927 = vadd.f32 %v3677, %v3926
        %v3928 = vpop.f32.mrb[0].mxu0
        %v3929 = vpop.f32.mrb[0].mxu0
        %v3930 = vadd.f32 %v3677, %v3929
        %v3931 = vpop.f32.mrb[0].mxu0
        %3932 = vmatprep.mubr.bf16.mxu0 0
        %3933 = vmatmul.mubr.bf16.gmra.mrb[0].mxu0 %v3626
        %v3934 = vpop.f32.mrb[0].mxu0
        %v3935 = vadd.f32 %v3677, %v3934
        %v3936 = vpop.f32.mrb[0].mxu0
        %v3937 = vpop.f32.mrb[0].mxu0
        %v3938 = vadd.f32 %v3677, %v3937
        %v3939 = vpop.f32.mrb[0].mxu0
        %3940 = vmatprep.mubr.bf16.mxu0 0
        %3941 = vmatmul.mubr.bf16.gmra.mrb[0].mxu0 %v3627
        %v3942 = vpop.f32.mrb[0].mxu0
        %v3943 = vadd.f32 %v3677, %v3942
        %v3944 = vpop.f32.mrb[0].mxu0
        %v3945 = vpop.f32.mrb[0].mxu0
        %v3946 = vadd.f32 %v3677, %v3945
        %v3947 = vpop.f32.mrb[0].mxu0
        %3948 = vmatprep.mubr.bf16.mxu0 0
        %3949 = vmatmul.mubr.bf16.gmra.mrb[0].mxu0 %v3628
        %v3950 = vpop.f32.mrb[0].mxu0
        %v3951 = vadd.f32 %v3677, %v3950
        %v3952 = vpop.f32.mrb[0].mxu0
        %v3953 = vpop.f32.mrb[0].mxu0
        %v3954 = vadd.f32 %v3677, %v3953
        %v3955 = vpop.f32.mrb[0].mxu0
        %3956 = vmatprep.mubr.bf16.mxu0 0
        %3957 = vmatmul.mubr.bf16.gmra.mrb[0].mxu0 %v3629
        %v3958 = vpop.f32.mrb[0].mxu0
        %v3959 = vadd.f32 %v3677, %v3958
        %v3960 = vpop.f32.mrb[0].mxu0
        %v3961 = vpop.f32.mrb[0].mxu0
        %v3962 = vadd.f32 %v3677, %v3961
        %v3963 = vpop.f32.mrb[0].mxu0
        %3964 = vdwg.mxu0
        %3965 = vst [vmem:[#allocation3] sm:$0xff] %v3844
        %3966 = vst [vmem:[#allocation3 + $0x8] sm:$0xff] %v3846
        %3967 = vst [vmem:[#allocation3 + $0x10] sm:$0xff] %v3927
        %3968 = vst [vmem:[#allocation3 + $0x18] sm:$0xff] %v3848
        %3969 = vst [vmem:[#allocation3 + $0x20] sm:$0xff] %v3850
        %3970 = vst [vmem:[#allocation3 + $0x28] sm:$0xff] %v3930
        %3971 = vst [vmem:[#allocation3 + $0x30] sm:$0xff] %v3854
        %3972 = vst [vmem:[#allocation3 + $0x38] sm:$0xff] %v3856
        %3973 = vst [vmem:[#allocation3 + $0x40] sm:$0xff] %v3935
        %3974 = vst [vmem:[#allocation3 + $0x48] sm:$0xff] %v3858
        %3975 = vst [vmem:[#allocation3 + $0x50] sm:$0xff] %v3860
        %3976 = vst [vmem:[#allocation3 + $0x58] sm:$0xff] %v3938
        %3977 = vst [vmem:[#allocation3 + $0x60] sm:$0xff] %v3864
        %3978 = vst [vmem:[#allocation3 + $0x68] sm:$0xff] %v3866
        %3979 = vst [vmem:[#allocation3 + $0x70] sm:$0xff] %v3943
        %3980 = vst [vmem:[#allocation3 + $0x78] sm:$0xff] %v3868
        %3981 = vst [vmem:[#allocation3 + $0x80] sm:$0xff] %v3870
        %3982 = vst [vmem:[#allocation3 + $0x88] sm:$0xff] %v3946
        %3983 = vst [vmem:[#allocation3 + $0x90] sm:$0xff] %v3874
        %3984 = vst [vmem:[#allocation3 + $0x98] sm:$0xff] %v3876
        %3985 = vst [vmem:[#allocation3 + $0xa0] sm:$0xff] %v3951
        %3986 = vst [vmem:[#allocation3 + $0xa8] sm:$0xff] %v3878
        %3987 = vst [vmem:[#allocation3 + $0xb0] sm:$0xff] %v3880
        %3988 = vst [vmem:[#allocation3 + $0xb8] sm:$0xff] %v3954
        %3989 = vst [vmem:[#allocation3 + $0xc0] sm:$0xff] %v3884
        %3990 = vst [vmem:[#allocation3 + $0xc8] sm:$0xff] %v3886
        %3991 = vst [vmem:[#allocation3 + $0xd0] sm:$0xff] %v3959
        %3992 = vst [vmem:[#allocation3 + $0xd8] sm:$0xff] %v3888
        %3993 = vst [vmem:[#allocation3 + $0xe0] sm:$0xff] %v3890
        %3994 = vst [vmem:[#allocation3 + $0xe8] sm:$0xff] %v3962
        %v3995 = vld [vmem:[#allocation3] sm:$0xff]
        %v3996 = vld [vmem:[#allocation3 + $0x18] sm:$0xff]
        %v3997 = vld [vmem:[#allocation3 + $0x30] sm:$0xff]
        %v3998 = vld [vmem:[#allocation3 + $0x48] sm:$0xff]
        %v3999 = vld [vmem:[#allocation3 + $0x60] sm:$0xff]
        %v4000 = vld [vmem:[#allocation3 + $0x78] sm:$0xff]
        %v4001 = vld [vmem:[#allocation3 + $0x90] sm:$0xff]
        %v4002 = vld [vmem:[#allocation3 + $0xa8] sm:$0xff]
        %v4003 = vld [vmem:[#allocation3 + $0xc0] sm:$0xff]
        %v4004 = vld [vmem:[#allocation3 + $0xd8] sm:$0xff]
        %v4005 = vpack.c.bf16 %v3996, %v3995
        %v4006 = vpack.c.bf16 %v3998, %v3997
        %v4007 = vpack.c.bf16 %v4000, %v3999
        %v4008 = vpack.c.bf16 %v4002, %v4001
        %v4009 = vpack.c.bf16 %v4004, %v4003
        %v4010 = vld [vmem:[#allocation3 + $0x8] sm:$0xff]
        %v4011 = vld [vmem:[#allocation3 + $0x20] sm:$0xff]
        %v4012 = vld [vmem:[#allocation3 + $0x38] sm:$0xff]
        %v4013 = vld [vmem:[#allocation3 + $0x50] sm:$0xff]
        %v4014 = vld [vmem:[#allocation3 + $0x68] sm:$0xff]
        %v4015 = vld [vmem:[#allocation3 + $0x80] sm:$0xff]
        %v4016 = vld [vmem:[#allocation3 + $0x98] sm:$0xff]
        %v4017 = vld [vmem:[#allocation3 + $0xb0] sm:$0xff]
        %v4018 = vld [vmem:[#allocation3 + $0xc8] sm:$0xff]
        %v4019 = vld [vmem:[#allocation3 + $0xe0] sm:$0xff]
        %4020 = vxpose.xlu0.b32.start [1/16] %v4010, 128
        %4021 = vxpose.xlu0.b32.cont [2/16] %v4011, 128
        %4022 = vxpose.xlu0.b32.cont [3/16] %v4012, 128
        %4023 = vxpose.xlu0.b32.cont [4/16] %v4013, 128
        %4024 = vxpose.xlu0.b32.cont [5/16] %v4014, 128
        %4025 = vxpose.xlu0.b32.cont [6/16] %v4015, 128
        %4026 = vxpose.xlu0.b32.cont [7/16] %v4016, 128
        %4027 = vxpose.xlu0.b32.cont [8/16] %v4017, 128
        %4028 = vxpose.xlu0.b32.cont [9/16] %v4018, 128
        %4029 = vxpose.xlu0.b32.cont [10/16] %v4019, 128
        %4030 = vxpose.xlu0.b32.cont [11/16] 0.0, 128
        %4031 = vxpose.xlu0.b32.cont [12/16] 0.0, 128
        %4032 = vxpose.xlu0.b32.cont [13/16] 0.0, 128
        %4033 = vxpose.xlu0.b32.cont [14/16] 0.0, 128
        %4034 = vxpose.xlu0.b32.cont [15/16] 0.0, 128
        %4035 = vxpose.xlu0.b32.end [16/16] 0.0, 128
        %v4036 = vpop.trf.xlu0
        %v4037 = vpop.trf.xlu0
        %v4038 = vpop.trf.xlu0
        %v4039 = vpop.trf.xlu0
        %v4040 = vpop.trf.xlu0
        %v4041 = vpop.trf.xlu0
        %v4042 = vpop.trf.xlu0
        %v4043 = vpop.trf.xlu0
        %v4044 = vpop.trf.xlu0
        %v4045 = vpop.trf.xlu0
        %v4046 = vpop.trf.xlu0
        %v4047 = vpop.trf.xlu0
        %v4048 = vpop.trf.xlu0
        %v4049 = vpop.trf.xlu0
        %v4050 = vpop.trf.xlu0
        %v4051 = vpop.trf.xlu0
        %v4052 = vpack.c.bf16 %v4037, %v4036
        %v4053 = vpack.c.bf16 %v4039, %v4038
        %v4054 = vpack.c.bf16 %v4041, %v4040
        %v4055 = vpack.c.bf16 %v4043, %v4042
        %v4056 = vpack.c.bf16 %v4045, %v4044
        %v4057 = vpack.c.bf16 %v4047, %v4046
        %v4058 = vpack.c.bf16 %v4049, %v4048
        %v4059 = vpack.c.bf16 %v4051, %v4050
        %v4060 = vld [vmem:[#allocation3 + $0x10] sm:$0xff]
        %v4061 = vld [vmem:[#allocation3 + $0x28] sm:$0xff]
        %v4062 = vld [vmem:[#allocation3 + $0x40] sm:$0xff]
        %v4063 = vld [vmem:[#allocation3 + $0x58] sm:$0xff]
        %v4064 = vld [vmem:[#allocation3 + $0x70] sm:$0xff]
        %v4065 = vld [vmem:[#allocation3 + $0x88] sm:$0xff]
        %v4066 = vld [vmem:[#allocation3 + $0xa0] sm:$0xff]
        %v4067 = vld [vmem:[#allocation3 + $0xb8] sm:$0xff]
        %v4068 = vld [vmem:[#allocation3 + $0xd0] sm:$0xff]
        %v4069 = vld [vmem:[#allocation3 + $0xe8] sm:$0xff]
        %v4070 = vpack.c.bf16 %v4061, %v4060
        %v4071 = vpack.c.bf16 %v4063, %v4062
        %v4072 = vpack.c.bf16 %v4065, %v4064
        %v4073 = vpack.c.bf16 %v4067, %v4066
        %v4074 = vpack.c.bf16 %v4069, %v4068
        %v4076 = vsel %vm1405, %v4005, 0
        %v4079 = vsel %vm1405, %v4006, 0
        %v4082 = vsel %vm1405, %v4007, 0
        %v4085 = vsel %vm1405, %v4008, 0
        %v4088 = vsel %vm1405, %v4009, 0
        %4090 = vmatprep.subr.bf16.mxu0 0
        %4091 = vmatpush1.bf16.msra.mxu0 %v4052
        %4092 = vmatprep.subr.bf16.mxu0 0
        %4093 = vmatpush1.bf16.msra.mxu0 %v4053
        %4094 = vmatprep.subr.bf16.mxu0 0
        %4095 = vmatpush1.bf16.msra.mxu0 0
        %4096 = vmatprep.subr.bf16.mxu0 0
        %4097 = vmatpush1.bf16.msra.mxu0 0
        %4098 = vmatprep.subr.bf16.mxu0 0
        %4099 = vmatpush1.bf16.msra.mxu0 0
        %4100 = vmatprep.subr.bf16.mxu0 0
        %4101 = vmatpush1.bf16.msra.mxu0 0
        %4102 = vmatprep.subr.bf16.mxu0 0
        %4103 = vmatpush1.bf16.msra.mxu0 0
        %4104 = vmatprep.subr.bf16.mxu0 0
        %4105 = vmatpush1.bf16.msra.mxu0 0
        %4106 = vmatprep.subr.bf16.mxu0 0
        %4107 = vmatpush1.bf16.msra.mxu0 0
        %4108 = vmatprep.subr.bf16.mxu0 0
        %4109 = vmatpush1.bf16.msra.mxu0 0
        %4110 = vmatprep.subr.bf16.mxu0 0
        %4111 = vmatpush1.bf16.msra.mxu0 0
        %4112 = vmatprep.subr.bf16.mxu0 0
        %4113 = vmatpush1.bf16.msra.mxu0 0
        %4114 = vmatprep.subr.bf16.mxu0 0
        %4115 = vmatpush1.bf16.msra.mxu0 0
        %4116 = vmatprep.subr.bf16.mxu0 0
        %4117 = vmatpush1.bf16.msra.mxu0 0
        %4118 = vmatprep.subr.bf16.mxu0 0
        %4119 = vmatpush1.bf16.msra.mxu0 0
        %4120 = vmatprep.subr.bf16.mxu0 0
        %4121 = vmatpush1.bf16.msra.mxu0 0
        %4122 = vmatprep.mubr.bf16.mxu0 0
        %4123 = vmatmul.mubr.bf16.gmra.mrb[0].mxu0 %v4076
        %v4124 = vpop.f32.mrb[0].mxu0
        %v4125 = vadd.f32 %v946, %v4124
        %v4126 = vpop.f32.mrb[0].mxu0
        %v4127 = vpop.f32.mrb[0].mxu0
        %v4128 = vadd.f32 %v946, %v4127
        %v4129 = vpop.f32.mrb[0].mxu0
        %4130 = vmatprep.mubr.bf16.mxu0 0
        %4131 = vmatmul.mubr.bf16.gmra.mrb[0].mxu0 %v4079
        %v4132 = vpop.f32.mrb[0].mxu0
        %v4133 = vadd.f32 %v946, %v4132
        %v4134 = vpop.f32.mrb[0].mxu0
        %v4135 = vpop.f32.mrb[0].mxu0
        %v4136 = vadd.f32 %v946, %v4135
        %v4137 = vpop.f32.mrb[0].mxu0
        %4138 = vmatprep.mubr.bf16.mxu0 0
        %4139 = vmatmul.mubr.bf16.gmra.mrb[0].mxu0 %v4082
        %v4140 = vpop.f32.mrb[0].mxu0
        %v4141 = vadd.f32 %v946, %v4140
        %v4142 = vpop.f32.mrb[0].mxu0
        %v4143 = vpop.f32.mrb[0].mxu0
        %v4144 = vadd.f32 %v946, %v4143
        %v4145 = vpop.f32.mrb[0].mxu0
        %4146 = vmatprep.mubr.bf16.mxu0 0
        %4147 = vmatmul.mubr.bf16.gmra.mrb[0].mxu0 %v4085
        %v4148 = vpop.f32.mrb[0].mxu0
        %v4149 = vadd.f32 %v946, %v4148
        %v4150 = vpop.f32.mrb[0].mxu0
        %v4151 = vpop.f32.mrb[0].mxu0
        %v4152 = vadd.f32 %v946, %v4151
        %v4153 = vpop.f32.mrb[0].mxu0
        %4154 = vmatprep.mubr.bf16.mxu0 0
        %4155 = vmatmul.mubr.bf16.gmra.mrb[0].mxu0 %v4088
        %v4156 = vpop.f32.mrb[0].mxu0
        %v4157 = vadd.f32 %v946, %v4156
        %v4158 = vpop.f32.mrb[0].mxu0
        %v4159 = vpop.f32.mrb[0].mxu0
        %v4160 = vadd.f32 %v946, %v4159
        %v4161 = vpop.f32.mrb[0].mxu0
        %4162 = vdwg.mxu0
        %v4163 = vsel %vm1494, %v4125, -inf
        %4164 = vmax.xlane.f32.xlu0 %v4163
        %v4165 = vpop.xlane.xlu0 %4164
        %v4166 = vsel %vm1494, %v4128, -inf
        %4167 = vmax.xlane.f32.xlu0 %v4166
        %v4168 = vpop.xlane.xlu0 %4167
        %v4169 = vsel %vm1494, %v4133, -inf
        %4170 = vmax.xlane.f32.xlu0 %v4169
        %v4171 = vpop.xlane.xlu0 %4170
        %v4172 = vsel %vm1494, %v4136, -inf
        %4173 = vmax.xlane.f32.xlu0 %v4172
        %v4174 = vpop.xlane.xlu0 %4173
        %v4175 = vsel %vm1494, %v4141, -inf
        %4176 = vmax.xlane.f32.xlu0 %v4175
        %v4177 = vpop.xlane.xlu0 %4176
        %v4178 = vsel %vm1494, %v4144, -inf
        %4179 = vmax.xlane.f32.xlu0 %v4178
        %v4180 = vpop.xlane.xlu0 %4179
        %v4181 = vsel %vm1494, %v4149, -inf
        %4182 = vmax.xlane.f32.xlu0 %v4181
        %v4183 = vpop.xlane.xlu0 %4182
        %v4184 = vsel %vm1494, %v4152, -inf
        %4185 = vmax.xlane.f32.xlu0 %v4184
        %v4186 = vpop.xlane.xlu0 %4185
        %v4187 = vsel %vm1494, %v4157, -inf
        %4188 = vmax.xlane.f32.xlu0 %v4187
        %v4189 = vpop.xlane.xlu0 %4188
        %v4190 = vsel %vm1494, %v4160, -inf
        %4191 = vmax.xlane.f32.xlu0 %v4190
        %v4192 = vpop.xlane.xlu0 %4191
        %v4193 = vsub.f32 %v4125, %v4165
        %v4194 = vsub.f32 %v4128, %v4168
        %v4195 = vsub.f32 %v4133, %v4171
        %v4196 = vsub.f32 %v4136, %v4174
        %v4197 = vsub.f32 %v4141, %v4177
        %v4198 = vsub.f32 %v4144, %v4180
        %v4199 = vsub.f32 %v4149, %v4183
        %v4200 = vsub.f32 %v4152, %v4186
        %v4201 = vsub.f32 %v4157, %v4189
        %v4202 = vsub.f32 %v4160, %v4192
        %v4203 = vmul.f32 %v4193, 1.442695
        %v4204 = vpow.pop %v4203
        %v4205 = vmul.f32 %v4194, 1.442695
        %v4206 = vpow.pop %v4205
        %v4207 = vmul.f32 %v4195, 1.442695
        %v4208 = vpow.pop %v4207
        %v4209 = vmul.f32 %v4196, 1.442695
        %v4210 = vpow.pop %v4209
        %v4211 = vmul.f32 %v4197, 1.442695
        %v4212 = vpow.pop %v4211
        %v4213 = vmul.f32 %v4198, 1.442695
        %v4214 = vpow.pop %v4213
        %v4215 = vmul.f32 %v4199, 1.442695
        %v4216 = vpow.pop %v4215
        %v4217 = vmul.f32 %v4200, 1.442695
        %v4218 = vpow.pop %v4217
        %v4219 = vmul.f32 %v4201, 1.442695
        %v4220 = vpow.pop %v4219
        %v4221 = vmul.f32 %v4202, 1.442695
        %v4222 = vpow.pop %v4221
        %v4223 = vsel %vm1494, %v4204, 0.0
        %4224 = vadd.xlane.f32.xlu0 %v4223
        %v4225 = vpop.xlane.xlu0 %4224
        %v4226 = vsel %vm1494, %v4206, 0.0
        %4227 = vadd.xlane.f32.xlu0 %v4226
        %v4228 = vpop.xlane.xlu0 %4227
        %v4229 = vsel %vm1494, %v4208, 0.0
        %4230 = vadd.xlane.f32.xlu0 %v4229
        %v4231 = vpop.xlane.xlu0 %4230
        %v4232 = vsel %vm1494, %v4210, 0.0
        %4233 = vadd.xlane.f32.xlu0 %v4232
        %v4234 = vpop.xlane.xlu0 %4233
        %v4235 = vsel %vm1494, %v4212, 0.0
        %4236 = vadd.xlane.f32.xlu0 %v4235
        %v4237 = vpop.xlane.xlu0 %4236
        %v4238 = vsel %vm1494, %v4214, 0.0
        %4239 = vadd.xlane.f32.xlu0 %v4238
        %v4240 = vpop.xlane.xlu0 %4239
        %v4241 = vsel %vm1494, %v4216, 0.0
        %4242 = vadd.xlane.f32.xlu0 %v4241
        %v4243 = vpop.xlane.xlu0 %4242
        %v4244 = vsel %vm1494, %v4218, 0.0
        %4245 = vadd.xlane.f32.xlu0 %v4244
        %v4246 = vpop.xlane.xlu0 %4245
        %v4247 = vsel %vm1494, %v4220, 0.0
        %4248 = vadd.xlane.f32.xlu0 %v4247
        %v4249 = vpop.xlane.xlu0 %4248
        %v4250 = vsel %vm1494, %v4222, 0.0
        %4251 = vadd.xlane.f32.xlu0 %v4250
        %v4252 = vpop.xlane.xlu0 %4251
        %v4253 = vrcp.pop %v4225
        %v4254 = vrcp.pop %v4228
        %v4255 = vrcp.pop %v4231
        %v4256 = vrcp.pop %v4234
        %v4257 = vrcp.pop %v4237
        %v4258 = vrcp.pop %v4240
        %v4259 = vrcp.pop %v4243
        %v4260 = vrcp.pop %v4246
        %v4261 = vrcp.pop %v4249
        %v4262 = vrcp.pop %v4252
        %v4263 = vmul.f32 %v4204, %v4253
        %v4264 = vmul.f32 %v4206, %v4254
        %v4265 = vmul.f32 %v4208, %v4255
        %v4266 = vmul.f32 %v4210, %v4256
        %v4267 = vmul.f32 %v4212, %v4257
        %v4268 = vmul.f32 %v4214, %v4258
        %v4269 = vmul.f32 %v4216, %v4259
        %v4270 = vmul.f32 %v4218, %v4260
        %v4271 = vmul.f32 %v4220, %v4261
        %v4272 = vmul.f32 %v4222, %v4262
        %v4273 = vpack.c.bf16 %v4264, %v4263
        %v4274 = vpack.c.bf16 %v4266, %v4265
        %v4275 = vpack.c.bf16 %v4268, %v4267
        %v4276 = vpack.c.bf16 %v4270, %v4269
        %v4277 = vpack.c.bf16 %v4272, %v4271
        %v4279 = vsel %vm1494, %v4273, 0
        %v4282 = vsel %vm1494, %v4274, 0
        %v4285 = vsel %vm1494, %v4275, 0
        %v4288 = vsel %vm1494, %v4276, 0
        %v4291 = vsel %vm1494, %v4277, 0
        %4293 = vmatprep.subr.bf16.mxu0 0
        %4294 = vmatpush1.bf16.msra.mxu0 %v4070
        %4295 = vmatprep.subr.bf16.mxu0 0
        %4296 = vmatpush1.bf16.msra.mxu0 %v4071
        %4297 = vmatprep.subr.bf16.mxu0 0
        %4298 = vmatpush1.bf16.msra.mxu0 %v4072
        %4299 = vmatprep.subr.bf16.mxu0 0
        %4300 = vmatpush1.bf16.msra.mxu0 %v4073
        %4301 = vmatprep.subr.bf16.mxu0 0
        %4302 = vmatpush1.bf16.msra.mxu0 %v4074
        %4303 = vmatprep.subr.bf16.mxu0 0
        %4304 = vmatpush1.bf16.msra.mxu0 0
        %4305 = vmatprep.subr.bf16.mxu0 0
        %4306 = vmatpush1.bf16.msra.mxu0 0
        %4307 = vmatprep.subr.bf16.mxu0 0
        %4308 = vmatpush1.bf16.msra.mxu0 0
        %4309 = vmatprep.subr.bf16.mxu0 0
        %4310 = vmatpush1.bf16.msra.mxu0 0
        %4311 = vmatprep.subr.bf16.mxu0 0
        %4312 = vmatpush1.bf16.msra.mxu0 0
        %4313 = vmatprep.subr.bf16.mxu0 0
        %4314 = vmatpush1.bf16.msra.mxu0 0
        %4315 = vmatprep.subr.bf16.mxu0 0
        %4316 = vmatpush1.bf16.msra.mxu0 0
        %4317 = vmatprep.subr.bf16.mxu0 0
        %4318 = vmatpush1.bf16.msra.mxu0 0
        %4319 = vmatprep.subr.bf16.mxu0 0
        %4320 = vmatpush1.bf16.msra.mxu0 0
        %4321 = vmatprep.subr.bf16.mxu0 0
        %4322 = vmatpush1.bf16.msra.mxu0 0
        %4323 = vmatprep.subr.bf16.mxu0 0
        %4324 = vmatpush1.bf16.msra.mxu0 0
        %4325 = vmatprep.mubr.bf16.mxu0 0
        %4326 = vmatmul.mubr.bf16.gmra.mrb[0].mxu0 %v4279
        %v4327 = vpop.f32.mrb[0].mxu0
        %v4328 = vadd.f32 0.0, %v4327
        %v4329 = vpop.f32.mrb[0].mxu0
        %v4330 = vpop.f32.mrb[0].mxu0
        %v4331 = vadd.f32 0.0, %v4330
        %v4332 = vpop.f32.mrb[0].mxu0
        %4333 = vmatprep.mubr.bf16.mxu0 0
        %4334 = vmatmul.mubr.bf16.gmra.mrb[0].mxu0 %v4282
        %v4335 = vpop.f32.mrb[0].mxu0
        %v4336 = vadd.f32 0.0, %v4335
        %v4337 = vpop.f32.mrb[0].mxu0
        %v4338 = vpop.f32.mrb[0].mxu0
        %v4339 = vadd.f32 0.0, %v4338
        %v4340 = vpop.f32.mrb[0].mxu0
        %4341 = vmatprep.mubr.bf16.mxu0 0
        %4342 = vmatmul.mubr.bf16.gmra.mrb[0].mxu0 %v4285
        %v4343 = vpop.f32.mrb[0].mxu0
        %v4344 = vadd.f32 0.0, %v4343
        %v4345 = vpop.f32.mrb[0].mxu0
        %v4346 = vpop.f32.mrb[0].mxu0
        %v4347 = vadd.f32 0.0, %v4346
        %v4348 = vpop.f32.mrb[0].mxu0
        %4349 = vmatprep.mubr.bf16.mxu0 0
        %4350 = vmatmul.mubr.bf16.gmra.mrb[0].mxu0 %v4288
        %v4351 = vpop.f32.mrb[0].mxu0
        %v4352 = vadd.f32 0.0, %v4351
        %v4353 = vpop.f32.mrb[0].mxu0
        %v4354 = vpop.f32.mrb[0].mxu0
        %v4355 = vadd.f32 0.0, %v4354
        %v4356 = vpop.f32.mrb[0].mxu0
        %4357 = vmatprep.mubr.bf16.mxu0 0
        %4358 = vmatmul.mubr.bf16.gmra.mrb[0].mxu0 %v4291
        %v4359 = vpop.f32.mrb[0].mxu0
        %v4360 = vadd.f32 0.0, %v4359
        %v4361 = vpop.f32.mrb[0].mxu0
        %v4362 = vpop.f32.mrb[0].mxu0
        %v4363 = vadd.f32 0.0, %v4362
        %v4364 = vpop.f32.mrb[0].mxu0
        %4365 = vdwg.mxu0
        %4366 = vst.msk [vmem:[#allocation4] sm:$0xff] %vm1405, %v4328
        %4367 = vst.msk [vmem:[#allocation4 + $0x8] sm:$0xff] %vm1405, %v4331
        %4368 = vst.msk [vmem:[#allocation4 + $0x10] sm:$0xff] %vm1405, %v4336
        %4369 = vst.msk [vmem:[#allocation4 + $0x18] sm:$0xff] %vm1405, %v4339
        %4370 = vst.msk [vmem:[#allocation4 + $0x20] sm:$0xff] %vm1405, %v4344
        %4371 = vst.msk [vmem:[#allocation4 + $0x28] sm:$0xff] %vm1405, %v4347
        %4372 = vst.msk [vmem:[#allocation4 + $0x30] sm:$0xff] %vm1405, %v4352
        %4373 = vst.msk [vmem:[#allocation4 + $0x38] sm:$0xff] %vm1405, %v4355
        %4374 = vst.msk [vmem:[#allocation4 + $0x40] sm:$0xff] %vm1405, %v4360
        %4375 = vst.msk [vmem:[#allocation4 + $0x48] sm:$0xff] %vm1405, %v4363
        %4381 = vrot.lane.b32.xlu0 %v4005, 96
        %v4382 = vpop.permute.xlu0 %4381
        %4383 = vrot.lane.b32.xlu0 %v4006, 96
        %v4384 = vpop.permute.xlu0 %4383
        %4385 = vrot.lane.b32.xlu0 %v4007, 96
        %v4386 = vpop.permute.xlu0 %4385
        %4387 = vrot.lane.b32.xlu0 %v4008, 96
        %v4388 = vpop.permute.xlu0 %4387
        %4389 = vrot.lane.b32.xlu0 %v4009, 96
        %v4390 = vpop.permute.xlu0 %4389
        %v4392 = vsel %vm1405, %v4382, 0
        %v4395 = vsel %vm1405, %v4384, 0
        %v4398 = vsel %vm1405, %v4386, 0
        %v4401 = vsel %vm1405, %v4388, 0
        %v4404 = vsel %vm1405, %v4390, 0
        %4406 = vmatprep.subr.bf16.mxu0 0
        %4407 = vmatpush1.bf16.msra.mxu0 %v4054
        %4408 = vmatprep.subr.bf16.mxu0 0
        %4409 = vmatpush1.bf16.msra.mxu0 %v4055
        %4410 = vmatprep.subr.bf16.mxu0 0
        %4411 = vmatpush1.bf16.msra.mxu0 0
        %4412 = vmatprep.subr.bf16.mxu0 0
        %4413 = vmatpush1.bf16.msra.mxu0 0
        %4414 = vmatprep.subr.bf16.mxu0 0
        %4415 = vmatpush1.bf16.msra.mxu0 0
        %4416 = vmatprep.subr.bf16.mxu0 0
        %4417 = vmatpush1.bf16.msra.mxu0 0
        %4418 = vmatprep.subr.bf16.mxu0 0
        %4419 = vmatpush1.bf16.msra.mxu0 0
        %4420 = vmatprep.subr.bf16.mxu0 0
        %4421 = vmatpush1.bf16.msra.mxu0 0
        %4422 = vmatprep.subr.bf16.mxu0 0
        %4423 = vmatpush1.bf16.msra.mxu0 0
        %4424 = vmatprep.subr.bf16.mxu0 0
        %4425 = vmatpush1.bf16.msra.mxu0 0
        %4426 = vmatprep.subr.bf16.mxu0 0
        %4427 = vmatpush1.bf16.msra.mxu0 0
        %4428 = vmatprep.subr.bf16.mxu0 0
        %4429 = vmatpush1.bf16.msra.mxu0 0
        %4430 = vmatprep.subr.bf16.mxu0 0
        %4431 = vmatpush1.bf16.msra.mxu0 0
        %4432 = vmatprep.subr.bf16.mxu0 0
        %4433 = vmatpush1.bf16.msra.mxu0 0
        %4434 = vmatprep.subr.bf16.mxu0 0
        %4435 = vmatpush1.bf16.msra.mxu0 0
        %4436 = vmatprep.subr.bf16.mxu0 0
        %4437 = vmatpush1.bf16.msra.mxu0 0
        %4438 = vmatprep.mubr.bf16.mxu0 0
        %4439 = vmatmul.mubr.bf16.gmra.mrb[0].mxu0 %v4392
        %v4440 = vpop.f32.mrb[0].mxu0
        %v4441 = vadd.f32 %v946, %v4440
        %v4442 = vpop.f32.mrb[0].mxu0
        %v4443 = vpop.f32.mrb[0].mxu0
        %v4444 = vadd.f32 %v946, %v4443
        %v4445 = vpop.f32.mrb[0].mxu0
        %4446 = vmatprep.mubr.bf16.mxu0 0
        %4447 = vmatmul.mubr.bf16.gmra.mrb[0].mxu0 %v4395
        %v4448 = vpop.f32.mrb[0].mxu0
        %v4449 = vadd.f32 %v946, %v4448
        %v4450 = vpop.f32.mrb[0].mxu0
        %v4451 = vpop.f32.mrb[0].mxu0
        %v4452 = vadd.f32 %v946, %v4451
        %v4453 = vpop.f32.mrb[0].mxu0
        %4454 = vmatprep.mubr.bf16.mxu0 0
        %4455 = vmatmul.mubr.bf16.gmra.mrb[0].mxu0 %v4398
        %v4456 = vpop.f32.mrb[0].mxu0
        %v4457 = vadd.f32 %v946, %v4456
        %v4458 = vpop.f32.mrb[0].mxu0
        %v4459 = vpop.f32.mrb[0].mxu0
        %v4460 = vadd.f32 %v946, %v4459
        %v4461 = vpop.f32.mrb[0].mxu0
        %4462 = vmatprep.mubr.bf16.mxu0 0
        %4463 = vmatmul.mubr.bf16.gmra.mrb[0].mxu0 %v4401
        %v4464 = vpop.f32.mrb[0].mxu0
        %v4465 = vadd.f32 %v946, %v4464
        %v4466 = vpop.f32.mrb[0].mxu0
        %v4467 = vpop.f32.mrb[0].mxu0
        %v4468 = vadd.f32 %v946, %v4467
        %v4469 = vpop.f32.mrb[0].mxu0
        %4470 = vmatprep.mubr.bf16.mxu0 0
        %4471 = vmatmul.mubr.bf16.gmra.mrb[0].mxu0 %v4404
        %v4472 = vpop.f32.mrb[0].mxu0
        %v4473 = vadd.f32 %v946, %v4472
        %v4474 = vpop.f32.mrb[0].mxu0
        %v4475 = vpop.f32.mrb[0].mxu0
        %v4476 = vadd.f32 %v946, %v4475
        %v4477 = vpop.f32.mrb[0].mxu0
        %4478 = vdwg.mxu0
        %v4479 = vsel %vm1494, %v4441, -inf
        %4480 = vmax.xlane.f32.xlu0 %v4479
        %v4481 = vpop.xlane.xlu0 %4480
        %v4482 = vsel %vm1494, %v4444, -inf
        %4483 = vmax.xlane.f32.xlu0 %v4482
        %v4484 = vpop.xlane.xlu0 %4483
        %v4485 = vsel %vm1494, %v4449, -inf
        %4486 = vmax.xlane.f32.xlu0 %v4485
        %v4487 = vpop.xlane.xlu0 %4486
        %v4488 = vsel %vm1494, %v4452, -inf
        %4489 = vmax.xlane.f32.xlu0 %v4488
        %v4490 = vpop.xlane.xlu0 %4489
        %v4491 = vsel %vm1494, %v4457, -inf
        %4492 = vmax.xlane.f32.xlu0 %v4491
        %v4493 = vpop.xlane.xlu0 %4492
        %v4494 = vsel %vm1494, %v4460, -inf
        %4495 = vmax.xlane.f32.xlu0 %v4494
        %v4496 = vpop.xlane.xlu0 %4495
        %v4497 = vsel %vm1494, %v4465, -inf
        %4498 = vmax.xlane.f32.xlu0 %v4497
        %v4499 = vpop.xlane.xlu0 %4498
        %v4500 = vsel %vm1494, %v4468, -inf
        %4501 = vmax.xlane.f32.xlu0 %v4500
        %v4502 = vpop.xlane.xlu0 %4501
        %v4503 = vsel %vm1494, %v4473, -inf
        %4504 = vmax.xlane.f32.xlu0 %v4503
        %v4505 = vpop.xlane.xlu0 %4504
        %v4506 = vsel %vm1494, %v4476, -inf
        %4507 = vmax.xlane.f32.xlu0 %v4506
        %v4508 = vpop.xlane.xlu0 %4507
        %v4509 = vsub.f32 %v4441, %v4481
        %v4510 = vsub.f32 %v4444, %v4484
        %v4511 = vsub.f32 %v4449, %v4487
        %v4512 = vsub.f32 %v4452, %v4490
        %v4513 = vsub.f32 %v4457, %v4493
        %v4514 = vsub.f32 %v4460, %v4496
        %v4515 = vsub.f32 %v4465, %v4499
        %v4516 = vsub.f32 %v4468, %v4502
        %v4517 = vsub.f32 %v4473, %v4505
        %v4518 = vsub.f32 %v4476, %v4508
        %v4519 = vmul.f32 %v4509, 1.442695
        %v4520 = vpow.pop %v4519
        %v4521 = vmul.f32 %v4510, 1.442695
        %v4522 = vpow.pop %v4521
        %v4523 = vmul.f32 %v4511, 1.442695
        %v4524 = vpow.pop %v4523
        %v4525 = vmul.f32 %v4512, 1.442695
        %v4526 = vpow.pop %v4525
        %v4527 = vmul.f32 %v4513, 1.442695
        %v4528 = vpow.pop %v4527
        %v4529 = vmul.f32 %v4514, 1.442695
        %v4530 = vpow.pop %v4529
        %v4531 = vmul.f32 %v4515, 1.442695
        %v4532 = vpow.pop %v4531
        %v4533 = vmul.f32 %v4516, 1.442695
        %v4534 = vpow.pop %v4533
        %v4535 = vmul.f32 %v4517, 1.442695
        %v4536 = vpow.pop %v4535
        %v4537 = vmul.f32 %v4518, 1.442695
        %v4538 = vpow.pop %v4537
        %v4539 = vsel %vm1494, %v4520, 0.0
        %4540 = vadd.xlane.f32.xlu0 %v4539
        %v4541 = vpop.xlane.xlu0 %4540
        %v4542 = vsel %vm1494, %v4522, 0.0
        %4543 = vadd.xlane.f32.xlu0 %v4542
        %v4544 = vpop.xlane.xlu0 %4543
        %v4545 = vsel %vm1494, %v4524, 0.0
        %4546 = vadd.xlane.f32.xlu0 %v4545
        %v4547 = vpop.xlane.xlu0 %4546
        %v4548 = vsel %vm1494, %v4526, 0.0
        %4549 = vadd.xlane.f32.xlu0 %v4548
        %v4550 = vpop.xlane.xlu0 %4549
        %v4551 = vsel %vm1494, %v4528, 0.0
        %4552 = vadd.xlane.f32.xlu0 %v4551
        %v4553 = vpop.xlane.xlu0 %4552
        %v4554 = vsel %vm1494, %v4530, 0.0
        %4555 = vadd.xlane.f32.xlu0 %v4554
        %v4556 = vpop.xlane.xlu0 %4555
        %v4557 = vsel %vm1494, %v4532, 0.0
        %4558 = vadd.xlane.f32.xlu0 %v4557
        %v4559 = vpop.xlane.xlu0 %4558
        %v4560 = vsel %vm1494, %v4534, 0.0
        %4561 = vadd.xlane.f32.xlu0 %v4560
        %v4562 = vpop.xlane.xlu0 %4561
        %v4563 = vsel %vm1494, %v4536, 0.0
        %4564 = vadd.xlane.f32.xlu0 %v4563
        %v4565 = vpop.xlane.xlu0 %4564
        %v4566 = vsel %vm1494, %v4538, 0.0
        %4567 = vadd.xlane.f32.xlu0 %v4566
        %v4568 = vpop.xlane.xlu0 %4567
        %v4569 = vrcp.pop %v4541
        %v4570 = vrcp.pop %v4544
        %v4571 = vrcp.pop %v4547
        %v4572 = vrcp.pop %v4550
        %v4573 = vrcp.pop %v4553
        %v4574 = vrcp.pop %v4556
        %v4575 = vrcp.pop %v4559
        %v4576 = vrcp.pop %v4562
        %v4577 = vrcp.pop %v4565
        %v4578 = vrcp.pop %v4568
        %v4579 = vmul.f32 %v4520, %v4569
        %v4580 = vmul.f32 %v4522, %v4570
        %v4581 = vmul.f32 %v4524, %v4571
        %v4582 = vmul.f32 %v4526, %v4572
        %v4583 = vmul.f32 %v4528, %v4573
        %v4584 = vmul.f32 %v4530, %v4574
        %v4585 = vmul.f32 %v4532, %v4575
        %v4586 = vmul.f32 %v4534, %v4576
        %v4587 = vmul.f32 %v4536, %v4577
        %v4588 = vmul.f32 %v4538, %v4578
        %v4589 = vpack.c.bf16 %v4580, %v4579
        %v4590 = vpack.c.bf16 %v4582, %v4581
        %v4591 = vpack.c.bf16 %v4584, %v4583
        %v4592 = vpack.c.bf16 %v4586, %v4585
        %v4593 = vpack.c.bf16 %v4588, %v4587
        %4599 = vrot.lane.b32.xlu0 %v4070, 96
        %v4600 = vpop.permute.xlu0 %4599
        %4601 = vrot.lane.b32.xlu0 %v4071, 96
        %v4602 = vpop.permute.xlu0 %4601
        %4603 = vrot.lane.b32.xlu0 %v4072, 96
        %v4604 = vpop.permute.xlu0 %4603
        %4605 = vrot.lane.b32.xlu0 %v4073, 96
        %v4606 = vpop.permute.xlu0 %4605
        %4607 = vrot.lane.b32.xlu0 %v4074, 96
        %v4608 = vpop.permute.xlu0 %4607
        %v4615 = vsel %vm1494, %v4589, 0
        %v4618 = vsel %vm1494, %v4590, 0
        %v4621 = vsel %vm1494, %v4591, 0
        %v4624 = vsel %vm1494, %v4592, 0
        %v4627 = vsel %vm1494, %v4593, 0
        %4629 = vmatprep.subr.bf16.mxu0 0
        %4630 = vmatpush1.bf16.msra.mxu0 %v4600
        %4631 = vmatprep.subr.bf16.mxu0 0
        %4632 = vmatpush1.bf16.msra.mxu0 %v4602
        %4633 = vmatprep.subr.bf16.mxu0 0
        %4634 = vmatpush1.bf16.msra.mxu0 %v4604
        %4635 = vmatprep.subr.bf16.mxu0 0
        %4636 = vmatpush1.bf16.msra.mxu0 %v4606
        %4637 = vmatprep.subr.bf16.mxu0 0
        %4638 = vmatpush1.bf16.msra.mxu0 %v4608
        %4639 = vmatprep.subr.bf16.mxu0 0
        %4640 = vmatpush1.bf16.msra.mxu0 0
        %4641 = vmatprep.subr.bf16.mxu0 0
        %4642 = vmatpush1.bf16.msra.mxu0 0
        %4643 = vmatprep.subr.bf16.mxu0 0
        %4644 = vmatpush1.bf16.msra.mxu0 0
        %4645 = vmatprep.subr.bf16.mxu0 0
        %4646 = vmatpush1.bf16.msra.mxu0 0
        %4647 = vmatprep.subr.bf16.mxu0 0
        %4648 = vmatpush1.bf16.msra.mxu0 0
        %4649 = vmatprep.subr.bf16.mxu0 0
        %4650 = vmatpush1.bf16.msra.mxu0 0
        %4651 = vmatprep.subr.bf16.mxu0 0
        %4652 = vmatpush1.bf16.msra.mxu0 0
        %4653 = vmatprep.subr.bf16.mxu0 0
        %4654 = vmatpush1.bf16.msra.mxu0 0
        %4655 = vmatprep.subr.bf16.mxu0 0
        %4656 = vmatpush1.bf16.msra.mxu0 0
        %4657 = vmatprep.subr.bf16.mxu0 0
        %4658 = vmatpush1.bf16.msra.mxu0 0
        %4659 = vmatprep.subr.bf16.mxu0 0
        %4660 = vmatpush1.bf16.msra.mxu0 0
        %4661 = vmatprep.mubr.bf16.mxu0 0
        %4662 = vmatmul.mubr.bf16.gmra.mrb[0].mxu0 %v4615
        %v4663 = vpop.f32.mrb[0].mxu0
        %v4664 = vadd.f32 0.0, %v4663
        %v4665 = vpop.f32.mrb[0].mxu0
        %v4666 = vpop.f32.mrb[0].mxu0
        %v4667 = vadd.f32 0.0, %v4666
        %v4668 = vpop.f32.mrb[0].mxu0
        %4669 = vmatprep.mubr.bf16.mxu0 0
        %4670 = vmatmul.mubr.bf16.gmra.mrb[0].mxu0 %v4618
        %v4671 = vpop.f32.mrb[0].mxu0
        %v4672 = vadd.f32 0.0, %v4671
        %v4673 = vpop.f32.mrb[0].mxu0
        %v4674 = vpop.f32.mrb[0].mxu0
        %v4675 = vadd.f32 0.0, %v4674
        %v4676 = vpop.f32.mrb[0].mxu0
        %4677 = vmatprep.mubr.bf16.mxu0 0
        %4678 = vmatmul.mubr.bf16.gmra.mrb[0].mxu0 %v4621
        %v4679 = vpop.f32.mrb[0].mxu0
        %v4680 = vadd.f32 0.0, %v4679
        %v4681 = vpop.f32.mrb[0].mxu0
        %v4682 = vpop.f32.mrb[0].mxu0
        %v4683 = vadd.f32 0.0, %v4682
        %v4684 = vpop.f32.mrb[0].mxu0
        %4685 = vmatprep.mubr.bf16.mxu0 0
        %4686 = vmatmul.mubr.bf16.gmra.mrb[0].mxu0 %v4624
        %v4687 = vpop.f32.mrb[0].mxu0
        %v4688 = vadd.f32 0.0, %v4687
        %v4689 = vpop.f32.mrb[0].mxu0
        %v4690 = vpop.f32.mrb[0].mxu0
        %v4691 = vadd.f32 0.0, %v4690
        %v4692 = vpop.f32.mrb[0].mxu0
        %4693 = vmatprep.mubr.bf16.mxu0 0
        %4694 = vmatmul.mubr.bf16.gmra.mrb[0].mxu0 %v4627
        %v4695 = vpop.f32.mrb[0].mxu0
        %v4696 = vadd.f32 0.0, %v4695
        %v4697 = vpop.f32.mrb[0].mxu0
        %v4698 = vpop.f32.mrb[0].mxu0
        %v4699 = vadd.f32 0.0, %v4698
        %v4700 = vpop.f32.mrb[0].mxu0
        %4701 = vdwg.mxu0
        %4712 = vrot.lane.b32.xlu0 %v4664, 32
        %v4713 = vpop.permute.xlu0 %4712
        %4714 = vrot.lane.b32.xlu0 %v4667, 32
        %v4715 = vpop.permute.xlu0 %4714
        %4716 = vrot.lane.b32.xlu0 %v4672, 32
        %v4717 = vpop.permute.xlu0 %4716
        %4718 = vrot.lane.b32.xlu0 %v4675, 32
        %v4719 = vpop.permute.xlu0 %4718
        %4720 = vrot.lane.b32.xlu0 %v4680, 32
        %v4721 = vpop.permute.xlu0 %4720
        %4722 = vrot.lane.b32.xlu0 %v4683, 32
        %v4723 = vpop.permute.xlu0 %4722
        %4724 = vrot.lane.b32.xlu0 %v4688, 32
        %v4725 = vpop.permute.xlu0 %4724
        %4726 = vrot.lane.b32.xlu0 %v4691, 32
        %v4727 = vpop.permute.xlu0 %4726
        %4728 = vrot.lane.b32.xlu0 %v4696, 32
        %v4729 = vpop.permute.xlu0 %4728
        %4730 = vrot.lane.b32.xlu0 %v4699, 32
        %v4731 = vpop.permute.xlu0 %4730
        %4742 = vst.msk [vmem:[#allocation4] sm:$0xff] %vm2074, %v4713
        %4743 = vst.msk [vmem:[#allocation4 + $0x8] sm:$0xff] %vm2074, %v4715
        %4744 = vst.msk [vmem:[#allocation4 + $0x10] sm:$0xff] %vm2074, %v4717
        %4745 = vst.msk [vmem:[#allocation4 + $0x18] sm:$0xff] %vm2074, %v4719
        %4746 = vst.msk [vmem:[#allocation4 + $0x20] sm:$0xff] %vm2074, %v4721
        %4747 = vst.msk [vmem:[#allocation4 + $0x28] sm:$0xff] %vm2074, %v4723
        %4748 = vst.msk [vmem:[#allocation4 + $0x30] sm:$0xff] %vm2074, %v4725
        %4749 = vst.msk [vmem:[#allocation4 + $0x38] sm:$0xff] %vm2074, %v4727
        %4750 = vst.msk [vmem:[#allocation4 + $0x40] sm:$0xff] %vm2074, %v4729
        %4751 = vst.msk [vmem:[#allocation4 + $0x48] sm:$0xff] %vm2074, %v4731
        %4752 = vrot.lane.b32.xlu0 %v4005, 64
        %v4753 = vpop.permute.xlu0 %4752
        %4754 = vrot.lane.b32.xlu0 %v4006, 64
        %v4755 = vpop.permute.xlu0 %4754
        %4756 = vrot.lane.b32.xlu0 %v4007, 64
        %v4757 = vpop.permute.xlu0 %4756
        %4758 = vrot.lane.b32.xlu0 %v4008, 64
        %v4759 = vpop.permute.xlu0 %4758
        %4760 = vrot.lane.b32.xlu0 %v4009, 64
        %v4761 = vpop.permute.xlu0 %4760
        %v4763 = vsel %vm1405, %v4753, 0
        %v4766 = vsel %vm1405, %v4755, 0
        %v4769 = vsel %vm1405, %v4757, 0
        %v4772 = vsel %vm1405, %v4759, 0
        %v4775 = vsel %vm1405, %v4761, 0
        %4777 = vmatprep.subr.bf16.mxu0 0
        %4778 = vmatpush1.bf16.msra.mxu0 %v4056
        %4779 = vmatprep.subr.bf16.mxu0 0
        %4780 = vmatpush1.bf16.msra.mxu0 %v4057
        %4781 = vmatprep.subr.bf16.mxu0 0
        %4782 = vmatpush1.bf16.msra.mxu0 0
        %4783 = vmatprep.subr.bf16.mxu0 0
        %4784 = vmatpush1.bf16.msra.mxu0 0
        %4785 = vmatprep.subr.bf16.mxu0 0
        %4786 = vmatpush1.bf16.msra.mxu0 0
        %4787 = vmatprep.subr.bf16.mxu0 0
        %4788 = vmatpush1.bf16.msra.mxu0 0
        %4789 = vmatprep.subr.bf16.mxu0 0
        %4790 = vmatpush1.bf16.msra.mxu0 0
        %4791 = vmatprep.subr.bf16.mxu0 0
        %4792 = vmatpush1.bf16.msra.mxu0 0
        %4793 = vmatprep.subr.bf16.mxu0 0
        %4794 = vmatpush1.bf16.msra.mxu0 0
        %4795 = vmatprep.subr.bf16.mxu0 0
        %4796 = vmatpush1.bf16.msra.mxu0 0
        %4797 = vmatprep.subr.bf16.mxu0 0
        %4798 = vmatpush1.bf16.msra.mxu0 0
        %4799 = vmatprep.subr.bf16.mxu0 0
        %4800 = vmatpush1.bf16.msra.mxu0 0
        %4801 = vmatprep.subr.bf16.mxu0 0
        %4802 = vmatpush1.bf16.msra.mxu0 0
        %4803 = vmatprep.subr.bf16.mxu0 0
        %4804 = vmatpush1.bf16.msra.mxu0 0
        %4805 = vmatprep.subr.bf16.mxu0 0
        %4806 = vmatpush1.bf16.msra.mxu0 0
        %4807 = vmatprep.subr.bf16.mxu0 0
        %4808 = vmatpush1.bf16.msra.mxu0 0
        %4809 = vmatprep.mubr.bf16.mxu0 0
        %4810 = vmatmul.mubr.bf16.gmra.mrb[0].mxu0 %v4763
        %v4811 = vpop.f32.mrb[0].mxu0
        %v4812 = vadd.f32 %v946, %v4811
        %v4813 = vpop.f32.mrb[0].mxu0
        %v4814 = vpop.f32.mrb[0].mxu0
        %v4815 = vadd.f32 %v946, %v4814
        %v4816 = vpop.f32.mrb[0].mxu0
        %4817 = vmatprep.mubr.bf16.mxu0 0
        %4818 = vmatmul.mubr.bf16.gmra.mrb[0].mxu0 %v4766
        %v4819 = vpop.f32.mrb[0].mxu0
        %v4820 = vadd.f32 %v946, %v4819
        %v4821 = vpop.f32.mrb[0].mxu0
        %v4822 = vpop.f32.mrb[0].mxu0
        %v4823 = vadd.f32 %v946, %v4822
        %v4824 = vpop.f32.mrb[0].mxu0
        %4825 = vmatprep.mubr.bf16.mxu0 0
        %4826 = vmatmul.mubr.bf16.gmra.mrb[0].mxu0 %v4769
        %v4827 = vpop.f32.mrb[0].mxu0
        %v4828 = vadd.f32 %v946, %v4827
        %v4829 = vpop.f32.mrb[0].mxu0
        %v4830 = vpop.f32.mrb[0].mxu0
        %v4831 = vadd.f32 %v946, %v4830
        %v4832 = vpop.f32.mrb[0].mxu0
        %4833 = vmatprep.mubr.bf16.mxu0 0
        %4834 = vmatmul.mubr.bf16.gmra.mrb[0].mxu0 %v4772
        %v4835 = vpop.f32.mrb[0].mxu0
        %v4836 = vadd.f32 %v946, %v4835
        %v4837 = vpop.f32.mrb[0].mxu0
        %v4838 = vpop.f32.mrb[0].mxu0
        %v4839 = vadd.f32 %v946, %v4838
        %v4840 = vpop.f32.mrb[0].mxu0
        %4841 = vmatprep.mubr.bf16.mxu0 0
        %4842 = vmatmul.mubr.bf16.gmra.mrb[0].mxu0 %v4775
        %v4843 = vpop.f32.mrb[0].mxu0
        %v4844 = vadd.f32 %v946, %v4843
        %v4845 = vpop.f32.mrb[0].mxu0
        %v4846 = vpop.f32.mrb[0].mxu0
        %v4847 = vadd.f32 %v946, %v4846
        %v4848 = vpop.f32.mrb[0].mxu0
        %4849 = vdwg.mxu0
        %v4850 = vsel %vm1494, %v4812, -inf
        %4851 = vmax.xlane.f32.xlu0 %v4850
        %v4852 = vpop.xlane.xlu0 %4851
        %v4853 = vsel %vm1494, %v4815, -inf
        %4854 = vmax.xlane.f32.xlu0 %v4853
        %v4855 = vpop.xlane.xlu0 %4854
        %v4856 = vsel %vm1494, %v4820, -inf
        %4857 = vmax.xlane.f32.xlu0 %v4856
        %v4858 = vpop.xlane.xlu0 %4857
        %v4859 = vsel %vm1494, %v4823, -inf
        %4860 = vmax.xlane.f32.xlu0 %v4859
        %v4861 = vpop.xlane.xlu0 %4860
        %v4862 = vsel %vm1494, %v4828, -inf
        %4863 = vmax.xlane.f32.xlu0 %v4862
        %v4864 = vpop.xlane.xlu0 %4863
        %v4865 = vsel %vm1494, %v4831, -inf
        %4866 = vmax.xlane.f32.xlu0 %v4865
        %v4867 = vpop.xlane.xlu0 %4866
        %v4868 = vsel %vm1494, %v4836, -inf
        %4869 = vmax.xlane.f32.xlu0 %v4868
        %v4870 = vpop.xlane.xlu0 %4869
        %v4871 = vsel %vm1494, %v4839, -inf
        %4872 = vmax.xlane.f32.xlu0 %v4871
        %v4873 = vpop.xlane.xlu0 %4872
        %v4874 = vsel %vm1494, %v4844, -inf
        %4875 = vmax.xlane.f32.xlu0 %v4874
        %v4876 = vpop.xlane.xlu0 %4875
        %v4877 = vsel %vm1494, %v4847, -inf
        %4878 = vmax.xlane.f32.xlu0 %v4877
        %v4879 = vpop.xlane.xlu0 %4878
        %v4880 = vsub.f32 %v4812, %v4852
        %v4881 = vsub.f32 %v4815, %v4855
        %v4882 = vsub.f32 %v4820, %v4858
        %v4883 = vsub.f32 %v4823, %v4861
        %v4884 = vsub.f32 %v4828, %v4864
        %v4885 = vsub.f32 %v4831, %v4867
        %v4886 = vsub.f32 %v4836, %v4870
        %v4887 = vsub.f32 %v4839, %v4873
        %v4888 = vsub.f32 %v4844, %v4876
        %v4889 = vsub.f32 %v4847, %v4879
        %v4890 = vmul.f32 %v4880, 1.442695
        %v4891 = vpow.pop %v4890
        %v4892 = vmul.f32 %v4881, 1.442695
        %v4893 = vpow.pop %v4892
        %v4894 = vmul.f32 %v4882, 1.442695
        %v4895 = vpow.pop %v4894
        %v4896 = vmul.f32 %v4883, 1.442695
        %v4897 = vpow.pop %v4896
        %v4898 = vmul.f32 %v4884, 1.442695
        %v4899 = vpow.pop %v4898
        %v4900 = vmul.f32 %v4885, 1.442695
        %v4901 = vpow.pop %v4900
        %v4902 = vmul.f32 %v4886, 1.442695
        %v4903 = vpow.pop %v4902
        %v4904 = vmul.f32 %v4887, 1.442695
        %v4905 = vpow.pop %v4904
        %v4906 = vmul.f32 %v4888, 1.442695
        %v4907 = vpow.pop %v4906
        %v4908 = vmul.f32 %v4889, 1.442695
        %v4909 = vpow.pop %v4908
        %v4910 = vsel %vm1494, %v4891, 0.0
        %4911 = vadd.xlane.f32.xlu0 %v4910
        %v4912 = vpop.xlane.xlu0 %4911
        %v4913 = vsel %vm1494, %v4893, 0.0
        %4914 = vadd.xlane.f32.xlu0 %v4913
        %v4915 = vpop.xlane.xlu0 %4914
        %v4916 = vsel %vm1494, %v4895, 0.0
        %4917 = vadd.xlane.f32.xlu0 %v4916
        %v4918 = vpop.xlane.xlu0 %4917
        %v4919 = vsel %vm1494, %v4897, 0.0
        %4920 = vadd.xlane.f32.xlu0 %v4919
        %v4921 = vpop.xlane.xlu0 %4920
        %v4922 = vsel %vm1494, %v4899, 0.0
        %4923 = vadd.xlane.f32.xlu0 %v4922
        %v4924 = vpop.xlane.xlu0 %4923
        %v4925 = vsel %vm1494, %v4901, 0.0
        %4926 = vadd.xlane.f32.xlu0 %v4925
        %v4927 = vpop.xlane.xlu0 %4926
        %v4928 = vsel %vm1494, %v4903, 0.0
        %4929 = vadd.xlane.f32.xlu0 %v4928
        %v4930 = vpop.xlane.xlu0 %4929
        %v4931 = vsel %vm1494, %v4905, 0.0
        %4932 = vadd.xlane.f32.xlu0 %v4931
        %v4933 = vpop.xlane.xlu0 %4932
        %v4934 = vsel %vm1494, %v4907, 0.0
        %4935 = vadd.xlane.f32.xlu0 %v4934
        %v4936 = vpop.xlane.xlu0 %4935
        %v4937 = vsel %vm1494, %v4909, 0.0
        %4938 = vadd.xlane.f32.xlu0 %v4937
        %v4939 = vpop.xlane.xlu0 %4938
        %v4940 = vrcp.pop %v4912
        %v4941 = vrcp.pop %v4915
        %v4942 = vrcp.pop %v4918
        %v4943 = vrcp.pop %v4921
        %v4944 = vrcp.pop %v4924
        %v4945 = vrcp.pop %v4927
        %v4946 = vrcp.pop %v4930
        %v4947 = vrcp.pop %v4933
        %v4948 = vrcp.pop %v4936
        %v4949 = vrcp.pop %v4939
        %v4950 = vmul.f32 %v4891, %v4940
        %v4951 = vmul.f32 %v4893, %v4941
        %v4952 = vmul.f32 %v4895, %v4942
        %v4953 = vmul.f32 %v4897, %v4943
        %v4954 = vmul.f32 %v4899, %v4944
        %v4955 = vmul.f32 %v4901, %v4945
        %v4956 = vmul.f32 %v4903, %v4946
        %v4957 = vmul.f32 %v4905, %v4947
        %v4958 = vmul.f32 %v4907, %v4948
        %v4959 = vmul.f32 %v4909, %v4949
        %v4960 = vpack.c.bf16 %v4951, %v4950
        %v4961 = vpack.c.bf16 %v4953, %v4952
        %v4962 = vpack.c.bf16 %v4955, %v4954
        %v4963 = vpack.c.bf16 %v4957, %v4956
        %v4964 = vpack.c.bf16 %v4959, %v4958
        %4965 = vrot.lane.b32.xlu0 %v4070, 64
        %v4966 = vpop.permute.xlu0 %4965
        %4967 = vrot.lane.b32.xlu0 %v4071, 64
        %v4968 = vpop.permute.xlu0 %4967
        %4969 = vrot.lane.b32.xlu0 %v4072, 64
        %v4970 = vpop.permute.xlu0 %4969
        %4971 = vrot.lane.b32.xlu0 %v4073, 64
        %v4972 = vpop.permute.xlu0 %4971
        %4973 = vrot.lane.b32.xlu0 %v4074, 64
        %v4974 = vpop.permute.xlu0 %4973
        %v4981 = vsel %vm1494, %v4960, 0
        %v4984 = vsel %vm1494, %v4961, 0
        %v4987 = vsel %vm1494, %v4962, 0
        %v4990 = vsel %vm1494, %v4963, 0
        %v4993 = vsel %vm1494, %v4964, 0
        %4995 = vmatprep.subr.bf16.mxu0 0
        %4996 = vmatpush1.bf16.msra.mxu0 %v4966
        %4997 = vmatprep.subr.bf16.mxu0 0
        %4998 = vmatpush1.bf16.msra.mxu0 %v4968
        %4999 = vmatprep.subr.bf16.mxu0 0
        %5000 = vmatpush1.bf16.msra.mxu0 %v4970
        %5001 = vmatprep.subr.bf16.mxu0 0
        %5002 = vmatpush1.bf16.msra.mxu0 %v4972
        %5003 = vmatprep.subr.bf16.mxu0 0
        %5004 = vmatpush1.bf16.msra.mxu0 %v4974
        %5005 = vmatprep.subr.bf16.mxu0 0
        %5006 = vmatpush1.bf16.msra.mxu0 0
        %5007 = vmatprep.subr.bf16.mxu0 0
        %5008 = vmatpush1.bf16.msra.mxu0 0
        %5009 = vmatprep.subr.bf16.mxu0 0
        %5010 = vmatpush1.bf16.msra.mxu0 0
        %5011 = vmatprep.subr.bf16.mxu0 0
        %5012 = vmatpush1.bf16.msra.mxu0 0
        %5013 = vmatprep.subr.bf16.mxu0 0
        %5014 = vmatpush1.bf16.msra.mxu0 0
        %5015 = vmatprep.subr.bf16.mxu0 0
        %5016 = vmatpush1.bf16.msra.mxu0 0
        %5017 = vmatprep.subr.bf16.mxu0 0
        %5018 = vmatpush1.bf16.msra.mxu0 0
        %5019 = vmatprep.subr.bf16.mxu0 0
        %5020 = vmatpush1.bf16.msra.mxu0 0
        %5021 = vmatprep.subr.bf16.mxu0 0
        %5022 = vmatpush1.bf16.msra.mxu0 0
        %5023 = vmatprep.subr.bf16.mxu0 0
        %5024 = vmatpush1.bf16.msra.mxu0 0
        %5025 = vmatprep.subr.bf16.mxu0 0
        %5026 = vmatpush1.bf16.msra.mxu0 0
        %5027 = vmatprep.mubr.bf16.mxu0 0
        %5028 = vmatmul.mubr.bf16.gmra.mrb[0].mxu0 %v4981
        %v5029 = vpop.f32.mrb[0].mxu0
        %v5030 = vadd.f32 0.0, %v5029
        %v5031 = vpop.f32.mrb[0].mxu0
        %v5032 = vpop.f32.mrb[0].mxu0
        %v5033 = vadd.f32 0.0, %v5032
        %v5034 = vpop.f32.mrb[0].mxu0
        %5035 = vmatprep.mubr.bf16.mxu0 0
        %5036 = vmatmul.mubr.bf16.gmra.mrb[0].mxu0 %v4984
        %v5037 = vpop.f32.mrb[0].mxu0
        %v5038 = vadd.f32 0.0, %v5037
        %v5039 = vpop.f32.mrb[0].mxu0
        %v5040 = vpop.f32.mrb[0].mxu0
        %v5041 = vadd.f32 0.0, %v5040
        %v5042 = vpop.f32.mrb[0].mxu0
        %5043 = vmatprep.mubr.bf16.mxu0 0
        %5044 = vmatmul.mubr.bf16.gmra.mrb[0].mxu0 %v4987
        %v5045 = vpop.f32.mrb[0].mxu0
        %v5046 = vadd.f32 0.0, %v5045
        %v5047 = vpop.f32.mrb[0].mxu0
        %v5048 = vpop.f32.mrb[0].mxu0
        %v5049 = vadd.f32 0.0, %v5048
        %v5050 = vpop.f32.mrb[0].mxu0
        %5051 = vmatprep.mubr.bf16.mxu0 0
        %5052 = vmatmul.mubr.bf16.gmra.mrb[0].mxu0 %v4990
        %v5053 = vpop.f32.mrb[0].mxu0
        %v5054 = vadd.f32 0.0, %v5053
        %v5055 = vpop.f32.mrb[0].mxu0
        %v5056 = vpop.f32.mrb[0].mxu0
        %v5057 = vadd.f32 0.0, %v5056
        %v5058 = vpop.f32.mrb[0].mxu0
        %5059 = vmatprep.mubr.bf16.mxu0 0
        %5060 = vmatmul.mubr.bf16.gmra.mrb[0].mxu0 %v4993
        %v5061 = vpop.f32.mrb[0].mxu0
        %v5062 = vadd.f32 0.0, %v5061
        %v5063 = vpop.f32.mrb[0].mxu0
        %v5064 = vpop.f32.mrb[0].mxu0
        %v5065 = vadd.f32 0.0, %v5064
        %v5066 = vpop.f32.mrb[0].mxu0
        %5067 = vdwg.mxu0
        %5078 = vrot.lane.b32.xlu0 %v5030, 64
        %v5079 = vpop.permute.xlu0 %5078
        %5080 = vrot.lane.b32.xlu0 %v5033, 64
        %v5081 = vpop.permute.xlu0 %5080
        %5082 = vrot.lane.b32.xlu0 %v5038, 64
        %v5083 = vpop.permute.xlu0 %5082
        %5084 = vrot.lane.b32.xlu0 %v5041, 64
        %v5085 = vpop.permute.xlu0 %5084
        %5086 = vrot.lane.b32.xlu0 %v5046, 64
        %v5087 = vpop.permute.xlu0 %5086
        %5088 = vrot.lane.b32.xlu0 %v5049, 64
        %v5089 = vpop.permute.xlu0 %5088
        %5090 = vrot.lane.b32.xlu0 %v5054, 64
        %v5091 = vpop.permute.xlu0 %5090
        %5092 = vrot.lane.b32.xlu0 %v5057, 64
        %v5093 = vpop.permute.xlu0 %5092
        %5094 = vrot.lane.b32.xlu0 %v5062, 64
        %v5095 = vpop.permute.xlu0 %5094
        %5096 = vrot.lane.b32.xlu0 %v5065, 64
        %v5097 = vpop.permute.xlu0 %5096
        %5108 = vst.msk [vmem:[#allocation4] sm:$0xff] %vm2441, %v5079
        %5109 = vst.msk [vmem:[#allocation4 + $0x8] sm:$0xff] %vm2441, %v5081
        %5110 = vst.msk [vmem:[#allocation4 + $0x10] sm:$0xff] %vm2441, %v5083
        %5111 = vst.msk [vmem:[#allocation4 + $0x18] sm:$0xff] %vm2441, %v5085
        %5112 = vst.msk [vmem:[#allocation4 + $0x20] sm:$0xff] %vm2441, %v5087
        %5113 = vst.msk [vmem:[#allocation4 + $0x28] sm:$0xff] %vm2441, %v5089
        %5114 = vst.msk [vmem:[#allocation4 + $0x30] sm:$0xff] %vm2441, %v5091
        %5115 = vst.msk [vmem:[#allocation4 + $0x38] sm:$0xff] %vm2441, %v5093
        %5116 = vst.msk [vmem:[#allocation4 + $0x40] sm:$0xff] %vm2441, %v5095
        %5117 = vst.msk [vmem:[#allocation4 + $0x48] sm:$0xff] %vm2441, %v5097
        %5118 = vrot.lane.b32.xlu0 %v4005, 32
        %v5119 = vpop.permute.xlu0 %5118
        %5120 = vrot.lane.b32.xlu0 %v4006, 32
        %v5121 = vpop.permute.xlu0 %5120
        %5122 = vrot.lane.b32.xlu0 %v4007, 32
        %v5123 = vpop.permute.xlu0 %5122
        %5124 = vrot.lane.b32.xlu0 %v4008, 32
        %v5125 = vpop.permute.xlu0 %5124
        %5126 = vrot.lane.b32.xlu0 %v4009, 32
        %v5127 = vpop.permute.xlu0 %5126
        %v5129 = vsel %vm1405, %v5119, 0
        %v5132 = vsel %vm1405, %v5121, 0
        %v5135 = vsel %vm1405, %v5123, 0
        %v5138 = vsel %vm1405, %v5125, 0
        %v5141 = vsel %vm1405, %v5127, 0
        %5143 = vmatprep.subr.bf16.mxu0 0
        %5144 = vmatpush1.bf16.msra.mxu0 %v4058
        %5145 = vmatprep.subr.bf16.mxu0 0
        %5146 = vmatpush1.bf16.msra.mxu0 %v4059
        %5147 = vmatprep.subr.bf16.mxu0 0
        %5148 = vmatpush1.bf16.msra.mxu0 0
        %5149 = vmatprep.subr.bf16.mxu0 0
        %5150 = vmatpush1.bf16.msra.mxu0 0
        %5151 = vmatprep.subr.bf16.mxu0 0
        %5152 = vmatpush1.bf16.msra.mxu0 0
        %5153 = vmatprep.subr.bf16.mxu0 0
        %5154 = vmatpush1.bf16.msra.mxu0 0
        %5155 = vmatprep.subr.bf16.mxu0 0
        %5156 = vmatpush1.bf16.msra.mxu0 0
        %5157 = vmatprep.subr.bf16.mxu0 0
        %5158 = vmatpush1.bf16.msra.mxu0 0
        %5159 = vmatprep.subr.bf16.mxu0 0
        %5160 = vmatpush1.bf16.msra.mxu0 0
        %5161 = vmatprep.subr.bf16.mxu0 0
        %5162 = vmatpush1.bf16.msra.mxu0 0
        %5163 = vmatprep.subr.bf16.mxu0 0
        %5164 = vmatpush1.bf16.msra.mxu0 0
        %5165 = vmatprep.subr.bf16.mxu0 0
        %5166 = vmatpush1.bf16.msra.mxu0 0
        %5167 = vmatprep.subr.bf16.mxu0 0
        %5168 = vmatpush1.bf16.msra.mxu0 0
        %5169 = vmatprep.subr.bf16.mxu0 0
        %5170 = vmatpush1.bf16.msra.mxu0 0
        %5171 = vmatprep.subr.bf16.mxu0 0
        %5172 = vmatpush1.bf16.msra.mxu0 0
        %5173 = vmatprep.subr.bf16.mxu0 0
        %5174 = vmatpush1.bf16.msra.mxu0 0
        %5175 = vmatprep.mubr.bf16.mxu0 0
        %5176 = vmatmul.mubr.bf16.gmra.mrb[0].mxu0 %v5129
        %v5177 = vpop.f32.mrb[0].mxu0
        %v5178 = vadd.f32 %v946, %v5177
        %v5179 = vpop.f32.mrb[0].mxu0
        %v5180 = vpop.f32.mrb[0].mxu0
        %v5181 = vadd.f32 %v946, %v5180
        %v5182 = vpop.f32.mrb[0].mxu0
        %5183 = vmatprep.mubr.bf16.mxu0 0
        %5184 = vmatmul.mubr.bf16.gmra.mrb[0].mxu0 %v5132
        %v5185 = vpop.f32.mrb[0].mxu0
        %v5186 = vadd.f32 %v946, %v5185
        %v5187 = vpop.f32.mrb[0].mxu0
        %v5188 = vpop.f32.mrb[0].mxu0
        %v5189 = vadd.f32 %v946, %v5188
        %v5190 = vpop.f32.mrb[0].mxu0
        %5191 = vmatprep.mubr.bf16.mxu0 0
        %5192 = vmatmul.mubr.bf16.gmra.mrb[0].mxu0 %v5135
        %v5193 = vpop.f32.mrb[0].mxu0
        %v5194 = vadd.f32 %v946, %v5193
        %v5195 = vpop.f32.mrb[0].mxu0
        %v5196 = vpop.f32.mrb[0].mxu0
        %v5197 = vadd.f32 %v946, %v5196
        %v5198 = vpop.f32.mrb[0].mxu0
        %5199 = vmatprep.mubr.bf16.mxu0 0
        %5200 = vmatmul.mubr.bf16.gmra.mrb[0].mxu0 %v5138
        %v5201 = vpop.f32.mrb[0].mxu0
        %v5202 = vadd.f32 %v946, %v5201
        %v5203 = vpop.f32.mrb[0].mxu0
        %v5204 = vpop.f32.mrb[0].mxu0
        %v5205 = vadd.f32 %v946, %v5204
        %v5206 = vpop.f32.mrb[0].mxu0
        %5207 = vmatprep.mubr.bf16.mxu0 0
        %5208 = vmatmul.mubr.bf16.gmra.mrb[0].mxu0 %v5141
        %v5209 = vpop.f32.mrb[0].mxu0
        %v5210 = vadd.f32 %v946, %v5209
        %v5211 = vpop.f32.mrb[0].mxu0
        %v5212 = vpop.f32.mrb[0].mxu0
        %v5213 = vadd.f32 %v946, %v5212
        %v5214 = vpop.f32.mrb[0].mxu0
        %5215 = vdwg.mxu0
        %v5216 = vsel %vm1494, %v5178, -inf
        %5217 = vmax.xlane.f32.xlu0 %v5216
        %v5218 = vpop.xlane.xlu0 %5217
        %v5219 = vsel %vm1494, %v5181, -inf
        %5220 = vmax.xlane.f32.xlu0 %v5219
        %v5221 = vpop.xlane.xlu0 %5220
        %v5222 = vsel %vm1494, %v5186, -inf
        %5223 = vmax.xlane.f32.xlu0 %v5222
        %v5224 = vpop.xlane.xlu0 %5223
        %v5225 = vsel %vm1494, %v5189, -inf
        %5226 = vmax.xlane.f32.xlu0 %v5225
        %v5227 = vpop.xlane.xlu0 %5226
        %v5228 = vsel %vm1494, %v5194, -inf
        %5229 = vmax.xlane.f32.xlu0 %v5228
        %v5230 = vpop.xlane.xlu0 %5229
        %v5231 = vsel %vm1494, %v5197, -inf
        %5232 = vmax.xlane.f32.xlu0 %v5231
        %v5233 = vpop.xlane.xlu0 %5232
        %v5234 = vsel %vm1494, %v5202, -inf
        %5235 = vmax.xlane.f32.xlu0 %v5234
        %v5236 = vpop.xlane.xlu0 %5235
        %v5237 = vsel %vm1494, %v5205, -inf
        %5238 = vmax.xlane.f32.xlu0 %v5237
        %v5239 = vpop.xlane.xlu0 %5238
        %v5240 = vsel %vm1494, %v5210, -inf
        %5241 = vmax.xlane.f32.xlu0 %v5240
        %v5242 = vpop.xlane.xlu0 %5241
        %v5243 = vsel %vm1494, %v5213, -inf
        %5244 = vmax.xlane.f32.xlu0 %v5243
        %v5245 = vpop.xlane.xlu0 %5244
        %v5246 = vsub.f32 %v5178, %v5218
        %v5247 = vsub.f32 %v5181, %v5221
        %v5248 = vsub.f32 %v5186, %v5224
        %v5249 = vsub.f32 %v5189, %v5227
        %v5250 = vsub.f32 %v5194, %v5230
        %v5251 = vsub.f32 %v5197, %v5233
        %v5252 = vsub.f32 %v5202, %v5236
        %v5253 = vsub.f32 %v5205, %v5239
        %v5254 = vsub.f32 %v5210, %v5242
        %v5255 = vsub.f32 %v5213, %v5245
        %v5256 = vmul.f32 %v5246, 1.442695
        %v5257 = vpow.pop %v5256
        %v5258 = vmul.f32 %v5247, 1.442695
        %v5259 = vpow.pop %v5258
        %v5260 = vmul.f32 %v5248, 1.442695
        %v5261 = vpow.pop %v5260
        %v5262 = vmul.f32 %v5249, 1.442695
        %v5263 = vpow.pop %v5262
        %v5264 = vmul.f32 %v5250, 1.442695
        %v5265 = vpow.pop %v5264
        %v5266 = vmul.f32 %v5251, 1.442695
        %v5267 = vpow.pop %v5266
        %v5268 = vmul.f32 %v5252, 1.442695
        %v5269 = vpow.pop %v5268
        %v5270 = vmul.f32 %v5253, 1.442695
        %v5271 = vpow.pop %v5270
        %v5272 = vmul.f32 %v5254, 1.442695
        %v5273 = vpow.pop %v5272
        %v5274 = vmul.f32 %v5255, 1.442695
        %v5275 = vpow.pop %v5274
        %v5276 = vsel %vm1494, %v5257, 0.0
        %5277 = vadd.xlane.f32.xlu0 %v5276
        %v5278 = vpop.xlane.xlu0 %5277
        %v5279 = vsel %vm1494, %v5259, 0.0
        %5280 = vadd.xlane.f32.xlu0 %v5279
        %v5281 = vpop.xlane.xlu0 %5280
        %v5282 = vsel %vm1494, %v5261, 0.0
        %5283 = vadd.xlane.f32.xlu0 %v5282
        %v5284 = vpop.xlane.xlu0 %5283
        %v5285 = vsel %vm1494, %v5263, 0.0
        %5286 = vadd.xlane.f32.xlu0 %v5285
        %v5287 = vpop.xlane.xlu0 %5286
        %v5288 = vsel %vm1494, %v5265, 0.0
        %5289 = vadd.xlane.f32.xlu0 %v5288
        %v5290 = vpop.xlane.xlu0 %5289
        %v5291 = vsel %vm1494, %v5267, 0.0
        %5292 = vadd.xlane.f32.xlu0 %v5291
        %v5293 = vpop.xlane.xlu0 %5292
        %v5294 = vsel %vm1494, %v5269, 0.0
        %5295 = vadd.xlane.f32.xlu0 %v5294
        %v5296 = vpop.xlane.xlu0 %5295
        %v5297 = vsel %vm1494, %v5271, 0.0
        %5298 = vadd.xlane.f32.xlu0 %v5297
        %v5299 = vpop.xlane.xlu0 %5298
        %v5300 = vsel %vm1494, %v5273, 0.0
        %5301 = vadd.xlane.f32.xlu0 %v5300
        %v5302 = vpop.xlane.xlu0 %5301
        %v5303 = vsel %vm1494, %v5275, 0.0
        %5304 = vadd.xlane.f32.xlu0 %v5303
        %v5305 = vpop.xlane.xlu0 %5304
        %v5306 = vrcp.pop %v5278
        %v5307 = vrcp.pop %v5281
        %v5308 = vrcp.pop %v5284
        %v5309 = vrcp.pop %v5287
        %v5310 = vrcp.pop %v5290
        %v5311 = vrcp.pop %v5293
        %v5312 = vrcp.pop %v5296
        %v5313 = vrcp.pop %v5299
        %v5314 = vrcp.pop %v5302
        %v5315 = vrcp.pop %v5305
        %v5316 = vmul.f32 %v5257, %v5306
        %v5317 = vmul.f32 %v5259, %v5307
        %v5318 = vmul.f32 %v5261, %v5308
        %v5319 = vmul.f32 %v5263, %v5309
        %v5320 = vmul.f32 %v5265, %v5310
        %v5321 = vmul.f32 %v5267, %v5311
        %v5322 = vmul.f32 %v5269, %v5312
        %v5323 = vmul.f32 %v5271, %v5313
        %v5324 = vmul.f32 %v5273, %v5314
        %v5325 = vmul.f32 %v5275, %v5315
        %v5326 = vpack.c.bf16 %v5317, %v5316
        %v5327 = vpack.c.bf16 %v5319, %v5318
        %v5328 = vpack.c.bf16 %v5321, %v5320
        %v5329 = vpack.c.bf16 %v5323, %v5322
        %v5330 = vpack.c.bf16 %v5325, %v5324
        %5331 = vrot.lane.b32.xlu0 %v4070, 32
        %v5332 = vpop.permute.xlu0 %5331
        %5333 = vrot.lane.b32.xlu0 %v4071, 32
        %v5334 = vpop.permute.xlu0 %5333
        %5335 = vrot.lane.b32.xlu0 %v4072, 32
        %v5336 = vpop.permute.xlu0 %5335
        %5337 = vrot.lane.b32.xlu0 %v4073, 32
        %v5338 = vpop.permute.xlu0 %5337
        %5339 = vrot.lane.b32.xlu0 %v4074, 32
        %v5340 = vpop.permute.xlu0 %5339
        %v5347 = vsel %vm1494, %v5326, 0
        %v5350 = vsel %vm1494, %v5327, 0
        %v5353 = vsel %vm1494, %v5328, 0
        %v5356 = vsel %vm1494, %v5329, 0
        %v5359 = vsel %vm1494, %v5330, 0
        %5361 = vmatprep.subr.bf16.mxu0 0
        %5362 = vmatpush1.bf16.msra.mxu0 %v5332
        %5363 = vmatprep.subr.bf16.mxu0 0
        %5364 = vmatpush1.bf16.msra.mxu0 %v5334
        %5365 = vmatprep.subr.bf16.mxu0 0
        %5366 = vmatpush1.bf16.msra.mxu0 %v5336
        %5367 = vmatprep.subr.bf16.mxu0 0
        %5368 = vmatpush1.bf16.msra.mxu0 %v5338
        %5369 = vmatprep.subr.bf16.mxu0 0
        %5370 = vmatpush1.bf16.msra.mxu0 %v5340
        %5371 = vmatprep.subr.bf16.mxu0 0
        %5372 = vmatpush1.bf16.msra.mxu0 0
        %5373 = vmatprep.subr.bf16.mxu0 0
        %5374 = vmatpush1.bf16.msra.mxu0 0
        %5375 = vmatprep.subr.bf16.mxu0 0
        %5376 = vmatpush1.bf16.msra.mxu0 0
        %5377 = vmatprep.subr.bf16.mxu0 0
        %5378 = vmatpush1.bf16.msra.mxu0 0
        %5379 = vmatprep.subr.bf16.mxu0 0
        %5380 = vmatpush1.bf16.msra.mxu0 0
        %5381 = vmatprep.subr.bf16.mxu0 0
        %5382 = vmatpush1.bf16.msra.mxu0 0
        %5383 = vmatprep.subr.bf16.mxu0 0
        %5384 = vmatpush1.bf16.msra.mxu0 0
        %5385 = vmatprep.subr.bf16.mxu0 0
        %5386 = vmatpush1.bf16.msra.mxu0 0
        %5387 = vmatprep.subr.bf16.mxu0 0
        %5388 = vmatpush1.bf16.msra.mxu0 0
        %5389 = vmatprep.subr.bf16.mxu0 0
        %5390 = vmatpush1.bf16.msra.mxu0 0
        %5391 = vmatprep.subr.bf16.mxu0 0
        %5392 = vmatpush1.bf16.msra.mxu0 0
        %5393 = vmatprep.mubr.bf16.mxu0 0
        %5394 = vmatmul.mubr.bf16.gmra.mrb[0].mxu0 %v5347
        %v5395 = vpop.f32.mrb[0].mxu0
        %v5396 = vadd.f32 0.0, %v5395
        %v5397 = vpop.f32.mrb[0].mxu0
        %v5398 = vpop.f32.mrb[0].mxu0
        %v5399 = vadd.f32 0.0, %v5398
        %v5400 = vpop.f32.mrb[0].mxu0
        %5401 = vmatprep.mubr.bf16.mxu0 0
        %5402 = vmatmul.mubr.bf16.gmra.mrb[0].mxu0 %v5350
        %v5403 = vpop.f32.mrb[0].mxu0
        %v5404 = vadd.f32 0.0, %v5403
        %v5405 = vpop.f32.mrb[0].mxu0
        %v5406 = vpop.f32.mrb[0].mxu0
        %v5407 = vadd.f32 0.0, %v5406
        %v5408 = vpop.f32.mrb[0].mxu0
        %5409 = vmatprep.mubr.bf16.mxu0 0
        %5410 = vmatmul.mubr.bf16.gmra.mrb[0].mxu0 %v5353
        %v5411 = vpop.f32.mrb[0].mxu0
        %v5412 = vadd.f32 0.0, %v5411
        %v5413 = vpop.f32.mrb[0].mxu0
        %v5414 = vpop.f32.mrb[0].mxu0
        %v5415 = vadd.f32 0.0, %v5414
        %v5416 = vpop.f32.mrb[0].mxu0
        %5417 = vmatprep.mubr.bf16.mxu0 0
        %5418 = vmatmul.mubr.bf16.gmra.mrb[0].mxu0 %v5356
        %v5419 = vpop.f32.mrb[0].mxu0
        %v5420 = vadd.f32 0.0, %v5419
        %v5421 = vpop.f32.mrb[0].mxu0
        %v5422 = vpop.f32.mrb[0].mxu0
        %v5423 = vadd.f32 0.0, %v5422
        %v5424 = vpop.f32.mrb[0].mxu0
        %5425 = vmatprep.mubr.bf16.mxu0 0
        %5426 = vmatmul.mubr.bf16.gmra.mrb[0].mxu0 %v5359
        %v5427 = vpop.f32.mrb[0].mxu0
        %v5428 = vadd.f32 0.0, %v5427
        %v5429 = vpop.f32.mrb[0].mxu0
        %v5430 = vpop.f32.mrb[0].mxu0
        %v5431 = vadd.f32 0.0, %v5430
        %v5432 = vpop.f32.mrb[0].mxu0
        %5433 = vdwg.mxu0
        %5444 = vrot.lane.b32.xlu0 %v5396, 96
        %v5445 = vpop.permute.xlu0 %5444
        %5446 = vrot.lane.b32.xlu0 %v5399, 96
        %v5447 = vpop.permute.xlu0 %5446
        %5448 = vrot.lane.b32.xlu0 %v5404, 96
        %v5449 = vpop.permute.xlu0 %5448
        %5450 = vrot.lane.b32.xlu0 %v5407, 96
        %v5451 = vpop.permute.xlu0 %5450
        %5452 = vrot.lane.b32.xlu0 %v5412, 96
        %v5453 = vpop.permute.xlu0 %5452
        %5454 = vrot.lane.b32.xlu0 %v5415, 96
        %v5455 = vpop.permute.xlu0 %5454
        %5456 = vrot.lane.b32.xlu0 %v5420, 96
        %v5457 = vpop.permute.xlu0 %5456
        %5458 = vrot.lane.b32.xlu0 %v5423, 96
        %v5459 = vpop.permute.xlu0 %5458
        %5460 = vrot.lane.b32.xlu0 %v5428, 96
        %v5461 = vpop.permute.xlu0 %5460
        %5462 = vrot.lane.b32.xlu0 %v5431, 96
        %v5463 = vpop.permute.xlu0 %5462
        %5474 = vst.msk [vmem:[#allocation4] sm:$0xff] %vm2808, %v5445
        %5475 = vst.msk [vmem:[#allocation4 + $0x8] sm:$0xff] %vm2808, %v5447
        %5476 = vst.msk [vmem:[#allocation4 + $0x10] sm:$0xff] %vm2808, %v5449
        %5477 = vst.msk [vmem:[#allocation4 + $0x18] sm:$0xff] %vm2808, %v5451
        %5478 = vst.msk [vmem:[#allocation4 + $0x20] sm:$0xff] %vm2808, %v5453
        %5479 = vst.msk [vmem:[#allocation4 + $0x28] sm:$0xff] %vm2808, %v5455
        %5480 = vst.msk [vmem:[#allocation4 + $0x30] sm:$0xff] %vm2808, %v5457
        %5481 = vst.msk [vmem:[#allocation4 + $0x38] sm:$0xff] %vm2808, %v5459
        %5482 = vst.msk [vmem:[#allocation4 + $0x40] sm:$0xff] %vm2808, %v5461
        %5483 = vst.msk [vmem:[#allocation4 + $0x48] sm:$0xff] %vm2808, %v5463
        %v5484 = vld [vmem:[#allocation4] sm:$0xff]
        %v5485 = vld [vmem:[#allocation4 + $0x8] sm:$0xff]
        %v5486 = vld [vmem:[#allocation4 + $0x10] sm:$0xff]
        %v5487 = vld [vmem:[#allocation4 + $0x18] sm:$0xff]
        %v5488 = vld [vmem:[#allocation4 + $0x20] sm:$0xff]
        %v5489 = vld [vmem:[#allocation4 + $0x28] sm:$0xff]
        %v5490 = vld [vmem:[#allocation4 + $0x30] sm:$0xff]
        %v5491 = vld [vmem:[#allocation4 + $0x38] sm:$0xff]
        %v5492 = vld [vmem:[#allocation4 + $0x40] sm:$0xff]
        %v5493 = vld [vmem:[#allocation4 + $0x48] sm:$0xff]
        %v5494 = vpack.c.bf16 %v5485, %v5484
        %v5495 = vpack.c.bf16 %v5487, %v5486
        %v5496 = vpack.c.bf16 %v5489, %v5488
        %v5497 = vpack.c.bf16 %v5491, %v5490
        %v5498 = vpack.c.bf16 %v5493, %v5492
        %s5499 = scalar_lea.vmem %s9, 64
        %v5500 = vld [vmem:[%s5499] sm:$0xf]
        %v5501 = vld [vmem:[%s5499 + $0x4] sm:$0xf]
        %v5502 = vld [vmem:[%s5499 + $0x8] sm:$0xf]
        %v5503 = vld [vmem:[%s5499 + $0xc] sm:$0xf]
        %v5504 = vld [vmem:[%s5499 + $0x10] sm:$0xf]
        %v5505 = vld [vmem:[%s5499 + $0x14] sm:$0xf]
        %v5506 = vld [vmem:[%s5499 + $0x18] sm:$0xf]
        %v5507 = vld [vmem:[%s5499 + $0x1c] sm:$0xf]
        %v5508 = vld [vmem:[%s5499 + $0x20] sm:$0xf]
        %v5509 = vld [vmem:[%s5499 + $0x24] sm:$0xf]
        %v5510 = vld [vmem:[%s5499 + $0x28] sm:$0xf]
        %v5511 = vld [vmem:[%s5499 + $0x2c] sm:$0xf]
        %v5512 = vld [vmem:[%s5499 + $0x30] sm:$0xf]
        %v5513 = vld [vmem:[%s5499 + $0x34] sm:$0xf]
        %v5514 = vld [vmem:[%s5499 + $0x38] sm:$0xf]
        %v5515 = vld [vmem:[%s5499 + $0x3c] sm:$0xf]
        %s5516 = scalar_lea.vmem %s10, 1
        %v5517 = vld [vmem:[%s5516] sm:$0x1]
        %v5519 = vlaneseq
        %v5520 = vshrl.u32 %v5519, 7
        %v5521 = vsub.s32 0, %v5520
        %v5522 = vrot.slane %v5517, %v5521
        %v5540 = vunpack.c.l.b16 %v5500
        %v5541 = vunpack.c.l.b16 %v5501
        %v5542 = vunpack.c.l.b16 %v5502
        %v5543 = vunpack.c.l.b16 %v5503
        %v5544 = vunpack.c.l.b16 %v5504
        %v5545 = vunpack.c.l.b16 %v5505
        %v5546 = vunpack.c.l.b16 %v5506
        %v5547 = vunpack.c.l.b16 %v5507
        %v5548 = vunpack.c.l.b16 %v5508
        %v5549 = vunpack.c.l.b16 %v5509
        %v5550 = vunpack.c.l.b16 %v5510
        %v5551 = vunpack.c.l.b16 %v5511
        %v5552 = vunpack.c.l.b16 %v5512
        %v5553 = vunpack.c.l.b16 %v5513
        %v5554 = vunpack.c.l.b16 %v5514
        %v5555 = vunpack.c.l.b16 %v5515
        %v5556 = vpack.c.b16 %v5541, %v5540
        %v5557 = vpack.c.b16 %v5543, %v5542
        %v5558 = vpack.c.b16 %v5545, %v5544
        %v5559 = vpack.c.b16 %v5547, %v5546
        %v5560 = vpack.c.b16 %v5549, %v5548
        %v5561 = vpack.c.b16 %v5551, %v5550
        %v5562 = vpack.c.b16 %v5553, %v5552
        %v5563 = vpack.c.b16 %v5555, %v5554
        %5572 = vmatprep.subr.bf16.mxu0 0
        %5573 = vmatpush1.bf16.msra.mxu0 %v5556
        %5574 = vmatprep.subr.bf16.mxu0 0
        %5575 = vmatpush1.bf16.msra.mxu0 %v5557
        %5576 = vmatprep.subr.bf16.mxu0 0
        %5577 = vmatpush1.bf16.msra.mxu0 %v5558
        %5578 = vmatprep.subr.bf16.mxu0 0
        %5579 = vmatpush1.bf16.msra.mxu0 %v5559
        %5580 = vmatprep.subr.bf16.mxu0 0
        %5581 = vmatpush1.bf16.msra.mxu0 %v5560
        %5582 = vmatprep.subr.bf16.mxu0 0
        %5583 = vmatpush1.bf16.msra.mxu0 %v5561
        %5584 = vmatprep.subr.bf16.mxu0 0
        %5585 = vmatpush1.bf16.msra.mxu0 %v5562
        %5586 = vmatprep.subr.bf16.mxu0 0
        %5587 = vmatpush1.bf16.msra.mxu0 %v5563
        %5588 = vmatprep.subr.bf16.mxu0 0
        %5589 = vmatpush1.bf16.msra.mxu0 0
        %5590 = vmatprep.subr.bf16.mxu0 0
        %5591 = vmatpush1.bf16.msra.mxu0 0
        %5592 = vmatprep.subr.bf16.mxu0 0
        %5593 = vmatpush1.bf16.msra.mxu0 0
        %5594 = vmatprep.subr.bf16.mxu0 0
        %5595 = vmatpush1.bf16.msra.mxu0 0
        %5596 = vmatprep.subr.bf16.mxu0 0
        %5597 = vmatpush1.bf16.msra.mxu0 0
        %5598 = vmatprep.subr.bf16.mxu0 0
        %5599 = vmatpush1.bf16.msra.mxu0 0
        %5600 = vmatprep.subr.bf16.mxu0 0
        %5601 = vmatpush1.bf16.msra.mxu0 0
        %5602 = vmatprep.subr.bf16.mxu0 0
        %5603 = vmatpush1.bf16.msra.mxu0 0
        %5604 = vmatprep.mubr.bf16.mxu0 0
        %5605 = vmatmul.mubr.bf16.gmra.mrb[0].mxu0 %v5494
        %v5606 = vpop.f32.mrb[0].mxu0
        %v5607 = vadd.f32 %v5522, %v5606
        %v5608 = vpop.f32.mrb[0].mxu0
        %v5609 = vpop.f32.mrb[0].mxu0
        %v5610 = vadd.f32 %v5522, %v5609
        %v5611 = vpop.f32.mrb[0].mxu0
        %5612 = vmatprep.mubr.bf16.mxu0 0
        %5613 = vmatmul.mubr.bf16.gmra.mrb[0].mxu0 %v5495
        %v5614 = vpop.f32.mrb[0].mxu0
        %v5615 = vadd.f32 %v5522, %v5614
        %v5616 = vpop.f32.mrb[0].mxu0
        %v5617 = vpop.f32.mrb[0].mxu0
        %v5618 = vadd.f32 %v5522, %v5617
        %v5619 = vpop.f32.mrb[0].mxu0
        %5620 = vmatprep.mubr.bf16.mxu0 0
        %5621 = vmatmul.mubr.bf16.gmra.mrb[0].mxu0 %v5496
        %v5622 = vpop.f32.mrb[0].mxu0
        %v5623 = vadd.f32 %v5522, %v5622
        %v5624 = vpop.f32.mrb[0].mxu0
        %v5625 = vpop.f32.mrb[0].mxu0
        %v5626 = vadd.f32 %v5522, %v5625
        %v5627 = vpop.f32.mrb[0].mxu0
        %5628 = vmatprep.mubr.bf16.mxu0 0
        %5629 = vmatmul.mubr.bf16.gmra.mrb[0].mxu0 %v5497
        %v5630 = vpop.f32.mrb[0].mxu0
        %v5631 = vadd.f32 %v5522, %v5630
        %v5632 = vpop.f32.mrb[0].mxu0
        %v5633 = vpop.f32.mrb[0].mxu0
        %v5634 = vadd.f32 %v5522, %v5633
        %v5635 = vpop.f32.mrb[0].mxu0
        %5636 = vmatprep.mubr.bf16.mxu0 0
        %5637 = vmatmul.mubr.bf16.gmra.mrb[0].mxu0 %v5498
        %v5638 = vpop.f32.mrb[0].mxu0
        %v5639 = vadd.f32 %v5522, %v5638
        %v5640 = vpop.f32.mrb[0].mxu0
        %v5641 = vpop.f32.mrb[0].mxu0
        %v5642 = vadd.f32 %v5522, %v5641
        %v5643 = vpop.f32.mrb[0].mxu0
        %5644 = vdwg.mxu0
        %v5645 = vld [vmem:[#allocation2] sm:$0xff]
        %v5646 = vld [vmem:[#allocation2 + $0x8] sm:$0xff]
        %v5647 = vld [vmem:[#allocation2 + $0x10] sm:$0xff]
        %v5648 = vld [vmem:[#allocation2 + $0x18] sm:$0xff]
        %v5649 = vld [vmem:[#allocation2 + $0x20] sm:$0xff]
        %v5650 = vld [vmem:[#allocation2 + $0x28] sm:$0xff]
        %v5651 = vld [vmem:[#allocation2 + $0x30] sm:$0xff]
        %v5652 = vld [vmem:[#allocation2 + $0x38] sm:$0xff]
        %v5653 = vld [vmem:[#allocation2 + $0x40] sm:$0xff]
        %v5654 = vld [vmem:[#allocation2 + $0x48] sm:$0xff]
        %v5655 = vadd.f32 %v5645, %v5607
        %v5656 = vadd.f32 %v5646, %v5610
        %v5657 = vadd.f32 %v5647, %v5615
        %v5658 = vadd.f32 %v5648, %v5618
        %v5659 = vadd.f32 %v5649, %v5623
        %v5660 = vadd.f32 %v5650, %v5626
        %v5661 = vadd.f32 %v5651, %v5631
        %v5662 = vadd.f32 %v5652, %v5634
        %v5663 = vadd.f32 %v5653, %v5639
        %v5664 = vadd.f32 %v5654, %v5642
        %s5665 = scalar_lea.vmem %s11, 1
        %v5666 = vld [vmem:[%s5665] sm:$0x1]
        %s5667 = scalar_lea.vmem %s12, 1
        %v5668 = vld [vmem:[%s5667] sm:$0x1]
        %5669 = vadd.xlane.f32.xlu0 %v5655
        %v5670 = vpop.xlane.xlu0 %5669
        %5671 = vadd.xlane.f32.xlu0 %v5656
        %v5672 = vpop.xlane.xlu0 %5671
        %5673 = vadd.xlane.f32.xlu0 %v5657
        %v5674 = vpop.xlane.xlu0 %5673
        %5675 = vadd.xlane.f32.xlu0 %v5658
        %v5676 = vpop.xlane.xlu0 %5675
        %5677 = vadd.xlane.f32.xlu0 %v5659
        %v5678 = vpop.xlane.xlu0 %5677
        %5679 = vadd.xlane.f32.xlu0 %v5660
        %v5680 = vpop.xlane.xlu0 %5679
        %5681 = vadd.xlane.f32.xlu0 %v5661
        %v5682 = vpop.xlane.xlu0 %5681
        %5683 = vadd.xlane.f32.xlu0 %v5662
        %v5684 = vpop.xlane.xlu0 %5683
        %5685 = vadd.xlane.f32.xlu0 %v5663
        %v5686 = vpop.xlane.xlu0 %5685
        %5687 = vadd.xlane.f32.xlu0 %v5664
        %v5688 = vpop.xlane.xlu0 %5687
        %v5689 = vmul.f32 %v5670, %v3020
        %v5690 = vmul.f32 %v5672, %v3020
        %v5691 = vmul.f32 %v5674, %v3020
        %v5692 = vmul.f32 %v5676, %v3020
        %v5693 = vmul.f32 %v5678, %v3020
        %v5694 = vmul.f32 %v5680, %v3020
        %v5695 = vmul.f32 %v5682, %v3020
        %v5696 = vmul.f32 %v5684, %v3020
        %v5697 = vmul.f32 %v5686, %v3020
        %v5698 = vmul.f32 %v5688, %v3020
        %v5699 = vsub.f32 %v5655, %v5689
        %v5700 = vsub.f32 %v5656, %v5690
        %v5701 = vsub.f32 %v5657, %v5691
        %v5702 = vsub.f32 %v5658, %v5692
        %v5703 = vsub.f32 %v5659, %v5693
        %v5704 = vsub.f32 %v5660, %v5694
        %v5705 = vsub.f32 %v5661, %v5695
        %v5706 = vsub.f32 %v5662, %v5696
        %v5707 = vsub.f32 %v5663, %v5697
        %v5708 = vsub.f32 %v5664, %v5698
        %v5709 = vmul.f32 %v5699, %v5699
        %v5710 = vmul.f32 %v5700, %v5700
        %v5711 = vmul.f32 %v5701, %v5701
        %v5712 = vmul.f32 %v5702, %v5702
        %v5713 = vmul.f32 %v5703, %v5703
        %v5714 = vmul.f32 %v5704, %v5704
        %v5715 = vmul.f32 %v5705, %v5705
        %v5716 = vmul.f32 %v5706, %v5706
        %v5717 = vmul.f32 %v5707, %v5707
        %v5718 = vmul.f32 %v5708, %v5708
        %5719 = vadd.xlane.f32.xlu0 %v5709
        %v5720 = vpop.xlane.xlu0 %5719
        %5721 = vadd.xlane.f32.xlu0 %v5710
        %v5722 = vpop.xlane.xlu0 %5721
        %5723 = vadd.xlane.f32.xlu0 %v5711
        %v5724 = vpop.xlane.xlu0 %5723
        %5725 = vadd.xlane.f32.xlu0 %v5712
        %v5726 = vpop.xlane.xlu0 %5725
        %5727 = vadd.xlane.f32.xlu0 %v5713
        %v5728 = vpop.xlane.xlu0 %5727
        %5729 = vadd.xlane.f32.xlu0 %v5714
        %v5730 = vpop.xlane.xlu0 %5729
        %5731 = vadd.xlane.f32.xlu0 %v5715
        %v5732 = vpop.xlane.xlu0 %5731
        %5733 = vadd.xlane.f32.xlu0 %v5716
        %v5734 = vpop.xlane.xlu0 %5733
        %5735 = vadd.xlane.f32.xlu0 %v5717
        %v5736 = vpop.xlane.xlu0 %5735
        %5737 = vadd.xlane.f32.xlu0 %v5718
        %v5738 = vpop.xlane.xlu0 %5737
        %v5739 = vmul.f32 %v5720, %v3020
        %v5740 = vmul.f32 %v5722, %v3020
        %v5741 = vmul.f32 %v5724, %v3020
        %v5742 = vmul.f32 %v5726, %v3020
        %v5743 = vmul.f32 %v5728, %v3020
        %v5744 = vmul.f32 %v5730, %v3020
        %v5745 = vmul.f32 %v5732, %v3020
        %v5746 = vmul.f32 %v5734, %v3020
        %v5747 = vmul.f32 %v5736, %v3020
        %v5748 = vmul.f32 %v5738, %v3020
        %v5749 = vadd.f32 %v5739, 1e-05
        %v5750 = vadd.f32 %v5740, 1e-05
        %v5751 = vadd.f32 %v5741, 1e-05
        %v5752 = vadd.f32 %v5742, 1e-05
        %v5753 = vadd.f32 %v5743, 1e-05
        %v5754 = vadd.f32 %v5744, 1e-05
        %v5755 = vadd.f32 %v5745, 1e-05
        %v5756 = vadd.f32 %v5746, 1e-05
        %v5757 = vadd.f32 %v5747, 1e-05
        %v5758 = vadd.f32 %v5748, 1e-05
        %v5759 = vrsqrt.pop %v5749
        %v5760 = vrsqrt.pop %v5750
        %v5761 = vrsqrt.pop %v5751
        %v5762 = vrsqrt.pop %v5752
        %v5763 = vrsqrt.pop %v5753
        %v5764 = vrsqrt.pop %v5754
        %v5765 = vrsqrt.pop %v5755
        %v5766 = vrsqrt.pop %v5756
        %v5767 = vrsqrt.pop %v5757
        %v5768 = vrsqrt.pop %v5758
        %v5769 = vmul.f32 %v5699, %v5759
        %v5770 = vmul.f32 %v5700, %v5760
        %v5771 = vmul.f32 %v5701, %v5761
        %v5772 = vmul.f32 %v5702, %v5762
        %v5773 = vmul.f32 %v5703, %v5763
        %v5774 = vmul.f32 %v5704, %v5764
        %v5775 = vmul.f32 %v5705, %v5765
        %v5776 = vmul.f32 %v5706, %v5766
        %v5777 = vmul.f32 %v5707, %v5767
        %v5778 = vmul.f32 %v5708, %v5768
        %v5780 = vlaneseq
        %v5781 = vshrl.u32 %v5780, 7
        %v5782 = vsub.s32 0, %v5781
        %v5783 = vrot.slane %v5666, %v5782
        %v5785 = vmul.f32 %v5769, %v5783
        %v5786 = vmul.f32 %v5770, %v5783
        %v5787 = vmul.f32 %v5771, %v5783
        %v5788 = vmul.f32 %v5772, %v5783
        %v5789 = vmul.f32 %v5773, %v5783
        %v5790 = vmul.f32 %v5774, %v5783
        %v5791 = vmul.f32 %v5775, %v5783
        %v5792 = vmul.f32 %v5776, %v5783
        %v5793 = vmul.f32 %v5777, %v5783
        %v5794 = vmul.f32 %v5778, %v5783
        %v5796 = vlaneseq
        %v5797 = vshrl.u32 %v5796, 7
        %v5798 = vsub.s32 0, %v5797
        %v5799 = vrot.slane %v5668, %v5798
        %v5801 = vadd.f32 %v5785, %v5799
        %v5802 = vadd.f32 %v5786, %v5799
        %v5803 = vadd.f32 %v5787, %v5799
        %v5804 = vadd.f32 %v5788, %v5799
        %v5805 = vadd.f32 %v5789, %v5799
        %v5806 = vadd.f32 %v5790, %v5799
        %v5807 = vadd.f32 %v5791, %v5799
        %v5808 = vadd.f32 %v5792, %v5799
        %v5809 = vadd.f32 %v5793, %v5799
        %v5810 = vadd.f32 %v5794, %v5799
        %v5811 = vpack.c.bf16 %v5802, %v5801
        %v5812 = vpack.c.bf16 %v5804, %v5803
        %v5813 = vpack.c.bf16 %v5806, %v5805
        %v5814 = vpack.c.bf16 %v5808, %v5807
        %v5815 = vpack.c.bf16 %v5810, %v5809
        %s5816 = scalar_lea.vmem [#allocation9], 64
        %v5817 = vld [vmem:[%s5816] sm:$0xf]
        %v5818 = vld [vmem:[%s5816 + $0x4] sm:$0xf]
        %v5819 = vld [vmem:[%s5816 + $0x8] sm:$0xf]
        %v5820 = vld [vmem:[%s5816 + $0xc] sm:$0xf]
        %v5821 = vld [vmem:[%s5816 + $0x10] sm:$0xf]
        %v5822 = vld [vmem:[%s5816 + $0x14] sm:$0xf]
        %v5823 = vld [vmem:[%s5816 + $0x18] sm:$0xf]
        %v5824 = vld [vmem:[%s5816 + $0x1c] sm:$0xf]
        %v5825 = vld [vmem:[%s5816 + $0x20] sm:$0xf]
        %v5826 = vld [vmem:[%s5816 + $0x24] sm:$0xf]
        %v5827 = vld [vmem:[%s5816 + $0x28] sm:$0xf]
        %v5828 = vld [vmem:[%s5816 + $0x2c] sm:$0xf]
        %v5829 = vld [vmem:[%s5816 + $0x30] sm:$0xf]
        %v5830 = vld [vmem:[%s5816 + $0x34] sm:$0xf]
        %v5831 = vld [vmem:[%s5816 + $0x38] sm:$0xf]
        %v5832 = vld [vmem:[%s5816 + $0x3c] sm:$0xf]
        %s5833 = scalar_lea.vmem %s14, 1
        %v5834 = vld [vmem:[%s5833] sm:$0x1]
        %v5836 = vlaneseq
        %v5837 = vshrl.u32 %v5836, 7
        %v5838 = vsub.s32 0, %v5837
        %v5839 = vrot.slane %v5834, %v5838
        %v5857 = vunpack.c.l.b16 %v5817
        %v5858 = vunpack.c.l.b16 %v5818
        %v5859 = vunpack.c.l.b16 %v5819
        %v5860 = vunpack.c.l.b16 %v5820
        %v5861 = vunpack.c.l.b16 %v5821
        %v5862 = vunpack.c.l.b16 %v5822
        %v5863 = vunpack.c.l.b16 %v5823
        %v5864 = vunpack.c.l.b16 %v5824
        %v5865 = vunpack.c.l.b16 %v5825
        %v5866 = vunpack.c.l.b16 %v5826
        %v5867 = vunpack.c.l.b16 %v5827
        %v5868 = vunpack.c.l.b16 %v5828
        %v5869 = vunpack.c.l.b16 %v5829
        %v5870 = vunpack.c.l.b16 %v5830
        %v5871 = vunpack.c.l.b16 %v5831
        %v5872 = vunpack.c.l.b16 %v5832
        %v5873 = vpack.c.b16 %v5858, %v5857
        %v5874 = vpack.c.b16 %v5860, %v5859
        %v5875 = vpack.c.b16 %v5862, %v5861
        %v5876 = vpack.c.b16 %v5864, %v5863
        %v5877 = vpack.c.b16 %v5866, %v5865
        %v5878 = vpack.c.b16 %v5868, %v5867
        %v5879 = vpack.c.b16 %v5870, %v5869
        %v5880 = vpack.c.b16 %v5872, %v5871
        %5889 = vmatprep.subr.bf16.mxu0 0
        %5890 = vmatpush1.bf16.msra.mxu0 %v5873
        %5891 = vmatprep.subr.bf16.mxu0 0
        %5892 = vmatpush1.bf16.msra.mxu0 %v5874
        %5893 = vmatprep.subr.bf16.mxu0 0
        %5894 = vmatpush1.bf16.msra.mxu0 %v5875
        %5895 = vmatprep.subr.bf16.mxu0 0
        %5896 = vmatpush1.bf16.msra.mxu0 %v5876
        %5897 = vmatprep.subr.bf16.mxu0 0
        %5898 = vmatpush1.bf16.msra.mxu0 %v5877
        %5899 = vmatprep.subr.bf16.mxu0 0
        %5900 = vmatpush1.bf16.msra.mxu0 %v5878
        %5901 = vmatprep.subr.bf16.mxu0 0
        %5902 = vmatpush1.bf16.msra.mxu0 %v5879
        %5903 = vmatprep.subr.bf16.mxu0 0
        %5904 = vmatpush1.bf16.msra.mxu0 %v5880
        %5905 = vmatprep.subr.bf16.mxu0 0
        %5906 = vmatpush1.bf16.msra.mxu0 0
        %5907 = vmatprep.subr.bf16.mxu0 0
        %5908 = vmatpush1.bf16.msra.mxu0 0
        %5909 = vmatprep.subr.bf16.mxu0 0
        %5910 = vmatpush1.bf16.msra.mxu0 0
        %5911 = vmatprep.subr.bf16.mxu0 0
        %5912 = vmatpush1.bf16.msra.mxu0 0
        %5913 = vmatprep.subr.bf16.mxu0 0
        %5914 = vmatpush1.bf16.msra.mxu0 0
        %5915 = vmatprep.subr.bf16.mxu0 0
        %5916 = vmatpush1.bf16.msra.mxu0 0
        %5917 = vmatprep.subr.bf16.mxu0 0
        %5918 = vmatpush1.bf16.msra.mxu0 0
        %5919 = vmatprep.subr.bf16.mxu0 0
        %5920 = vmatpush1.bf16.msra.mxu0 0
        %5921 = vmatprep.mubr.bf16.mxu0 0
        %5922 = vmatmul.mubr.bf16.gmra.mrb[0].mxu0 %v5811
        %v5923 = vpop.f32.mrb[0].mxu0
        %v5924 = vadd.f32 %v5839, %v5923
        %v5925 = vpop.f32.mrb[0].mxu0
        %v5926 = vpop.f32.mrb[0].mxu0
        %v5927 = vadd.f32 %v5839, %v5926
        %v5928 = vpop.f32.mrb[0].mxu0
        %5929 = vmatprep.mubr.bf16.mxu0 0
        %5930 = vmatmul.mubr.bf16.gmra.mrb[0].mxu0 %v5812
        %v5931 = vpop.f32.mrb[0].mxu0
        %v5932 = vadd.f32 %v5839, %v5931
        %v5933 = vpop.f32.mrb[0].mxu0
        %v5934 = vpop.f32.mrb[0].mxu0
        %v5935 = vadd.f32 %v5839, %v5934
        %v5936 = vpop.f32.mrb[0].mxu0
        %5937 = vmatprep.mubr.bf16.mxu0 0
        %5938 = vmatmul.mubr.bf16.gmra.mrb[0].mxu0 %v5813
        %v5939 = vpop.f32.mrb[0].mxu0
        %v5940 = vadd.f32 %v5839, %v5939
        %v5941 = vpop.f32.mrb[0].mxu0
        %v5942 = vpop.f32.mrb[0].mxu0
        %v5943 = vadd.f32 %v5839, %v5942
        %v5944 = vpop.f32.mrb[0].mxu0
        %5945 = vmatprep.mubr.bf16.mxu0 0
        %5946 = vmatmul.mubr.bf16.gmra.mrb[0].mxu0 %v5814
        %v5947 = vpop.f32.mrb[0].mxu0
        %v5948 = vadd.f32 %v5839, %v5947
        %v5949 = vpop.f32.mrb[0].mxu0
        %v5950 = vpop.f32.mrb[0].mxu0
        %v5951 = vadd.f32 %v5839, %v5950
        %v5952 = vpop.f32.mrb[0].mxu0
        %5953 = vmatprep.mubr.bf16.mxu0 0
        %5954 = vmatmul.mubr.bf16.gmra.mrb[0].mxu0 %v5815
        %v5955 = vpop.f32.mrb[0].mxu0
        %v5956 = vadd.f32 %v5839, %v5955
        %v5957 = vpop.f32.mrb[0].mxu0
        %v5958 = vpop.f32.mrb[0].mxu0
        %v5959 = vadd.f32 %v5839, %v5958
        %v5960 = vpop.f32.mrb[0].mxu0
        %5961 = vdwg.mxu0
        %v5962 = vmax.f32 %v5924, 0.0
        %v5963 = vmax.f32 %v5927, 0.0
        %v5964 = vmax.f32 %v5932, 0.0
        %v5965 = vmax.f32 %v5935, 0.0
        %v5966 = vmax.f32 %v5940, 0.0
        %v5967 = vmax.f32 %v5943, 0.0
        %v5968 = vmax.f32 %v5948, 0.0
        %v5969 = vmax.f32 %v5951, 0.0
        %v5970 = vmax.f32 %v5956, 0.0
        %v5971 = vmax.f32 %v5959, 0.0
        %v5972 = vpack.c.bf16 %v5963, %v5962
        %v5973 = vpack.c.bf16 %v5965, %v5964
        %v5974 = vpack.c.bf16 %v5967, %v5966
        %v5975 = vpack.c.bf16 %v5969, %v5968
        %v5976 = vpack.c.bf16 %v5971, %v5970
        %s5977 = scalar_lea.vmem [#allocation11], 64
        %v5978 = vld [vmem:[%s5977] sm:$0xf]
        %v5979 = vld [vmem:[%s5977 + $0x4] sm:$0xf]
        %v5980 = vld [vmem:[%s5977 + $0x8] sm:$0xf]
        %v5981 = vld [vmem:[%s5977 + $0xc] sm:$0xf]
        %v5982 = vld [vmem:[%s5977 + $0x10] sm:$0xf]
        %v5983 = vld [vmem:[%s5977 + $0x14] sm:$0xf]
        %v5984 = vld [vmem:[%s5977 + $0x18] sm:$0xf]
        %v5985 = vld [vmem:[%s5977 + $0x1c] sm:$0xf]
        %v5986 = vld [vmem:[%s5977 + $0x20] sm:$0xf]
        %v5987 = vld [vmem:[%s5977 + $0x24] sm:$0xf]
        %v5988 = vld [vmem:[%s5977 + $0x28] sm:$0xf]
        %v5989 = vld [vmem:[%s5977 + $0x2c] sm:$0xf]
        %v5990 = vld [vmem:[%s5977 + $0x30] sm:$0xf]
        %v5991 = vld [vmem:[%s5977 + $0x34] sm:$0xf]
        %v5992 = vld [vmem:[%s5977 + $0x38] sm:$0xf]
        %v5993 = vld [vmem:[%s5977 + $0x3c] sm:$0xf]
        %s5994 = scalar_lea.vmem %s16, 1
        %v5995 = vld [vmem:[%s5994] sm:$0x1]
        %v5997 = vlaneseq
        %v5998 = vshrl.u32 %v5997, 7
        %v5999 = vsub.s32 0, %v5998
        %v6000 = vrot.slane %v5995, %v5999
        %v6018 = vunpack.c.l.b16 %v5978
        %v6019 = vunpack.c.l.b16 %v5979
        %v6020 = vunpack.c.l.b16 %v5980
        %v6021 = vunpack.c.l.b16 %v5981
        %v6022 = vunpack.c.l.b16 %v5982
        %v6023 = vunpack.c.l.b16 %v5983
        %v6024 = vunpack.c.l.b16 %v5984
        %v6025 = vunpack.c.l.b16 %v5985
        %v6026 = vunpack.c.l.b16 %v5986
        %v6027 = vunpack.c.l.b16 %v5987
        %v6028 = vunpack.c.l.b16 %v5988
        %v6029 = vunpack.c.l.b16 %v5989
        %v6030 = vunpack.c.l.b16 %v5990
        %v6031 = vunpack.c.l.b16 %v5991
        %v6032 = vunpack.c.l.b16 %v5992
        %v6033 = vunpack.c.l.b16 %v5993
        %v6034 = vpack.c.b16 %v6019, %v6018
        %v6035 = vpack.c.b16 %v6021, %v6020
        %v6036 = vpack.c.b16 %v6023, %v6022
        %v6037 = vpack.c.b16 %v6025, %v6024
        %v6038 = vpack.c.b16 %v6027, %v6026
        %v6039 = vpack.c.b16 %v6029, %v6028
        %v6040 = vpack.c.b16 %v6031, %v6030
        %v6041 = vpack.c.b16 %v6033, %v6032
        %6050 = vmatprep.subr.bf16.mxu0 0
        %6051 = vmatpush1.bf16.msra.mxu0 %v6034
        %6052 = vmatprep.subr.bf16.mxu0 0
        %6053 = vmatpush1.bf16.msra.mxu0 %v6035
        %6054 = vmatprep.subr.bf16.mxu0 0
        %6055 = vmatpush1.bf16.msra.mxu0 %v6036
        %6056 = vmatprep.subr.bf16.mxu0 0
        %6057 = vmatpush1.bf16.msra.mxu0 %v6037
        %6058 = vmatprep.subr.bf16.mxu0 0
        %6059 = vmatpush1.bf16.msra.mxu0 %v6038
        %6060 = vmatprep.subr.bf16.mxu0 0
        %6061 = vmatpush1.bf16.msra.mxu0 %v6039
        %6062 = vmatprep.subr.bf16.mxu0 0
        %6063 = vmatpush1.bf16.msra.mxu0 %v6040
        %6064 = vmatprep.subr.bf16.mxu0 0
        %6065 = vmatpush1.bf16.msra.mxu0 %v6041
        %6066 = vmatprep.subr.bf16.mxu0 0
        %6067 = vmatpush1.bf16.msra.mxu0 0
        %6068 = vmatprep.subr.bf16.mxu0 0
        %6069 = vmatpush1.bf16.msra.mxu0 0
        %6070 = vmatprep.subr.bf16.mxu0 0
        %6071 = vmatpush1.bf16.msra.mxu0 0
        %6072 = vmatprep.subr.bf16.mxu0 0
        %6073 = vmatpush1.bf16.msra.mxu0 0
        %6074 = vmatprep.subr.bf16.mxu0 0
        %6075 = vmatpush1.bf16.msra.mxu0 0
        %6076 = vmatprep.subr.bf16.mxu0 0
        %6077 = vmatpush1.bf16.msra.mxu0 0
        %6078 = vmatprep.subr.bf16.mxu0 0
        %6079 = vmatpush1.bf16.msra.mxu0 0
        %6080 = vmatprep.subr.bf16.mxu0 0
        %6081 = vmatpush1.bf16.msra.mxu0 0
        %6082 = vmatprep.mubr.bf16.mxu0 0
        %6083 = vmatmul.mubr.bf16.gmra.mrb[0].mxu0 %v5972
        %v6084 = vpop.f32.mrb[0].mxu0
        %v6085 = vadd.f32 %v6000, %v6084
        %v6086 = vpop.f32.mrb[0].mxu0
        %v6087 = vpop.f32.mrb[0].mxu0
        %v6088 = vadd.f32 %v6000, %v6087
        %v6089 = vpop.f32.mrb[0].mxu0
        %6090 = vmatprep.mubr.bf16.mxu0 0
        %6091 = vmatmul.mubr.bf16.gmra.mrb[0].mxu0 %v5973
        %v6092 = vpop.f32.mrb[0].mxu0
        %v6093 = vadd.f32 %v6000, %v6092
        %v6094 = vpop.f32.mrb[0].mxu0
        %v6095 = vpop.f32.mrb[0].mxu0
        %v6096 = vadd.f32 %v6000, %v6095
        %v6097 = vpop.f32.mrb[0].mxu0
        %6098 = vmatprep.mubr.bf16.mxu0 0
        %6099 = vmatmul.mubr.bf16.gmra.mrb[0].mxu0 %v5974
        %v6100 = vpop.f32.mrb[0].mxu0
        %v6101 = vadd.f32 %v6000, %v6100
        %v6102 = vpop.f32.mrb[0].mxu0
        %v6103 = vpop.f32.mrb[0].mxu0
        %v6104 = vadd.f32 %v6000, %v6103
        %v6105 = vpop.f32.mrb[0].mxu0
        %6106 = vmatprep.mubr.bf16.mxu0 0
        %6107 = vmatmul.mubr.bf16.gmra.mrb[0].mxu0 %v5975
        %v6108 = vpop.f32.mrb[0].mxu0
        %v6109 = vadd.f32 %v6000, %v6108
        %v6110 = vpop.f32.mrb[0].mxu0
        %v6111 = vpop.f32.mrb[0].mxu0
        %v6112 = vadd.f32 %v6000, %v6111
        %v6113 = vpop.f32.mrb[0].mxu0
        %6114 = vmatprep.mubr.bf16.mxu0 0
        %6115 = vmatmul.mubr.bf16.gmra.mrb[0].mxu0 %v5976
        %v6116 = vpop.f32.mrb[0].mxu0
        %v6117 = vadd.f32 %v6000, %v6116
        %v6118 = vpop.f32.mrb[0].mxu0
        %v6119 = vpop.f32.mrb[0].mxu0
        %v6120 = vadd.f32 %v6000, %v6119
        %v6121 = vpop.f32.mrb[0].mxu0
        %6122 = vdwg.mxu0
        %v6123 = vadd.f32 %v5801, %v6085
        %v6124 = vadd.f32 %v5802, %v6088
        %v6125 = vadd.f32 %v5803, %v6093
        %v6126 = vadd.f32 %v5804, %v6096
        %v6127 = vadd.f32 %v5805, %v6101
        %v6128 = vadd.f32 %v5806, %v6104
        %v6129 = vadd.f32 %v5807, %v6109
        %v6130 = vadd.f32 %v5808, %v6112
        %v6131 = vadd.f32 %v5809, %v6117
        %v6132 = vadd.f32 %v5810, %v6120
        %s6133 = scalar_lea.vmem %s17, 1
        %v6134 = vld [vmem:[%s6133] sm:$0x1]
        %s6135 = scalar_lea.vmem %s18, 1
        %v6136 = vld [vmem:[%s6135] sm:$0x1]
        %6137 = vadd.xlane.f32.xlu0 %v6123
        %v6138 = vpop.xlane.xlu0 %6137
        %6139 = vadd.xlane.f32.xlu0 %v6124
        %v6140 = vpop.xlane.xlu0 %6139
        %6141 = vadd.xlane.f32.xlu0 %v6125
        %v6142 = vpop.xlane.xlu0 %6141
        %6143 = vadd.xlane.f32.xlu0 %v6126
        %v6144 = vpop.xlane.xlu0 %6143
        %6145 = vadd.xlane.f32.xlu0 %v6127
        %v6146 = vpop.xlane.xlu0 %6145
        %6147 = vadd.xlane.f32.xlu0 %v6128
        %v6148 = vpop.xlane.xlu0 %6147
        %6149 = vadd.xlane.f32.xlu0 %v6129
        %v6150 = vpop.xlane.xlu0 %6149
        %6151 = vadd.xlane.f32.xlu0 %v6130
        %v6152 = vpop.xlane.xlu0 %6151
        %6153 = vadd.xlane.f32.xlu0 %v6131
        %v6154 = vpop.xlane.xlu0 %6153
        %6155 = vadd.xlane.f32.xlu0 %v6132
        %v6156 = vpop.xlane.xlu0 %6155
        %v6157 = vmul.f32 %v6138, %v3020
        %v6158 = vmul.f32 %v6140, %v3020
        %v6159 = vmul.f32 %v6142, %v3020
        %v6160 = vmul.f32 %v6144, %v3020
        %v6161 = vmul.f32 %v6146, %v3020
        %v6162 = vmul.f32 %v6148, %v3020
        %v6163 = vmul.f32 %v6150, %v3020
        %v6164 = vmul.f32 %v6152, %v3020
        %v6165 = vmul.f32 %v6154, %v3020
        %v6166 = vmul.f32 %v6156, %v3020
        %v6167 = vsub.f32 %v6123, %v6157
        %v6168 = vsub.f32 %v6124, %v6158
        %v6169 = vsub.f32 %v6125, %v6159
        %v6170 = vsub.f32 %v6126, %v6160
        %v6171 = vsub.f32 %v6127, %v6161
        %v6172 = vsub.f32 %v6128, %v6162
        %v6173 = vsub.f32 %v6129, %v6163
        %v6174 = vsub.f32 %v6130, %v6164
        %v6175 = vsub.f32 %v6131, %v6165
        %v6176 = vsub.f32 %v6132, %v6166
        %v6177 = vmul.f32 %v6167, %v6167
        %v6178 = vmul.f32 %v6168, %v6168
        %v6179 = vmul.f32 %v6169, %v6169
        %v6180 = vmul.f32 %v6170, %v6170
        %v6181 = vmul.f32 %v6171, %v6171
        %v6182 = vmul.f32 %v6172, %v6172
        %v6183 = vmul.f32 %v6173, %v6173
        %v6184 = vmul.f32 %v6174, %v6174
        %v6185 = vmul.f32 %v6175, %v6175
        %v6186 = vmul.f32 %v6176, %v6176
        %6187 = vadd.xlane.f32.xlu0 %v6177
        %v6188 = vpop.xlane.xlu0 %6187
        %6189 = vadd.xlane.f32.xlu0 %v6178
        %v6190 = vpop.xlane.xlu0 %6189
        %6191 = vadd.xlane.f32.xlu0 %v6179
        %v6192 = vpop.xlane.xlu0 %6191
        %6193 = vadd.xlane.f32.xlu0 %v6180
        %v6194 = vpop.xlane.xlu0 %6193
        %6195 = vadd.xlane.f32.xlu0 %v6181
        %v6196 = vpop.xlane.xlu0 %6195
        %6197 = vadd.xlane.f32.xlu0 %v6182
        %v6198 = vpop.xlane.xlu0 %6197
        %6199 = vadd.xlane.f32.xlu0 %v6183
        %v6200 = vpop.xlane.xlu0 %6199
        %6201 = vadd.xlane.f32.xlu0 %v6184
        %v6202 = vpop.xlane.xlu0 %6201
        %6203 = vadd.xlane.f32.xlu0 %v6185
        %v6204 = vpop.xlane.xlu0 %6203
        %6205 = vadd.xlane.f32.xlu0 %v6186
        %v6206 = vpop.xlane.xlu0 %6205
        %v6207 = vmul.f32 %v6188, %v3020
        %v6208 = vmul.f32 %v6190, %v3020
        %v6209 = vmul.f32 %v6192, %v3020
        %v6210 = vmul.f32 %v6194, %v3020
        %v6211 = vmul.f32 %v6196, %v3020
        %v6212 = vmul.f32 %v6198, %v3020
        %v6213 = vmul.f32 %v6200, %v3020
        %v6214 = vmul.f32 %v6202, %v3020
        %v6215 = vmul.f32 %v6204, %v3020
        %v6216 = vmul.f32 %v6206, %v3020
        %v6217 = vadd.f32 %v6207, 1e-05
        %v6218 = vadd.f32 %v6208, 1e-05
        %v6219 = vadd.f32 %v6209, 1e-05
        %v6220 = vadd.f32 %v6210, 1e-05
        %v6221 = vadd.f32 %v6211, 1e-05
        %v6222 = vadd.f32 %v6212, 1e-05
        %v6223 = vadd.f32 %v6213, 1e-05
        %v6224 = vadd.f32 %v6214, 1e-05
        %v6225 = vadd.f32 %v6215, 1e-05
        %v6226 = vadd.f32 %v6216, 1e-05
        %v6227 = vrsqrt.pop %v6217
        %v6228 = vrsqrt.pop %v6218
        %v6229 = vrsqrt.pop %v6219
        %v6230 = vrsqrt.pop %v6220
        %v6231 = vrsqrt.pop %v6221
        %v6232 = vrsqrt.pop %v6222
        %v6233 = vrsqrt.pop %v6223
        %v6234 = vrsqrt.pop %v6224
        %v6235 = vrsqrt.pop %v6225
        %v6236 = vrsqrt.pop %v6226
        %v6237 = vmul.f32 %v6167, %v6227
        %v6238 = vmul.f32 %v6168, %v6228
        %v6239 = vmul.f32 %v6169, %v6229
        %v6240 = vmul.f32 %v6170, %v6230
        %v6241 = vmul.f32 %v6171, %v6231
        %v6242 = vmul.f32 %v6172, %v6232
        %v6243 = vmul.f32 %v6173, %v6233
        %v6244 = vmul.f32 %v6174, %v6234
        %v6245 = vmul.f32 %v6175, %v6235
        %v6246 = vmul.f32 %v6176, %v6236
        %v6248 = vlaneseq
        %v6249 = vshrl.u32 %v6248, 7
        %v6250 = vsub.s32 0, %v6249
        %v6251 = vrot.slane %v6134, %v6250
        %v6253 = vmul.f32 %v6237, %v6251
        %v6254 = vmul.f32 %v6238, %v6251
        %v6255 = vmul.f32 %v6239, %v6251
        %v6256 = vmul.f32 %v6240, %v6251
        %v6257 = vmul.f32 %v6241, %v6251
        %v6258 = vmul.f32 %v6242, %v6251
        %v6259 = vmul.f32 %v6243, %v6251
        %v6260 = vmul.f32 %v6244, %v6251
        %v6261 = vmul.f32 %v6245, %v6251
        %v6262 = vmul.f32 %v6246, %v6251
        %v6264 = vlaneseq
        %v6265 = vshrl.u32 %v6264, 7
        %v6266 = vsub.s32 0, %v6265
        %v6267 = vrot.slane %v6136, %v6266
        %v6269 = vadd.f32 %v6253, %v6267
        %v6270 = vadd.f32 %v6254, %v6267
        %v6271 = vadd.f32 %v6255, %v6267
        %v6272 = vadd.f32 %v6256, %v6267
        %v6273 = vadd.f32 %v6257, %v6267
        %v6274 = vadd.f32 %v6258, %v6267
        %v6275 = vadd.f32 %v6259, %v6267
        %v6276 = vadd.f32 %v6260, %v6267
        %v6277 = vadd.f32 %v6261, %v6267
        %v6278 = vadd.f32 %v6262, %v6267
        %6279 = vst [vmem:[#allocation2] sm:$0xff] %v6269
        %6280 = vst [vmem:[#allocation2 + $0x8] sm:$0xff] %v6270
        %6281 = vst [vmem:[#allocation2 + $0x10] sm:$0xff] %v6271
        %6282 = vst [vmem:[#allocation2 + $0x18] sm:$0xff] %v6272
        %6283 = vst [vmem:[#allocation2 + $0x20] sm:$0xff] %v6273
        %6284 = vst [vmem:[#allocation2 + $0x28] sm:$0xff] %v6274
        %6285 = vst [vmem:[#allocation2 + $0x30] sm:$0xff] %v6275
        %6286 = vst [vmem:[#allocation2 + $0x38] sm:$0xff] %v6276
        %6287 = vst [vmem:[#allocation2 + $0x40] sm:$0xff] %v6277
        %6288 = vst [vmem:[#allocation2 + $0x48] sm:$0xff] %v6278
        %v6289 = vld [vmem:[#allocation2 + $0x20] sm:$0x1]
        %v6290 = vld [vmem:[%s5] sm:$0x1]
        %v6291 = vmul.f32 %v6289, %v6290
        %vm6292 = vcmask 1040384
        %v6293 = vsel %vm6292, %v6291, 0.0
        %6294 = vadd.xlane.f32.xlu0 %v6293
        %v6295 = vpop.xlane.xlu0 %6294
        %v6296 = vld [vmem:[#allocation5] sm:$0x1]
        %v6297 = vadd.f32 %v6295, %v6296
        %v6298 = vxor.u32 %v6297, 2147483648
        %v6299 = vmul.f32 %v6298, 1.442695
        %v6300 = vpow.pop %v6299
        %v6301 = vadd.f32 %v6300, 1.0
        %v6302 = vrcp.pop %v6301
        %v6303 = vmul.f32 1.0, %v6302
        %6305 = vset.pattern.permute.xlu0 0
        %6306 = vperm.xlu0 %6305, %v6303
        %v6307 = vpop.permute.xlu0 %6306
        %6309 = vst [vmem:[%s641] sm:$0x1] %v6307
        %s6310 = sand.u32 %s449, 1
        %s6311 = scalar_lea.sflag [#allocation8], %s6310
        %s6312 = sand.u32 %s449, 1
        %s6313 = scalar_lea.vmem [#allocation12], %s6312
        // Predicated region
        $region109: #{tpu_custom_call.1} parent=95 // pred_check
          %p6314 = pneg %p459
        $region110: #{tpu_custom_call.1} parent=95 // pred_check_branch
          %6316 = sbr.rel (%p6314) target = $region112
        $region111: #{tpu_custom_call.1} parent=95 // pred_region
          %s6318 = ssub.s32 16, 16
          %6319 = vsyncadd %s6311, %s6318
          %s6320 = smul.addr %s37, 16
          %s6321 = scalar_lea.hbm %s19, %s6320
          %s6323 = sshll.u32 %s6313, 4
          %s6324 = int_to_ptr.vmem [resolvable:$true] %s6323
          %6326 = dma.vmem_to_hbm [thread:$0]  %s6324, 16, %s6321, %s6311
        $region112: #{tpu_custom_call.1} parent=95 // pred_fallthru
          _
      $region96: #{tpu_custom_call.1} parent=5 // pred_fallthru
        _
      %p6327 = scmp.le.s32.totalorder 2, %s32
      // Predicated region
      $region113: #{tpu_custom_call.1} parent=5 // pred_check
        %p6328 = pneg %p6327
      $region114: #{tpu_custom_call.1} parent=5 // pred_check_branch
        %6330 = sbr.rel (%p6328) target = $region116
      $region115: #{tpu_custom_call.1} parent=5 // pred_region
        %s6331 = ssub.s32 %s32, 2
        // Predicated region
        $region117: #{tpu_custom_call.1} parent=115 // pred_check
          %p6332 = pneg %p465
        $region118: #{tpu_custom_call.1} parent=115 // pred_check_branch
          %6334 = sbr.rel (%p6332) target = $region120
        $region119: #{tpu_custom_call.1} parent=115 // pred_region
          %s6335 = sand.u32 %s450, 1
          %s6336 = scalar_lea.sflag [#allocation8], %s6335
          %s6337 = sand.u32 %s450, 1
          %s6338 = scalar_lea.vmem [#allocation12], %s6337
          %6339 = dma.done %s6336, 16
        $region120: #{tpu_custom_call.1} parent=115 // pred_fallthru
          _
      $region116: #{tpu_custom_call.1} parent=5 // pred_fallthru
        _
    $region6: #{tpu_custom_call.1} parent=1 // loop_footer
      %s36 = sadd.s32 1, %s32
    $region7: #{tpu_custom_call.1} parent=1 // loop_footer_branch
      %31 = sbr.rel target = $region3
    $region8: #{tpu_custom_call.1} parent=1 // loop_exit
      _
    %6340 = vsyncpa [#allocation7], 1
    %s6341 = scalar_lea.sflag [#allocation7], 1
    %6342 = vsyncpa %s6341, 1
    %6343 = vsyncpa [#allocation10], 1
    %6344 = vsyncpa [#allocation8], 1
    %s6345 = scalar_lea.sflag [#allocation8], 1
    %6346 = vsyncpa %s6345, 1

</llo_original>
